<compile_context>
chip_gen: v7x
topology: tpu7x:2x2x1
jax: 0.10.0
libtpu: 0.0.40
codegen_flags: <defaults>
</compile_context>

<pallas_src>
import functools

import jax
import jax.numpy as jnp
from jax import lax
from jax.experimental import pallas as pl
from jax.experimental.pallas import tpu as pltpu

_SMEM = pltpu.MemorySpace.SMEM


def _cparams(n_parallel_axes):
    return pltpu.CompilerParams(
        dimension_semantics=("parallel",) * n_parallel_axes,
        vmem_limit_bytes=48 * 1024 * 1024,   # safe on v7x (64 MiB physical)
    )


def _p_tile(p, cap=512):
    """Lane tile along the spatial axis: whole axis if small, else a 128-multiple cap."""
    return p if p <= cap else cap


# ---------------------------------------------------------------------------
# Pallas kernels
# ---------------------------------------------------------------------------
def _conv_mm_kernel(x_ref, w_ref, b_ref, *rest, act, has_add):
    """out = act(W @ patches + b) [+ add].  Shapes: W (Cout,K), patches (1,K,TP)."""
    rest = list(rest)
    o_ref = rest.pop()
    idx = 0
    alpha_ref = None
    add_ref = None
    if act == "prelu":
        alpha_ref = rest[idx]
        idx += 1
    if has_add:
        add_ref = rest[idx]
        idx += 1

    y = jnp.dot(w_ref[...], x_ref[0], preferred_element_type=jnp.float32)
    y = y + b_ref[...]                           # (Cout, 1) broadcasts over lanes
    if act == "prelu":
        a = alpha_ref[0]                         # scalar from SMEM
        y = jnp.where(y >= 0.0, y, a * y)
    if has_add:
        y = y + add_ref[0]
    o_ref[0] = y.astype(o_ref.dtype)


def _pam_kernel(xf_ref, xq_ref, wq_ref, bq_ref, wk_ref, bk_ref, wv_ref, bv_ref,
                g_ref, o_ref):
    """Fused PAM: q/k/v 1x1 convs + softmax attention + residual, query-tiled."""
    xf = xf_ref[0]                               # (C, HW)   full keys/values
    xq = xq_ref[0]                               # (C, TQ)   query tile
    q = jnp.dot(wq_ref[...], xq, preferred_element_type=jnp.float32) + bq_ref[...]
    k = jnp.dot(wk_ref[...], xf, preferred_element_type=jnp.float32) + bk_ref[...]
    v = jnp.dot(wv_ref[...], xf, preferred_element_type=jnp.float32) + bv_ref[...]
    # energy[i, j] = sum_c q[c, i] * k[c, j]  ->  (TQ, HW)
    energy = lax.dot_general(q, k, (((0,), (0,)), ((), ())),
                             preferred_element_type=jnp.float32)
    energy = energy - jnp.max(energy, axis=-1, keepdims=True)
    e = jnp.exp(energy)
    attn = e / jnp.sum(e, axis=-1, keepdims=True)          # softmax(dim=-1)
    # out_tile = V @ attn^T -> (C, TQ)
    out = lax.dot_general(v, attn, (((1,), (1,)), ((), ())),
                          preferred_element_type=jnp.float32)
    o_ref[0] = g_ref[0] * out + xq


def _cam_kernel(x_ref, g_ref, o_ref):
    x = x_ref[0]                                 # (C, HW)
    energy = lax.dot_general(x, x, (((1,), (1,)), ((), ())),
                             preferred_element_type=jnp.float32)   # (C, C)
    energy_new = jnp.max(energy, axis=-1, keepdims=True) - energy
    e = jnp.exp(energy_new - jnp.max(energy_new, axis=-1, keepdims=True))
    attn = e / jnp.sum(e, axis=-1, keepdims=True)
    out = jnp.dot(attn, x, preferred_element_type=jnp.float32)     # (C, HW)
    o_ref[0] = g_ref[0] * out + x


def _gate_fuse_kernel(pam_ref, cam_ref, x_ref, x1_ref, outm_ref, w8_ref, b8_ref,
                      wm_ref, xnew_ref, outm_new_ref):
    """Fused: conv8_1(pam+cam) -> sigmoid gate with x1 -> OUT_M accumulation."""
    s = pam_ref[0] + cam_ref[0]                                    # (C, TP)
    attn = jnp.dot(w8_ref[...], s, preferred_element_type=jnp.float32) + b8_ref[...]
    gate = 1.0 / (1.0 + jnp.exp(-attn))
    xn = gate * x1_ref[0] + x_ref[0]
    xnew_ref[0] = xn
    outm_new_ref[0] = outm_ref[0] + wm_ref[0] * xn


def _absdiff_kernel(a_ref, b_ref, o_ref):
    o_ref[...] = jnp.abs(a_ref[...] - b_ref[...])


# ---------------------------------------------------------------------------
# pallas_call wrappers
# ---------------------------------------------------------------------------
def _conv_matmul(patches, wmat, bias, act="none", alpha=None, add=None):
    """patches (N,K,P), wmat (Cout,K), bias (Cout,) -> (N,Cout,P)."""
    n, k, pdim = patches.shape
    cout = wmat.shape[0]
    tp = _p_tile(pdim)
    grid = (n, pl.cdiv(pdim, tp))

    xspec = pl.BlockSpec((1, k, tp), lambda nn, pp: (nn, 0, pp))
    wspec = pl.BlockSpec((cout, k), lambda nn, pp: (0, 0))
    bspec = pl.BlockSpec((cout, 1), lambda nn, pp: (0, 0))
    ospec = pl.BlockSpec((1, cout, tp), lambda nn, pp: (nn, 0, pp))

    operands = [patches, wmat, bias.reshape(cout, 1)]
    in_specs = [xspec, wspec, bspec]
    if act == "prelu":
        operands.append(alpha.reshape(1).astype(jnp.float32))
        in_specs.append(pl.BlockSpec(memory_space=_SMEM))
    has_add = add is not None
    if has_add:
        operands.append(add)
        in_specs.append(pl.BlockSpec((1, cout, tp), lambda nn, pp: (nn, 0, pp)))

    kernel = functools.partial(_conv_mm_kernel, act=act, has_add=has_add)
    return pl.pallas_call(
        kernel,
        out_shape=jax.ShapeDtypeStruct((n, cout, pdim), jnp.float32),
        grid=grid,
        in_specs=in_specs,
        out_specs=ospec,
        compiler_params=_cparams(2),
    )(*operands)


def pam_attention(x, wq, bq, wk, bk, wv, bv, gamma):
    """x (N,C,P) -> gamma * PAM(x) + x, query-tiled to bound VMEM."""
    n, c, pdim = x.shape
    c8 = wq.shape[0]
    tq = _p_tile(pdim, cap=128)
    grid = (n, pl.cdiv(pdim, tq))
    return pl.pallas_call(
        _pam_kernel,
        out_shape=jax.ShapeDtypeStruct((n, c, pdim), jnp.float32),
        grid=grid,
        in_specs=[
            pl.BlockSpec((1, c, pdim), lambda nn, qq: (nn, 0, 0)),   # full x (k/v)
            pl.BlockSpec((1, c, tq), lambda nn, qq: (nn, 0, qq)),    # query tile
            pl.BlockSpec((c8, c), lambda nn, qq: (0, 0)),
            pl.BlockSpec((c8, 1), lambda nn, qq: (0, 0)),
            pl.BlockSpec((c8, c), lambda nn, qq: (0, 0)),
            pl.BlockSpec((c8, 1), lambda nn, qq: (0, 0)),
            pl.BlockSpec((c, c), lambda nn, qq: (0, 0)),
            pl.BlockSpec((c, 1), lambda nn, qq: (0, 0)),
            pl.BlockSpec(memory_space=_SMEM),
        ],
        out_specs=pl.BlockSpec((1, c, tq), lambda nn, qq: (nn, 0, qq)),
        compiler_params=_cparams(2),
    )(x, x, wq, bq.reshape(c8, 1), wk, bk.reshape(c8, 1), wv, bv.reshape(c, 1),
      gamma.reshape(1))


def cam_attention(x, gamma):
    n, c, pdim = x.shape
    return pl.pallas_call(
        _cam_kernel,
        out_shape=jax.ShapeDtypeStruct((n, c, pdim), jnp.float32),
        grid=(n,),
        in_specs=[pl.BlockSpec((1, c, pdim), lambda nn: (nn, 0, 0)),
                  pl.BlockSpec(memory_space=_SMEM)],
        out_specs=pl.BlockSpec((1, c, pdim), lambda nn: (nn, 0, 0)),
        compiler_params=_cparams(1),
    )(x, gamma.reshape(1))


def gate_fuse(pam4, cam4, x, x1, out_m, w8, b8, wm):
    """Fused conv8_1(pam4+cam4) -> sigmoid()*x1 + x -> OUT_M += wm * x_new."""
    n, c, pdim = x.shape
    tp = _p_tile(pdim)
    grid = (n, pl.cdiv(pdim, tp))
    blk = pl.BlockSpec((1, c, tp), lambda nn, pp: (nn, 0, pp))
    x_new, outm_new = pl.pallas_call(
        _gate_fuse_kernel,
        out_shape=(jax.ShapeDtypeStruct(x.shape, jnp.float32),
                   jax.ShapeDtypeStruct(x.shape, jnp.float32)),
        grid=grid,
        in_specs=[blk, blk, blk, blk, blk,
                  pl.BlockSpec((c, c), lambda nn, pp: (0, 0)),
                  pl.BlockSpec((c, 1), lambda nn, pp: (0, 0)),
                  pl.BlockSpec(memory_space=_SMEM)],
        out_specs=(blk, blk),
        compiler_params=_cparams(2),
    )(pam4, cam4, x, x1, out_m, w8, b8.reshape(c, 1),
      jnp.asarray(wm, jnp.float32).reshape(1))
    return x_new, outm_new


def ew_absdiff(a, b):
    """|a - b| on a lane-dense 2-D reshape (last dim a multiple of 128)."""
    shape = a.shape
    total = a.size
    lane = shape[-1]
    for cand in (512, 256, 128):
        if total % cand == 0:
            lane = cand
            break
    rows = total // lane
    tm = rows if rows <= 256 else 256
    spec = pl.BlockSpec((tm, lane), lambda i: (i, 0))
    out = pl.pallas_call(
        _absdiff_kernel,
        out_shape=jax.ShapeDtypeStruct((rows, lane), jnp.float32),
        grid=(pl.cdiv(rows, tm),),
        in_specs=[spec, spec],
        out_specs=spec,
        compiler_params=_cparams(1),
    )(a.reshape(rows, lane), b.reshape(rows, lane))
    return out.reshape(shape)


# ---------------------------------------------------------------------------
# Convolution glue (im2col for k>1 in plain JAX; matmul in Pallas)
# ---------------------------------------------------------------------------
def conv2d(x, h, w, weight, bias, stride=1, pad=0, act="none", alpha=None, add=None):
    """x: (N, Cin, H*W), weight: (Cout, Cin, kh, kw) torch layout -> (N, Cout, Ho*Wo)."""
    n, cin, _ = x.shape
    cout, _, kh, kw = weight.shape
    if kh == 1 and kw == 1 and stride == 1 and pad == 0:
        patches, ho, wo = x, h, w                 # 1x1 conv: no im2col at all
    else:
        x4 = x.reshape(n, cin, h, w)
        xp = jnp.pad(x4, ((0, 0), (0, 0), (pad, pad), (pad, pad)))
        ho = (h + 2 * pad - kh) // stride + 1
        wo = (w + 2 * pad - kw) // stride + 1
        cols = []
        for dy in range(kh):
            for dx in range(kw):
                cols.append(xp[:, :, dy::stride, dx::stride][:, :, :ho, :wo])
        col = jnp.stack(cols, axis=2)             # (N, Cin, kh*kw, Ho, Wo)
        patches = col.reshape(n, cin * kh * kw, ho * wo)
    y = _conv_matmul(patches, weight.reshape(cout, -1), bias,
                     act=act, alpha=alpha, add=add)
    return y, ho, wo


def deconv2d(x, h, w, weight, bias, act="none", alpha=None):
    """torch ConvTranspose2d(k=6, stride=2, pad=2) via sub-pixel decomposition."""
    n = x.shape[0]
    cin, cout = weight.shape[0], weight.shape[1]
    subs = []
    for py in range(2):
        for px in range(2):
            sub = jnp.flip(weight[:, :, py::2, px::2], axis=(2, 3))
            subs.append(jnp.transpose(sub, (1, 0, 2, 3)))     # (Cout, Cin, 3, 3)
    wcat = jnp.concatenate(subs, axis=0)                       # (4*Cout, Cin, 3, 3)
    bcat = jnp.tile(bias, 4)
    y, _, _ = conv2d(x, h, w, wcat, bcat, stride=1, pad=1, act=act, alpha=alpha)
    # interleave the 4 phase outputs -> (N, Cout, 2H, 2W)
    y = y.reshape(n, 2, 2, cout, h, w)
    y = jnp.transpose(y, (0, 3, 4, 1, 5, 2))                   # (N,Cout,H,2,W,2)
    y = y.reshape(n, cout, 4 * h * w)
    return y, 2 * h, 2 * w


# ---------------------------------------------------------------------------
# LAEAN forward
# ---------------------------------------------------------------------------
def laean_forward(params, x, *, num_recurs):
    p = params
    n, cin, h, w = x.shape
    nf = p["conv_in_w"].shape[0]
    weight_m = jax.nn.softmax(p["weight_M"], axis=0)

    xf = x.reshape(n, cin, h * w)
    xf, h, w = conv2d(xf, h, w, p["sub_mean_w"], p["sub_mean_b"])          # sub_mean
    xf, h, w = conv2d(xf, h, w, p["conv_in_w"], p["conv_in_b"], pad=1,
                      act="prelu", alpha=p["conv_in_a"])
    residual = xf
    x1 = xf

    # back-projection refinement loop
    for _ in range(3):
        up1, h2, w2 = deconv2d(x1, h, w, p["up1_1_w"], p["up1_1_b"],
                               act="prelu", alpha=p["up1_1_a"])
        d1, _, _ = conv2d(up1, h2, w2, p["down1_1_w"], p["down1_1_b"],
                          stride=2, pad=2, act="prelu", alpha=p["down1_1_a"])
        up2, _, _ = deconv2d(d1, h, w, p["up1_2_w"], p["up1_2_b"],
                             act="prelu", alpha=p["up1_2_a"])
        res_up = ew_absdiff(up2, up1)
        # "+ x1" residual fused into the down1_2 conv epilogue
        x1, _, _ = conv2d(res_up, h2, w2, p["down1_2_w"], p["down1_2_b"],
                          stride=2, pad=2, act="prelu", alpha=p["down1_2_a"],
                          add=x1)

    xcur = xf
    out_m = jnp.zeros_like(xf)
    wq = p["pam_q_w"].reshape(nf // 8, nf)
    wk = p["pam_k_w"].reshape(nf // 8, nf)
    wv = p["pam_v_w"].reshape(nf, nf)
    w8 = p["conv8_1_w"].reshape(nf, nf)
    for idx in range(num_recurs):
        # PAM_CAM_Layer (use_pam=True): fused q/k/v + attention + residual
        pam = pam_attention(xcur, wq, p["pam_q_b"], wk, p["pam_k_b"],
                            wv, p["pam_v_b"], p["pam_gamma"])
        pam4, _, _ = conv2d(pam, h, w, p["pam_conv_w"], p["pam_conv_b"],
                            pad=1, act="prelu", alpha=p["pam_a"])
        # PAM_CAM_Layer (use_pam=False -> CAM)
        cam = cam_attention(xcur, p["cam_gamma"])
        cam4, _, _ = conv2d(cam, h, w, p["cam_conv_w"], p["cam_conv_b"],
                            pad=1, act="prelu", alpha=p["cam_a"])
        # fused conv8_1 + sigmoid gate + weighted accumulation
        xcur, out_m = gate_fuse(pam4, cam4, xcur, x1, out_m,
                                w8, p["conv8_1_b"], weight_m[idx])

    compress, _, _ = conv2d(out_m, h, w, p["conv_fusion_w"], p["conv_fusion_b"],
                            add=residual)                                   # + residual fused
    out, ho, wo = deconv2d(compress, h, w, p["deconv_w"], p["deconv_b"],
                           act="prelu", alpha=p["deconv_a"])
    out, _, _ = conv2d(out, ho, wo, p["conv_out_w"], p["conv_out_b"])
    out, _, _ = conv2d(out, ho, wo, p["add_mean_w"], p["add_mean_b"])       # add_mean
    return out.reshape(n, -1, ho, wo)


# ---------------------------------------------------------------------------
# Deterministic parameter initialization
# ---------------------------------------------------------------------------
def init_params(key, in_ch=3, out_ch=3, nf=16, num_recurs=2):
    keys = iter(jax.random.split(key, 40))

    def rnd(shape, scale=0.1):
        return (scale * jax.random.normal(next(keys), shape)).astype(jnp.float32)

    rgb_mean = jnp.array([0.4488, 0.4371, 0.404], jnp.float32)
    eye3 = jnp.eye(3, dtype=jnp.float32).reshape(3, 3, 1, 1)
    alpha = jnp.full((1,), 0.25, jnp.float32)        # torch PReLU default init

    return {
        "weight_M": jnp.ones((num_recurs,), jnp.float32),
        "sub_mean_w": eye3, "sub_mean_b": -rgb_mean,
        "add_mean_w": eye3, "add_mean_b": rgb_mean,
        "conv_in_w": rnd((nf, in_ch, 3, 3)), "conv_in_b": rnd((nf,), 0.01), "conv_in_a": alpha,
        # projection units (upscale_factor=2 -> kernel 6, stride 2, pad 2)
        "up1_1_w": rnd((nf, nf, 6, 6), 0.05), "up1_1_b": rnd((nf,), 0.01), "up1_1_a": alpha,
        "up1_2_w": rnd((nf, nf, 6, 6), 0.05), "up1_2_b": rnd((nf,), 0.01), "up1_2_a": alpha,
        "down1_1_w": rnd((nf, nf, 6, 6), 0.05), "down1_1_b": rnd((nf,), 0.01), "down1_1_a": alpha,
        "down1_2_w": rnd((nf, nf, 6, 6), 0.05), "down1_2_b": rnd((nf,), 0.01), "down1_2_a": alpha,
        # PAM branch (query/key: nf//8 out channels)
        "pam_q_w": rnd((nf // 8, nf, 1, 1)), "pam_q_b": rnd((nf // 8,), 0.01),
        "pam_k_w": rnd((nf // 8, nf, 1, 1)), "pam_k_b": rnd((nf // 8,), 0.01),
        "pam_v_w": rnd((nf, nf, 1, 1)), "pam_v_b": rnd((nf,), 0.01),
        # torch inits gamma to 0 (attention is a no-op at init); use a nonzero
        # deterministic value so the attention compute path is exercised.
        "pam_gamma": jnp.full((1,), 0.1, jnp.float32),
        "pam_conv_w": rnd((nf, nf, 3, 3)), "pam_conv_b": rnd((nf,), 0.01), "pam_a": alpha,
        # CAM branch
        "cam_gamma": jnp.full((1,), 0.1, jnp.float32),
        "cam_conv_w": rnd((nf, nf, 3, 3)), "cam_conv_b": rnd((nf,), 0.01), "cam_a": alpha,
        "conv8_1_w": rnd((nf, nf, 1, 1)), "conv8_1_b": rnd((nf,), 0.01),
        "conv_fusion_w": rnd((nf, nf, 1, 1)), "conv_fusion_b": rnd((nf,), 0.01),
        "deconv_w": rnd((nf, nf, 6, 6), 0.05), "deconv_b": rnd((nf,), 0.01), "deconv_a": alpha,
        "conv_out_w": rnd((out_ch, nf, 1, 1)), "conv_out_b": rnd((out_ch,), 0.01),
    }


if __name__ == "__main__":
    num_recurs = 2
    key = jax.random.PRNGKey(0)
    pkey, xkey = jax.random.split(key)
    params = init_params(pkey, in_ch=3, out_ch=3, nf=16, num_recurs=num_recurs)
    x = jax.random.normal(xkey, (2, 3, 8, 8), jnp.float32)     # NCHW, like PyTorch

    fwd = jax.jit(functools.partial(laean_forward, num_recurs=num_recurs))
    out = jax.block_until_ready(fwd(params, x))

    assert out.shape == (2, 3, 16, 16), out.shape              # upscale_factor = 2
    assert bool(jnp.all(jnp.isfinite(out)))
    print("KERNEL_OK")
</pallas_src>

<mosaic_0001>
module attributes {stable_mosaic.version = 11 : i64} {
  func.func @_conv_mm_kernel(%arg0: i32, %arg1: i32, %arg2: memref<1x3x64xf32, #tpu.memory_space<vmem>>, %arg3: memref<3x3xf32, #tpu.memory_space<vmem>>, %arg4: memref<3x1xf32, #tpu.memory_space<vmem>>, %arg5: memref<1x3x64xf32, #tpu.memory_space<vmem>>) attributes {dimension_semantics = [#tpu.dimension_semantics<parallel>, #tpu.dimension_semantics<parallel>], iteration_bounds = array<i64: 2, 1>, scalar_prefetch = 0 : i64, scratch_operands = 0 : i64, tpu.core_type = #tpu.core_type<tc>, window_params = [{transform_indices = @transform_0, window_bounds = array<i64: 1, 3, 64>}, {pipeline_mode = #tpu.pipeline_mode<synchronous>, transform_indices = @transform_1, window_bounds = array<i64: 3, 3>}, {pipeline_mode = #tpu.pipeline_mode<synchronous>, transform_indices = @transform_2, window_bounds = array<i64: 3, 1>}, {transform_indices = @transform_3, window_bounds = array<i64: 1, 3, 64>}]} {
    %c0 = arith.constant 0 : index
    %c0_0 = arith.constant 0 : index
    %0 = vector.load %arg3[%c0, %c0_0] : memref<3x3xf32, #tpu.memory_space<vmem>>, vector<3x3xf32>
    %c0_1 = arith.constant 0 : index
    %c0_2 = arith.constant 0 : index
    %c0_3 = arith.constant 0 : index
    %1 = vector.load %arg2[%c0_1, %c0_2, %c0_3] : memref<1x3x64xf32, #tpu.memory_space<vmem>>, vector<1x3x64xf32>
    %2 = vector.shape_cast %1 : vector<1x3x64xf32> to vector<3x64xf32>
    %cst = arith.constant dense<0.000000e+00> : vector<3x64xf32>
    %3 = tpu.matmul %0, %2, %cst {dimension_numbers = #tpu.dot_dimension_numbers<[1], [0], [0], [1], [0, 0, 1, 1], [], []>} : vector<3x3xf32>, vector<3x64xf32>, vector<3x64xf32> -> vector<3x64xf32>
    %c0_4 = arith.constant 0 : index
    %c0_5 = arith.constant 0 : index
    %4 = vector.load %arg4[%c0_4, %c0_5] : memref<3x1xf32, #tpu.memory_space<vmem>>, vector<3x1xf32>
    %5 = vector.broadcast %4 : vector<3x1xf32> to vector<3x64xf32>
    %6 = arith.addf %3, %5 : vector<3x64xf32>
    %c0_6 = arith.constant 0 : index
    %c0_7 = arith.constant 0 : index
    %c0_8 = arith.constant 0 : index
    %7 = vector.load %arg5[%c0_6, %c0_7, %c0_8] : memref<1x3x64xf32, #tpu.memory_space<vmem>>, vector<1x3x64xf32>
    %8 = vector.shape_cast %7 : vector<1x3x64xf32> to vector<3x64xf32>
    %9 = vector.shape_cast %6 : vector<3x64xf32> to vector<1x3x64xf32>
    tpu.vector_store %arg5[%c0_6, %c0_7, %c0_8], %9 {strides = array<i32>} : memref<1x3x64xf32, #tpu.memory_space<vmem>>, vector<1x3x64xf32>,
    return
  }
  func.func @transform_0(%arg0: i32, %arg1: i32) -> (i32, i32, i32) {
    %c0_i32 = arith.constant 0 : i32
    %c0_i32_0 = arith.constant 0 : i32
    return %arg0, %c0_i32, %arg1 : i32, i32, i32
  }
  func.func @transform_1(%arg0: i32, %arg1: i32) -> (i32, i32) {
    %c0_i32 = arith.constant 0 : i32
    %c0_i32_0 = arith.constant 0 : i32
    %c0_i32_1 = arith.constant 0 : i32
    return %c0_i32, %c0_i32_0 : i32, i32
  }
  func.func @transform_2(%arg0: i32, %arg1: i32) -> (i32, i32) {
    %c0_i32 = arith.constant 0 : i32
    %c0_i32_0 = arith.constant 0 : i32
    %c0_i32_1 = arith.constant 0 : i32
    return %c0_i32, %c0_i32_0 : i32, i32
  }
  func.func @transform_3(%arg0: i32, %arg1: i32) -> (i32, i32, i32) {
    %c0_i32 = arith.constant 0 : i32
    %c0_i32_0 = arith.constant 0 : i32
    return %arg0, %c0_i32, %arg1 : i32, i32, i32
  }
}

module attributes {stable_mosaic.version = 11 : i64} {
  func.func @_conv_mm_kernel(%arg0: i32, %arg1: i32, %arg2: memref<1x27x64xf32, #tpu.memory_space<vmem>>, %arg3: memref<16x27xf32, #tpu.memory_space<vmem>>, %arg4: memref<16x1xf32, #tpu.memory_space<vmem>>, %arg5: memref<1xf32, #tpu.memory_space<smem>>, %arg6: memref<1x16x64xf32, #tpu.memory_space<vmem>>) attributes {dimension_semantics = [#tpu.dimension_semantics<parallel>, #tpu.dimension_semantics<parallel>], iteration_bounds = array<i64: 2, 1>, scalar_prefetch = 0 : i64, scratch_operands = 0 : i64, tpu.core_type = #tpu.core_type<tc>, window_params = [{transform_indices = @transform_0, window_bounds = array<i64: 1, 27, 64>}, {pipeline_mode = #tpu.pipeline_mode<synchronous>, transform_indices = @transform_1, window_bounds = array<i64: 16, 27>}, {pipeline_mode = #tpu.pipeline_mode<synchronous>, transform_indices = @transform_2, window_bounds = array<i64: 16, 1>}, {transform_indices = @transform_3, window_bounds = array<i64: 1>}, {transform_indices = @transform_4, window_bounds = array<i64: 1, 16, 64>}]} {
    %c0 = arith.constant 0 : index
    %c0_0 = arith.constant 0 : index
    %0 = vector.load %arg3[%c0, %c0_0] : memref<16x27xf32, #tpu.memory_space<vmem>>, vector<16x27xf32>
    %c0_1 = arith.constant 0 : index
    %c0_2 = arith.constant 0 : index
    %c0_3 = arith.constant 0 : index
    %1 = vector.load %arg2[%c0_1, %c0_2, %c0_3] : memref<1x27x64xf32, #tpu.memory_space<vmem>>, vector<1x27x64xf32>
    %2 = vector.shape_cast %1 : vector<1x27x64xf32> to vector<27x64xf32>
    %cst = arith.constant dense<0.000000e+00> : vector<16x64xf32>
    %3 = tpu.matmul %0, %2, %cst {dimension_numbers = #tpu.dot_dimension_numbers<[1], [0], [0], [1], [0, 0, 1, 1], [], []>} : vector<16x27xf32>, vector<27x64xf32>, vector<16x64xf32> -> vector<16x64xf32>
    %c0_4 = arith.constant 0 : index
    %c0_5 = arith.constant 0 : index
    %4 = vector.load %arg4[%c0_4, %c0_5] : memref<16x1xf32, #tpu.memory_space<vmem>>, vector<16x1xf32>
    %5 = vector.broadcast %4 : vector<16x1xf32> to vector<16x64xf32>
    %6 = arith.addf %3, %5 : vector<16x64xf32>
    %c0_6 = arith.constant 0 : index
    %7 = memref.load %arg5[%c0_6] : memref<1xf32, #tpu.memory_space<smem>>
    %cst_7 = arith.constant 0.000000e+00 : f32
    %8 = vector.broadcast %cst_7 : f32 to vector<16x64xf32>
    %9 = arith.cmpf oge, %6, %8 : vector<16x64xf32>
    %10 = vector.broadcast %7 : f32 to vector<16x64xf32>
    %11 = arith.mulf %10, %6 : vector<16x64xf32>
    %12 = arith.select %9, %6, %11 : vector<16x64xi1>, vector<16x64xf32>
    %c0_8 = arith.constant 0 : index
    %c0_9 = arith.constant 0 : index
    %c0_10 = arith.constant 0 : index
    %13 = vector.load %arg6[%c0_8, %c0_9, %c0_10] : memref<1x16x64xf32, #tpu.memory_space<vmem>>, vector<1x16x64xf32>
    %14 = vector.shape_cast %13 : vector<1x16x64xf32> to vector<16x64xf32>
    %15 = vector.shape_cast %12 : vector<16x64xf32> to vector<1x16x64xf32>
    tpu.vector_store %arg6[%c0_8, %c0_9, %c0_10], %15 {strides = array<i32>} : memref<1x16x64xf32, #tpu.memory_space<vmem>>, vector<1x16x64xf32>,
    return
  }
  func.func @transform_0(%arg0: i32, %arg1: i32) -> (i32, i32, i32) {
    %c0_i32 = arith.constant 0 : i32
    %c0_i32_0 = arith.constant 0 : i32
    return %arg0, %c0_i32, %arg1 : i32, i32, i32
  }
  func.func @transform_1(%arg0: i32, %arg1: i32) -> (i32, i32) {
    %c0_i32 = arith.constant 0 : i32
    %c0_i32_0 = arith.constant 0 : i32
    %c0_i32_1 = arith.constant 0 : i32
    return %c0_i32, %c0_i32_0 : i32, i32
  }
  func.func @transform_2(%arg0: i32, %arg1: i32) -> (i32, i32) {
    %c0_i32 = arith.constant 0 : i32
    %c0_i32_0 = arith.constant 0 : i32
    %c0_i32_1 = arith.constant 0 : i32
    return %c0_i32, %c0_i32_0 : i32, i32
  }
  func.func @transform_3(%arg0: i32, %arg1: i32) -> i32 {
    %c0_i32 = arith.constant 0 : i32
    %c0_i32_0 = arith.constant 0 : i32
    return %c0_i32 : i32
  }
  func.func @transform_4(%arg0: i32, %arg1: i32) -> (i32, i32, i32) {
    %c0_i32 = arith.constant 0 : i32
    %c0_i32_0 = arith.constant 0 : i32
    return %arg0, %c0_i32, %arg1 : i32, i32, i32
  }
}

module attributes {stable_mosaic.version = 11 : i64} {
  func.func @_conv_mm_kernel(%arg0: i32, %arg1: i32, %arg2: memref<1x144x64xf32, #tpu.memory_space<vmem>>, %arg3: memref<64x144xf32, #tpu.memory_space<vmem>>, %arg4: memref<64x1xf32, #tpu.memory_space<vmem>>, %arg5: memref<1xf32, #tpu.memory_space<smem>>, %arg6: memref<1x64x64xf32, #tpu.memory_space<vmem>>) attributes {dimension_semantics = [#tpu.dimension_semantics<parallel>, #tpu.dimension_semantics<parallel>], iteration_bounds = array<i64: 2, 1>, scalar_prefetch = 0 : i64, scratch_operands = 0 : i64, tpu.core_type = #tpu.core_type<tc>, window_params = [{transform_indices = @transform_0, window_bounds = array<i64: 1, 144, 64>}, {pipeline_mode = #tpu.pipeline_mode<synchronous>, transform_indices = @transform_1, window_bounds = array<i64: 64, 144>}, {pipeline_mode = #tpu.pipeline_mode<synchronous>, transform_indices = @transform_2, window_bounds = array<i64: 64, 1>}, {transform_indices = @transform_3, window_bounds = array<i64: 1>}, {transform_indices = @transform_4, window_bounds = array<i64: 1, 64, 64>}]} {
    %c0 = arith.constant 0 : index
    %c0_0 = arith.constant 0 : index
    %0 = vector.load %arg3[%c0, %c0_0] : memref<64x144xf32, #tpu.memory_space<vmem>>, vector<64x144xf32>
    %c0_1 = arith.constant 0 : index
    %c0_2 = arith.constant 0 : index
    %c0_3 = arith.constant 0 : index
    %1 = vector.load %arg2[%c0_1, %c0_2, %c0_3] : memref<1x144x64xf32, #tpu.memory_space<vmem>>, vector<1x144x64xf32>
    %2 = vector.shape_cast %1 : vector<1x144x64xf32> to vector<144x64xf32>
    %cst = arith.constant dense<0.000000e+00> : vector<64x64xf32>
    %3 = tpu.matmul %0, %2, %cst {dimension_numbers = #tpu.dot_dimension_numbers<[1], [0], [0], [1], [0, 0, 1, 1], [], []>} : vector<64x144xf32>, vector<144x64xf32>, vector<64x64xf32> -> vector<64x64xf32>
    %c0_4 = arith.constant 0 : index
    %c0_5 = arith.constant 0 : index
    %4 = vector.load %arg4[%c0_4, %c0_5] : memref<64x1xf32, #tpu.memory_space<vmem>>, vector<64x1xf32>
    %5 = vector.broadcast %4 : vector<64x1xf32> to vector<64x64xf32>
    %6 = arith.addf %3, %5 : vector<64x64xf32>
    %c0_6 = arith.constant 0 : index
    %7 = memref.load %arg5[%c0_6] : memref<1xf32, #tpu.memory_space<smem>>
    %cst_7 = arith.constant 0.000000e+00 : f32
    %8 = vector.broadcast %cst_7 : f32 to vector<64x64xf32>
    %9 = arith.cmpf oge, %6, %8 : vector<64x64xf32>
    %10 = vector.broadcast %7 : f32 to vector<64x64xf32>
    %11 = arith.mulf %10, %6 : vector<64x64xf32>
    %12 = arith.select %9, %6, %11 : vector<64x64xi1>, vector<64x64xf32>
    %c0_8 = arith.constant 0 : index
    %c0_9 = arith.constant 0 : index
    %c0_10 = arith.constant 0 : index
    %13 = vector.load %arg6[%c0_8, %c0_9, %c0_10] : memref<1x64x64xf32, #tpu.memory_space<vmem>>, vector<1x64x64xf32>
    %14 = vector.shape_cast %13 : vector<1x64x64xf32> to vector<64x64xf32>
    %15 = vector.shape_cast %12 : vector<64x64xf32> to vector<1x64x64xf32>
    tpu.vector_store %arg6[%c0_8, %c0_9, %c0_10], %15 {strides = array<i32>} : memref<1x64x64xf32, #tpu.memory_space<vmem>>, vector<1x64x64xf32>,
    return
  }
  func.func @transform_0(%arg0: i32, %arg1: i32) -> (i32, i32, i32) {
    %c0_i32 = arith.constant 0 : i32
    %c0_i32_0 = arith.constant 0 : i32
    return %arg0, %c0_i32, %arg1 : i32, i32, i32
  }
  func.func @transform_1(%arg0: i32, %arg1: i32) -> (i32, i32) {
    %c0_i32 = arith.constant 0 : i32
    %c0_i32_0 = arith.constant 0 : i32
    %c0_i32_1 = arith.constant 0 : i32
    return %c0_i32, %c0_i32_0 : i32, i32
  }
  func.func @transform_2(%arg0: i32, %arg1: i32) -> (i32, i32) {
    %c0_i32 = arith.constant 0 : i32
    %c0_i32_0 = arith.constant 0 : i32
    %c0_i32_1 = arith.constant 0 : i32
    return %c0_i32, %c0_i32_0 : i32, i32
  }
  func.func @transform_3(%arg0: i32, %arg1: i32) -> i32 {
    %c0_i32 = arith.constant 0 : i32
    %c0_i32_0 = arith.constant 0 : i32
    return %c0_i32 : i32
  }
  func.func @transform_4(%arg0: i32, %arg1: i32) -> (i32, i32, i32) {
    %c0_i32 = arith.constant 0 : i32
    %c0_i32_0 = arith.constant 0 : i32
    return %arg0, %c0_i32, %arg1 : i32, i32, i32
  }
}

module attributes {stable_mosaic.version = 11 : i64} {
  func.func @_conv_mm_kernel(%arg0: i32, %arg1: i32, %arg2: memref<1x576x64xf32, #tpu.memory_space<vmem>>, %arg3: memref<16x576xf32, #tpu.memory_space<vmem>>, %arg4: memref<16x1xf32, #tpu.memory_space<vmem>>, %arg5: memref<1xf32, #tpu.memory_space<smem>>, %arg6: memref<1x16x64xf32, #tpu.memory_space<vmem>>) attributes {dimension_semantics = [#tpu.dimension_semantics<parallel>, #tpu.dimension_semantics<parallel>], iteration_bounds = array<i64: 2, 1>, scalar_prefetch = 0 : i64, scratch_operands = 0 : i64, tpu.core_type = #tpu.core_type<tc>, window_params = [{transform_indices = @transform_0, window_bounds = array<i64: 1, 576, 64>}, {pipeline_mode = #tpu.pipeline_mode<synchronous>, transform_indices = @transform_1, window_bounds = array<i64: 16, 576>}, {pipeline_mode = #tpu.pipeline_mode<synchronous>, transform_indices = @transform_2, window_bounds = array<i64: 16, 1>}, {transform_indices = @transform_3, window_bounds = array<i64: 1>}, {transform_indices = @transform_4, window_bounds = array<i64: 1, 16, 64>}]} {
    %c0 = arith.constant 0 : index
    %c0_0 = arith.constant 0 : index
    %0 = vector.load %arg3[%c0, %c0_0] : memref<16x576xf32, #tpu.memory_space<vmem>>, vector<16x576xf32>
    %c0_1 = arith.constant 0 : index
    %c0_2 = arith.constant 0 : index
    %c0_3 = arith.constant 0 : index
    %1 = vector.load %arg2[%c0_1, %c0_2, %c0_3] : memref<1x576x64xf32, #tpu.memory_space<vmem>>, vector<1x576x64xf32>
    %2 = vector.shape_cast %1 : vector<1x576x64xf32> to vector<576x64xf32>
    %cst = arith.constant dense<0.000000e+00> : vector<16x64xf32>
    %3 = tpu.matmul %0, %2, %cst {dimension_numbers = #tpu.dot_dimension_numbers<[1], [0], [0], [1], [0, 0, 1, 1], [], []>} : vector<16x576xf32>, vector<576x64xf32>, vector<16x64xf32> -> vector<16x64xf32>
    %c0_4 = arith.constant 0 : index
    %c0_5 = arith.constant 0 : index
    %4 = vector.load %arg4[%c0_4, %c0_5] : memref<16x1xf32, #tpu.memory_space<vmem>>, vector<16x1xf32>
    %5 = vector.broadcast %4 : vector<16x1xf32> to vector<16x64xf32>
    %6 = arith.addf %3, %5 : vector<16x64xf32>
    %c0_6 = arith.constant 0 : index
    %7 = memref.load %arg5[%c0_6] : memref<1xf32, #tpu.memory_space<smem>>
    %cst_7 = arith.constant 0.000000e+00 : f32
    %8 = vector.broadcast %cst_7 : f32 to vector<16x64xf32>
    %9 = arith.cmpf oge, %6, %8 : vector<16x64xf32>
    %10 = vector.broadcast %7 : f32 to vector<16x64xf32>
    %11 = arith.mulf %10, %6 : vector<16x64xf32>
    %12 = arith.select %9, %6, %11 : vector<16x64xi1>, vector<16x64xf32>
    %c0_8 = arith.constant 0 : index
    %c0_9 = arith.constant 0 : index
    %c0_10 = arith.constant 0 : index
    %13 = vector.load %arg6[%c0_8, %c0_9, %c0_10] : memref<1x16x64xf32, #tpu.memory_space<vmem>>, vector<1x16x64xf32>
    %14 = vector.shape_cast %13 : vector<1x16x64xf32> to vector<16x64xf32>
    %15 = vector.shape_cast %12 : vector<16x64xf32> to vector<1x16x64xf32>
    tpu.vector_store %arg6[%c0_8, %c0_9, %c0_10], %15 {strides = array<i32>} : memref<1x16x64xf32, #tpu.memory_space<vmem>>, vector<1x16x64xf32>,
    return
  }
  func.func @transform_0(%arg0: i32, %arg1: i32) -> (i32, i32, i32) {
    %c0_i32 = arith.constant 0 : i32
    %c0_i32_0 = arith.constant 0 : i32
    return %arg0, %c0_i32, %arg1 : i32, i32, i32
  }
  func.func @transform_1(%arg0: i32, %arg1: i32) -> (i32, i32) {
    %c0_i32 = arith.constant 0 : i32
    %c0_i32_0 = arith.constant 0 : i32
    %c0_i32_1 = arith.constant 0 : i32
    return %c0_i32, %c0_i32_0 : i32, i32
  }
  func.func @transform_2(%arg0: i32, %arg1: i32) -> (i32, i32) {
    %c0_i32 = arith.constant 0 : i32
    %c0_i32_0 = arith.constant 0 : i32
    %c0_i32_1 = arith.constant 0 : i32
    return %c0_i32, %c0_i32_0 : i32, i32
  }
  func.func @transform_3(%arg0: i32, %arg1: i32) -> i32 {
    %c0_i32 = arith.constant 0 : i32
    %c0_i32_0 = arith.constant 0 : i32
    return %c0_i32 : i32
  }
  func.func @transform_4(%arg0: i32, %arg1: i32) -> (i32, i32, i32) {
    %c0_i32 = arith.constant 0 : i32
    %c0_i32_0 = arith.constant 0 : i32
    return %arg0, %c0_i32, %arg1 : i32, i32, i32
  }
}

module attributes {stable_mosaic.version = 11 : i64} {
  func.func @_absdiff_kernel(%arg0: i32, %arg1: memref<16x512xf32, #tpu.memory_space<vmem>>, %arg2: memref<16x512xf32, #tpu.memory_space<vmem>>, %arg3: memref<16x512xf32, #tpu.memory_space<vmem>>) attributes {dimension_semantics = [#tpu.dimension_semantics<parallel>], iteration_bounds = array<i64: 1>, scalar_prefetch = 0 : i64, scratch_operands = 0 : i64, tpu.core_type = #tpu.core_type<tc>, window_params = [{transform_indices = @transform_0, window_bounds = array<i64: 16, 512>}, {transform_indices = @transform_1, window_bounds = array<i64: 16, 512>}, {transform_indices = @transform_2, window_bounds = array<i64: 16, 512>}]} {
    %c0 = arith.constant 0 : index
    %c0_0 = arith.constant 0 : index
    %0 = vector.load %arg1[%c0, %c0_0] : memref<16x512xf32, #tpu.memory_space<vmem>>, vector<16x512xf32>
    %c0_1 = arith.constant 0 : index
    %c0_2 = arith.constant 0 : index
    %1 = vector.load %arg2[%c0_1, %c0_2] : memref<16x512xf32, #tpu.memory_space<vmem>>, vector<16x512xf32>
    %2 = arith.subf %0, %1 : vector<16x512xf32>
    %3 = math.absf %2 : vector<16x512xf32>
    %c0_3 = arith.constant 0 : index
    %c0_4 = arith.constant 0 : index
    %4 = vector.load %arg3[%c0_3, %c0_4] : memref<16x512xf32, #tpu.memory_space<vmem>>, vector<16x512xf32>
    tpu.vector_store %arg3[%c0_3, %c0_4], %3 {strides = array<i32>} : memref<16x512xf32, #tpu.memory_space<vmem>>, vector<16x512xf32>,
    return
  }
  func.func @transform_0(%arg0: i32) -> (i32, i32) {
    %c0_i32 = arith.constant 0 : i32
    %c0_i32_0 = arith.constant 0 : i32
    return %arg0, %c0_i32 : i32, i32
  }
  func.func @transform_1(%arg0: i32) -> (i32, i32) {
    %c0_i32 = arith.constant 0 : i32
    %c0_i32_0 = arith.constant 0 : i32
    return %arg0, %c0_i32 : i32, i32
  }
  func.func @transform_2(%arg0: i32) -> (i32, i32) {
    %c0_i32 = arith.constant 0 : i32
    %c0_i32_0 = arith.constant 0 : i32
    return %arg0, %c0_i32 : i32, i32
  }
}

module attributes {stable_mosaic.version = 11 : i64} {
  func.func @_conv_mm_kernel(%arg0: i32, %arg1: i32, %arg2: memref<1x576x64xf32, #tpu.memory_space<vmem>>, %arg3: memref<16x576xf32, #tpu.memory_space<vmem>>, %arg4: memref<16x1xf32, #tpu.memory_space<vmem>>, %arg5: memref<1xf32, #tpu.memory_space<smem>>, %arg6: memref<1x16x64xf32, #tpu.memory_space<vmem>>, %arg7: memref<1x16x64xf32, #tpu.memory_space<vmem>>) attributes {dimension_semantics = [#tpu.dimension_semantics<parallel>, #tpu.dimension_semantics<parallel>], iteration_bounds = array<i64: 2, 1>, scalar_prefetch = 0 : i64, scratch_operands = 0 : i64, tpu.core_type = #tpu.core_type<tc>, window_params = [{transform_indices = @transform_0, window_bounds = array<i64: 1, 576, 64>}, {pipeline_mode = #tpu.pipeline_mode<synchronous>, transform_indices = @transform_1, window_bounds = array<i64: 16, 576>}, {pipeline_mode = #tpu.pipeline_mode<synchronous>, transform_indices = @transform_2, window_bounds = array<i64: 16, 1>}, {transform_indices = @transform_3, window_bounds = array<i64: 1>}, {transform_indices = @transform_4, window_bounds = array<i64: 1, 16, 64>}, {transform_indices = @transform_5, window_bounds = array<i64: 1, 16, 64>}]} {
    %c0 = arith.constant 0 : index
    %c0_0 = arith.constant 0 : index
    %0 = vector.load %arg3[%c0, %c0_0] : memref<16x576xf32, #tpu.memory_space<vmem>>, vector<16x576xf32>
    %c0_1 = arith.constant 0 : index
    %c0_2 = arith.constant 0 : index
    %c0_3 = arith.constant 0 : index
    %1 = vector.load %arg2[%c0_1, %c0_2, %c0_3] : memref<1x576x64xf32, #tpu.memory_space<vmem>>, vector<1x576x64xf32>
    %2 = vector.shape_cast %1 : vector<1x576x64xf32> to vector<576x64xf32>
    %cst = arith.constant dense<0.000000e+00> : vector<16x64xf32>
    %3 = tpu.matmul %0, %2, %cst {dimension_numbers = #tpu.dot_dimension_numbers<[1], [0], [0], [1], [0, 0, 1, 1], [], []>} : vector<16x576xf32>, vector<576x64xf32>, vector<16x64xf32> -> vector<16x64xf32>
    %c0_4 = arith.constant 0 : index
    %c0_5 = arith.constant 0 : index
    %4 = vector.load %arg4[%c0_4, %c0_5] : memref<16x1xf32, #tpu.memory_space<vmem>>, vector<16x1xf32>
    %5 = vector.broadcast %4 : vector<16x1xf32> to vector<16x64xf32>
    %6 = arith.addf %3, %5 : vector<16x64xf32>
    %c0_6 = arith.constant 0 : index
    %7 = memref.load %arg5[%c0_6] : memref<1xf32, #tpu.memory_space<smem>>
    %cst_7 = arith.constant 0.000000e+00 : f32
    %8 = vector.broadcast %cst_7 : f32 to vector<16x64xf32>
    %9 = arith.cmpf oge, %6, %8 : vector<16x64xf32>
    %10 = vector.broadcast %7 : f32 to vector<16x64xf32>
    %11 = arith.mulf %10, %6 : vector<16x64xf32>
    %12 = arith.select %9, %6, %11 : vector<16x64xi1>, vector<16x64xf32>
    %c0_8 = arith.constant 0 : index
    %c0_9 = arith.constant 0 : index
    %c0_10 = arith.constant 0 : index
    %13 = vector.load %arg6[%c0_8, %c0_9, %c0_10] : memref<1x16x64xf32, #tpu.memory_space<vmem>>, vector<1x16x64xf32>
    %14 = vector.shape_cast %13 : vector<1x16x64xf32> to vector<16x64xf32>
    %15 = arith.addf %12, %14 : vector<16x64xf32>
    %c0_11 = arith.constant 0 : index
    %c0_12 = arith.constant 0 : index
    %c0_13 = arith.constant 0 : index
    %16 = vector.load %arg7[%c0_11, %c0_12, %c0_13] : memref<1x16x64xf32, #tpu.memory_space<vmem>>, vector<1x16x64xf32>
    %17 = vector.shape_cast %16 : vector<1x16x64xf32> to vector<16x64xf32>
    %18 = vector.shape_cast %15 : vector<16x64xf32> to vector<1x16x64xf32>
    tpu.vector_store %arg7[%c0_11, %c0_12, %c0_13], %18 {strides = array<i32>} : memref<1x16x64xf32, #tpu.memory_space<vmem>>, vector<1x16x64xf32>,
    return
  }
  func.func @transform_0(%arg0: i32, %arg1: i32) -> (i32, i32, i32) {
    %c0_i32 = arith.constant 0 : i32
    %c0_i32_0 = arith.constant 0 : i32
    return %arg0, %c0_i32, %arg1 : i32, i32, i32
  }
  func.func @transform_1(%arg0: i32, %arg1: i32) -> (i32, i32) {
    %c0_i32 = arith.constant 0 : i32
    %c0_i32_0 = arith.constant 0 : i32
    %c0_i32_1 = arith.constant 0 : i32
    return %c0_i32, %c0_i32_0 : i32, i32
  }
  func.func @transform_2(%arg0: i32, %arg1: i32) -> (i32, i32) {
    %c0_i32 = arith.constant 0 : i32
    %c0_i32_0 = arith.constant 0 : i32
    %c0_i32_1 = arith.constant 0 : i32
    return %c0_i32, %c0_i32_0 : i32, i32
  }
  func.func @transform_3(%arg0: i32, %arg1: i32) -> i32 {
    %c0_i32 = arith.constant 0 : i32
    %c0_i32_0 = arith.constant 0 : i32
    return %c0_i32 : i32
  }
  func.func @transform_4(%arg0: i32, %arg1: i32) -> (i32, i32, i32) {
    %c0_i32 = arith.constant 0 : i32
    %c0_i32_0 = arith.constant 0 : i32
    return %arg0, %c0_i32, %arg1 : i32, i32, i32
  }
  func.func @transform_5(%arg0: i32, %arg1: i32) -> (i32, i32, i32) {
    %c0_i32 = arith.constant 0 : i32
    %c0_i32_0 = arith.constant 0 : i32
    return %arg0, %c0_i32, %arg1 : i32, i32, i32
  }
}

module attributes {stable_mosaic.version = 11 : i64} {
  func.func @_pam_kernel(%arg0: i32, %arg1: i32, %arg2: memref<1x16x64xf32, #tpu.memory_space<vmem>>, %arg3: memref<1x16x64xf32, #tpu.memory_space<vmem>>, %arg4: memref<2x16xf32, #tpu.memory_space<vmem>>, %arg5: memref<2x1xf32, #tpu.memory_space<vmem>>, %arg6: memref<2x16xf32, #tpu.memory_space<vmem>>, %arg7: memref<2x1xf32, #tpu.memory_space<vmem>>, %arg8: memref<16x16xf32, #tpu.memory_space<vmem>>, %arg9: memref<16x1xf32, #tpu.memory_space<vmem>>, %arg10: memref<1xf32, #tpu.memory_space<smem>>, %arg11: memref<1x16x64xf32, #tpu.memory_space<vmem>>) attributes {dimension_semantics = [#tpu.dimension_semantics<parallel>, #tpu.dimension_semantics<parallel>], iteration_bounds = array<i64: 2, 1>, scalar_prefetch = 0 : i64, scratch_operands = 0 : i64, tpu.core_type = #tpu.core_type<tc>, window_params = [{transform_indices = @transform_0, window_bounds = array<i64: 1, 16, 64>}, {transform_indices = @transform_1, window_bounds = array<i64: 1, 16, 64>}, {pipeline_mode = #tpu.pipeline_mode<synchronous>, transform_indices = @transform_2, window_bounds = array<i64: 2, 16>}, {pipeline_mode = #tpu.pipeline_mode<synchronous>, transform_indices = @transform_3, window_bounds = array<i64: 2, 1>}, {pipeline_mode = #tpu.pipeline_mode<synchronous>, transform_indices = @transform_4, window_bounds = array<i64: 2, 16>}, {pipeline_mode = #tpu.pipeline_mode<synchronous>, transform_indices = @transform_5, window_bounds = array<i64: 2, 1>}, {pipeline_mode = #tpu.pipeline_mode<synchronous>, transform_indices = @transform_6, window_bounds = array<i64: 16, 16>}, {pipeline_mode = #tpu.pipeline_mode<synchronous>, transform_indices = @transform_7, window_bounds = array<i64: 16, 1>}, {transform_indices = @transform_8, window_bounds = array<i64: 1>}, {transform_indices = @transform_9, window_bounds = array<i64: 1, 16, 64>}]} {
    %c0 = arith.constant 0 : index
    %c0_0 = arith.constant 0 : index
    %c0_1 = arith.constant 0 : index
    %0 = vector.load %arg2[%c0, %c0_0, %c0_1] : memref<1x16x64xf32, #tpu.memory_space<vmem>>, vector<1x16x64xf32>
    %1 = vector.shape_cast %0 : vector<1x16x64xf32> to vector<16x64xf32>
    %c0_2 = arith.constant 0 : index
    %c0_3 = arith.constant 0 : index
    %c0_4 = arith.constant 0 : index
    %2 = vector.load %arg3[%c0_2, %c0_3, %c0_4] : memref<1x16x64xf32, #tpu.memory_space<vmem>>, vector<1x16x64xf32>
    %3 = vector.shape_cast %2 : vector<1x16x64xf32> to vector<16x64xf32>
    %c0_5 = arith.constant 0 : index
    %c0_6 = arith.constant 0 : index
    %4 = vector.load %arg4[%c0_5, %c0_6] : memref<2x16xf32, #tpu.memory_space<vmem>>, vector<2x16xf32>
    %cst = arith.constant dense<0.000000e+00> : vector<2x64xf32>
    %5 = tpu.matmul %4, %3, %cst {dimension_numbers = #tpu.dot_dimension_numbers<[1], [0], [0], [1], [0, 0, 1, 1], [], []>} : vector<2x16xf32>, vector<16x64xf32>, vector<2x64xf32> -> vector<2x64xf32>
    %c0_7 = arith.constant 0 : index
    %c0_8 = arith.constant 0 : index
    %6 = vector.load %arg5[%c0_7, %c0_8] : memref<2x1xf32, #tpu.memory_space<vmem>>, vector<2x1xf32>
    %7 = vector.broadcast %6 : vector<2x1xf32> to vector<2x64xf32>
    %8 = arith.addf %5, %7 : vector<2x64xf32>
    %c0_9 = arith.constant 0 : index
    %c0_10 = arith.constant 0 : index
    %9 = vector.load %arg6[%c0_9, %c0_10] : memref<2x16xf32, #tpu.memory_space<vmem>>, vector<2x16xf32>
    %cst_11 = arith.constant dense<0.000000e+00> : vector<2x64xf32>
    %10 = tpu.matmul %9, %1, %cst_11 {dimension_numbers = #tpu.dot_dimension_numbers<[1], [0], [0], [1], [0, 0, 1, 1], [], []>} : vector<2x16xf32>, vector<16x64xf32>, vector<2x64xf32> -> vector<2x64xf32>
    %c0_12 = arith.constant 0 : index
    %c0_13 = arith.constant 0 : index
    %11 = vector.load %arg7[%c0_12, %c0_13] : memref<2x1xf32, #tpu.memory_space<vmem>>, vector<2x1xf32>
    %12 = vector.broadcast %11 : vector<2x1xf32> to vector<2x64xf32>
    %13 = arith.addf %10, %12 : vector<2x64xf32>
    %c0_14 = arith.constant 0 : index
    %c0_15 = arith.constant 0 : index
    %14 = vector.load %arg8[%c0_14, %c0_15] : memref<16x16xf32, #tpu.memory_space<vmem>>, vector<16x16xf32>
    %cst_16 = arith.constant dense<0.000000e+00> : vector<16x64xf32>
    %15 = tpu.matmul %14, %1, %cst_16 {dimension_numbers = #tpu.dot_dimension_numbers<[1], [0], [0], [1], [0, 0, 1, 1], [], []>} : vector<16x16xf32>, vector<16x64xf32>, vector<16x64xf32> -> vector<16x64xf32>
    %c0_17 = arith.constant 0 : index
    %c0_18 = arith.constant 0 : index
    %16 = vector.load %arg9[%c0_17, %c0_18] : memref<16x1xf32, #tpu.memory_space<vmem>>, vector<16x1xf32>
    %17 = vector.broadcast %16 : vector<16x1xf32> to vector<16x64xf32>
    %18 = arith.addf %15, %17 : vector<16x64xf32>
    %cst_19 = arith.constant dense<0.000000e+00> : vector<64x64xf32>
    %19 = tpu.matmul %8, %13, %cst_19 {dimension_numbers = #tpu.dot_dimension_numbers<[0], [0], [1], [1], [0, 1, 1, 1], [], []>} : vector<2x64xf32>, vector<2x64xf32>, vector<64x64xf32> -> vector<64x64xf32>
    %cst_20 = arith.constant dense<0xFF800000> : vector<64xf32>
    %20 = vector.multi_reduction <maximumf>, %19, %cst_20 [1] : vector<64x64xf32> to vector<64xf32>
    %21 = vector.shape_cast %20 : vector<64xf32> to vector<64x1xf32>
    %22 = vector.broadcast %21 : vector<64x1xf32> to vector<64x64xf32>
    %23 = arith.subf %19, %22 : vector<64x64xf32>
    %24 = math.exp %23 : vector<64x64xf32>
    %cst_21 = arith.constant dense<0.000000e+00> : vector<64xf32>
    %25 = vector.multi_reduction <add>, %24, %cst_21 [1] : vector<64x64xf32> to vector<64xf32>
    %26 = vector.shape_cast %25 : vector<64xf32> to vector<64x1xf32>
    %27 = vector.broadcast %26 : vector<64x1xf32> to vector<64x64xf32>
    %28 = arith.divf %24, %27 : vector<64x64xf32>
    %cst_22 = arith.constant dense<0.000000e+00> : vector<16x64xf32>
    %29 = tpu.matmul %18, %28, %cst_22 {dimension_numbers = #tpu.dot_dimension_numbers<[1], [1], [0], [0], [0, 0, 1, 0], [], []>} : vector<16x64xf32>, vector<64x64xf32>, vector<16x64xf32> -> vector<16x64xf32>
    %c0_23 = arith.constant 0 : index
    %30 = memref.load %arg10[%c0_23] : memref<1xf32, #tpu.memory_space<smem>>
    %31 = vector.broadcast %30 : f32 to vector<16x64xf32>
    %32 = arith.mulf %31, %29 : vector<16x64xf32>
    %33 = arith.addf %32, %3 : vector<16x64xf32>
    %c0_24 = arith.constant 0 : index
    %c0_25 = arith.constant 0 : index
    %c0_26 = arith.constant 0 : index
    %34 = vector.load %arg11[%c0_24, %c0_25, %c0_26] : memref<1x16x64xf32, #tpu.memory_space<vmem>>, vector<1x16x64xf32>
    %35 = vector.shape_cast %34 : vector<1x16x64xf32> to vector<16x64xf32>
    %36 = vector.shape_cast %33 : vector<16x64xf32> to vector<1x16x64xf32>
    tpu.vector_store %arg11[%c0_24, %c0_25, %c0_26], %36 {strides = array<i32>} : memref<1x16x64xf32, #tpu.memory_space<vmem>>, vector<1x16x64xf32>,
    return
  }
  func.func @transform_0(%arg0: i32, %arg1: i32) -> (i32, i32, i32) {
    %c0_i32 = arith.constant 0 : i32
    %c0_i32_0 = arith.constant 0 : i32
    %c0_i32_1 = arith.constant 0 : i32
    return %arg0, %c0_i32, %c0_i32_0 : i32, i32, i32
  }
  func.func @transform_1(%arg0: i32, %arg1: i32) -> (i32, i32, i32) {
    %c0_i32 = arith.constant 0 : i32
    %c0_i32_0 = arith.constant 0 : i32
    return %arg0, %c0_i32, %arg1 : i32, i32, i32
  }
  func.func @transform_2(%arg0: i32, %arg1: i32) -> (i32, i32) {
    %c0_i32 = arith.constant 0 : i32
    %c0_i32_0 = arith.constant 0 : i32
    %c0_i32_1 = arith.constant 0 : i32
    return %c0_i32, %c0_i32_0 : i32, i32
  }
  func.func @transform_3(%arg0: i32, %arg1: i32) -> (i32, i32) {
    %c0_i32 = arith.constant 0 : i32
    %c0_i32_0 = arith.constant 0 : i32
    %c0_i32_1 = arith.constant 0 : i32
    return %c0_i32, %c0_i32_0 : i32, i32
  }
  func.func @transform_4(%arg0: i32, %arg1: i32) -> (i32, i32) {
    %c0_i32 = arith.constant 0 : i32
    %c0_i32_0 = arith.constant 0 : i32
    %c0_i32_1 = arith.constant 0 : i32
    return %c0_i32, %c0_i32_0 : i32, i32
  }
  func.func @transform_5(%arg0: i32, %arg1: i32) -> (i32, i32) {
    %c0_i32 = arith.constant 0 : i32
    %c0_i32_0 = arith.constant 0 : i32
    %c0_i32_1 = arith.constant 0 : i32
    return %c0_i32, %c0_i32_0 : i32, i32
  }
  func.func @transform_6(%arg0: i32, %arg1: i32) -> (i32, i32) {
    %c0_i32 = arith.constant 0 : i32
    %c0_i32_0 = arith.constant 0 : i32
    %c0_i32_1 = arith.constant 0 : i32
    return %c0_i32, %c0_i32_0 : i32, i32
  }
  func.func @transform_7(%arg0: i32, %arg1: i32) -> (i32, i32) {
    %c0_i32 = arith.constant 0 : i32
    %c0_i32_0 = arith.constant 0 : i32
    %c0_i32_1 = arith.constant 0 : i32
    return %c0_i32, %c0_i32_0 : i32, i32
  }
  func.func @transform_8(%arg0: i32, %arg1: i32) -> i32 {
    %c0_i32 = arith.constant 0 : i32
    %c0_i32_0 = arith.constant 0 : i32
    return %c0_i32 : i32
  }
  func.func @transform_9(%arg0: i32, %arg1: i32) -> (i32, i32, i32) {
    %c0_i32 = arith.constant 0 : i32
    %c0_i32_0 = arith.constant 0 : i32
    return %arg0, %c0_i32, %arg1 : i32, i32, i32
  }
}

module attributes {stable_mosaic.version = 11 : i64} {
  func.func @_conv_mm_kernel(%arg0: i32, %arg1: i32, %arg2: memref<1x144x64xf32, #tpu.memory_space<vmem>>, %arg3: memref<16x144xf32, #tpu.memory_space<vmem>>, %arg4: memref<16x1xf32, #tpu.memory_space<vmem>>, %arg5: memref<1xf32, #tpu.memory_space<smem>>, %arg6: memref<1x16x64xf32, #tpu.memory_space<vmem>>) attributes {dimension_semantics = [#tpu.dimension_semantics<parallel>, #tpu.dimension_semantics<parallel>], iteration_bounds = array<i64: 2, 1>, scalar_prefetch = 0 : i64, scratch_operands = 0 : i64, tpu.core_type = #tpu.core_type<tc>, window_params = [{transform_indices = @transform_0, window_bounds = array<i64: 1, 144, 64>}, {pipeline_mode = #tpu.pipeline_mode<synchronous>, transform_indices = @transform_1, window_bounds = array<i64: 16, 144>}, {pipeline_mode = #tpu.pipeline_mode<synchronous>, transform_indices = @transform_2, window_bounds = array<i64: 16, 1>}, {transform_indices = @transform_3, window_bounds = array<i64: 1>}, {transform_indices = @transform_4, window_bounds = array<i64: 1, 16, 64>}]} {
    %c0 = arith.constant 0 : index
    %c0_0 = arith.constant 0 : index
    %0 = vector.load %arg3[%c0, %c0_0] : memref<16x144xf32, #tpu.memory_space<vmem>>, vector<16x144xf32>
    %c0_1 = arith.constant 0 : index
    %c0_2 = arith.constant 0 : index
    %c0_3 = arith.constant 0 : index
    %1 = vector.load %arg2[%c0_1, %c0_2, %c0_3] : memref<1x144x64xf32, #tpu.memory_space<vmem>>, vector<1x144x64xf32>
    %2 = vector.shape_cast %1 : vector<1x144x64xf32> to vector<144x64xf32>
    %cst = arith.constant dense<0.000000e+00> : vector<16x64xf32>
    %3 = tpu.matmul %0, %2, %cst {dimension_numbers = #tpu.dot_dimension_numbers<[1], [0], [0], [1], [0, 0, 1, 1], [], []>} : vector<16x144xf32>, vector<144x64xf32>, vector<16x64xf32> -> vector<16x64xf32>
    %c0_4 = arith.constant 0 : index
    %c0_5 = arith.constant 0 : index
    %4 = vector.load %arg4[%c0_4, %c0_5] : memref<16x1xf32, #tpu.memory_space<vmem>>, vector<16x1xf32>
    %5 = vector.broadcast %4 : vector<16x1xf32> to vector<16x64xf32>
    %6 = arith.addf %3, %5 : vector<16x64xf32>
    %c0_6 = arith.constant 0 : index
    %7 = memref.load %arg5[%c0_6] : memref<1xf32, #tpu.memory_space<smem>>
    %cst_7 = arith.constant 0.000000e+00 : f32
    %8 = vector.broadcast %cst_7 : f32 to vector<16x64xf32>
    %9 = arith.cmpf oge, %6, %8 : vector<16x64xf32>
    %10 = vector.broadcast %7 : f32 to vector<16x64xf32>
    %11 = arith.mulf %10, %6 : vector<16x64xf32>
    %12 = arith.select %9, %6, %11 : vector<16x64xi1>, vector<16x64xf32>
    %c0_8 = arith.constant 0 : index
    %c0_9 = arith.constant 0 : index
    %c0_10 = arith.constant 0 : index
    %13 = vector.load %arg6[%c0_8, %c0_9, %c0_10] : memref<1x16x64xf32, #tpu.memory_space<vmem>>, vector<1x16x64xf32>
    %14 = vector.shape_cast %13 : vector<1x16x64xf32> to vector<16x64xf32>
    %15 = vector.shape_cast %12 : vector<16x64xf32> to vector<1x16x64xf32>
    tpu.vector_store %arg6[%c0_8, %c0_9, %c0_10], %15 {strides = array<i32>} : memref<1x16x64xf32, #tpu.memory_space<vmem>>, vector<1x16x64xf32>,
    return
  }
  func.func @transform_0(%arg0: i32, %arg1: i32) -> (i32, i32, i32) {
    %c0_i32 = arith.constant 0 : i32
    %c0_i32_0 = arith.constant 0 : i32
    return %arg0, %c0_i32, %arg1 : i32, i32, i32
  }
  func.func @transform_1(%arg0: i32, %arg1: i32) -> (i32, i32) {
    %c0_i32 = arith.constant 0 : i32
    %c0_i32_0 = arith.constant 0 : i32
    %c0_i32_1 = arith.constant 0 : i32
    return %c0_i32, %c0_i32_0 : i32, i32
  }
  func.func @transform_2(%arg0: i32, %arg1: i32) -> (i32, i32) {
    %c0_i32 = arith.constant 0 : i32
    %c0_i32_0 = arith.constant 0 : i32
    %c0_i32_1 = arith.constant 0 : i32
    return %c0_i32, %c0_i32_0 : i32, i32
  }
  func.func @transform_3(%arg0: i32, %arg1: i32) -> i32 {
    %c0_i32 = arith.constant 0 : i32
    %c0_i32_0 = arith.constant 0 : i32
    return %c0_i32 : i32
  }
  func.func @transform_4(%arg0: i32, %arg1: i32) -> (i32, i32, i32) {
    %c0_i32 = arith.constant 0 : i32
    %c0_i32_0 = arith.constant 0 : i32
    return %arg0, %c0_i32, %arg1 : i32, i32, i32
  }
}

module attributes {stable_mosaic.version = 11 : i64} {
  func.func @_cam_kernel(%arg0: i32, %arg1: memref<1x16x64xf32, #tpu.memory_space<vmem>>, %arg2: memref<1xf32, #tpu.memory_space<smem>>, %arg3: memref<1x16x64xf32, #tpu.memory_space<vmem>>) attributes {dimension_semantics = [#tpu.dimension_semantics<parallel>], iteration_bounds = array<i64: 2>, scalar_prefetch = 0 : i64, scratch_operands = 0 : i64, tpu.core_type = #tpu.core_type<tc>, window_params = [{transform_indices = @transform_0, window_bounds = array<i64: 1, 16, 64>}, {transform_indices = @transform_1, window_bounds = array<i64: 1>}, {transform_indices = @transform_2, window_bounds = array<i64: 1, 16, 64>}]} {
    %c0 = arith.constant 0 : index
    %c0_0 = arith.constant 0 : index
    %c0_1 = arith.constant 0 : index
    %0 = vector.load %arg1[%c0, %c0_0, %c0_1] : memref<1x16x64xf32, #tpu.memory_space<vmem>>, vector<1x16x64xf32>
    %1 = vector.shape_cast %0 : vector<1x16x64xf32> to vector<16x64xf32>
    %cst = arith.constant dense<0.000000e+00> : vector<16x16xf32>
    %2 = tpu.matmul %1, %1, %cst {dimension_numbers = #tpu.dot_dimension_numbers<[1], [1], [0], [0], [0, 0, 1, 0], [], []>} : vector<16x64xf32>, vector<16x64xf32>, vector<16x16xf32> -> vector<16x16xf32>
    %cst_2 = arith.constant dense<0xFF800000> : vector<16xf32>
    %3 = vector.multi_reduction <maximumf>, %2, %cst_2 [1] : vector<16x16xf32> to vector<16xf32>
    %4 = vector.shape_cast %3 : vector<16xf32> to vector<16x1xf32>
    %5 = vector.broadcast %4 : vector<16x1xf32> to vector<16x16xf32>
    %6 = arith.subf %5, %2 : vector<16x16xf32>
    %cst_3 = arith.constant dense<0xFF800000> : vector<16xf32>
    %7 = vector.multi_reduction <maximumf>, %6, %cst_3 [1] : vector<16x16xf32> to vector<16xf32>
    %8 = vector.shape_cast %7 : vector<16xf32> to vector<16x1xf32>
    %9 = vector.broadcast %8 : vector<16x1xf32> to vector<16x16xf32>
    %10 = arith.subf %6, %9 : vector<16x16xf32>
    %11 = math.exp %10 : vector<16x16xf32>
    %cst_4 = arith.constant dense<0.000000e+00> : vector<16xf32>
    %12 = vector.multi_reduction <add>, %11, %cst_4 [1] : vector<16x16xf32> to vector<16xf32>
    %13 = vector.shape_cast %12 : vector<16xf32> to vector<16x1xf32>
    %14 = vector.broadcast %13 : vector<16x1xf32> to vector<16x16xf32>
    %15 = arith.divf %11, %14 : vector<16x16xf32>
    %cst_5 = arith.constant dense<0.000000e+00> : vector<16x64xf32>
    %16 = tpu.matmul %15, %1, %cst_5 {dimension_numbers = #tpu.dot_dimension_numbers<[1], [0], [0], [1], [0, 0, 1, 1], [], []>} : vector<16x16xf32>, vector<16x64xf32>, vector<16x64xf32> -> vector<16x64xf32>
    %c0_6 = arith.constant 0 : index
    %17 = memref.load %arg2[%c0_6] : memref<1xf32, #tpu.memory_space<smem>>
    %18 = vector.broadcast %17 : f32 to vector<16x64xf32>
    %19 = arith.mulf %18, %16 : vector<16x64xf32>
    %20 = arith.addf %19, %1 : vector<16x64xf32>
    %c0_7 = arith.constant 0 : index
    %c0_8 = arith.constant 0 : index
    %c0_9 = arith.constant 0 : index
    %21 = vector.load %arg3[%c0_7, %c0_8, %c0_9] : memref<1x16x64xf32, #tpu.memory_space<vmem>>, vector<1x16x64xf32>
    %22 = vector.shape_cast %21 : vector<1x16x64xf32> to vector<16x64xf32>
    %23 = vector.shape_cast %20 : vector<16x64xf32> to vector<1x16x64xf32>
    tpu.vector_store %arg3[%c0_7, %c0_8, %c0_9], %23 {strides = array<i32>} : memref<1x16x64xf32, #tpu.memory_space<vmem>>, vector<1x16x64xf32>,
    return
  }
  func.func @transform_0(%arg0: i32) -> (i32, i32, i32) {
    %c0_i32 = arith.constant 0 : i32
    %c0_i32_0 = arith.constant 0 : i32
    %c0_i32_1 = arith.constant 0 : i32
    return %arg0, %c0_i32, %c0_i32_0 : i32, i32, i32
  }
  func.func @transform_1(%arg0: i32) -> i32 {
    %c0_i32 = arith.constant 0 : i32
    %c0_i32_0 = arith.constant 0 : i32
    return %c0_i32 : i32
  }
  func.func @transform_2(%arg0: i32) -> (i32, i32, i32) {
    %c0_i32 = arith.constant 0 : i32
    %c0_i32_0 = arith.constant 0 : i32
    %c0_i32_1 = arith.constant 0 : i32
    return %arg0, %c0_i32, %c0_i32_0 : i32, i32, i32
  }
}

module attributes {stable_mosaic.version = 11 : i64} {
  func.func @_gate_fuse_kernel(%arg0: i32, %arg1: i32, %arg2: memref<1x16x64xf32, #tpu.memory_space<vmem>>, %arg3: memref<1x16x64xf32, #tpu.memory_space<vmem>>, %arg4: memref<1x16x64xf32, #tpu.memory_space<vmem>>, %arg5: memref<1x16x64xf32, #tpu.memory_space<vmem>>, %arg6: memref<1x16x64xf32, #tpu.memory_space<vmem>>, %arg7: memref<16x16xf32, #tpu.memory_space<vmem>>, %arg8: memref<16x1xf32, #tpu.memory_space<vmem>>, %arg9: memref<1xf32, #tpu.memory_space<smem>>, %arg10: memref<1x16x64xf32, #tpu.memory_space<vmem>>, %arg11: memref<1x16x64xf32, #tpu.memory_space<vmem>>) attributes {dimension_semantics = [#tpu.dimension_semantics<parallel>, #tpu.dimension_semantics<parallel>], iteration_bounds = array<i64: 2, 1>, scalar_prefetch = 0 : i64, scratch_operands = 0 : i64, tpu.core_type = #tpu.core_type<tc>, window_params = [{transform_indices = @transform_0, window_bounds = array<i64: 1, 16, 64>}, {transform_indices = @transform_1, window_bounds = array<i64: 1, 16, 64>}, {transform_indices = @transform_2, window_bounds = array<i64: 1, 16, 64>}, {transform_indices = @transform_3, window_bounds = array<i64: 1, 16, 64>}, {transform_indices = @transform_4, window_bounds = array<i64: 1, 16, 64>}, {pipeline_mode = #tpu.pipeline_mode<synchronous>, transform_indices = @transform_5, window_bounds = array<i64: 16, 16>}, {pipeline_mode = #tpu.pipeline_mode<synchronous>, transform_indices = @transform_6, window_bounds = array<i64: 16, 1>}, {transform_indices = @transform_7, window_bounds = array<i64: 1>}, {transform_indices = @transform_8, window_bounds = array<i64: 1, 16, 64>}, {transform_indices = @transform_9, window_bounds = array<i64: 1, 16, 64>}]} {
    %c0 = arith.constant 0 : index
    %c0_0 = arith.constant 0 : index
    %c0_1 = arith.constant 0 : index
    %0 = vector.load %arg2[%c0, %c0_0, %c0_1] : memref<1x16x64xf32, #tpu.memory_space<vmem>>, vector<1x16x64xf32>
    %1 = vector.shape_cast %0 : vector<1x16x64xf32> to vector<16x64xf32>
    %c0_2 = arith.constant 0 : index
    %c0_3 = arith.constant 0 : index
    %c0_4 = arith.constant 0 : index
    %2 = vector.load %arg3[%c0_2, %c0_3, %c0_4] : memref<1x16x64xf32, #tpu.memory_space<vmem>>, vector<1x16x64xf32>
    %3 = vector.shape_cast %2 : vector<1x16x64xf32> to vector<16x64xf32>
    %4 = arith.addf %1, %3 : vector<16x64xf32>
    %c0_5 = arith.constant 0 : index
    %c0_6 = arith.constant 0 : index
    %5 = vector.load %arg7[%c0_5, %c0_6] : memref<16x16xf32, #tpu.memory_space<vmem>>, vector<16x16xf32>
    %cst = arith.constant dense<0.000000e+00> : vector<16x64xf32>
    %6 = tpu.matmul %5, %4, %cst {dimension_numbers = #tpu.dot_dimension_numbers<[1], [0], [0], [1], [0, 0, 1, 1], [], []>} : vector<16x16xf32>, vector<16x64xf32>, vector<16x64xf32> -> vector<16x64xf32>
    %c0_7 = arith.constant 0 : index
    %c0_8 = arith.constant 0 : index
    %7 = vector.load %arg8[%c0_7, %c0_8] : memref<16x1xf32, #tpu.memory_space<vmem>>, vector<16x1xf32>
    %8 = vector.broadcast %7 : vector<16x1xf32> to vector<16x64xf32>
    %9 = arith.addf %6, %8 : vector<16x64xf32>
    %cst_9 = arith.constant 0.000000e+00 : f32
    %10 = vector.broadcast %cst_9 : f32 to vector<16x64xf32>
    %11 = arith.subf %10, %9 : vector<16x64xf32>
    %12 = math.exp %11 : vector<16x64xf32>
    %cst_10 = arith.constant 1.000000e+00 : f32
    %13 = vector.broadcast %cst_10 : f32 to vector<16x64xf32>
    %14 = arith.addf %13, %12 : vector<16x64xf32>
    %cst_11 = arith.constant 1.000000e+00 : f32
    %15 = vector.broadcast %cst_11 : f32 to vector<16x64xf32>
    %16 = arith.divf %15, %14 : vector<16x64xf32>
    %c0_12 = arith.constant 0 : index
    %c0_13 = arith.constant 0 : index
    %c0_14 = arith.constant 0 : index
    %17 = vector.load %arg5[%c0_12, %c0_13, %c0_14] : memref<1x16x64xf32, #tpu.memory_space<vmem>>, vector<1x16x64xf32>
    %18 = vector.shape_cast %17 : vector<1x16x64xf32> to vector<16x64xf32>
    %19 = arith.mulf %16, %18 : vector<16x64xf32>
    %c0_15 = arith.constant 0 : index
    %c0_16 = arith.constant 0 : index
    %c0_17 = arith.constant 0 : index
    %20 = vector.load %arg4[%c0_15, %c0_16, %c0_17] : memref<1x16x64xf32, #tpu.memory_space<vmem>>, vector<1x16x64xf32>
    %21 = vector.shape_cast %20 : vector<1x16x64xf32> to vector<16x64xf32>
    %22 = arith.addf %19, %21 : vector<16x64xf32>
    %c0_18 = arith.constant 0 : index
    %c0_19 = arith.constant 0 : index
    %c0_20 = arith.constant 0 : index
    %23 = vector.load %arg10[%c0_18, %c0_19, %c0_20] : memref<1x16x64xf32, #tpu.memory_space<vmem>>, vector<1x16x64xf32>
    %24 = vector.shape_cast %23 : vector<1x16x64xf32> to vector<16x64xf32>
    %25 = vector.shape_cast %22 : vector<16x64xf32> to vector<1x16x64xf32>
    tpu.vector_store %arg10[%c0_18, %c0_19, %c0_20], %25 {strides = array<i32>} : memref<1x16x64xf32, #tpu.memory_space<vmem>>, vector<1x16x64xf32>,
    %c0_21 = arith.constant 0 : index
    %c0_22 = arith.constant 0 : index
    %c0_23 = arith.constant 0 : index
    %26 = vector.load %arg6[%c0_21, %c0_22, %c0_23] : memref<1x16x64xf32, #tpu.memory_space<vmem>>, vector<1x16x64xf32>
    %27 = vector.shape_cast %26 : vector<1x16x64xf32> to vector<16x64xf32>
    %c0_24 = arith.constant 0 : index
    %28 = memref.load %arg9[%c0_24] : memref<1xf32, #tpu.memory_space<smem>>
    %29 = vector.broadcast %28 : f32 to vector<16x64xf32>
    %30 = arith.mulf %29, %22 : vector<16x64xf32>
    %31 = arith.addf %27, %30 : vector<16x64xf32>
    %c0_25 = arith.constant 0 : index
    %c0_26 = arith.constant 0 : index
    %c0_27 = arith.constant 0 : index
    %32 = vector.load %arg11[%c0_25, %c0_26, %c0_27] : memref<1x16x64xf32, #tpu.memory_space<vmem>>, vector<1x16x64xf32>
    %33 = vector.shape_cast %32 : vector<1x16x64xf32> to vector<16x64xf32>
    %34 = vector.shape_cast %31 : vector<16x64xf32> to vector<1x16x64xf32>
    tpu.vector_store %arg11[%c0_25, %c0_26, %c0_27], %34 {strides = array<i32>} : memref<1x16x64xf32, #tpu.memory_space<vmem>>, vector<1x16x64xf32>,
    return
  }
  func.func @transform_0(%arg0: i32, %arg1: i32) -> (i32, i32, i32) {
    %c0_i32 = arith.constant 0 : i32
    %c0_i32_0 = arith.constant 0 : i32
    return %arg0, %c0_i32, %arg1 : i32, i32, i32
  }
  func.func @transform_1(%arg0: i32, %arg1: i32) -> (i32, i32, i32) {
    %c0_i32 = arith.constant 0 : i32
    %c0_i32_0 = arith.constant 0 : i32
    return %arg0, %c0_i32, %arg1 : i32, i32, i32
  }
  func.func @transform_2(%arg0: i32, %arg1: i32) -> (i32, i32, i32) {
    %c0_i32 = arith.constant 0 : i32
    %c0_i32_0 = arith.constant 0 : i32
    return %arg0, %c0_i32, %arg1 : i32, i32, i32
  }
  func.func @transform_3(%arg0: i32, %arg1: i32) -> (i32, i32, i32) {
    %c0_i32 = arith.constant 0 : i32
    %c0_i32_0 = arith.constant 0 : i32
    return %arg0, %c0_i32, %arg1 : i32, i32, i32
  }
  func.func @transform_4(%arg0: i32, %arg1: i32) -> (i32, i32, i32) {
    %c0_i32 = arith.constant 0 : i32
    %c0_i32_0 = arith.constant 0 : i32
    return %arg0, %c0_i32, %arg1 : i32, i32, i32
  }
  func.func @transform_5(%arg0: i32, %arg1: i32) -> (i32, i32) {
    %c0_i32 = arith.constant 0 : i32
    %c0_i32_0 = arith.constant 0 : i32
    %c0_i32_1 = arith.constant 0 : i32
    return %c0_i32, %c0_i32_0 : i32, i32
  }
  func.func @transform_6(%arg0: i32, %arg1: i32) -> (i32, i32) {
    %c0_i32 = arith.constant 0 : i32
    %c0_i32_0 = arith.constant 0 : i32
    %c0_i32_1 = arith.constant 0 : i32
    return %c0_i32, %c0_i32_0 : i32, i32
  }
  func.func @transform_7(%arg0: i32, %arg1: i32) -> i32 {
    %c0_i32 = arith.constant 0 : i32
    %c0_i32_0 = arith.constant 0 : i32
    return %c0_i32 : i32
  }
  func.func @transform_8(%arg0: i32, %arg1: i32) -> (i32, i32, i32) {
    %c0_i32 = arith.constant 0 : i32
    %c0_i32_0 = arith.constant 0 : i32
    return %arg0, %c0_i32, %arg1 : i32, i32, i32
  }
  func.func @transform_9(%arg0: i32, %arg1: i32) -> (i32, i32, i32) {
    %c0_i32 = arith.constant 0 : i32
    %c0_i32_0 = arith.constant 0 : i32
    return %arg0, %c0_i32, %arg1 : i32, i32, i32
  }
}

module attributes {stable_mosaic.version = 11 : i64} {
  func.func @_gate_fuse_kernel(%arg0: i32, %arg1: i32, %arg2: memref<1x16x64xf32, #tpu.memory_space<vmem>>, %arg3: memref<1x16x64xf32, #tpu.memory_space<vmem>>, %arg4: memref<1x16x64xf32, #tpu.memory_space<vmem>>, %arg5: memref<1x16x64xf32, #tpu.memory_space<vmem>>, %arg6: memref<1x16x64xf32, #tpu.memory_space<vmem>>, %arg7: memref<16x16xf32, #tpu.memory_space<vmem>>, %arg8: memref<16x1xf32, #tpu.memory_space<vmem>>, %arg9: memref<1xf32, #tpu.memory_space<smem>>, %arg10: memref<1x16x64xf32, #tpu.memory_space<vmem>>, %arg11: memref<1x16x64xf32, #tpu.memory_space<vmem>>) attributes {dimension_semantics = [#tpu.dimension_semantics<parallel>, #tpu.dimension_semantics<parallel>], iteration_bounds = array<i64: 2, 1>, scalar_prefetch = 0 : i64, scratch_operands = 0 : i64, tpu.core_type = #tpu.core_type<tc>, window_params = [{transform_indices = @transform_0, window_bounds = array<i64: 1, 16, 64>}, {transform_indices = @transform_1, window_bounds = array<i64: 1, 16, 64>}, {transform_indices = @transform_2, window_bounds = array<i64: 1, 16, 64>}, {transform_indices = @transform_3, window_bounds = array<i64: 1, 16, 64>}, {transform_indices = @transform_4, window_bounds = array<i64: 1, 16, 64>}, {pipeline_mode = #tpu.pipeline_mode<synchronous>, transform_indices = @transform_5, window_bounds = array<i64: 16, 16>}, {pipeline_mode = #tpu.pipeline_mode<synchronous>, transform_indices = @transform_6, window_bounds = array<i64: 16, 1>}, {transform_indices = @transform_7, window_bounds = array<i64: 1>}, {transform_indices = @transform_8, window_bounds = array<i64: 1, 16, 64>}, {transform_indices = @transform_9, window_bounds = array<i64: 1, 16, 64>}]} {
    %c0 = arith.constant 0 : index
    %c0_0 = arith.constant 0 : index
    %c0_1 = arith.constant 0 : index
    %0 = vector.load %arg2[%c0, %c0_0, %c0_1] : memref<1x16x64xf32, #tpu.memory_space<vmem>>, vector<1x16x64xf32>
    %1 = vector.shape_cast %0 : vector<1x16x64xf32> to vector<16x64xf32>
    %c0_2 = arith.constant 0 : index
    %c0_3 = arith.constant 0 : index
    %c0_4 = arith.constant 0 : index
    %2 = vector.load %arg3[%c0_2, %c0_3, %c0_4] : memref<1x16x64xf32, #tpu.memory_space<vmem>>, vector<1x16x64xf32>
    %3 = vector.shape_cast %2 : vector<1x16x64xf32> to vector<16x64xf32>
    %4 = arith.addf %1, %3 : vector<16x64xf32>
    %c0_5 = arith.constant 0 : index
    %c0_6 = arith.constant 0 : index
    %5 = vector.load %arg7[%c0_5, %c0_6] : memref<16x16xf32, #tpu.memory_space<vmem>>, vector<16x16xf32>
    %cst = arith.constant dense<0.000000e+00> : vector<16x64xf32>
    %6 = tpu.matmul %5, %4, %cst {dimension_numbers = #tpu.dot_dimension_numbers<[1], [0], [0], [1], [0, 0, 1, 1], [], []>} : vector<16x16xf32>, vector<16x64xf32>, vector<16x64xf32> -> vector<16x64xf32>
    %c0_7 = arith.constant 0 : index
    %c0_8 = arith.constant 0 : index
    %7 = vector.load %arg8[%c0_7, %c0_8] : memref<16x1xf32, #tpu.memory_space<vmem>>, vector<16x1xf32>
    %8 = vector.broadcast %7 : vector<16x1xf32> to vector<16x64xf32>
    %9 = arith.addf %6, %8 : vector<16x64xf32>
    %cst_9 = arith.constant 0.000000e+00 : f32
    %10 = vector.broadcast %cst_9 : f32 to vector<16x64xf32>
    %11 = arith.subf %10, %9 : vector<16x64xf32>
    %12 = math.exp %11 : vector<16x64xf32>
    %cst_10 = arith.constant 1.000000e+00 : f32
    %13 = vector.broadcast %cst_10 : f32 to vector<16x64xf32>
    %14 = arith.addf %13, %12 : vector<16x64xf32>
    %cst_11 = arith.constant 1.000000e+00 : f32
    %15 = vector.broadcast %cst_11 : f32 to vector<16x64xf32>
    %16 = arith.divf %15, %14 : vector<16x64xf32>
    %c0_12 = arith.constant 0 : index
    %c0_13 = arith.constant 0 : index
    %c0_14 = arith.constant 0 : index
    %17 = vector.load %arg5[%c0_12, %c0_13, %c0_14] : memref<1x16x64xf32, #tpu.memory_space<vmem>>, vector<1x16x64xf32>
    %18 = vector.shape_cast %17 : vector<1x16x64xf32> to vector<16x64xf32>
    %19 = arith.mulf %16, %18 : vector<16x64xf32>
    %c0_15 = arith.constant 0 : index
    %c0_16 = arith.constant 0 : index
    %c0_17 = arith.constant 0 : index
    %20 = vector.load %arg4[%c0_15, %c0_16, %c0_17] : memref<1x16x64xf32, #tpu.memory_space<vmem>>, vector<1x16x64xf32>
    %21 = vector.shape_cast %20 : vector<1x16x64xf32> to vector<16x64xf32>
    %22 = arith.addf %19, %21 : vector<16x64xf32>
    %c0_18 = arith.constant 0 : index
    %c0_19 = arith.constant 0 : index
    %c0_20 = arith.constant 0 : index
    %23 = vector.load %arg10[%c0_18, %c0_19, %c0_20] : memref<1x16x64xf32, #tpu.memory_space<vmem>>, vector<1x16x64xf32>
    %24 = vector.shape_cast %23 : vector<1x16x64xf32> to vector<16x64xf32>
    %25 = vector.shape_cast %22 : vector<16x64xf32> to vector<1x16x64xf32>
    tpu.vector_store %arg10[%c0_18, %c0_19, %c0_20], %25 {strides = array<i32>} : memref<1x16x64xf32, #tpu.memory_space<vmem>>, vector<1x16x64xf32>,
    %c0_21 = arith.constant 0 : index
    %c0_22 = arith.constant 0 : index
    %c0_23 = arith.constant 0 : index
    %26 = vector.load %arg6[%c0_21, %c0_22, %c0_23] : memref<1x16x64xf32, #tpu.memory_space<vmem>>, vector<1x16x64xf32>
    %27 = vector.shape_cast %26 : vector<1x16x64xf32> to vector<16x64xf32>
    %c0_24 = arith.constant 0 : index
    %28 = memref.load %arg9[%c0_24] : memref<1xf32, #tpu.memory_space<smem>>
    %29 = vector.broadcast %28 : f32 to vector<16x64xf32>
    %30 = arith.mulf %29, %22 : vector<16x64xf32>
    %31 = arith.addf %27, %30 : vector<16x64xf32>
    %c0_25 = arith.constant 0 : index
    %c0_26 = arith.constant 0 : index
    %c0_27 = arith.constant 0 : index
    %32 = vector.load %arg11[%c0_25, %c0_26, %c0_27] : memref<1x16x64xf32, #tpu.memory_space<vmem>>, vector<1x16x64xf32>
    %33 = vector.shape_cast %32 : vector<1x16x64xf32> to vector<16x64xf32>
    %34 = vector.shape_cast %31 : vector<16x64xf32> to vector<1x16x64xf32>
    tpu.vector_store %arg11[%c0_25, %c0_26, %c0_27], %34 {strides = array<i32>} : memref<1x16x64xf32, #tpu.memory_space<vmem>>, vector<1x16x64xf32>,
    return
  }
  func.func @transform_0(%arg0: i32, %arg1: i32) -> (i32, i32, i32) {
    %c0_i32 = arith.constant 0 : i32
    %c0_i32_0 = arith.constant 0 : i32
    return %arg0, %c0_i32, %arg1 : i32, i32, i32
  }
  func.func @transform_1(%arg0: i32, %arg1: i32) -> (i32, i32, i32) {
    %c0_i32 = arith.constant 0 : i32
    %c0_i32_0 = arith.constant 0 : i32
    return %arg0, %c0_i32, %arg1 : i32, i32, i32
  }
  func.func @transform_2(%arg0: i32, %arg1: i32) -> (i32, i32, i32) {
    %c0_i32 = arith.constant 0 : i32
    %c0_i32_0 = arith.constant 0 : i32
    return %arg0, %c0_i32, %arg1 : i32, i32, i32
  }
  func.func @transform_3(%arg0: i32, %arg1: i32) -> (i32, i32, i32) {
    %c0_i32 = arith.constant 0 : i32
    %c0_i32_0 = arith.constant 0 : i32
    return %arg0, %c0_i32, %arg1 : i32, i32, i32
  }
  func.func @transform_4(%arg0: i32, %arg1: i32) -> (i32, i32, i32) {
    %c0_i32 = arith.constant 0 : i32
    %c0_i32_0 = arith.constant 0 : i32
    return %arg0, %c0_i32, %arg1 : i32, i32, i32
  }
  func.func @transform_5(%arg0: i32, %arg1: i32) -> (i32, i32) {
    %c0_i32 = arith.constant 0 : i32
    %c0_i32_0 = arith.constant 0 : i32
    %c0_i32_1 = arith.constant 0 : i32
    return %c0_i32, %c0_i32_0 : i32, i32
  }
  func.func @transform_6(%arg0: i32, %arg1: i32) -> (i32, i32) {
    %c0_i32 = arith.constant 0 : i32
    %c0_i32_0 = arith.constant 0 : i32
    %c0_i32_1 = arith.constant 0 : i32
    return %c0_i32, %c0_i32_0 : i32, i32
  }
  func.func @transform_7(%arg0: i32, %arg1: i32) -> i32 {
    %c0_i32 = arith.constant 0 : i32
    %c0_i32_0 = arith.constant 0 : i32
    return %c0_i32 : i32
  }
  func.func @transform_8(%arg0: i32, %arg1: i32) -> (i32, i32, i32) {
    %c0_i32 = arith.constant 0 : i32
    %c0_i32_0 = arith.constant 0 : i32
    return %arg0, %c0_i32, %arg1 : i32, i32, i32
  }
  func.func @transform_9(%arg0: i32, %arg1: i32) -> (i32, i32, i32) {
    %c0_i32 = arith.constant 0 : i32
    %c0_i32_0 = arith.constant 0 : i32
    return %arg0, %c0_i32, %arg1 : i32, i32, i32
  }
}

module attributes {stable_mosaic.version = 11 : i64} {
  func.func @_conv_mm_kernel(%arg0: i32, %arg1: i32, %arg2: memref<1x16x64xf32, #tpu.memory_space<vmem>>, %arg3: memref<16x16xf32, #tpu.memory_space<vmem>>, %arg4: memref<16x1xf32, #tpu.memory_space<vmem>>, %arg5: memref<1x16x64xf32, #tpu.memory_space<vmem>>, %arg6: memref<1x16x64xf32, #tpu.memory_space<vmem>>) attributes {dimension_semantics = [#tpu.dimension_semantics<parallel>, #tpu.dimension_semantics<parallel>], iteration_bounds = array<i64: 2, 1>, scalar_prefetch = 0 : i64, scratch_operands = 0 : i64, tpu.core_type = #tpu.core_type<tc>, window_params = [{transform_indices = @transform_0, window_bounds = array<i64: 1, 16, 64>}, {pipeline_mode = #tpu.pipeline_mode<synchronous>, transform_indices = @transform_1, window_bounds = array<i64: 16, 16>}, {pipeline_mode = #tpu.pipeline_mode<synchronous>, transform_indices = @transform_2, window_bounds = array<i64: 16, 1>}, {transform_indices = @transform_3, window_bounds = array<i64: 1, 16, 64>}, {transform_indices = @transform_4, window_bounds = array<i64: 1, 16, 64>}]} {
    %c0 = arith.constant 0 : index
    %c0_0 = arith.constant 0 : index
    %0 = vector.load %arg3[%c0, %c0_0] : memref<16x16xf32, #tpu.memory_space<vmem>>, vector<16x16xf32>
    %c0_1 = arith.constant 0 : index
    %c0_2 = arith.constant 0 : index
    %c0_3 = arith.constant 0 : index
    %1 = vector.load %arg2[%c0_1, %c0_2, %c0_3] : memref<1x16x64xf32, #tpu.memory_space<vmem>>, vector<1x16x64xf32>
    %2 = vector.shape_cast %1 : vector<1x16x64xf32> to vector<16x64xf32>
    %cst = arith.constant dense<0.000000e+00> : vector<16x64xf32>
    %3 = tpu.matmul %0, %2, %cst {dimension_numbers = #tpu.dot_dimension_numbers<[1], [0], [0], [1], [0, 0, 1, 1], [], []>} : vector<16x16xf32>, vector<16x64xf32>, vector<16x64xf32> -> vector<16x64xf32>
    %c0_4 = arith.constant 0 : index
    %c0_5 = arith.constant 0 : index
    %4 = vector.load %arg4[%c0_4, %c0_5] : memref<16x1xf32, #tpu.memory_space<vmem>>, vector<16x1xf32>
    %5 = vector.broadcast %4 : vector<16x1xf32> to vector<16x64xf32>
    %6 = arith.addf %3, %5 : vector<16x64xf32>
    %c0_6 = arith.constant 0 : index
    %c0_7 = arith.constant 0 : index
    %c0_8 = arith.constant 0 : index
    %7 = vector.load %arg5[%c0_6, %c0_7, %c0_8] : memref<1x16x64xf32, #tpu.memory_space<vmem>>, vector<1x16x64xf32>
    %8 = vector.shape_cast %7 : vector<1x16x64xf32> to vector<16x64xf32>
    %9 = arith.addf %6, %8 : vector<16x64xf32>
    %c0_9 = arith.constant 0 : index
    %c0_10 = arith.constant 0 : index
    %c0_11 = arith.constant 0 : index
    %10 = vector.load %arg6[%c0_9, %c0_10, %c0_11] : memref<1x16x64xf32, #tpu.memory_space<vmem>>, vector<1x16x64xf32>
    %11 = vector.shape_cast %10 : vector<1x16x64xf32> to vector<16x64xf32>
    %12 = vector.shape_cast %9 : vector<16x64xf32> to vector<1x16x64xf32>
    tpu.vector_store %arg6[%c0_9, %c0_10, %c0_11], %12 {strides = array<i32>} : memref<1x16x64xf32, #tpu.memory_space<vmem>>, vector<1x16x64xf32>,
    return
  }
  func.func @transform_0(%arg0: i32, %arg1: i32) -> (i32, i32, i32) {
    %c0_i32 = arith.constant 0 : i32
    %c0_i32_0 = arith.constant 0 : i32
    return %arg0, %c0_i32, %arg1 : i32, i32, i32
  }
  func.func @transform_1(%arg0: i32, %arg1: i32) -> (i32, i32) {
    %c0_i32 = arith.constant 0 : i32
    %c0_i32_0 = arith.constant 0 : i32
    %c0_i32_1 = arith.constant 0 : i32
    return %c0_i32, %c0_i32_0 : i32, i32
  }
  func.func @transform_2(%arg0: i32, %arg1: i32) -> (i32, i32) {
    %c0_i32 = arith.constant 0 : i32
    %c0_i32_0 = arith.constant 0 : i32
    %c0_i32_1 = arith.constant 0 : i32
    return %c0_i32, %c0_i32_0 : i32, i32
  }
  func.func @transform_3(%arg0: i32, %arg1: i32) -> (i32, i32, i32) {
    %c0_i32 = arith.constant 0 : i32
    %c0_i32_0 = arith.constant 0 : i32
    return %arg0, %c0_i32, %arg1 : i32, i32, i32
  }
  func.func @transform_4(%arg0: i32, %arg1: i32) -> (i32, i32, i32) {
    %c0_i32 = arith.constant 0 : i32
    %c0_i32_0 = arith.constant 0 : i32
    return %arg0, %c0_i32, %arg1 : i32, i32, i32
  }
}

module attributes {stable_mosaic.version = 11 : i64} {
  func.func @_conv_mm_kernel(%arg0: i32, %arg1: i32, %arg2: memref<1x3x256xf32, #tpu.memory_space<vmem>>, %arg3: memref<3x3xf32, #tpu.memory_space<vmem>>, %arg4: memref<3x1xf32, #tpu.memory_space<vmem>>, %arg5: memref<1x3x256xf32, #tpu.memory_space<vmem>>) attributes {dimension_semantics = [#tpu.dimension_semantics<parallel>, #tpu.dimension_semantics<parallel>], iteration_bounds = array<i64: 2, 1>, scalar_prefetch = 0 : i64, scratch_operands = 0 : i64, tpu.core_type = #tpu.core_type<tc>, window_params = [{transform_indices = @transform_0, window_bounds = array<i64: 1, 3, 256>}, {pipeline_mode = #tpu.pipeline_mode<synchronous>, transform_indices = @transform_1, window_bounds = array<i64: 3, 3>}, {pipeline_mode = #tpu.pipeline_mode<synchronous>, transform_indices = @transform_2, window_bounds = array<i64: 3, 1>}, {transform_indices = @transform_3, window_bounds = array<i64: 1, 3, 256>}]} {
    %c0 = arith.constant 0 : index
    %c0_0 = arith.constant 0 : index
    %0 = vector.load %arg3[%c0, %c0_0] : memref<3x3xf32, #tpu.memory_space<vmem>>, vector<3x3xf32>
    %c0_1 = arith.constant 0 : index
    %c0_2 = arith.constant 0 : index
    %c0_3 = arith.constant 0 : index
    %1 = vector.load %arg2[%c0_1, %c0_2, %c0_3] : memref<1x3x256xf32, #tpu.memory_space<vmem>>, vector<1x3x256xf32>
    %2 = vector.shape_cast %1 : vector<1x3x256xf32> to vector<3x256xf32>
    %cst = arith.constant dense<0.000000e+00> : vector<3x256xf32>
    %3 = tpu.matmul %0, %2, %cst {dimension_numbers = #tpu.dot_dimension_numbers<[1], [0], [0], [1], [0, 0, 1, 1], [], []>} : vector<3x3xf32>, vector<3x256xf32>, vector<3x256xf32> -> vector<3x256xf32>
    %c0_4 = arith.constant 0 : index
    %c0_5 = arith.constant 0 : index
    %4 = vector.load %arg4[%c0_4, %c0_5] : memref<3x1xf32, #tpu.memory_space<vmem>>, vector<3x1xf32>
    %5 = vector.broadcast %4 : vector<3x1xf32> to vector<3x256xf32>
    %6 = arith.addf %3, %5 : vector<3x256xf32>
    %c0_6 = arith.constant 0 : index
    %c0_7 = arith.constant 0 : index
    %c0_8 = arith.constant 0 : index
    %7 = vector.load %arg5[%c0_6, %c0_7, %c0_8] : memref<1x3x256xf32, #tpu.memory_space<vmem>>, vector<1x3x256xf32>
    %8 = vector.shape_cast %7 : vector<1x3x256xf32> to vector<3x256xf32>
    %9 = vector.shape_cast %6 : vector<3x256xf32> to vector<1x3x256xf32>
    tpu.vector_store %arg5[%c0_6, %c0_7, %c0_8], %9 {strides = array<i32>} : memref<1x3x256xf32, #tpu.memory_space<vmem>>, vector<1x3x256xf32>,
    return
  }
  func.func @transform_0(%arg0: i32, %arg1: i32) -> (i32, i32, i32) {
    %c0_i32 = arith.constant 0 : i32
    %c0_i32_0 = arith.constant 0 : i32
    return %arg0, %c0_i32, %arg1 : i32, i32, i32
  }
  func.func @transform_1(%arg0: i32, %arg1: i32) -> (i32, i32) {
    %c0_i32 = arith.constant 0 : i32
    %c0_i32_0 = arith.constant 0 : i32
    %c0_i32_1 = arith.constant 0 : i32
    return %c0_i32, %c0_i32_0 : i32, i32
  }
  func.func @transform_2(%arg0: i32, %arg1: i32) -> (i32, i32) {
    %c0_i32 = arith.constant 0 : i32
    %c0_i32_0 = arith.constant 0 : i32
    %c0_i32_1 = arith.constant 0 : i32
    return %c0_i32, %c0_i32_0 : i32, i32
  }
  func.func @transform_3(%arg0: i32, %arg1: i32) -> (i32, i32, i32) {
    %c0_i32 = arith.constant 0 : i32
    %c0_i32_0 = arith.constant 0 : i32
    return %arg0, %c0_i32, %arg1 : i32, i32, i32
  }
}

module attributes {stable_mosaic.version = 11 : i64} {
  func.func @_conv_mm_kernel(%arg0: i32, %arg1: i32, %arg2: memref<1x16x256xf32, #tpu.memory_space<vmem>>, %arg3: memref<3x16xf32, #tpu.memory_space<vmem>>, %arg4: memref<3x1xf32, #tpu.memory_space<vmem>>, %arg5: memref<1x3x256xf32, #tpu.memory_space<vmem>>) attributes {dimension_semantics = [#tpu.dimension_semantics<parallel>, #tpu.dimension_semantics<parallel>], iteration_bounds = array<i64: 2, 1>, scalar_prefetch = 0 : i64, scratch_operands = 0 : i64, tpu.core_type = #tpu.core_type<tc>, window_params = [{transform_indices = @transform_0, window_bounds = array<i64: 1, 16, 256>}, {pipeline_mode = #tpu.pipeline_mode<synchronous>, transform_indices = @transform_1, window_bounds = array<i64: 3, 16>}, {pipeline_mode = #tpu.pipeline_mode<synchronous>, transform_indices = @transform_2, window_bounds = array<i64: 3, 1>}, {transform_indices = @transform_3, window_bounds = array<i64: 1, 3, 256>}]} {
    %c0 = arith.constant 0 : index
    %c0_0 = arith.constant 0 : index
    %0 = vector.load %arg3[%c0, %c0_0] : memref<3x16xf32, #tpu.memory_space<vmem>>, vector<3x16xf32>
    %c0_1 = arith.constant 0 : index
    %c0_2 = arith.constant 0 : index
    %c0_3 = arith.constant 0 : index
    %1 = vector.load %arg2[%c0_1, %c0_2, %c0_3] : memref<1x16x256xf32, #tpu.memory_space<vmem>>, vector<1x16x256xf32>
    %2 = vector.shape_cast %1 : vector<1x16x256xf32> to vector<16x256xf32>
    %cst = arith.constant dense<0.000000e+00> : vector<3x256xf32>
    %3 = tpu.matmul %0, %2, %cst {dimension_numbers = #tpu.dot_dimension_numbers<[1], [0], [0], [1], [0, 0, 1, 1], [], []>} : vector<3x16xf32>, vector<16x256xf32>, vector<3x256xf32> -> vector<3x256xf32>
    %c0_4 = arith.constant 0 : index
    %c0_5 = arith.constant 0 : index
    %4 = vector.load %arg4[%c0_4, %c0_5] : memref<3x1xf32, #tpu.memory_space<vmem>>, vector<3x1xf32>
    %5 = vector.broadcast %4 : vector<3x1xf32> to vector<3x256xf32>
    %6 = arith.addf %3, %5 : vector<3x256xf32>
    %c0_6 = arith.constant 0 : index
    %c0_7 = arith.constant 0 : index
    %c0_8 = arith.constant 0 : index
    %7 = vector.load %arg5[%c0_6, %c0_7, %c0_8] : memref<1x3x256xf32, #tpu.memory_space<vmem>>, vector<1x3x256xf32>
    %8 = vector.shape_cast %7 : vector<1x3x256xf32> to vector<3x256xf32>
    %9 = vector.shape_cast %6 : vector<3x256xf32> to vector<1x3x256xf32>
    tpu.vector_store %arg5[%c0_6, %c0_7, %c0_8], %9 {strides = array<i32>} : memref<1x3x256xf32, #tpu.memory_space<vmem>>, vector<1x3x256xf32>,
    return
  }
  func.func @transform_0(%arg0: i32, %arg1: i32) -> (i32, i32, i32) {
    %c0_i32 = arith.constant 0 : i32
    %c0_i32_0 = arith.constant 0 : i32
    return %arg0, %c0_i32, %arg1 : i32, i32, i32
  }
  func.func @transform_1(%arg0: i32, %arg1: i32) -> (i32, i32) {
    %c0_i32 = arith.constant 0 : i32
    %c0_i32_0 = arith.constant 0 : i32
    %c0_i32_1 = arith.constant 0 : i32
    return %c0_i32, %c0_i32_0 : i32, i32
  }
  func.func @transform_2(%arg0: i32, %arg1: i32) -> (i32, i32) {
    %c0_i32 = arith.constant 0 : i32
    %c0_i32_0 = arith.constant 0 : i32
    %c0_i32_1 = arith.constant 0 : i32
    return %c0_i32, %c0_i32_0 : i32, i32
  }
  func.func @transform_3(%arg0: i32, %arg1: i32) -> (i32, i32, i32) {
    %c0_i32 = arith.constant 0 : i32
    %c0_i32_0 = arith.constant 0 : i32
    return %arg0, %c0_i32, %arg1 : i32, i32, i32
  }
}

</mosaic_0001>

<llo_original>
// kernel: laean_forward.31
$region0: #{laean_forward.31}
  #allocation0 [shape = 'u32[]', space=smem, size = 0x4, offset = 0x4, fixed_abs, tag = 'smem constant byte address 0x4 - core index']
  #allocation1 [shape = 'u32[144,128]{1,0:T(1,128)}', space=vmem, size = 0x12000, scoped, tag = 'internal scratch']
  %s0 = inlined_call_operand.vmem [shape: f32[2,3,64], index: 0, kind: input, shape index: {}]
  %s1 = inlined_call_operand.vmem [shape: f32[3,3], index: 1, kind: input, shape index: {}]
  %s2 = inlined_call_operand.vmem [shape: f32[3,1], index: 2, kind: input, shape index: {}]
  %s3 = inlined_call_operand.vmem [shape: f32[2,3,64], index: 3, kind: output, shape index: {}]
  %s4 = sld [smem:[#allocation0]]
  $region45: #{laean_forward.31} parent=0
    _
  %s6 = ssub.s32 1, %s4
  %s7 = scalar_select 0, %s6, %s4
  loop: start=0, step=1, limit=4
  $region2: #{laean_forward.31} parent=0 // loop_pre_header
    _
  $region3: #{laean_forward.31} parent=0 // loop_header
    %s9 = sphi 0, %s13
    %p10 = scmp.ge.s32.totalorder %s9, 4
    %s16 = sphi 0, %s28
    %s17 = sphi 0, %s24
    %s18 = sphi 0, %s16
    %s19 = sphi 0, %s17
    %s20 = sphi 0, %s18
    %s21 = sphi 0, %s19
    %s33 = sphi 0, %s35
    %s36 = sphi 0, %s33
    %s37 = sphi 0, %s36
    %s53 = sphi 0, %s37
    %s57 = sphi 0, %s57
    %s59 = sphi 0, %s57
    %s60 = sphi 0, %s59
    %s74 = sphi 0, %s60
    %s78 = sphi 0, %s78
    %s80 = sphi 0, %s78
    %s81 = sphi 0, %s80
    %s95 = sphi 0, %s81
    %s103 = sphi 0, %s105
    %s106 = sphi 0, %s103
    %s107 = sphi 0, %s106
    %s123 = sphi 0, %s107
  $region4: #{laean_forward.31} parent=0 // loop_header_branch
    %12 = sbr.rel (%p10) target = $region8
  $region5: #{laean_forward.31} parent=0 // loop_body
    %s14 = ssub.s32 %s9, 1
    %s15 = ssub.s32 %s9, 2
    %s22 = sadd.s32 1, %s17
    %p23 = scmp.ge.s32.totalorder %s22, 1
    %s24 = scalar_select %p23, 0, %s22
    %s25 = sadd.s32 1, %s16
    %s26 = scalar_select %p23, %s25, %s16
    %p27 = scmp.ge.s32.totalorder %s26, 2
    %s28 = scalar_select %p27, 0, %s26
    %s29 = ssub.s32 %s16, %s28
    %s30 = ssub.s32 %s17, %s24
    %s31 = sor.u32 %s29, %s30
    %p32 = scmp.eq.s32.totalorder %s31, 0
    %s34 = sadd.s32 %s33, 1
    %s35 = scalar_select %p32, %s33, %s34
    %p38 = pneg %p32
    %p39 = scmp.eq.s32.totalorder %s9, 1
    %p40 = por %p38, %p39
    %p41 = scmp.ne.s32.totalorder %s33, %s36
    %p42 = scmp.eq.s32.totalorder %s9, 0
    %p43 = por %p41, %p42
    %p44 = scmp.ne.s32.totalorder %s33, %s36
    %p45 = scmp.eq.s32.totalorder %s14, 1
    %p46 = por %p44, %p45
    %p47 = scmp.ne.s32.totalorder %s36, %s37
    %p48 = scmp.eq.s32.totalorder %s14, 0
    %p49 = por %p47, %p48
    %p50 = scmp.ne.s32.totalorder %s36, %s37
    %p51 = scmp.eq.s32.totalorder %s15, 1
    %p52 = por %p50, %p51
    %p54 = scmp.ne.s32.totalorder %s37, %s53
    %p55 = scmp.eq.s32.totalorder %s15, 0
    %p56 = por %p54, %p55
    %s58 = sadd.s32 %s57, 1
    %p61 = scmp.eq.s32.totalorder %s9, 1
    %p62 = scmp.ne.s32.totalorder %s57, %s59
    %p63 = scmp.eq.s32.totalorder %s9, 0
    %p64 = por %p62, %p63
    %p65 = scmp.ne.s32.totalorder %s57, %s59
    %p66 = scmp.eq.s32.totalorder %s14, 1
    %p67 = por %p65, %p66
    %p68 = scmp.ne.s32.totalorder %s59, %s60
    %p69 = scmp.eq.s32.totalorder %s14, 0
    %p70 = por %p68, %p69
    %p71 = scmp.ne.s32.totalorder %s59, %s60
    %p72 = scmp.eq.s32.totalorder %s15, 1
    %p73 = por %p71, %p72
    %p75 = scmp.ne.s32.totalorder %s60, %s74
    %p76 = scmp.eq.s32.totalorder %s15, 0
    %p77 = por %p75, %p76
    %s79 = sadd.s32 %s78, 1
    %p82 = scmp.eq.s32.totalorder %s9, 1
    %p83 = scmp.ne.s32.totalorder %s78, %s80
    %p84 = scmp.eq.s32.totalorder %s9, 0
    %p85 = por %p83, %p84
    %p86 = scmp.ne.s32.totalorder %s78, %s80
    %p87 = scmp.eq.s32.totalorder %s14, 1
    %p88 = por %p86, %p87
    %p89 = scmp.ne.s32.totalorder %s80, %s81
    %p90 = scmp.eq.s32.totalorder %s14, 0
    %p91 = por %p89, %p90
    %p92 = scmp.ne.s32.totalorder %s80, %s81
    %p93 = scmp.eq.s32.totalorder %s15, 1
    %p94 = por %p92, %p93
    %p96 = scmp.ne.s32.totalorder %s81, %s95
    %p97 = scmp.eq.s32.totalorder %s15, 0
    %p98 = por %p96, %p97
    %s99 = ssub.s32 %s16, %s28
    %s100 = ssub.s32 %s17, %s24
    %s101 = sor.u32 %s99, %s100
    %p102 = scmp.eq.s32.totalorder %s101, 0
    %s104 = sadd.s32 %s103, 1
    %s105 = scalar_select %p102, %s103, %s104
    %p108 = pneg %p102
    %p109 = scmp.eq.s32.totalorder %s9, 1
    %p110 = por %p108, %p109
    %p111 = scmp.ne.s32.totalorder %s103, %s106
    %p112 = scmp.eq.s32.totalorder %s9, 0
    %p113 = por %p111, %p112
    %p114 = scmp.ne.s32.totalorder %s103, %s106
    %p115 = scmp.eq.s32.totalorder %s14, 1
    %p116 = por %p114, %p115
    %p117 = scmp.ne.s32.totalorder %s106, %s107
    %p118 = scmp.eq.s32.totalorder %s14, 0
    %p119 = por %p117, %p118
    %p120 = scmp.ne.s32.totalorder %s106, %s107
    %p121 = scmp.eq.s32.totalorder %s15, 1
    %p122 = por %p120, %p121
    %p124 = scmp.ne.s32.totalorder %s107, %s123
    %p125 = scmp.eq.s32.totalorder %s15, 0
    %p126 = por %p124, %p125
    %p127 = scmp.le.s32.totalorder 1, %s9
    %p128 = scmp.lt.s32.totalorder %s9, 3
    %p129 = pnand %p127, %p128
    %p130 = pneg %p129
    // Predicated region
    $region9: #{laean_forward.31} parent=5 // pred_check
      _
    $region10: #{laean_forward.31} parent=5 // pred_check_branch
      %132 = sbr.rel (%p129) target = $region12
    $region11: #{laean_forward.31} parent=5 // pred_region
      %s133 = ssub.s32 %s9, 1
      // Predicated region
      $region13: #{laean_forward.31} parent=11 // pred_check
        %p134 = pneg %p70
      $region14: #{laean_forward.31} parent=11 // pred_check_branch
        %136 = sbr.rel (%p134) target = $region16
      $region15: #{laean_forward.31} parent=11 // pred_region
        _
      $region16: #{laean_forward.31} parent=11 // pred_fallthru
        _
      // Predicated region
      $region17: #{laean_forward.31} parent=11 // pred_check
        %p137 = pneg %p91
      $region18: #{laean_forward.31} parent=11 // pred_check_branch
        %139 = sbr.rel (%p137) target = $region20
      $region19: #{laean_forward.31} parent=11 // pred_region
        _
      $region20: #{laean_forward.31} parent=11 // pred_fallthru
        _
    $region12: #{laean_forward.31} parent=5 // pred_fallthru
      _
    %p140 = scmp.lt.s32.totalorder %s9, 2
    // Predicated region
    $region21: #{laean_forward.31} parent=5 // pred_check
      %p141 = pneg %p140
    $region22: #{laean_forward.31} parent=5 // pred_check_branch
      %143 = sbr.rel (%p141) target = $region24
    $region23: #{laean_forward.31} parent=5 // pred_region
      // Predicated region
      $region25: #{laean_forward.31} parent=23 // pred_check
        %p144 = pneg %p43
      $region26: #{laean_forward.31} parent=23 // pred_check_branch
        %146 = sbr.rel (%p144) target = $region28
      $region27: #{laean_forward.31} parent=23 // pred_region
        %p147 = scmp.lt.s32.totalorder %s16, 1
        %s148 = scalar_select %p147, %s16, 1
        %p149 = scmp.lt.s32.totalorder %s17, 0
        %s150 = scalar_select %p149, %s17, 0
        %s151 = sadd.s32 %s150, %s148
        %s152 = smul.addr %s151, 4
        %s153 = scalar_lea.vmem %s0, %s152
      $region28: #{laean_forward.31} parent=23 // pred_fallthru
        _
    $region24: #{laean_forward.31} parent=5 // pred_fallthru
      _
    %p154 = scmp.le.s32.totalorder 1, %s9
    %p155 = scmp.lt.s32.totalorder %s9, 3
    %p156 = pnand %p154, %p155
    %p157 = pneg %p156
    // Predicated region
    $region29: #{laean_forward.31} parent=5 // pred_check
      _
    $region30: #{laean_forward.31} parent=5 // pred_check_branch
      %159 = sbr.rel (%p156) target = $region32
    $region31: #{laean_forward.31} parent=5 // pred_region
      %s160 = ssub.s32 %s9, 1
      %p161 = scmp.lt.s32.totalorder %s18, 1
      %s162 = scalar_select %p161, %s18, 1
      %p163 = scmp.lt.s32.totalorder %s19, 0
      %s164 = scalar_select %p163, %s19, 0
      %s165 = sadd.s32 %s164, %s162
      %s166 = smul.addr %s165, 4
      %s167 = scalar_lea.vmem %s0, %s166
      %p168 = pneg %p49
      %p169 = pneg %p46
      %p170 = pneg %p70
      %p171 = pneg %p67
      %p172 = pneg %p91
      %p173 = pneg %p88
      %p174 = pneg %p119
      %p175 = pneg %p116
      %p176 = scmp.lt.s32.totalorder %s18, 1
      %s177 = scalar_select %p176, %s18, 1
      %p178 = scmp.lt.s32.totalorder %s19, 0
      %s179 = scalar_select %p178, %s19, 0
      %s180 = sadd.s32 %s179, %s177
      %s181 = smul.addr %s180, 4
      %s182 = scalar_lea.vmem %s3, %s181
      %p183 = scmp.lt.s32.totalorder %s18, 1
      %s184 = scalar_select %p183, %s18, 1
      %p185 = scmp.lt.s32.totalorder %s19, 0
      %s186 = scalar_select %p185, %s19, 0
      %s187 = sadd.s32 %s186, %s184
      %s188 = smul.addr %s187, 4
      %s189 = scalar_lea.vmem %s0, %s188
      %p190 = scmp.lt.s32.totalorder %s18, 1
      %s191 = scalar_select %p190, %s18, 1
      %p192 = scmp.lt.s32.totalorder %s19, 0
      %s193 = scalar_select %p192, %s19, 0
      %s194 = sadd.s32 %s193, %s191
      %s195 = smul.addr %s194, 4
      %s196 = scalar_lea.vmem %s3, %s195
      %v197 = vld [vmem:[%s1] sm:$0x7]
      %v198 = vld [vmem:[%s189] sm:$0x7]
      %v199 = vld [vmem:[%s2] sm:$0x7]
      %201 = vset.pattern.permute.xlu0 0
      %202 = vperm.xlu0 %201, %v199
      %v203 = vpop.permute.xlu0 %202
      %vm205 = vcmask 23552
      %v207 = vsel %vm205, %v197, 0
      %vm209 = vcmask 1042432
      %v211 = vsel %vm209, %v198, 0
      %213 = vmatprep.subr.mxu0 0.0
      %214 = vmatpush1.msra.mxu0 %v211
      %215 = vmatprep.subr.mxu0 0.0
      %216 = vmatpush1.msra.mxu0 0.0
      %217 = vmatprep.subr.mxu0 0.0
      %218 = vmatpush1.msra.mxu0 0.0
      %219 = vmatprep.subr.mxu0 0.0
      %220 = vmatpush1.msra.mxu0 0.0
      %221 = vmatprep.subr.mxu0 0.0
      %222 = vmatpush1.msra.mxu0 0.0
      %223 = vmatprep.subr.mxu0 0.0
      %224 = vmatpush1.msra.mxu0 0.0
      %225 = vmatprep.subr.mxu0 0.0
      %226 = vmatpush1.msra.mxu0 0.0
      %227 = vmatprep.subr.mxu0 0.0
      %228 = vmatpush1.msra.mxu0 0.0
      %229 = vmatprep.subr.mxu0 0.0
      %230 = vmatpush1.msra.mxu0 0.0
      %231 = vmatprep.subr.mxu0 0.0
      %232 = vmatpush1.msra.mxu0 0.0
      %233 = vmatprep.subr.mxu0 0.0
      %234 = vmatpush1.msra.mxu0 0.0
      %235 = vmatprep.subr.mxu0 0.0
      %236 = vmatpush1.msra.mxu0 0.0
      %237 = vmatprep.subr.mxu0 0.0
      %238 = vmatpush1.msra.mxu0 0.0
      %239 = vmatprep.subr.mxu0 0.0
      %240 = vmatpush1.msra.mxu0 0.0
      %241 = vmatprep.subr.mxu0 0.0
      %242 = vmatpush1.msra.mxu0 0.0
      %243 = vmatprep.subr.mxu0 0.0
      %244 = vmatpush1.msra.mxu0 0.0
      %245 = vmatprep.subr.mxu0 0.0
      %246 = vmatpush1.msra.mxu0 0.0
      %247 = vmatprep.subr.mxu0 0.0
      %248 = vmatpush1.msra.mxu0 0.0
      %249 = vmatprep.subr.mxu0 0.0
      %250 = vmatpush1.msra.mxu0 0.0
      %251 = vmatprep.subr.mxu0 0.0
      %252 = vmatpush1.msra.mxu0 0.0
      %253 = vmatprep.subr.mxu0 0.0
      %254 = vmatpush1.msra.mxu0 0.0
      %255 = vmatprep.subr.mxu0 0.0
      %256 = vmatpush1.msra.mxu0 0.0
      %257 = vmatprep.subr.mxu0 0.0
      %258 = vmatpush1.msra.mxu0 0.0
      %259 = vmatprep.subr.mxu0 0.0
      %260 = vmatpush1.msra.mxu0 0.0
      %261 = vmatprep.subr.mxu0 0.0
      %262 = vmatpush1.msra.mxu0 0.0
      %263 = vmatprep.subr.mxu0 0.0
      %264 = vmatpush1.msra.mxu0 0.0
      %265 = vmatprep.subr.mxu0 0.0
      %266 = vmatpush1.msra.mxu0 0.0
      %267 = vmatprep.subr.mxu0 0.0
      %268 = vmatpush1.msra.mxu0 0.0
      %269 = vmatprep.subr.mxu0 0.0
      %270 = vmatpush1.msra.mxu0 0.0
      %271 = vmatprep.subr.mxu0 0.0
      %272 = vmatpush1.msra.mxu0 0.0
      %273 = vmatprep.subr.mxu0 0.0
      %274 = vmatpush1.msra.mxu0 0.0
      %275 = vmatprep.subr.mxu0 0.0
      %276 = vmatpush1.msra.mxu0 0.0
      %277 = vmatprep.mubr.f32.mxu0 0.0
      %278 = vmatmul.mubr.f32.gmra.mrb[0].mxu0 %v207
      %v279 = vpop.f32.mrb[0].mxu0
      %v280 = vadd.f32 %v203, %v279
      %v281 = vpop.f32.mrb[0].mxu0
      %282 = vdwg.mxu0
      %vm283 = vcmask 518144
      %284 = vst.msk [vmem:[%s196] sm:$0x7] %vm283, %v280
      %p285 = scmp.lt.s32.totalorder %s18, 1
      %s286 = scalar_select %p285, %s18, 1
      %p287 = scmp.lt.s32.totalorder %s19, 0
      %s288 = scalar_select %p287, %s19, 0
      %s289 = sadd.s32 %s288, %s286
      %s290 = smul.addr %s289, 4
      %s291 = scalar_lea.vmem %s3, %s290
      // Predicated region
      $region33: #{laean_forward.31} parent=31 // pred_check
        %p292 = pneg %p116
      $region34: #{laean_forward.31} parent=31 // pred_check_branch
        %294 = sbr.rel (%p292) target = $region36
      $region35: #{laean_forward.31} parent=31 // pred_region
        _
      $region36: #{laean_forward.31} parent=31 // pred_fallthru
        _
    $region32: #{laean_forward.31} parent=5 // pred_fallthru
      _
    %p295 = scmp.le.s32.totalorder 2, %s9
    // Predicated region
    $region37: #{laean_forward.31} parent=5 // pred_check
      %p296 = pneg %p295
    $region38: #{laean_forward.31} parent=5 // pred_check_branch
      %298 = sbr.rel (%p296) target = $region40
    $region39: #{laean_forward.31} parent=5 // pred_region
      %s299 = ssub.s32 %s9, 2
      // Predicated region
      $region41: #{laean_forward.31} parent=39 // pred_check
        %p300 = pneg %p122
      $region42: #{laean_forward.31} parent=39 // pred_check_branch
        %302 = sbr.rel (%p300) target = $region44
      $region43: #{laean_forward.31} parent=39 // pred_region
        %p303 = scmp.lt.s32.totalorder %s20, 1
        %s304 = scalar_select %p303, %s20, 1
        %p305 = scmp.lt.s32.totalorder %s21, 0
        %s306 = scalar_select %p305, %s21, 0
        %s307 = sadd.s32 %s306, %s304
        %s308 = smul.addr %s307, 4
        %s309 = scalar_lea.vmem %s3, %s308
      $region44: #{laean_forward.31} parent=39 // pred_fallthru
        _
    $region40: #{laean_forward.31} parent=5 // pred_fallthru
      _
  $region6: #{laean_forward.31} parent=0 // loop_footer
    %s13 = sadd.s32 1, %s9
  $region7: #{laean_forward.31} parent=0 // loop_footer_branch
    %8 = sbr.rel target = $region3
  $region8: #{laean_forward.31} parent=0 // loop_exit
    _

// kernel: laean_forward.32
$region0: #{laean_forward.32}
  #allocation0 [shape = 'u32[]', space=smem, size = 0x4, offset = 0x4, fixed_abs, tag = 'smem constant byte address 0x4 - core index']
  #allocation1 [shape = 'u32[144,128]{1,0:T(1,128)}', space=vmem, size = 0x12000, scoped, tag = 'internal scratch']
  #allocation2 [shape = 'f32[1]{0:T(128)S(6)}', space=smem, size = 0x200, scoped, tag = 'scoped memory for laean_forward.32']
  %s0 = inlined_call_operand.vmem [shape: f32[2,27,64], index: 0, kind: input, shape index: {}]
  %s1 = inlined_call_operand.vmem [shape: f32[16,27], index: 1, kind: input, shape index: {}]
  %s2 = inlined_call_operand.vmem [shape: f32[16,1], index: 2, kind: input, shape index: {}]
  %s3 = inlined_call_operand.<no memory space> [shape: f32[1], index: 3, kind: input, shape index: {}]
  %s4 = inlined_call_operand.vmem [shape: f32[2,16,64], index: 4, kind: output, shape index: {}]
  %s5 = sld [smem:[#allocation0]]
  $region49: #{laean_forward.32} parent=0
    _
  %s7 = ssub.s32 1, %s5
  %s8 = scalar_select 0, %s7, %s5
  %9 = sst [smem:[#allocation2]] %s3
  loop: start=0, step=1, limit=4
  $region2: #{laean_forward.32} parent=0 // loop_pre_header
    _
  $region3: #{laean_forward.32} parent=0 // loop_header
    %s11 = sphi 0, %s15
    %p12 = scmp.ge.s32.totalorder %s11, 4
    %s18 = sphi 0, %s30
    %s19 = sphi 0, %s26
    %s20 = sphi 0, %s18
    %s21 = sphi 0, %s19
    %s22 = sphi 0, %s20
    %s23 = sphi 0, %s21
    %s35 = sphi 0, %s37
    %s38 = sphi 0, %s35
    %s39 = sphi 0, %s38
    %s55 = sphi 0, %s39
    %s59 = sphi 0, %s59
    %s61 = sphi 0, %s59
    %s62 = sphi 0, %s61
    %s76 = sphi 0, %s62
    %s80 = sphi 0, %s80
    %s82 = sphi 0, %s80
    %s83 = sphi 0, %s82
    %s97 = sphi 0, %s83
    %s101 = sphi 0, %s101
    %s103 = sphi 0, %s101
    %s104 = sphi 0, %s103
    %s118 = sphi 0, %s104
    %s126 = sphi 0, %s128
    %s129 = sphi 0, %s126
    %s130 = sphi 0, %s129
    %s146 = sphi 0, %s130
  $region4: #{laean_forward.32} parent=0 // loop_header_branch
    %14 = sbr.rel (%p12) target = $region8
  $region5: #{laean_forward.32} parent=0 // loop_body
    %s16 = ssub.s32 %s11, 1
    %s17 = ssub.s32 %s11, 2
    %s24 = sadd.s32 1, %s19
    %p25 = scmp.ge.s32.totalorder %s24, 1
    %s26 = scalar_select %p25, 0, %s24
    %s27 = sadd.s32 1, %s18
    %s28 = scalar_select %p25, %s27, %s18
    %p29 = scmp.ge.s32.totalorder %s28, 2
    %s30 = scalar_select %p29, 0, %s28
    %s31 = ssub.s32 %s18, %s30
    %s32 = ssub.s32 %s19, %s26
    %s33 = sor.u32 %s31, %s32
    %p34 = scmp.eq.s32.totalorder %s33, 0
    %s36 = sadd.s32 %s35, 1
    %s37 = scalar_select %p34, %s35, %s36
    %p40 = pneg %p34
    %p41 = scmp.eq.s32.totalorder %s11, 1
    %p42 = por %p40, %p41
    %p43 = scmp.ne.s32.totalorder %s35, %s38
    %p44 = scmp.eq.s32.totalorder %s11, 0
    %p45 = por %p43, %p44
    %p46 = scmp.ne.s32.totalorder %s35, %s38
    %p47 = scmp.eq.s32.totalorder %s16, 1
    %p48 = por %p46, %p47
    %p49 = scmp.ne.s32.totalorder %s38, %s39
    %p50 = scmp.eq.s32.totalorder %s16, 0
    %p51 = por %p49, %p50
    %p52 = scmp.ne.s32.totalorder %s38, %s39
    %p53 = scmp.eq.s32.totalorder %s17, 1
    %p54 = por %p52, %p53
    %p56 = scmp.ne.s32.totalorder %s39, %s55
    %p57 = scmp.eq.s32.totalorder %s17, 0
    %p58 = por %p56, %p57
    %s60 = sadd.s32 %s59, 1
    %p63 = scmp.eq.s32.totalorder %s11, 1
    %p64 = scmp.ne.s32.totalorder %s59, %s61
    %p65 = scmp.eq.s32.totalorder %s11, 0
    %p66 = por %p64, %p65
    %p67 = scmp.ne.s32.totalorder %s59, %s61
    %p68 = scmp.eq.s32.totalorder %s16, 1
    %p69 = por %p67, %p68
    %p70 = scmp.ne.s32.totalorder %s61, %s62
    %p71 = scmp.eq.s32.totalorder %s16, 0
    %p72 = por %p70, %p71
    %p73 = scmp.ne.s32.totalorder %s61, %s62
    %p74 = scmp.eq.s32.totalorder %s17, 1
    %p75 = por %p73, %p74
    %p77 = scmp.ne.s32.totalorder %s62, %s76
    %p78 = scmp.eq.s32.totalorder %s17, 0
    %p79 = por %p77, %p78
    %s81 = sadd.s32 %s80, 1
    %p84 = scmp.eq.s32.totalorder %s11, 1
    %p85 = scmp.ne.s32.totalorder %s80, %s82
    %p86 = scmp.eq.s32.totalorder %s11, 0
    %p87 = por %p85, %p86
    %p88 = scmp.ne.s32.totalorder %s80, %s82
    %p89 = scmp.eq.s32.totalorder %s16, 1
    %p90 = por %p88, %p89
    %p91 = scmp.ne.s32.totalorder %s82, %s83
    %p92 = scmp.eq.s32.totalorder %s16, 0
    %p93 = por %p91, %p92
    %p94 = scmp.ne.s32.totalorder %s82, %s83
    %p95 = scmp.eq.s32.totalorder %s17, 1
    %p96 = por %p94, %p95
    %p98 = scmp.ne.s32.totalorder %s83, %s97
    %p99 = scmp.eq.s32.totalorder %s17, 0
    %p100 = por %p98, %p99
    %s102 = sadd.s32 %s101, 1
    %p105 = scmp.eq.s32.totalorder %s11, 1
    %p106 = scmp.ne.s32.totalorder %s101, %s103
    %p107 = scmp.eq.s32.totalorder %s11, 0
    %p108 = por %p106, %p107
    %p109 = scmp.ne.s32.totalorder %s101, %s103
    %p110 = scmp.eq.s32.totalorder %s16, 1
    %p111 = por %p109, %p110
    %p112 = scmp.ne.s32.totalorder %s103, %s104
    %p113 = scmp.eq.s32.totalorder %s16, 0
    %p114 = por %p112, %p113
    %p115 = scmp.ne.s32.totalorder %s103, %s104
    %p116 = scmp.eq.s32.totalorder %s17, 1
    %p117 = por %p115, %p116
    %p119 = scmp.ne.s32.totalorder %s104, %s118
    %p120 = scmp.eq.s32.totalorder %s17, 0
    %p121 = por %p119, %p120
    %s122 = ssub.s32 %s18, %s30
    %s123 = ssub.s32 %s19, %s26
    %s124 = sor.u32 %s122, %s123
    %p125 = scmp.eq.s32.totalorder %s124, 0
    %s127 = sadd.s32 %s126, 1
    %s128 = scalar_select %p125, %s126, %s127
    %p131 = pneg %p125
    %p132 = scmp.eq.s32.totalorder %s11, 1
    %p133 = por %p131, %p132
    %p134 = scmp.ne.s32.totalorder %s126, %s129
    %p135 = scmp.eq.s32.totalorder %s11, 0
    %p136 = por %p134, %p135
    %p137 = scmp.ne.s32.totalorder %s126, %s129
    %p138 = scmp.eq.s32.totalorder %s16, 1
    %p139 = por %p137, %p138
    %p140 = scmp.ne.s32.totalorder %s129, %s130
    %p141 = scmp.eq.s32.totalorder %s16, 0
    %p142 = por %p140, %p141
    %p143 = scmp.ne.s32.totalorder %s129, %s130
    %p144 = scmp.eq.s32.totalorder %s17, 1
    %p145 = por %p143, %p144
    %p147 = scmp.ne.s32.totalorder %s130, %s146
    %p148 = scmp.eq.s32.totalorder %s17, 0
    %p149 = por %p147, %p148
    %p150 = scmp.le.s32.totalorder 1, %s11
    %p151 = scmp.lt.s32.totalorder %s11, 3
    %p152 = pnand %p150, %p151
    %p153 = pneg %p152
    // Predicated region
    $region9: #{laean_forward.32} parent=5 // pred_check
      _
    $region10: #{laean_forward.32} parent=5 // pred_check_branch
      %155 = sbr.rel (%p152) target = $region12
    $region11: #{laean_forward.32} parent=5 // pred_region
      %s156 = ssub.s32 %s11, 1
      // Predicated region
      $region13: #{laean_forward.32} parent=11 // pred_check
        %p157 = pneg %p72
      $region14: #{laean_forward.32} parent=11 // pred_check_branch
        %159 = sbr.rel (%p157) target = $region16
      $region15: #{laean_forward.32} parent=11 // pred_region
        _
      $region16: #{laean_forward.32} parent=11 // pred_fallthru
        _
      // Predicated region
      $region17: #{laean_forward.32} parent=11 // pred_check
        %p160 = pneg %p93
      $region18: #{laean_forward.32} parent=11 // pred_check_branch
        %162 = sbr.rel (%p160) target = $region20
      $region19: #{laean_forward.32} parent=11 // pred_region
        _
      $region20: #{laean_forward.32} parent=11 // pred_fallthru
        _
      // Predicated region
      $region21: #{laean_forward.32} parent=11 // pred_check
        %p163 = pneg %p114
      $region22: #{laean_forward.32} parent=11 // pred_check_branch
        %165 = sbr.rel (%p163) target = $region24
      $region23: #{laean_forward.32} parent=11 // pred_region
        _
      $region24: #{laean_forward.32} parent=11 // pred_fallthru
        _
    $region12: #{laean_forward.32} parent=5 // pred_fallthru
      _
    %p166 = scmp.lt.s32.totalorder %s11, 2
    // Predicated region
    $region25: #{laean_forward.32} parent=5 // pred_check
      %p167 = pneg %p166
    $region26: #{laean_forward.32} parent=5 // pred_check_branch
      %169 = sbr.rel (%p167) target = $region28
    $region27: #{laean_forward.32} parent=5 // pred_region
      // Predicated region
      $region29: #{laean_forward.32} parent=27 // pred_check
        %p170 = pneg %p45
      $region30: #{laean_forward.32} parent=27 // pred_check_branch
        %172 = sbr.rel (%p170) target = $region32
      $region31: #{laean_forward.32} parent=27 // pred_region
        %p173 = scmp.lt.s32.totalorder %s18, 1
        %s174 = scalar_select %p173, %s18, 1
        %p175 = scmp.lt.s32.totalorder %s19, 0
        %s176 = scalar_select %p175, %s19, 0
        %s177 = smul.addr %s174, 4
        %s178 = sadd.s32 %s176, %s177
        %s179 = smul.addr %s178, 8
        %s180 = scalar_lea.vmem %s0, %s179
      $region32: #{laean_forward.32} parent=27 // pred_fallthru
        _
    $region28: #{laean_forward.32} parent=5 // pred_fallthru
      _
    %p181 = scmp.le.s32.totalorder 1, %s11
    %p182 = scmp.lt.s32.totalorder %s11, 3
    %p183 = pnand %p181, %p182
    %p184 = pneg %p183
    // Predicated region
    $region33: #{laean_forward.32} parent=5 // pred_check
      _
    $region34: #{laean_forward.32} parent=5 // pred_check_branch
      %186 = sbr.rel (%p183) target = $region36
    $region35: #{laean_forward.32} parent=5 // pred_region
      %s187 = ssub.s32 %s11, 1
      %p188 = scmp.lt.s32.totalorder %s20, 1
      %s189 = scalar_select %p188, %s20, 1
      %p190 = scmp.lt.s32.totalorder %s21, 0
      %s191 = scalar_select %p190, %s21, 0
      %s192 = smul.addr %s189, 4
      %s193 = sadd.s32 %s191, %s192
      %s194 = smul.addr %s193, 8
      %s195 = scalar_lea.vmem %s0, %s194
      %p196 = pneg %p51
      %p197 = pneg %p48
      %p198 = pneg %p72
      %p199 = pneg %p69
      %p200 = pneg %p93
      %p201 = pneg %p90
      %p202 = pneg %p114
      %p203 = pneg %p111
      %p204 = pneg %p142
      %p205 = pneg %p139
      %p206 = scmp.lt.s32.totalorder %s20, 1
      %s207 = scalar_select %p206, %s20, 1
      %p208 = scmp.lt.s32.totalorder %s21, 0
      %s209 = scalar_select %p208, %s21, 0
      %s210 = smul.addr %s207, 2
      %s211 = sadd.s32 %s209, %s210
      %s212 = smul.addr %s211, 8
      %s213 = scalar_lea.vmem %s4, %s212
      %p214 = scmp.lt.s32.totalorder %s20, 1
      %s215 = scalar_select %p214, %s20, 1
      %p216 = scmp.lt.s32.totalorder %s21, 0
      %s217 = scalar_select %p216, %s21, 0
      %s218 = smul.addr %s215, 4
      %s219 = sadd.s32 %s217, %s218
      %s220 = smul.addr %s219, 8
      %s221 = scalar_lea.vmem %s0, %s220
      %p222 = scmp.lt.s32.totalorder %s20, 1
      %s223 = scalar_select %p222, %s20, 1
      %p224 = scmp.lt.s32.totalorder %s21, 0
      %s225 = scalar_select %p224, %s21, 0
      %s226 = smul.addr %s223, 2
      %s227 = sadd.s32 %s225, %s226
      %s228 = smul.addr %s227, 8
      %s229 = scalar_lea.vmem %s4, %s228
      %v230 = vld [vmem:[%s1] sm:$0xff]
      %v231 = vld [vmem:[%s1 + $0x8] sm:$0xff]
      %v232 = vld [vmem:[%s221] sm:$0xff]
      %v233 = vld [vmem:[%s221 + $0x8] sm:$0xff]
      %v234 = vld [vmem:[%s221 + $0x10] sm:$0xff]
      %v235 = vld [vmem:[%s221 + $0x18] sm:$0x7]
      %v236 = vld [vmem:[%s2] sm:$0xff]
      %v237 = vld [vmem:[%s2 + $0x8] sm:$0xff]
      %239 = vset.pattern.permute.xlu0 0
      %240 = vperm.xlu0 %239, %v236
      %v241 = vpop.permute.xlu0 %240
      %244 = vset.pattern.permute.xlu0 0
      %245 = vperm.xlu0 %244, %v237
      %v246 = vpop.permute.xlu0 %245
      %vm248 = vcmask 220160
      %v250 = vsel %vm248, %v230, 0
      %v253 = vsel %vm248, %v231, 0
      %vm255 = vcmask 1042432
      %v257 = vsel %vm255, %v235, 0
      %259 = vmatprep.subr.mxu0 0.0
      %260 = vmatpush1.msra.mxu0 %v232
      %261 = vmatprep.subr.mxu0 0.0
      %262 = vmatpush1.msra.mxu0 %v233
      %263 = vmatprep.subr.mxu0 0.0
      %264 = vmatpush1.msra.mxu0 %v234
      %265 = vmatprep.subr.mxu0 0.0
      %266 = vmatpush1.msra.mxu0 %v257
      %267 = vmatprep.subr.mxu0 0.0
      %268 = vmatpush1.msra.mxu0 0.0
      %269 = vmatprep.subr.mxu0 0.0
      %270 = vmatpush1.msra.mxu0 0.0
      %271 = vmatprep.subr.mxu0 0.0
      %272 = vmatpush1.msra.mxu0 0.0
      %273 = vmatprep.subr.mxu0 0.0
      %274 = vmatpush1.msra.mxu0 0.0
      %275 = vmatprep.subr.mxu0 0.0
      %276 = vmatpush1.msra.mxu0 0.0
      %277 = vmatprep.subr.mxu0 0.0
      %278 = vmatpush1.msra.mxu0 0.0
      %279 = vmatprep.subr.mxu0 0.0
      %280 = vmatpush1.msra.mxu0 0.0
      %281 = vmatprep.subr.mxu0 0.0
      %282 = vmatpush1.msra.mxu0 0.0
      %283 = vmatprep.subr.mxu0 0.0
      %284 = vmatpush1.msra.mxu0 0.0
      %285 = vmatprep.subr.mxu0 0.0
      %286 = vmatpush1.msra.mxu0 0.0
      %287 = vmatprep.subr.mxu0 0.0
      %288 = vmatpush1.msra.mxu0 0.0
      %289 = vmatprep.subr.mxu0 0.0
      %290 = vmatpush1.msra.mxu0 0.0
      %291 = vmatprep.subr.mxu0 0.0
      %292 = vmatpush1.msra.mxu0 0.0
      %293 = vmatprep.subr.mxu0 0.0
      %294 = vmatpush1.msra.mxu0 0.0
      %295 = vmatprep.subr.mxu0 0.0
      %296 = vmatpush1.msra.mxu0 0.0
      %297 = vmatprep.subr.mxu0 0.0
      %298 = vmatpush1.msra.mxu0 0.0
      %299 = vmatprep.subr.mxu0 0.0
      %300 = vmatpush1.msra.mxu0 0.0
      %301 = vmatprep.subr.mxu0 0.0
      %302 = vmatpush1.msra.mxu0 0.0
      %303 = vmatprep.subr.mxu0 0.0
      %304 = vmatpush1.msra.mxu0 0.0
      %305 = vmatprep.subr.mxu0 0.0
      %306 = vmatpush1.msra.mxu0 0.0
      %307 = vmatprep.subr.mxu0 0.0
      %308 = vmatpush1.msra.mxu0 0.0
      %309 = vmatprep.subr.mxu0 0.0
      %310 = vmatpush1.msra.mxu0 0.0
      %311 = vmatprep.subr.mxu0 0.0
      %312 = vmatpush1.msra.mxu0 0.0
      %313 = vmatprep.subr.mxu0 0.0
      %314 = vmatpush1.msra.mxu0 0.0
      %315 = vmatprep.subr.mxu0 0.0
      %316 = vmatpush1.msra.mxu0 0.0
      %317 = vmatprep.subr.mxu0 0.0
      %318 = vmatpush1.msra.mxu0 0.0
      %319 = vmatprep.subr.mxu0 0.0
      %320 = vmatpush1.msra.mxu0 0.0
      %321 = vmatprep.subr.mxu0 0.0
      %322 = vmatpush1.msra.mxu0 0.0
      %323 = vmatprep.mubr.f32.mxu0 0.0
      %324 = vmatmul.mubr.f32.gmra.mrb[0].mxu0 %v250
      %v325 = vpop.f32.mrb[0].mxu0
      %v326 = vadd.f32 %v241, %v325
      %v327 = vpop.f32.mrb[0].mxu0
      %328 = vmatprep.mubr.f32.mxu0 0.0
      %329 = vmatmul.mubr.f32.gmra.mrb[0].mxu0 %v253
      %v330 = vpop.f32.mrb[0].mxu0
      %v331 = vadd.f32 %v246, %v330
      %v332 = vpop.f32.mrb[0].mxu0
      %333 = vdwg.mxu0
      %s334 = sld [smem:[#allocation2]]
      %vm335 = vcmp.ge.f32.partialorder %v326, 0.0
      %vm336 = vcmp.ge.f32.partialorder %v331, 0.0
      %v337 = vstv %s334
      %v338 = vmul.f32 %v337, %v326
      %v339 = vmul.f32 %v337, %v331
      %v340 = vsel %vm335, %v326, %v338
      %v341 = vsel %vm336, %v331, %v339
      %vm342 = vcmask 523264
      %343 = vst.msk [vmem:[%s229] sm:$0xff] %vm342, %v340
      %344 = vst.msk [vmem:[%s229 + $0x8] sm:$0xff] %vm342, %v341
      %p345 = scmp.lt.s32.totalorder %s20, 1
      %s346 = scalar_select %p345, %s20, 1
      %p347 = scmp.lt.s32.totalorder %s21, 0
      %s348 = scalar_select %p347, %s21, 0
      %s349 = smul.addr %s346, 2
      %s350 = sadd.s32 %s348, %s349
      %s351 = smul.addr %s350, 8
      %s352 = scalar_lea.vmem %s4, %s351
      // Predicated region
      $region37: #{laean_forward.32} parent=35 // pred_check
        %p353 = pneg %p139
      $region38: #{laean_forward.32} parent=35 // pred_check_branch
        %355 = sbr.rel (%p353) target = $region40
      $region39: #{laean_forward.32} parent=35 // pred_region
        _
      $region40: #{laean_forward.32} parent=35 // pred_fallthru
        _
    $region36: #{laean_forward.32} parent=5 // pred_fallthru
      _
    %p356 = scmp.le.s32.totalorder 2, %s11
    // Predicated region
    $region41: #{laean_forward.32} parent=5 // pred_check
      %p357 = pneg %p356
    $region42: #{laean_forward.32} parent=5 // pred_check_branch
      %359 = sbr.rel (%p357) target = $region44
    $region43: #{laean_forward.32} parent=5 // pred_region
      %s360 = ssub.s32 %s11, 2
      // Predicated region
      $region45: #{laean_forward.32} parent=43 // pred_check
        %p361 = pneg %p145
      $region46: #{laean_forward.32} parent=43 // pred_check_branch
        %363 = sbr.rel (%p361) target = $region48
      $region47: #{laean_forward.32} parent=43 // pred_region
        %p364 = scmp.lt.s32.totalorder %s22, 1
        %s365 = scalar_select %p364, %s22, 1
        %p366 = scmp.lt.s32.totalorder %s23, 0
        %s367 = scalar_select %p366, %s23, 0
        %s368 = smul.addr %s365, 2
        %s369 = sadd.s32 %s367, %s368
        %s370 = smul.addr %s369, 8
        %s371 = scalar_lea.vmem %s4, %s370
      $region48: #{laean_forward.32} parent=43 // pred_fallthru
        _
    $region44: #{laean_forward.32} parent=5 // pred_fallthru
      _
  $region6: #{laean_forward.32} parent=0 // loop_footer
    %s15 = sadd.s32 1, %s11
  $region7: #{laean_forward.32} parent=0 // loop_footer_branch
    %10 = sbr.rel target = $region3
  $region8: #{laean_forward.32} parent=0 // loop_exit
    _

// kernel: tile.38
$region0: #{tile.38}
  #allocation0 [shape = 's32[1]{0}', space=sflag, size = 0x4, scoped, tag = 'scoped memory for tile.38']
  %s0 = inlined_call_operand.vmem [shape: f32[16], index: 0, kind: input, shape index: {}]
  %s1 = inlined_call_operand.vmem [shape: f32[4,16], index: 1, kind: output, shape index: {}]
  // Predicated region
  $region2: #{tile.38} parent=0 // pred_check
    _
  $region3: #{tile.38} parent=0 // pred_check_branch
    %3 = sbr.rel (0) target = $region5
  $region4: #{tile.38} parent=0 // pred_region
    _
  $region5: #{tile.38} parent=0 // pred_fallthru
    _
  %v4 = vld [vmem:[%s0] ss:$0 sm:$0xff]
  %5 = vst [vmem:[%s1] sm:$0xf] %v4

// kernel: tile.0
$region0: #{tile.0}
  %s0 = inlined_call_operand.vmem [shape: f32[4,16], index: 0, kind: input, shape index: {}]
  %s1 = inlined_call_operand.vmem [shape: f32[64,1], index: 1, kind: output, shape index: {}]
  $region1: #{tile.0} parent=0
    #allocation0 [shape = 'u8[4096]{0}', space=vmem, size = 0x1000, scoped, tag = 'scoped mem for input reshape']
    %s3 = sshllo.u32 0, 4
    %v4 = vld [vmem:[%s0] sm:%s3]
    %5 = vst [vmem:[#allocation0] sm:%s3] %v4
    %v6 = vld [vmem:[#allocation0] sm:$0xf]
    %vm7 = vcmask 7168
    %8 = vst.msk [vmem:[%s1] ss:$16 sm:$0x3] %vm7, %v6
    %9 = vst.msk [vmem:[%s1] ss:$16 sm:$0xc] %vm7, %v6
    %v10 = vld [vmem:[#allocation0] sm:$0xf]
    %11 = vrot.lane.b32.xlu0 %v10, 127
    %v12 = vpop.permute.xlu0 %11
    %vm13 = vcmask 7168
    %s14 = scalar_lea.vmem %s1, 1
    %15 = vst.msk [vmem:[%s14] ss:$16 sm:$0x3] %vm13, %v12
    %s16 = scalar_lea.vmem %s1, 1
    %17 = vst.msk [vmem:[%s16] ss:$16 sm:$0xc] %vm13, %v12
    %v18 = vld [vmem:[#allocation0] sm:$0xf]
    %19 = vrot.lane.b32.xlu0 %v18, 126
    %v20 = vpop.permute.xlu0 %19
    %vm21 = vcmask 7168
    %s22 = scalar_lea.vmem %s1, 2
    %23 = vst.msk [vmem:[%s22] ss:$16 sm:$0x3] %vm21, %v20
    %s24 = scalar_lea.vmem %s1, 2
    %25 = vst.msk [vmem:[%s24] ss:$16 sm:$0xc] %vm21, %v20
    %v26 = vld [vmem:[#allocation0] sm:$0xf]
    %27 = vrot.lane.b32.xlu0 %v26, 125
    %v28 = vpop.permute.xlu0 %27
    %vm29 = vcmask 7168
    %s30 = scalar_lea.vmem %s1, 3
    %31 = vst.msk [vmem:[%s30] ss:$16 sm:$0x3] %vm29, %v28
    %s32 = scalar_lea.vmem %s1, 3
    %33 = vst.msk [vmem:[%s32] ss:$16 sm:$0xc] %vm29, %v28
    %v34 = vld [vmem:[#allocation0] sm:$0xf]
    %35 = vrot.lane.b32.xlu0 %v34, 124
    %v36 = vpop.permute.xlu0 %35
    %vm37 = vcmask 7168
    %s38 = scalar_lea.vmem %s1, 4
    %39 = vst.msk [vmem:[%s38] ss:$16 sm:$0x3] %vm37, %v36
    %s40 = scalar_lea.vmem %s1, 4
    %41 = vst.msk [vmem:[%s40] ss:$16 sm:$0xc] %vm37, %v36
    %v42 = vld [vmem:[#allocation0] sm:$0xf]
    %43 = vrot.lane.b32.xlu0 %v42, 123
    %v44 = vpop.permute.xlu0 %43
    %vm45 = vcmask 7168
    %s46 = scalar_lea.vmem %s1, 5
    %47 = vst.msk [vmem:[%s46] ss:$16 sm:$0x3] %vm45, %v44
    %s48 = scalar_lea.vmem %s1, 5
    %49 = vst.msk [vmem:[%s48] ss:$16 sm:$0xc] %vm45, %v44
    %v50 = vld [vmem:[#allocation0] sm:$0xf]
    %51 = vrot.lane.b32.xlu0 %v50, 122
    %v52 = vpop.permute.xlu0 %51
    %vm53 = vcmask 7168
    %s54 = scalar_lea.vmem %s1, 6
    %55 = vst.msk [vmem:[%s54] ss:$16 sm:$0x3] %vm53, %v52
    %s56 = scalar_lea.vmem %s1, 6
    %57 = vst.msk [vmem:[%s56] ss:$16 sm:$0xc] %vm53, %v52
    %v58 = vld [vmem:[#allocation0] sm:$0xf]
    %59 = vrot.lane.b32.xlu0 %v58, 121
    %v60 = vpop.permute.xlu0 %59
    %vm61 = vcmask 7168
    %s62 = scalar_lea.vmem %s1, 7
    %63 = vst.msk [vmem:[%s62] ss:$16 sm:$0x3] %vm61, %v60
    %s64 = scalar_lea.vmem %s1, 7
    %65 = vst.msk [vmem:[%s64] ss:$16 sm:$0xc] %vm61, %v60
    %v66 = vld [vmem:[#allocation0] sm:$0xf]
    %67 = vrot.lane.b32.xlu0 %v66, 120
    %v68 = vpop.permute.xlu0 %67
    %vm69 = vcmask 7168
    %s70 = scalar_lea.vmem %s1, 8
    %71 = vst.msk [vmem:[%s70] ss:$16 sm:$0x3] %vm69, %v68
    %s72 = scalar_lea.vmem %s1, 8
    %73 = vst.msk [vmem:[%s72] ss:$16 sm:$0xc] %vm69, %v68
    %v74 = vld [vmem:[#allocation0] sm:$0xf]
    %75 = vrot.lane.b32.xlu0 %v74, 119
    %v76 = vpop.permute.xlu0 %75
    %vm77 = vcmask 7168
    %s78 = scalar_lea.vmem %s1, 9
    %79 = vst.msk [vmem:[%s78] ss:$16 sm:$0x3] %vm77, %v76
    %s80 = scalar_lea.vmem %s1, 9
    %81 = vst.msk [vmem:[%s80] ss:$16 sm:$0xc] %vm77, %v76
    %v82 = vld [vmem:[#allocation0] sm:$0xf]
    %83 = vrot.lane.b32.xlu0 %v82, 118
    %v84 = vpop.permute.xlu0 %83
    %vm85 = vcmask 7168
    %s86 = scalar_lea.vmem %s1, 10
    %87 = vst.msk [vmem:[%s86] ss:$16 sm:$0x3] %vm85, %v84
    %s88 = scalar_lea.vmem %s1, 10
    %89 = vst.msk [vmem:[%s88] ss:$16 sm:$0xc] %vm85, %v84
    %v90 = vld [vmem:[#allocation0] sm:$0xf]
    %91 = vrot.lane.b32.xlu0 %v90, 117
    %v92 = vpop.permute.xlu0 %91
    %vm93 = vcmask 7168
    %s94 = scalar_lea.vmem %s1, 11
    %95 = vst.msk [vmem:[%s94] ss:$16 sm:$0x3] %vm93, %v92
    %s96 = scalar_lea.vmem %s1, 11
    %97 = vst.msk [vmem:[%s96] ss:$16 sm:$0xc] %vm93, %v92
    %v98 = vld [vmem:[#allocation0] sm:$0xf]
    %99 = vrot.lane.b32.xlu0 %v98, 116
    %v100 = vpop.permute.xlu0 %99
    %vm101 = vcmask 7168
    %s102 = scalar_lea.vmem %s1, 12
    %103 = vst.msk [vmem:[%s102] ss:$16 sm:$0x3] %vm101, %v100
    %s104 = scalar_lea.vmem %s1, 12
    %105 = vst.msk [vmem:[%s104] ss:$16 sm:$0xc] %vm101, %v100
    %v106 = vld [vmem:[#allocation0] sm:$0xf]
    %107 = vrot.lane.b32.xlu0 %v106, 115
    %v108 = vpop.permute.xlu0 %107
    %vm109 = vcmask 7168
    %s110 = scalar_lea.vmem %s1, 13
    %111 = vst.msk [vmem:[%s110] ss:$16 sm:$0x3] %vm109, %v108
    %s112 = scalar_lea.vmem %s1, 13
    %113 = vst.msk [vmem:[%s112] ss:$16 sm:$0xc] %vm109, %v108
    %v114 = vld [vmem:[#allocation0] sm:$0xf]
    %115 = vrot.lane.b32.xlu0 %v114, 114
    %v116 = vpop.permute.xlu0 %115
    %vm117 = vcmask 7168
    %s118 = scalar_lea.vmem %s1, 14
    %119 = vst.msk [vmem:[%s118] ss:$16 sm:$0x3] %vm117, %v116
    %s120 = scalar_lea.vmem %s1, 14
    %121 = vst.msk [vmem:[%s120] ss:$16 sm:$0xc] %vm117, %v116
    %v122 = vld [vmem:[#allocation0] sm:$0xf]
    %123 = vrot.lane.b32.xlu0 %v122, 113
    %v124 = vpop.permute.xlu0 %123
    %vm125 = vcmask 7168
    %s126 = scalar_lea.vmem %s1, 15
    %127 = vst.msk [vmem:[%s126] ss:$16 sm:$0x3] %vm125, %v124
    %s128 = scalar_lea.vmem %s1, 15
    %129 = vst.msk [vmem:[%s128] ss:$16 sm:$0xc] %vm125, %v124

// kernel: laean_forward.33
$region0: #{laean_forward.33}
  #allocation0 [shape = 'u32[]', space=smem, size = 0x4, offset = 0x4, fixed_abs, tag = 'smem constant byte address 0x4 - core index']
  #allocation1 [shape = 'u32[144,128]{1,0:T(1,128)}', space=vmem, size = 0x12000, scoped, tag = 'internal scratch']
  #allocation2 [shape = 'f32[1]{0:T(128)S(6)}', space=smem, size = 0x200, scoped, tag = 'scoped memory for laean_forward.33']
  %s0 = inlined_call_operand.vmem [shape: f32[2,144,64], index: 0, kind: input, shape index: {}]
  %s1 = inlined_call_operand.vmem [shape: f32[64,144], index: 1, kind: input, shape index: {}]
  %s2 = inlined_call_operand.vmem [shape: f32[64,1], index: 2, kind: input, shape index: {}]
  %s3 = inlined_call_operand.<no memory space> [shape: f32[1], index: 3, kind: input, shape index: {}]
  %s4 = inlined_call_operand.vmem [shape: f32[2,64,64], index: 4, kind: output, shape index: {}]
  %s5 = sld [smem:[#allocation0]]
  $region49: #{laean_forward.33} parent=0
    _
  %s7 = ssub.s32 1, %s5
  %s8 = scalar_select 0, %s7, %s5
  %9 = sst [smem:[#allocation2]] %s3
  loop: start=0, step=1, limit=4
  $region2: #{laean_forward.33} parent=0 // loop_pre_header
    _
  $region3: #{laean_forward.33} parent=0 // loop_header
    %s11 = sphi 0, %s15
    %p12 = scmp.ge.s32.totalorder %s11, 4
    %s18 = sphi 0, %s30
    %s19 = sphi 0, %s26
    %s20 = sphi 0, %s18
    %s21 = sphi 0, %s19
    %s22 = sphi 0, %s20
    %s23 = sphi 0, %s21
    %s35 = sphi 0, %s37
    %s38 = sphi 0, %s35
    %s39 = sphi 0, %s38
    %s55 = sphi 0, %s39
    %s59 = sphi 0, %s59
    %s61 = sphi 0, %s59
    %s62 = sphi 0, %s61
    %s76 = sphi 0, %s62
    %s80 = sphi 0, %s80
    %s82 = sphi 0, %s80
    %s83 = sphi 0, %s82
    %s97 = sphi 0, %s83
    %s101 = sphi 0, %s101
    %s103 = sphi 0, %s101
    %s104 = sphi 0, %s103
    %s118 = sphi 0, %s104
    %s126 = sphi 0, %s128
    %s129 = sphi 0, %s126
    %s130 = sphi 0, %s129
    %s146 = sphi 0, %s130
  $region4: #{laean_forward.33} parent=0 // loop_header_branch
    %14 = sbr.rel (%p12) target = $region8
  $region5: #{laean_forward.33} parent=0 // loop_body
    %s16 = ssub.s32 %s11, 1
    %s17 = ssub.s32 %s11, 2
    %s24 = sadd.s32 1, %s19
    %p25 = scmp.ge.s32.totalorder %s24, 1
    %s26 = scalar_select %p25, 0, %s24
    %s27 = sadd.s32 1, %s18
    %s28 = scalar_select %p25, %s27, %s18
    %p29 = scmp.ge.s32.totalorder %s28, 2
    %s30 = scalar_select %p29, 0, %s28
    %s31 = ssub.s32 %s18, %s30
    %s32 = ssub.s32 %s19, %s26
    %s33 = sor.u32 %s31, %s32
    %p34 = scmp.eq.s32.totalorder %s33, 0
    %s36 = sadd.s32 %s35, 1
    %s37 = scalar_select %p34, %s35, %s36
    %p40 = pneg %p34
    %p41 = scmp.eq.s32.totalorder %s11, 1
    %p42 = por %p40, %p41
    %p43 = scmp.ne.s32.totalorder %s35, %s38
    %p44 = scmp.eq.s32.totalorder %s11, 0
    %p45 = por %p43, %p44
    %p46 = scmp.ne.s32.totalorder %s35, %s38
    %p47 = scmp.eq.s32.totalorder %s16, 1
    %p48 = por %p46, %p47
    %p49 = scmp.ne.s32.totalorder %s38, %s39
    %p50 = scmp.eq.s32.totalorder %s16, 0
    %p51 = por %p49, %p50
    %p52 = scmp.ne.s32.totalorder %s38, %s39
    %p53 = scmp.eq.s32.totalorder %s17, 1
    %p54 = por %p52, %p53
    %p56 = scmp.ne.s32.totalorder %s39, %s55
    %p57 = scmp.eq.s32.totalorder %s17, 0
    %p58 = por %p56, %p57
    %s60 = sadd.s32 %s59, 1
    %p63 = scmp.eq.s32.totalorder %s11, 1
    %p64 = scmp.ne.s32.totalorder %s59, %s61
    %p65 = scmp.eq.s32.totalorder %s11, 0
    %p66 = por %p64, %p65
    %p67 = scmp.ne.s32.totalorder %s59, %s61
    %p68 = scmp.eq.s32.totalorder %s16, 1
    %p69 = por %p67, %p68
    %p70 = scmp.ne.s32.totalorder %s61, %s62
    %p71 = scmp.eq.s32.totalorder %s16, 0
    %p72 = por %p70, %p71
    %p73 = scmp.ne.s32.totalorder %s61, %s62
    %p74 = scmp.eq.s32.totalorder %s17, 1
    %p75 = por %p73, %p74
    %p77 = scmp.ne.s32.totalorder %s62, %s76
    %p78 = scmp.eq.s32.totalorder %s17, 0
    %p79 = por %p77, %p78
    %s81 = sadd.s32 %s80, 1
    %p84 = scmp.eq.s32.totalorder %s11, 1
    %p85 = scmp.ne.s32.totalorder %s80, %s82
    %p86 = scmp.eq.s32.totalorder %s11, 0
    %p87 = por %p85, %p86
    %p88 = scmp.ne.s32.totalorder %s80, %s82
    %p89 = scmp.eq.s32.totalorder %s16, 1
    %p90 = por %p88, %p89
    %p91 = scmp.ne.s32.totalorder %s82, %s83
    %p92 = scmp.eq.s32.totalorder %s16, 0
    %p93 = por %p91, %p92
    %p94 = scmp.ne.s32.totalorder %s82, %s83
    %p95 = scmp.eq.s32.totalorder %s17, 1
    %p96 = por %p94, %p95
    %p98 = scmp.ne.s32.totalorder %s83, %s97
    %p99 = scmp.eq.s32.totalorder %s17, 0
    %p100 = por %p98, %p99
    %s102 = sadd.s32 %s101, 1
    %p105 = scmp.eq.s32.totalorder %s11, 1
    %p106 = scmp.ne.s32.totalorder %s101, %s103
    %p107 = scmp.eq.s32.totalorder %s11, 0
    %p108 = por %p106, %p107
    %p109 = scmp.ne.s32.totalorder %s101, %s103
    %p110 = scmp.eq.s32.totalorder %s16, 1
    %p111 = por %p109, %p110
    %p112 = scmp.ne.s32.totalorder %s103, %s104
    %p113 = scmp.eq.s32.totalorder %s16, 0
    %p114 = por %p112, %p113
    %p115 = scmp.ne.s32.totalorder %s103, %s104
    %p116 = scmp.eq.s32.totalorder %s17, 1
    %p117 = por %p115, %p116
    %p119 = scmp.ne.s32.totalorder %s104, %s118
    %p120 = scmp.eq.s32.totalorder %s17, 0
    %p121 = por %p119, %p120
    %s122 = ssub.s32 %s18, %s30
    %s123 = ssub.s32 %s19, %s26
    %s124 = sor.u32 %s122, %s123
    %p125 = scmp.eq.s32.totalorder %s124, 0
    %s127 = sadd.s32 %s126, 1
    %s128 = scalar_select %p125, %s126, %s127
    %p131 = pneg %p125
    %p132 = scmp.eq.s32.totalorder %s11, 1
    %p133 = por %p131, %p132
    %p134 = scmp.ne.s32.totalorder %s126, %s129
    %p135 = scmp.eq.s32.totalorder %s11, 0
    %p136 = por %p134, %p135
    %p137 = scmp.ne.s32.totalorder %s126, %s129
    %p138 = scmp.eq.s32.totalorder %s16, 1
    %p139 = por %p137, %p138
    %p140 = scmp.ne.s32.totalorder %s129, %s130
    %p141 = scmp.eq.s32.totalorder %s16, 0
    %p142 = por %p140, %p141
    %p143 = scmp.ne.s32.totalorder %s129, %s130
    %p144 = scmp.eq.s32.totalorder %s17, 1
    %p145 = por %p143, %p144
    %p147 = scmp.ne.s32.totalorder %s130, %s146
    %p148 = scmp.eq.s32.totalorder %s17, 0
    %p149 = por %p147, %p148
    %p150 = scmp.le.s32.totalorder 1, %s11
    %p151 = scmp.lt.s32.totalorder %s11, 3
    %p152 = pnand %p150, %p151
    %p153 = pneg %p152
    // Predicated region
    $region9: #{laean_forward.33} parent=5 // pred_check
      _
    $region10: #{laean_forward.33} parent=5 // pred_check_branch
      %155 = sbr.rel (%p152) target = $region12
    $region11: #{laean_forward.33} parent=5 // pred_region
      %s156 = ssub.s32 %s11, 1
      // Predicated region
      $region13: #{laean_forward.33} parent=11 // pred_check
        %p157 = pneg %p72
      $region14: #{laean_forward.33} parent=11 // pred_check_branch
        %159 = sbr.rel (%p157) target = $region16
      $region15: #{laean_forward.33} parent=11 // pred_region
        _
      $region16: #{laean_forward.33} parent=11 // pred_fallthru
        _
      // Predicated region
      $region17: #{laean_forward.33} parent=11 // pred_check
        %p160 = pneg %p93
      $region18: #{laean_forward.33} parent=11 // pred_check_branch
        %162 = sbr.rel (%p160) target = $region20
      $region19: #{laean_forward.33} parent=11 // pred_region
        _
      $region20: #{laean_forward.33} parent=11 // pred_fallthru
        _
      // Predicated region
      $region21: #{laean_forward.33} parent=11 // pred_check
        %p163 = pneg %p114
      $region22: #{laean_forward.33} parent=11 // pred_check_branch
        %165 = sbr.rel (%p163) target = $region24
      $region23: #{laean_forward.33} parent=11 // pred_region
        _
      $region24: #{laean_forward.33} parent=11 // pred_fallthru
        _
    $region12: #{laean_forward.33} parent=5 // pred_fallthru
      _
    %p166 = scmp.lt.s32.totalorder %s11, 2
    // Predicated region
    $region25: #{laean_forward.33} parent=5 // pred_check
      %p167 = pneg %p166
    $region26: #{laean_forward.33} parent=5 // pred_check_branch
      %169 = sbr.rel (%p167) target = $region28
    $region27: #{laean_forward.33} parent=5 // pred_region
      // Predicated region
      $region29: #{laean_forward.33} parent=27 // pred_check
        %p170 = pneg %p45
      $region30: #{laean_forward.33} parent=27 // pred_check_branch
        %172 = sbr.rel (%p170) target = $region32
      $region31: #{laean_forward.33} parent=27 // pred_region
        %p173 = scmp.lt.s32.totalorder %s18, 1
        %s174 = scalar_select %p173, %s18, 1
        %p175 = scmp.lt.s32.totalorder %s19, 0
        %s176 = scalar_select %p175, %s19, 0
        %s177 = smul.addr %s174, 18
        %s178 = sadd.s32 %s176, %s177
        %s179 = smul.addr %s178, 8
        %s180 = scalar_lea.vmem %s0, %s179
      $region32: #{laean_forward.33} parent=27 // pred_fallthru
        _
    $region28: #{laean_forward.33} parent=5 // pred_fallthru
      _
    %p181 = scmp.le.s32.totalorder 1, %s11
    %p182 = scmp.lt.s32.totalorder %s11, 3
    %p183 = pnand %p181, %p182
    %p184 = pneg %p183
    // Predicated region
    $region33: #{laean_forward.33} parent=5 // pred_check
      _
    $region34: #{laean_forward.33} parent=5 // pred_check_branch
      %186 = sbr.rel (%p183) target = $region36
    $region35: #{laean_forward.33} parent=5 // pred_region
      %s187 = ssub.s32 %s11, 1
      %p188 = scmp.lt.s32.totalorder %s20, 1
      %s189 = scalar_select %p188, %s20, 1
      %p190 = scmp.lt.s32.totalorder %s21, 0
      %s191 = scalar_select %p190, %s21, 0
      %s192 = smul.addr %s189, 18
      %s193 = sadd.s32 %s191, %s192
      %s194 = smul.addr %s193, 8
      %s195 = scalar_lea.vmem %s0, %s194
      %p196 = pneg %p51
      %p197 = pneg %p48
      %p198 = pneg %p72
      %p199 = pneg %p69
      %p200 = pneg %p93
      %p201 = pneg %p90
      %p202 = pneg %p114
      %p203 = pneg %p111
      %p204 = pneg %p142
      %p205 = pneg %p139
      %p206 = scmp.lt.s32.totalorder %s20, 1
      %s207 = scalar_select %p206, %s20, 1
      %p208 = scmp.lt.s32.totalorder %s21, 0
      %s209 = scalar_select %p208, %s21, 0
      %s210 = smul.addr %s207, 8
      %s211 = sadd.s32 %s209, %s210
      %s212 = smul.addr %s211, 8
      %s213 = scalar_lea.vmem %s4, %s212
      %p214 = scmp.lt.s32.totalorder %s20, 1
      %s215 = scalar_select %p214, %s20, 1
      %p216 = scmp.lt.s32.totalorder %s21, 0
      %s217 = scalar_select %p216, %s21, 0
      %s218 = smul.addr %s215, 18
      %s219 = sadd.s32 %s217, %s218
      %s220 = smul.addr %s219, 8
      %s221 = scalar_lea.vmem %s0, %s220
      %p222 = scmp.lt.s32.totalorder %s20, 1
      %s223 = scalar_select %p222, %s20, 1
      %p224 = scmp.lt.s32.totalorder %s21, 0
      %s225 = scalar_select %p224, %s21, 0
      %s226 = smul.addr %s223, 8
      %s227 = sadd.s32 %s225, %s226
      %s228 = smul.addr %s227, 8
      %s229 = scalar_lea.vmem %s4, %s228
      %v230 = vld [vmem:[%s1] sm:$0xff]
      %v231 = vld [vmem:[%s1 + $0x8] sm:$0xff]
      %v232 = vld [vmem:[%s1 + $0x10] sm:$0xff]
      %v233 = vld [vmem:[%s1 + $0x18] sm:$0xff]
      %v234 = vld [vmem:[%s1 + $0x20] sm:$0xff]
      %v235 = vld [vmem:[%s1 + $0x28] sm:$0xff]
      %v236 = vld [vmem:[%s1 + $0x30] sm:$0xff]
      %v237 = vld [vmem:[%s1 + $0x38] sm:$0xff]
      %v238 = vld [vmem:[%s1 + $0x40] sm:$0xff]
      %v239 = vld [vmem:[%s1 + $0x48] sm:$0xff]
      %v240 = vld [vmem:[%s1 + $0x50] sm:$0xff]
      %v241 = vld [vmem:[%s1 + $0x58] sm:$0xff]
      %v242 = vld [vmem:[%s1 + $0x60] sm:$0xff]
      %v243 = vld [vmem:[%s1 + $0x68] sm:$0xff]
      %v244 = vld [vmem:[%s1 + $0x70] sm:$0xff]
      %v245 = vld [vmem:[%s1 + $0x78] sm:$0xff]
      %v246 = vld [vmem:[%s221] sm:$0xff]
      %v247 = vld [vmem:[%s221 + $0x8] sm:$0xff]
      %v248 = vld [vmem:[%s221 + $0x10] sm:$0xff]
      %v249 = vld [vmem:[%s221 + $0x18] sm:$0xff]
      %v250 = vld [vmem:[%s221 + $0x20] sm:$0xff]
      %v251 = vld [vmem:[%s221 + $0x28] sm:$0xff]
      %v252 = vld [vmem:[%s221 + $0x30] sm:$0xff]
      %v253 = vld [vmem:[%s221 + $0x38] sm:$0xff]
      %v254 = vld [vmem:[%s221 + $0x40] sm:$0xff]
      %v255 = vld [vmem:[%s221 + $0x48] sm:$0xff]
      %v256 = vld [vmem:[%s221 + $0x50] sm:$0xff]
      %v257 = vld [vmem:[%s221 + $0x58] sm:$0xff]
      %v258 = vld [vmem:[%s221 + $0x60] sm:$0xff]
      %v259 = vld [vmem:[%s221 + $0x68] sm:$0xff]
      %v260 = vld [vmem:[%s221 + $0x70] sm:$0xff]
      %v261 = vld [vmem:[%s221 + $0x78] sm:$0xff]
      %v262 = vld [vmem:[%s221 + $0x80] sm:$0xff]
      %v263 = vld [vmem:[%s221 + $0x88] sm:$0xff]
      %v264 = vld [vmem:[%s2] sm:$0xff]
      %v265 = vld [vmem:[%s2 + $0x8] sm:$0xff]
      %v266 = vld [vmem:[%s2 + $0x10] sm:$0xff]
      %v267 = vld [vmem:[%s2 + $0x18] sm:$0xff]
      %v268 = vld [vmem:[%s2 + $0x20] sm:$0xff]
      %v269 = vld [vmem:[%s2 + $0x28] sm:$0xff]
      %v270 = vld [vmem:[%s2 + $0x30] sm:$0xff]
      %v271 = vld [vmem:[%s2 + $0x38] sm:$0xff]
      %273 = vset.pattern.permute.xlu0 0
      %274 = vperm.xlu0 %273, %v264
      %v275 = vpop.permute.xlu0 %274
      %278 = vset.pattern.permute.xlu0 0
      %279 = vperm.xlu0 %278, %v265
      %v280 = vpop.permute.xlu0 %279
      %283 = vset.pattern.permute.xlu0 0
      %284 = vperm.xlu0 %283, %v266
      %v285 = vpop.permute.xlu0 %284
      %288 = vset.pattern.permute.xlu0 0
      %289 = vperm.xlu0 %288, %v267
      %v290 = vpop.permute.xlu0 %289
      %293 = vset.pattern.permute.xlu0 0
      %294 = vperm.xlu0 %293, %v268
      %v295 = vpop.permute.xlu0 %294
      %298 = vset.pattern.permute.xlu0 0
      %299 = vperm.xlu0 %298, %v269
      %v300 = vpop.permute.xlu0 %299
      %303 = vset.pattern.permute.xlu0 0
      %304 = vperm.xlu0 %303, %v270
      %v305 = vpop.permute.xlu0 %304
      %308 = vset.pattern.permute.xlu0 0
      %309 = vperm.xlu0 %308, %v271
      %v310 = vpop.permute.xlu0 %309
      %vm312 = vcmask 130048
      %v314 = vsel %vm312, %v231, 0
      %v317 = vsel %vm312, %v233, 0
      %v320 = vsel %vm312, %v235, 0
      %v323 = vsel %vm312, %v237, 0
      %v326 = vsel %vm312, %v239, 0
      %v329 = vsel %vm312, %v241, 0
      %v332 = vsel %vm312, %v243, 0
      %v335 = vsel %vm312, %v245, 0
      %337 = vmatprep.subr.mxu0 0.0
      %338 = vmatpush1.msra.mxu0 %v246
      %339 = vmatprep.subr.mxu0 0.0
      %340 = vmatpush1.msra.mxu0 %v247
      %341 = vmatprep.subr.mxu0 0.0
      %342 = vmatpush1.msra.mxu0 %v248
      %343 = vmatprep.subr.mxu0 0.0
      %344 = vmatpush1.msra.mxu0 %v249
      %345 = vmatprep.subr.mxu0 0.0
      %346 = vmatpush1.msra.mxu0 %v250
      %347 = vmatprep.subr.mxu0 0.0
      %348 = vmatpush1.msra.mxu0 %v251
      %349 = vmatprep.subr.mxu0 0.0
      %350 = vmatpush1.msra.mxu0 %v252
      %351 = vmatprep.subr.mxu0 0.0
      %352 = vmatpush1.msra.mxu0 %v253
      %353 = vmatprep.subr.mxu0 0.0
      %354 = vmatpush1.msra.mxu0 %v254
      %355 = vmatprep.subr.mxu0 0.0
      %356 = vmatpush1.msra.mxu0 %v255
      %357 = vmatprep.subr.mxu0 0.0
      %358 = vmatpush1.msra.mxu0 %v256
      %359 = vmatprep.subr.mxu0 0.0
      %360 = vmatpush1.msra.mxu0 %v257
      %361 = vmatprep.subr.mxu0 0.0
      %362 = vmatpush1.msra.mxu0 %v258
      %363 = vmatprep.subr.mxu0 0.0
      %364 = vmatpush1.msra.mxu0 %v259
      %365 = vmatprep.subr.mxu0 0.0
      %366 = vmatpush1.msra.mxu0 %v260
      %367 = vmatprep.subr.mxu0 0.0
      %368 = vmatpush1.msra.mxu0 %v261
      %369 = vmatprep.subr.mxu0 0.0
      %370 = vmatpush1.msra.mxu0 %v262
      %371 = vmatprep.subr.mxu0 0.0
      %372 = vmatpush1.msra.mxu0 %v263
      %373 = vmatprep.subr.mxu0 0.0
      %374 = vmatpush1.msra.mxu0 0.0
      %375 = vmatprep.subr.mxu0 0.0
      %376 = vmatpush1.msra.mxu0 0.0
      %377 = vmatprep.subr.mxu0 0.0
      %378 = vmatpush1.msra.mxu0 0.0
      %379 = vmatprep.subr.mxu0 0.0
      %380 = vmatpush1.msra.mxu0 0.0
      %381 = vmatprep.subr.mxu0 0.0
      %382 = vmatpush1.msra.mxu0 0.0
      %383 = vmatprep.subr.mxu0 0.0
      %384 = vmatpush1.msra.mxu0 0.0
      %385 = vmatprep.subr.mxu0 0.0
      %386 = vmatpush1.msra.mxu0 0.0
      %387 = vmatprep.subr.mxu0 0.0
      %388 = vmatpush1.msra.mxu0 0.0
      %389 = vmatprep.subr.mxu0 0.0
      %390 = vmatpush1.msra.mxu0 0.0
      %391 = vmatprep.subr.mxu0 0.0
      %392 = vmatpush1.msra.mxu0 0.0
      %393 = vmatprep.subr.mxu0 0.0
      %394 = vmatpush1.msra.mxu0 0.0
      %395 = vmatprep.subr.mxu0 0.0
      %396 = vmatpush1.msra.mxu0 0.0
      %397 = vmatprep.subr.mxu0 0.0
      %398 = vmatpush1.msra.mxu0 0.0
      %399 = vmatprep.subr.mxu0 0.0
      %400 = vmatpush1.msra.mxu0 0.0
      %401 = vmatprep.mubr.f32.mxu0 %v314
      %402 = vmatmul.mubr.f32.gmra.mrb[0].mxu0 %v230
      %v403 = vpop.f32.mrb[0].mxu0
      %v404 = vadd.f32 %v275, %v403
      %v405 = vpop.f32.mrb[0].mxu0
      %406 = vmatprep.mubr.f32.mxu0 %v317
      %407 = vmatmul.mubr.f32.gmra.mrb[0].mxu0 %v232
      %v408 = vpop.f32.mrb[0].mxu0
      %v409 = vadd.f32 %v280, %v408
      %v410 = vpop.f32.mrb[0].mxu0
      %411 = vmatprep.mubr.f32.mxu0 %v320
      %412 = vmatmul.mubr.f32.gmra.mrb[0].mxu0 %v234
      %v413 = vpop.f32.mrb[0].mxu0
      %v414 = vadd.f32 %v285, %v413
      %v415 = vpop.f32.mrb[0].mxu0
      %416 = vmatprep.mubr.f32.mxu0 %v323
      %417 = vmatmul.mubr.f32.gmra.mrb[0].mxu0 %v236
      %v418 = vpop.f32.mrb[0].mxu0
      %v419 = vadd.f32 %v290, %v418
      %v420 = vpop.f32.mrb[0].mxu0
      %421 = vmatprep.mubr.f32.mxu0 %v326
      %422 = vmatmul.mubr.f32.gmra.mrb[0].mxu0 %v238
      %v423 = vpop.f32.mrb[0].mxu0
      %v424 = vadd.f32 %v295, %v423
      %v425 = vpop.f32.mrb[0].mxu0
      %426 = vmatprep.mubr.f32.mxu0 %v329
      %427 = vmatmul.mubr.f32.gmra.mrb[0].mxu0 %v240
      %v428 = vpop.f32.mrb[0].mxu0
      %v429 = vadd.f32 %v300, %v428
      %v430 = vpop.f32.mrb[0].mxu0
      %431 = vmatprep.mubr.f32.mxu0 %v332
      %432 = vmatmul.mubr.f32.gmra.mrb[0].mxu0 %v242
      %v433 = vpop.f32.mrb[0].mxu0
      %v434 = vadd.f32 %v305, %v433
      %v435 = vpop.f32.mrb[0].mxu0
      %436 = vmatprep.mubr.f32.mxu0 %v335
      %437 = vmatmul.mubr.f32.gmra.mrb[0].mxu0 %v244
      %v438 = vpop.f32.mrb[0].mxu0
      %v439 = vadd.f32 %v310, %v438
      %v440 = vpop.f32.mrb[0].mxu0
      %441 = vdwg.mxu0
      %s442 = sld [smem:[#allocation2]]
      %vm443 = vcmp.ge.f32.partialorder %v404, 0.0
      %vm444 = vcmp.ge.f32.partialorder %v409, 0.0
      %vm445 = vcmp.ge.f32.partialorder %v414, 0.0
      %vm446 = vcmp.ge.f32.partialorder %v419, 0.0
      %vm447 = vcmp.ge.f32.partialorder %v424, 0.0
      %vm448 = vcmp.ge.f32.partialorder %v429, 0.0
      %vm449 = vcmp.ge.f32.partialorder %v434, 0.0
      %vm450 = vcmp.ge.f32.partialorder %v439, 0.0
      %v451 = vstv %s442
      %v452 = vmul.f32 %v451, %v404
      %v453 = vmul.f32 %v451, %v409
      %v454 = vmul.f32 %v451, %v414
      %v455 = vmul.f32 %v451, %v419
      %v456 = vmul.f32 %v451, %v424
      %v457 = vmul.f32 %v451, %v429
      %v458 = vmul.f32 %v451, %v434
      %v459 = vmul.f32 %v451, %v439
      %v460 = vsel %vm443, %v404, %v452
      %v461 = vsel %vm444, %v409, %v453
      %v462 = vsel %vm445, %v414, %v454
      %v463 = vsel %vm446, %v419, %v455
      %v464 = vsel %vm447, %v424, %v456
      %v465 = vsel %vm448, %v429, %v457
      %v466 = vsel %vm449, %v434, %v458
      %v467 = vsel %vm450, %v439, %v459
      %vm468 = vcmask 523264
      %469 = vst.msk [vmem:[%s229] sm:$0xff] %vm468, %v460
      %470 = vst.msk [vmem:[%s229 + $0x8] sm:$0xff] %vm468, %v461
      %471 = vst.msk [vmem:[%s229 + $0x10] sm:$0xff] %vm468, %v462
      %472 = vst.msk [vmem:[%s229 + $0x18] sm:$0xff] %vm468, %v463
      %473 = vst.msk [vmem:[%s229 + $0x20] sm:$0xff] %vm468, %v464
      %474 = vst.msk [vmem:[%s229 + $0x28] sm:$0xff] %vm468, %v465
      %475 = vst.msk [vmem:[%s229 + $0x30] sm:$0xff] %vm468, %v466
      %476 = vst.msk [vmem:[%s229 + $0x38] sm:$0xff] %vm468, %v467
      %p477 = scmp.lt.s32.totalorder %s20, 1
      %s478 = scalar_select %p477, %s20, 1
      %p479 = scmp.lt.s32.totalorder %s21, 0
      %s480 = scalar_select %p479, %s21, 0
      %s481 = smul.addr %s478, 8
      %s482 = sadd.s32 %s480, %s481
      %s483 = smul.addr %s482, 8
      %s484 = scalar_lea.vmem %s4, %s483
      // Predicated region
      $region37: #{laean_forward.33} parent=35 // pred_check
        %p485 = pneg %p139
      $region38: #{laean_forward.33} parent=35 // pred_check_branch
        %487 = sbr.rel (%p485) target = $region40
      $region39: #{laean_forward.33} parent=35 // pred_region
        _
      $region40: #{laean_forward.33} parent=35 // pred_fallthru
        _
    $region36: #{laean_forward.33} parent=5 // pred_fallthru
      _
    %p488 = scmp.le.s32.totalorder 2, %s11
    // Predicated region
    $region41: #{laean_forward.33} parent=5 // pred_check
      %p489 = pneg %p488
    $region42: #{laean_forward.33} parent=5 // pred_check_branch
      %491 = sbr.rel (%p489) target = $region44
    $region43: #{laean_forward.33} parent=5 // pred_region
      %s492 = ssub.s32 %s11, 2
      // Predicated region
      $region45: #{laean_forward.33} parent=43 // pred_check
        %p493 = pneg %p145
      $region46: #{laean_forward.33} parent=43 // pred_check_branch
        %495 = sbr.rel (%p493) target = $region48
      $region47: #{laean_forward.33} parent=43 // pred_region
        %p496 = scmp.lt.s32.totalorder %s22, 1
        %s497 = scalar_select %p496, %s22, 1
        %p498 = scmp.lt.s32.totalorder %s23, 0
        %s499 = scalar_select %p498, %s23, 0
        %s500 = smul.addr %s497, 8
        %s501 = sadd.s32 %s499, %s500
        %s502 = smul.addr %s501, 8
        %s503 = scalar_lea.vmem %s4, %s502
      $region48: #{laean_forward.33} parent=43 // pred_fallthru
        _
    $region44: #{laean_forward.33} parent=5 // pred_fallthru
      _
  $region6: #{laean_forward.33} parent=0 // loop_footer
    %s15 = sadd.s32 1, %s11
  $region7: #{laean_forward.33} parent=0 // loop_footer_branch
    %10 = sbr.rel target = $region3
  $region8: #{laean_forward.33} parent=0 // loop_exit
    _

// kernel: laean_forward.34
$region0: #{laean_forward.34}
  #allocation0 [shape = 'u32[]', space=smem, size = 0x4, offset = 0x4, fixed_abs, tag = 'smem constant byte address 0x4 - core index']
  #allocation1 [shape = 'u32[144,128]{1,0:T(1,128)}', space=vmem, size = 0x12000, scoped, tag = 'internal scratch']
  #allocation2 [shape = 'f32[1]{0:T(128)S(6)}', space=smem, size = 0x200, scoped, tag = 'scoped memory for laean_forward.34']
  %s0 = inlined_call_operand.vmem [shape: f32[2,576,64], index: 0, kind: input, shape index: {}]
  %s1 = inlined_call_operand.vmem [shape: f32[16,576], index: 1, kind: input, shape index: {}]
  %s2 = inlined_call_operand.vmem [shape: f32[16,1], index: 2, kind: input, shape index: {}]
  %s3 = inlined_call_operand.<no memory space> [shape: f32[1], index: 3, kind: input, shape index: {}]
  %s4 = inlined_call_operand.vmem [shape: f32[2,16,64], index: 4, kind: output, shape index: {}]
  %s5 = sld [smem:[#allocation0]]
  $region49: #{laean_forward.34} parent=0
    _
  %s7 = ssub.s32 1, %s5
  %s8 = scalar_select 0, %s7, %s5
  %9 = sst [smem:[#allocation2]] %s3
  loop: start=0, step=1, limit=4
  $region2: #{laean_forward.34} parent=0 // loop_pre_header
    _
  $region3: #{laean_forward.34} parent=0 // loop_header
    %s11 = sphi 0, %s15
    %p12 = scmp.ge.s32.totalorder %s11, 4
    %s18 = sphi 0, %s30
    %s19 = sphi 0, %s26
    %s20 = sphi 0, %s18
    %s21 = sphi 0, %s19
    %s22 = sphi 0, %s20
    %s23 = sphi 0, %s21
    %s35 = sphi 0, %s37
    %s38 = sphi 0, %s35
    %s39 = sphi 0, %s38
    %s55 = sphi 0, %s39
    %s59 = sphi 0, %s59
    %s61 = sphi 0, %s59
    %s62 = sphi 0, %s61
    %s76 = sphi 0, %s62
    %s80 = sphi 0, %s80
    %s82 = sphi 0, %s80
    %s83 = sphi 0, %s82
    %s97 = sphi 0, %s83
    %s101 = sphi 0, %s101
    %s103 = sphi 0, %s101
    %s104 = sphi 0, %s103
    %s118 = sphi 0, %s104
    %s126 = sphi 0, %s128
    %s129 = sphi 0, %s126
    %s130 = sphi 0, %s129
    %s146 = sphi 0, %s130
  $region4: #{laean_forward.34} parent=0 // loop_header_branch
    %14 = sbr.rel (%p12) target = $region8
  $region5: #{laean_forward.34} parent=0 // loop_body
    %s16 = ssub.s32 %s11, 1
    %s17 = ssub.s32 %s11, 2
    %s24 = sadd.s32 1, %s19
    %p25 = scmp.ge.s32.totalorder %s24, 1
    %s26 = scalar_select %p25, 0, %s24
    %s27 = sadd.s32 1, %s18
    %s28 = scalar_select %p25, %s27, %s18
    %p29 = scmp.ge.s32.totalorder %s28, 2
    %s30 = scalar_select %p29, 0, %s28
    %s31 = ssub.s32 %s18, %s30
    %s32 = ssub.s32 %s19, %s26
    %s33 = sor.u32 %s31, %s32
    %p34 = scmp.eq.s32.totalorder %s33, 0
    %s36 = sadd.s32 %s35, 1
    %s37 = scalar_select %p34, %s35, %s36
    %p40 = pneg %p34
    %p41 = scmp.eq.s32.totalorder %s11, 1
    %p42 = por %p40, %p41
    %p43 = scmp.ne.s32.totalorder %s35, %s38
    %p44 = scmp.eq.s32.totalorder %s11, 0
    %p45 = por %p43, %p44
    %p46 = scmp.ne.s32.totalorder %s35, %s38
    %p47 = scmp.eq.s32.totalorder %s16, 1
    %p48 = por %p46, %p47
    %p49 = scmp.ne.s32.totalorder %s38, %s39
    %p50 = scmp.eq.s32.totalorder %s16, 0
    %p51 = por %p49, %p50
    %p52 = scmp.ne.s32.totalorder %s38, %s39
    %p53 = scmp.eq.s32.totalorder %s17, 1
    %p54 = por %p52, %p53
    %p56 = scmp.ne.s32.totalorder %s39, %s55
    %p57 = scmp.eq.s32.totalorder %s17, 0
    %p58 = por %p56, %p57
    %s60 = sadd.s32 %s59, 1
    %p63 = scmp.eq.s32.totalorder %s11, 1
    %p64 = scmp.ne.s32.totalorder %s59, %s61
    %p65 = scmp.eq.s32.totalorder %s11, 0
    %p66 = por %p64, %p65
    %p67 = scmp.ne.s32.totalorder %s59, %s61
    %p68 = scmp.eq.s32.totalorder %s16, 1
    %p69 = por %p67, %p68
    %p70 = scmp.ne.s32.totalorder %s61, %s62
    %p71 = scmp.eq.s32.totalorder %s16, 0
    %p72 = por %p70, %p71
    %p73 = scmp.ne.s32.totalorder %s61, %s62
    %p74 = scmp.eq.s32.totalorder %s17, 1
    %p75 = por %p73, %p74
    %p77 = scmp.ne.s32.totalorder %s62, %s76
    %p78 = scmp.eq.s32.totalorder %s17, 0
    %p79 = por %p77, %p78
    %s81 = sadd.s32 %s80, 1
    %p84 = scmp.eq.s32.totalorder %s11, 1
    %p85 = scmp.ne.s32.totalorder %s80, %s82
    %p86 = scmp.eq.s32.totalorder %s11, 0
    %p87 = por %p85, %p86
    %p88 = scmp.ne.s32.totalorder %s80, %s82
    %p89 = scmp.eq.s32.totalorder %s16, 1
    %p90 = por %p88, %p89
    %p91 = scmp.ne.s32.totalorder %s82, %s83
    %p92 = scmp.eq.s32.totalorder %s16, 0
    %p93 = por %p91, %p92
    %p94 = scmp.ne.s32.totalorder %s82, %s83
    %p95 = scmp.eq.s32.totalorder %s17, 1
    %p96 = por %p94, %p95
    %p98 = scmp.ne.s32.totalorder %s83, %s97
    %p99 = scmp.eq.s32.totalorder %s17, 0
    %p100 = por %p98, %p99
    %s102 = sadd.s32 %s101, 1
    %p105 = scmp.eq.s32.totalorder %s11, 1
    %p106 = scmp.ne.s32.totalorder %s101, %s103
    %p107 = scmp.eq.s32.totalorder %s11, 0
    %p108 = por %p106, %p107
    %p109 = scmp.ne.s32.totalorder %s101, %s103
    %p110 = scmp.eq.s32.totalorder %s16, 1
    %p111 = por %p109, %p110
    %p112 = scmp.ne.s32.totalorder %s103, %s104
    %p113 = scmp.eq.s32.totalorder %s16, 0
    %p114 = por %p112, %p113
    %p115 = scmp.ne.s32.totalorder %s103, %s104
    %p116 = scmp.eq.s32.totalorder %s17, 1
    %p117 = por %p115, %p116
    %p119 = scmp.ne.s32.totalorder %s104, %s118
    %p120 = scmp.eq.s32.totalorder %s17, 0
    %p121 = por %p119, %p120
    %s122 = ssub.s32 %s18, %s30
    %s123 = ssub.s32 %s19, %s26
    %s124 = sor.u32 %s122, %s123
    %p125 = scmp.eq.s32.totalorder %s124, 0
    %s127 = sadd.s32 %s126, 1
    %s128 = scalar_select %p125, %s126, %s127
    %p131 = pneg %p125
    %p132 = scmp.eq.s32.totalorder %s11, 1
    %p133 = por %p131, %p132
    %p134 = scmp.ne.s32.totalorder %s126, %s129
    %p135 = scmp.eq.s32.totalorder %s11, 0
    %p136 = por %p134, %p135
    %p137 = scmp.ne.s32.totalorder %s126, %s129
    %p138 = scmp.eq.s32.totalorder %s16, 1
    %p139 = por %p137, %p138
    %p140 = scmp.ne.s32.totalorder %s129, %s130
    %p141 = scmp.eq.s32.totalorder %s16, 0
    %p142 = por %p140, %p141
    %p143 = scmp.ne.s32.totalorder %s129, %s130
    %p144 = scmp.eq.s32.totalorder %s17, 1
    %p145 = por %p143, %p144
    %p147 = scmp.ne.s32.totalorder %s130, %s146
    %p148 = scmp.eq.s32.totalorder %s17, 0
    %p149 = por %p147, %p148
    %p150 = scmp.le.s32.totalorder 1, %s11
    %p151 = scmp.lt.s32.totalorder %s11, 3
    %p152 = pnand %p150, %p151
    %p153 = pneg %p152
    // Predicated region
    $region9: #{laean_forward.34} parent=5 // pred_check
      _
    $region10: #{laean_forward.34} parent=5 // pred_check_branch
      %155 = sbr.rel (%p152) target = $region12
    $region11: #{laean_forward.34} parent=5 // pred_region
      %s156 = ssub.s32 %s11, 1
      // Predicated region
      $region13: #{laean_forward.34} parent=11 // pred_check
        %p157 = pneg %p72
      $region14: #{laean_forward.34} parent=11 // pred_check_branch
        %159 = sbr.rel (%p157) target = $region16
      $region15: #{laean_forward.34} parent=11 // pred_region
        _
      $region16: #{laean_forward.34} parent=11 // pred_fallthru
        _
      // Predicated region
      $region17: #{laean_forward.34} parent=11 // pred_check
        %p160 = pneg %p93
      $region18: #{laean_forward.34} parent=11 // pred_check_branch
        %162 = sbr.rel (%p160) target = $region20
      $region19: #{laean_forward.34} parent=11 // pred_region
        _
      $region20: #{laean_forward.34} parent=11 // pred_fallthru
        _
      // Predicated region
      $region21: #{laean_forward.34} parent=11 // pred_check
        %p163 = pneg %p114
      $region22: #{laean_forward.34} parent=11 // pred_check_branch
        %165 = sbr.rel (%p163) target = $region24
      $region23: #{laean_forward.34} parent=11 // pred_region
        _
      $region24: #{laean_forward.34} parent=11 // pred_fallthru
        _
    $region12: #{laean_forward.34} parent=5 // pred_fallthru
      _
    %p166 = scmp.lt.s32.totalorder %s11, 2
    // Predicated region
    $region25: #{laean_forward.34} parent=5 // pred_check
      %p167 = pneg %p166
    $region26: #{laean_forward.34} parent=5 // pred_check_branch
      %169 = sbr.rel (%p167) target = $region28
    $region27: #{laean_forward.34} parent=5 // pred_region
      // Predicated region
      $region29: #{laean_forward.34} parent=27 // pred_check
        %p170 = pneg %p45
      $region30: #{laean_forward.34} parent=27 // pred_check_branch
        %172 = sbr.rel (%p170) target = $region32
      $region31: #{laean_forward.34} parent=27 // pred_region
        %p173 = scmp.lt.s32.totalorder %s18, 1
        %s174 = scalar_select %p173, %s18, 1
        %p175 = scmp.lt.s32.totalorder %s19, 0
        %s176 = scalar_select %p175, %s19, 0
        %s177 = smul.addr %s174, 72
        %s178 = sadd.s32 %s176, %s177
        %s179 = smul.addr %s178, 8
        %s180 = scalar_lea.vmem %s0, %s179
      $region32: #{laean_forward.34} parent=27 // pred_fallthru
        _
    $region28: #{laean_forward.34} parent=5 // pred_fallthru
      _
    %p181 = scmp.le.s32.totalorder 1, %s11
    %p182 = scmp.lt.s32.totalorder %s11, 3
    %p183 = pnand %p181, %p182
    %p184 = pneg %p183
    // Predicated region
    $region33: #{laean_forward.34} parent=5 // pred_check
      _
    $region34: #{laean_forward.34} parent=5 // pred_check_branch
      %186 = sbr.rel (%p183) target = $region36
    $region35: #{laean_forward.34} parent=5 // pred_region
      %s187 = ssub.s32 %s11, 1
      %p188 = scmp.lt.s32.totalorder %s20, 1
      %s189 = scalar_select %p188, %s20, 1
      %p190 = scmp.lt.s32.totalorder %s21, 0
      %s191 = scalar_select %p190, %s21, 0
      %s192 = smul.addr %s189, 72
      %s193 = sadd.s32 %s191, %s192
      %s194 = smul.addr %s193, 8
      %s195 = scalar_lea.vmem %s0, %s194
      %p196 = pneg %p51
      %p197 = pneg %p48
      %p198 = pneg %p72
      %p199 = pneg %p69
      %p200 = pneg %p93
      %p201 = pneg %p90
      %p202 = pneg %p114
      %p203 = pneg %p111
      %p204 = pneg %p142
      %p205 = pneg %p139
      %p206 = scmp.lt.s32.totalorder %s20, 1
      %s207 = scalar_select %p206, %s20, 1
      %p208 = scmp.lt.s32.totalorder %s21, 0
      %s209 = scalar_select %p208, %s21, 0
      %s210 = smul.addr %s207, 2
      %s211 = sadd.s32 %s209, %s210
      %s212 = smul.addr %s211, 8
      %s213 = scalar_lea.vmem %s4, %s212
      %p214 = scmp.lt.s32.totalorder %s20, 1
      %s215 = scalar_select %p214, %s20, 1
      %p216 = scmp.lt.s32.totalorder %s21, 0
      %s217 = scalar_select %p216, %s21, 0
      %s218 = smul.addr %s215, 72
      %s219 = sadd.s32 %s217, %s218
      %s220 = smul.addr %s219, 8
      %s221 = scalar_lea.vmem %s0, %s220
      %p222 = scmp.lt.s32.totalorder %s20, 1
      %s223 = scalar_select %p222, %s20, 1
      %p224 = scmp.lt.s32.totalorder %s21, 0
      %s225 = scalar_select %p224, %s21, 0
      %s226 = smul.addr %s223, 2
      %s227 = sadd.s32 %s225, %s226
      %s228 = smul.addr %s227, 8
      %s229 = scalar_lea.vmem %s4, %s228
      %v230 = vld [vmem:[%s1] sm:$0xff]
      %v231 = vld [vmem:[%s1 + $0x8] sm:$0xff]
      %v232 = vld [vmem:[%s1 + $0x10] sm:$0xff]
      %v233 = vld [vmem:[%s1 + $0x18] sm:$0xff]
      %v234 = vld [vmem:[%s1 + $0x20] sm:$0xff]
      %v235 = vld [vmem:[%s1 + $0x28] sm:$0xff]
      %v236 = vld [vmem:[%s1 + $0x30] sm:$0xff]
      %v237 = vld [vmem:[%s1 + $0x38] sm:$0xff]
      %v238 = vld [vmem:[%s1 + $0x40] sm:$0xff]
      %v239 = vld [vmem:[%s1 + $0x48] sm:$0xff]
      %v240 = vld [vmem:[%s221] sm:$0xff]
      %v241 = vld [vmem:[%s221 + $0x8] sm:$0xff]
      %v242 = vld [vmem:[%s221 + $0x10] sm:$0xff]
      %v243 = vld [vmem:[%s221 + $0x18] sm:$0xff]
      %v244 = vld [vmem:[%s221 + $0x20] sm:$0xff]
      %v245 = vld [vmem:[%s221 + $0x28] sm:$0xff]
      %v246 = vld [vmem:[%s221 + $0x30] sm:$0xff]
      %v247 = vld [vmem:[%s221 + $0x38] sm:$0xff]
      %v248 = vld [vmem:[%s221 + $0x40] sm:$0xff]
      %v249 = vld [vmem:[%s221 + $0x48] sm:$0xff]
      %v250 = vld [vmem:[%s221 + $0x50] sm:$0xff]
      %v251 = vld [vmem:[%s221 + $0x58] sm:$0xff]
      %v252 = vld [vmem:[%s221 + $0x60] sm:$0xff]
      %v253 = vld [vmem:[%s221 + $0x68] sm:$0xff]
      %v254 = vld [vmem:[%s221 + $0x70] sm:$0xff]
      %v255 = vld [vmem:[%s221 + $0x78] sm:$0xff]
      %v256 = vld [vmem:[%s221 + $0x80] sm:$0xff]
      %v257 = vld [vmem:[%s221 + $0x88] sm:$0xff]
      %v258 = vld [vmem:[%s221 + $0x90] sm:$0xff]
      %v259 = vld [vmem:[%s221 + $0x98] sm:$0xff]
      %v260 = vld [vmem:[%s221 + $0xa0] sm:$0xff]
      %v261 = vld [vmem:[%s221 + $0xa8] sm:$0xff]
      %v262 = vld [vmem:[%s221 + $0xb0] sm:$0xff]
      %v263 = vld [vmem:[%s221 + $0xb8] sm:$0xff]
      %v264 = vld [vmem:[%s221 + $0xc0] sm:$0xff]
      %v265 = vld [vmem:[%s221 + $0xc8] sm:$0xff]
      %v266 = vld [vmem:[%s221 + $0xd0] sm:$0xff]
      %v267 = vld [vmem:[%s221 + $0xd8] sm:$0xff]
      %v268 = vld [vmem:[%s221 + $0xe0] sm:$0xff]
      %v269 = vld [vmem:[%s221 + $0xe8] sm:$0xff]
      %v270 = vld [vmem:[%s221 + $0xf0] sm:$0xff]
      %v271 = vld [vmem:[%s221 + $0xf8] sm:$0xff]
      %v272 = vld [vmem:[%s221 + $0x100] sm:$0xff]
      %v273 = vld [vmem:[%s221 + $0x108] sm:$0xff]
      %v274 = vld [vmem:[%s221 + $0x110] sm:$0xff]
      %v275 = vld [vmem:[%s221 + $0x118] sm:$0xff]
      %v276 = vld [vmem:[%s221 + $0x120] sm:$0xff]
      %v277 = vld [vmem:[%s221 + $0x128] sm:$0xff]
      %v278 = vld [vmem:[%s221 + $0x130] sm:$0xff]
      %v279 = vld [vmem:[%s221 + $0x138] sm:$0xff]
      %v280 = vld [vmem:[%s221 + $0x140] sm:$0xff]
      %v281 = vld [vmem:[%s221 + $0x148] sm:$0xff]
      %v282 = vld [vmem:[%s221 + $0x150] sm:$0xff]
      %v283 = vld [vmem:[%s221 + $0x158] sm:$0xff]
      %v284 = vld [vmem:[%s221 + $0x160] sm:$0xff]
      %v285 = vld [vmem:[%s221 + $0x168] sm:$0xff]
      %v286 = vld [vmem:[%s221 + $0x170] sm:$0xff]
      %v287 = vld [vmem:[%s221 + $0x178] sm:$0xff]
      %v288 = vld [vmem:[%s221 + $0x180] sm:$0xff]
      %v289 = vld [vmem:[%s221 + $0x188] sm:$0xff]
      %v290 = vld [vmem:[%s221 + $0x190] sm:$0xff]
      %v291 = vld [vmem:[%s221 + $0x198] sm:$0xff]
      %v292 = vld [vmem:[%s221 + $0x1a0] sm:$0xff]
      %v293 = vld [vmem:[%s221 + $0x1a8] sm:$0xff]
      %v294 = vld [vmem:[%s221 + $0x1b0] sm:$0xff]
      %v295 = vld [vmem:[%s221 + $0x1b8] sm:$0xff]
      %v296 = vld [vmem:[%s221 + $0x1c0] sm:$0xff]
      %v297 = vld [vmem:[%s221 + $0x1c8] sm:$0xff]
      %v298 = vld [vmem:[%s221 + $0x1d0] sm:$0xff]
      %v299 = vld [vmem:[%s221 + $0x1d8] sm:$0xff]
      %v300 = vld [vmem:[%s221 + $0x1e0] sm:$0xff]
      %v301 = vld [vmem:[%s221 + $0x1e8] sm:$0xff]
      %v302 = vld [vmem:[%s221 + $0x1f0] sm:$0xff]
      %v303 = vld [vmem:[%s221 + $0x1f8] sm:$0xff]
      %v304 = vld [vmem:[%s221 + $0x200] sm:$0xff]
      %v305 = vld [vmem:[%s221 + $0x208] sm:$0xff]
      %v306 = vld [vmem:[%s221 + $0x210] sm:$0xff]
      %v307 = vld [vmem:[%s221 + $0x218] sm:$0xff]
      %v308 = vld [vmem:[%s221 + $0x220] sm:$0xff]
      %v309 = vld [vmem:[%s221 + $0x228] sm:$0xff]
      %v310 = vld [vmem:[%s221 + $0x230] sm:$0xff]
      %v311 = vld [vmem:[%s221 + $0x238] sm:$0xff]
      %v312 = vld [vmem:[%s2] sm:$0xff]
      %v313 = vld [vmem:[%s2 + $0x8] sm:$0xff]
      %315 = vset.pattern.permute.xlu0 0
      %316 = vperm.xlu0 %315, %v312
      %v317 = vpop.permute.xlu0 %316
      %320 = vset.pattern.permute.xlu0 0
      %321 = vperm.xlu0 %320, %v313
      %v322 = vpop.permute.xlu0 %321
      %vm324 = vcmask 523264
      %v326 = vsel %vm324, %v234, 0
      %v329 = vsel %vm324, %v239, 0
      %331 = vmatprep.subr.mxu0 0.0
      %332 = vmatpush1.msra.mxu0 %v240
      %333 = vmatprep.subr.mxu0 0.0
      %334 = vmatpush1.msra.mxu0 %v241
      %335 = vmatprep.subr.mxu0 0.0
      %336 = vmatpush1.msra.mxu0 %v242
      %337 = vmatprep.subr.mxu0 0.0
      %338 = vmatpush1.msra.mxu0 %v243
      %339 = vmatprep.subr.mxu0 0.0
      %340 = vmatpush1.msra.mxu0 %v244
      %341 = vmatprep.subr.mxu0 0.0
      %342 = vmatpush1.msra.mxu0 %v245
      %343 = vmatprep.subr.mxu0 0.0
      %344 = vmatpush1.msra.mxu0 %v246
      %345 = vmatprep.subr.mxu0 0.0
      %346 = vmatpush1.msra.mxu0 %v247
      %347 = vmatprep.subr.mxu0 0.0
      %348 = vmatpush1.msra.mxu0 %v248
      %349 = vmatprep.subr.mxu0 0.0
      %350 = vmatpush1.msra.mxu0 %v249
      %351 = vmatprep.subr.mxu0 0.0
      %352 = vmatpush1.msra.mxu0 %v250
      %353 = vmatprep.subr.mxu0 0.0
      %354 = vmatpush1.msra.mxu0 %v251
      %355 = vmatprep.subr.mxu0 0.0
      %356 = vmatpush1.msra.mxu0 %v252
      %357 = vmatprep.subr.mxu0 0.0
      %358 = vmatpush1.msra.mxu0 %v253
      %359 = vmatprep.subr.mxu0 0.0
      %360 = vmatpush1.msra.mxu0 %v254
      %361 = vmatprep.subr.mxu0 0.0
      %362 = vmatpush1.msra.mxu0 %v255
      %363 = vmatprep.subr.mxu0 0.0
      %364 = vmatpush1.msra.mxu0 %v256
      %365 = vmatprep.subr.mxu0 0.0
      %366 = vmatpush1.msra.mxu0 %v257
      %367 = vmatprep.subr.mxu0 0.0
      %368 = vmatpush1.msra.mxu0 %v258
      %369 = vmatprep.subr.mxu0 0.0
      %370 = vmatpush1.msra.mxu0 %v259
      %371 = vmatprep.subr.mxu0 0.0
      %372 = vmatpush1.msra.mxu0 %v260
      %373 = vmatprep.subr.mxu0 0.0
      %374 = vmatpush1.msra.mxu0 %v261
      %375 = vmatprep.subr.mxu0 0.0
      %376 = vmatpush1.msra.mxu0 %v262
      %377 = vmatprep.subr.mxu0 0.0
      %378 = vmatpush1.msra.mxu0 %v263
      %379 = vmatprep.subr.mxu0 0.0
      %380 = vmatpush1.msra.mxu0 %v264
      %381 = vmatprep.subr.mxu0 0.0
      %382 = vmatpush1.msra.mxu0 %v265
      %383 = vmatprep.subr.mxu0 0.0
      %384 = vmatpush1.msra.mxu0 %v266
      %385 = vmatprep.subr.mxu0 0.0
      %386 = vmatpush1.msra.mxu0 %v267
      %387 = vmatprep.subr.mxu0 0.0
      %388 = vmatpush1.msra.mxu0 %v268
      %389 = vmatprep.subr.mxu0 0.0
      %390 = vmatpush1.msra.mxu0 %v269
      %391 = vmatprep.subr.mxu0 0.0
      %392 = vmatpush1.msra.mxu0 %v270
      %393 = vmatprep.subr.mxu0 0.0
      %394 = vmatpush1.msra.mxu0 %v271
      %395 = vmatprep.mubr.f32.mxu0 %v231
      %396 = vmatmul.mubr.f32.gmra.mrb[0].mxu0 %v230
      %v397 = vpop.f32.mrb[0].mxu0
      %v398 = vadd.f32 %v317, %v397
      %v399 = vpop.f32.mrb[0].mxu0
      %400 = vmatprep.mubr.f32.mxu0 %v236
      %401 = vmatmul.mubr.f32.gmra.mrb[0].mxu0 %v235
      %v402 = vpop.f32.mrb[0].mxu0
      %v403 = vadd.f32 %v322, %v402
      %v404 = vpop.f32.mrb[0].mxu0
      %405 = vdwg.mxu0
      %406 = vmatprep.subr.mxu0 0.0
      %407 = vmatpush1.msra.mxu0 %v272
      %408 = vmatprep.subr.mxu0 0.0
      %409 = vmatpush1.msra.mxu0 %v273
      %410 = vmatprep.subr.mxu0 0.0
      %411 = vmatpush1.msra.mxu0 %v274
      %412 = vmatprep.subr.mxu0 0.0
      %413 = vmatpush1.msra.mxu0 %v275
      %414 = vmatprep.subr.mxu0 0.0
      %415 = vmatpush1.msra.mxu0 %v276
      %416 = vmatprep.subr.mxu0 0.0
      %417 = vmatpush1.msra.mxu0 %v277
      %418 = vmatprep.subr.mxu0 0.0
      %419 = vmatpush1.msra.mxu0 %v278
      %420 = vmatprep.subr.mxu0 0.0
      %421 = vmatpush1.msra.mxu0 %v279
      %422 = vmatprep.subr.mxu0 0.0
      %423 = vmatpush1.msra.mxu0 %v280
      %424 = vmatprep.subr.mxu0 0.0
      %425 = vmatpush1.msra.mxu0 %v281
      %426 = vmatprep.subr.mxu0 0.0
      %427 = vmatpush1.msra.mxu0 %v282
      %428 = vmatprep.subr.mxu0 0.0
      %429 = vmatpush1.msra.mxu0 %v283
      %430 = vmatprep.subr.mxu0 0.0
      %431 = vmatpush1.msra.mxu0 %v284
      %432 = vmatprep.subr.mxu0 0.0
      %433 = vmatpush1.msra.mxu0 %v285
      %434 = vmatprep.subr.mxu0 0.0
      %435 = vmatpush1.msra.mxu0 %v286
      %436 = vmatprep.subr.mxu0 0.0
      %437 = vmatpush1.msra.mxu0 %v287
      %438 = vmatprep.subr.mxu0 0.0
      %439 = vmatpush1.msra.mxu0 %v288
      %440 = vmatprep.subr.mxu0 0.0
      %441 = vmatpush1.msra.mxu0 %v289
      %442 = vmatprep.subr.mxu0 0.0
      %443 = vmatpush1.msra.mxu0 %v290
      %444 = vmatprep.subr.mxu0 0.0
      %445 = vmatpush1.msra.mxu0 %v291
      %446 = vmatprep.subr.mxu0 0.0
      %447 = vmatpush1.msra.mxu0 %v292
      %448 = vmatprep.subr.mxu0 0.0
      %449 = vmatpush1.msra.mxu0 %v293
      %450 = vmatprep.subr.mxu0 0.0
      %451 = vmatpush1.msra.mxu0 %v294
      %452 = vmatprep.subr.mxu0 0.0
      %453 = vmatpush1.msra.mxu0 %v295
      %454 = vmatprep.subr.mxu0 0.0
      %455 = vmatpush1.msra.mxu0 %v296
      %456 = vmatprep.subr.mxu0 0.0
      %457 = vmatpush1.msra.mxu0 %v297
      %458 = vmatprep.subr.mxu0 0.0
      %459 = vmatpush1.msra.mxu0 %v298
      %460 = vmatprep.subr.mxu0 0.0
      %461 = vmatpush1.msra.mxu0 %v299
      %462 = vmatprep.subr.mxu0 0.0
      %463 = vmatpush1.msra.mxu0 %v300
      %464 = vmatprep.subr.mxu0 0.0
      %465 = vmatpush1.msra.mxu0 %v301
      %466 = vmatprep.subr.mxu0 0.0
      %467 = vmatpush1.msra.mxu0 %v302
      %468 = vmatprep.subr.mxu0 0.0
      %469 = vmatpush1.msra.mxu0 %v303
      %470 = vmatprep.mubr.f32.mxu0 %v233
      %471 = vmatmul.mubr.f32.gmra.mrb[0].mxu0 %v232
      %v472 = vpop.f32.mrb[0].mxu0
      %v473 = vadd.f32 %v398, %v472
      %v474 = vpop.f32.mrb[0].mxu0
      %475 = vmatprep.mubr.f32.mxu0 %v238
      %476 = vmatmul.mubr.f32.gmra.mrb[0].mxu0 %v237
      %v477 = vpop.f32.mrb[0].mxu0
      %v478 = vadd.f32 %v403, %v477
      %v479 = vpop.f32.mrb[0].mxu0
      %480 = vdwg.mxu0
      %481 = vmatprep.subr.mxu0 0.0
      %482 = vmatpush1.msra.mxu0 %v304
      %483 = vmatprep.subr.mxu0 0.0
      %484 = vmatpush1.msra.mxu0 %v305
      %485 = vmatprep.subr.mxu0 0.0
      %486 = vmatpush1.msra.mxu0 %v306
      %487 = vmatprep.subr.mxu0 0.0
      %488 = vmatpush1.msra.mxu0 %v307
      %489 = vmatprep.subr.mxu0 0.0
      %490 = vmatpush1.msra.mxu0 %v308
      %491 = vmatprep.subr.mxu0 0.0
      %492 = vmatpush1.msra.mxu0 %v309
      %493 = vmatprep.subr.mxu0 0.0
      %494 = vmatpush1.msra.mxu0 %v310
      %495 = vmatprep.subr.mxu0 0.0
      %496 = vmatpush1.msra.mxu0 %v311
      %497 = vmatprep.subr.mxu0 0.0
      %498 = vmatpush1.msra.mxu0 0.0
      %499 = vmatprep.subr.mxu0 0.0
      %500 = vmatpush1.msra.mxu0 0.0
      %501 = vmatprep.subr.mxu0 0.0
      %502 = vmatpush1.msra.mxu0 0.0
      %503 = vmatprep.subr.mxu0 0.0
      %504 = vmatpush1.msra.mxu0 0.0
      %505 = vmatprep.subr.mxu0 0.0
      %506 = vmatpush1.msra.mxu0 0.0
      %507 = vmatprep.subr.mxu0 0.0
      %508 = vmatpush1.msra.mxu0 0.0
      %509 = vmatprep.subr.mxu0 0.0
      %510 = vmatpush1.msra.mxu0 0.0
      %511 = vmatprep.subr.mxu0 0.0
      %512 = vmatpush1.msra.mxu0 0.0
      %513 = vmatprep.subr.mxu0 0.0
      %514 = vmatpush1.msra.mxu0 0.0
      %515 = vmatprep.subr.mxu0 0.0
      %516 = vmatpush1.msra.mxu0 0.0
      %517 = vmatprep.subr.mxu0 0.0
      %518 = vmatpush1.msra.mxu0 0.0
      %519 = vmatprep.subr.mxu0 0.0
      %520 = vmatpush1.msra.mxu0 0.0
      %521 = vmatprep.subr.mxu0 0.0
      %522 = vmatpush1.msra.mxu0 0.0
      %523 = vmatprep.subr.mxu0 0.0
      %524 = vmatpush1.msra.mxu0 0.0
      %525 = vmatprep.subr.mxu0 0.0
      %526 = vmatpush1.msra.mxu0 0.0
      %527 = vmatprep.subr.mxu0 0.0
      %528 = vmatpush1.msra.mxu0 0.0
      %529 = vmatprep.subr.mxu0 0.0
      %530 = vmatpush1.msra.mxu0 0.0
      %531 = vmatprep.subr.mxu0 0.0
      %532 = vmatpush1.msra.mxu0 0.0
      %533 = vmatprep.subr.mxu0 0.0
      %534 = vmatpush1.msra.mxu0 0.0
      %535 = vmatprep.subr.mxu0 0.0
      %536 = vmatpush1.msra.mxu0 0.0
      %537 = vmatprep.subr.mxu0 0.0
      %538 = vmatpush1.msra.mxu0 0.0
      %539 = vmatprep.subr.mxu0 0.0
      %540 = vmatpush1.msra.mxu0 0.0
      %541 = vmatprep.subr.mxu0 0.0
      %542 = vmatpush1.msra.mxu0 0.0
      %543 = vmatprep.subr.mxu0 0.0
      %544 = vmatpush1.msra.mxu0 0.0
      %545 = vmatprep.mubr.f32.mxu0 0.0
      %546 = vmatmul.mubr.f32.gmra.mrb[0].mxu0 %v326
      %v547 = vpop.f32.mrb[0].mxu0
      %v548 = vadd.f32 %v473, %v547
      %v549 = vpop.f32.mrb[0].mxu0
      %550 = vmatprep.mubr.f32.mxu0 0.0
      %551 = vmatmul.mubr.f32.gmra.mrb[0].mxu0 %v329
      %v552 = vpop.f32.mrb[0].mxu0
      %v553 = vadd.f32 %v478, %v552
      %v554 = vpop.f32.mrb[0].mxu0
      %555 = vdwg.mxu0
      %s556 = sld [smem:[#allocation2]]
      %vm557 = vcmp.ge.f32.partialorder %v548, 0.0
      %vm558 = vcmp.ge.f32.partialorder %v553, 0.0
      %v559 = vstv %s556
      %v560 = vmul.f32 %v559, %v548
      %v561 = vmul.f32 %v559, %v553
      %v562 = vsel %vm557, %v548, %v560
      %v563 = vsel %vm558, %v553, %v561
      %564 = vst.msk [vmem:[%s229] sm:$0xff] %vm324, %v562
      %565 = vst.msk [vmem:[%s229 + $0x8] sm:$0xff] %vm324, %v563
      %p566 = scmp.lt.s32.totalorder %s20, 1
      %s567 = scalar_select %p566, %s20, 1
      %p568 = scmp.lt.s32.totalorder %s21, 0
      %s569 = scalar_select %p568, %s21, 0
      %s570 = smul.addr %s567, 2
      %s571 = sadd.s32 %s569, %s570
      %s572 = smul.addr %s571, 8
      %s573 = scalar_lea.vmem %s4, %s572
      // Predicated region
      $region37: #{laean_forward.34} parent=35 // pred_check
        %p574 = pneg %p139
      $region38: #{laean_forward.34} parent=35 // pred_check_branch
        %576 = sbr.rel (%p574) target = $region40
      $region39: #{laean_forward.34} parent=35 // pred_region
        _
      $region40: #{laean_forward.34} parent=35 // pred_fallthru
        _
    $region36: #{laean_forward.34} parent=5 // pred_fallthru
      _
    %p577 = scmp.le.s32.totalorder 2, %s11
    // Predicated region
    $region41: #{laean_forward.34} parent=5 // pred_check
      %p578 = pneg %p577
    $region42: #{laean_forward.34} parent=5 // pred_check_branch
      %580 = sbr.rel (%p578) target = $region44
    $region43: #{laean_forward.34} parent=5 // pred_region
      %s581 = ssub.s32 %s11, 2
      // Predicated region
      $region45: #{laean_forward.34} parent=43 // pred_check
        %p582 = pneg %p145
      $region46: #{laean_forward.34} parent=43 // pred_check_branch
        %584 = sbr.rel (%p582) target = $region48
      $region47: #{laean_forward.34} parent=43 // pred_region
        %p585 = scmp.lt.s32.totalorder %s22, 1
        %s586 = scalar_select %p585, %s22, 1
        %p587 = scmp.lt.s32.totalorder %s23, 0
        %s588 = scalar_select %p587, %s23, 0
        %s589 = smul.addr %s586, 2
        %s590 = sadd.s32 %s588, %s589
        %s591 = smul.addr %s590, 8
        %s592 = scalar_lea.vmem %s4, %s591
      $region48: #{laean_forward.34} parent=43 // pred_fallthru
        _
    $region44: #{laean_forward.34} parent=5 // pred_fallthru
      _
  $region6: #{laean_forward.34} parent=0 // loop_footer
    %s15 = sadd.s32 1, %s11
  $region7: #{laean_forward.34} parent=0 // loop_footer_branch
    %10 = sbr.rel target = $region3
  $region8: #{laean_forward.34} parent=0 // loop_exit
    _

// kernel: laean_forward.36
$region0: #{laean_forward.36}
  #allocation0 [shape = 'u32[]', space=smem, size = 0x4, offset = 0x4, fixed_abs, tag = 'smem constant byte address 0x4 - core index']
  #allocation1 [shape = 'u32[144,128]{1,0:T(1,128)}', space=vmem, size = 0x12000, scoped, tag = 'internal scratch']
  %s0 = inlined_call_operand.vmem [shape: f32[16,512], index: 0, kind: input, shape index: {}]
  %s1 = inlined_call_operand.vmem [shape: f32[16,512], index: 1, kind: input, shape index: {}]
  %s2 = inlined_call_operand.vmem [shape: f32[16,512], index: 2, kind: output, shape index: {}]
  %s3 = sld [smem:[#allocation0]]
  $region18: #{laean_forward.36} parent=0
    _
  %s5 = ssub.s32 1, %s3
  %s6 = scalar_select 0, %s5, %s3
  // Predicated region
  $region2: #{laean_forward.36} parent=0 // pred_check
    _
  $region3: #{laean_forward.36} parent=0 // pred_check_branch
    %8 = sbr.rel (0) target = $region5
  $region4: #{laean_forward.36} parent=0 // pred_region
    _
  $region5: #{laean_forward.36} parent=0 // pred_fallthru
    _
  // Predicated region
  $region6: #{laean_forward.36} parent=0 // pred_check
    _
  $region7: #{laean_forward.36} parent=0 // pred_check_branch
    %10 = sbr.rel (0) target = $region9
  $region8: #{laean_forward.36} parent=0 // pred_region
    _
  $region9: #{laean_forward.36} parent=0 // pred_fallthru
    _
  %v11 = vld [vmem:[%s0] sm:$0xff]
  %v12 = vld [vmem:[%s0 + $0x8] sm:$0xff]
  %v13 = vld [vmem:[%s0 + $0x10] sm:$0xff]
  %v14 = vld [vmem:[%s0 + $0x18] sm:$0xff]
  %v15 = vld [vmem:[%s0 + $0x20] sm:$0xff]
  %v16 = vld [vmem:[%s0 + $0x28] sm:$0xff]
  %v17 = vld [vmem:[%s0 + $0x30] sm:$0xff]
  %v18 = vld [vmem:[%s0 + $0x38] sm:$0xff]
  %v19 = vld [vmem:[%s1] sm:$0xff]
  %v20 = vld [vmem:[%s1 + $0x8] sm:$0xff]
  %v21 = vld [vmem:[%s1 + $0x10] sm:$0xff]
  %v22 = vld [vmem:[%s1 + $0x18] sm:$0xff]
  %v23 = vld [vmem:[%s1 + $0x20] sm:$0xff]
  %v24 = vld [vmem:[%s1 + $0x28] sm:$0xff]
  %v25 = vld [vmem:[%s1 + $0x30] sm:$0xff]
  %v26 = vld [vmem:[%s1 + $0x38] sm:$0xff]
  %v27 = vsub.f32 %v11, %v19
  %v28 = vsub.f32 %v12, %v20
  %v29 = vsub.f32 %v13, %v21
  %v30 = vsub.f32 %v14, %v22
  %v31 = vsub.f32 %v15, %v23
  %v32 = vsub.f32 %v16, %v24
  %v33 = vsub.f32 %v17, %v25
  %v34 = vsub.f32 %v18, %v26
  %v35 = vand.u32 2147483647, %v27
  %v36 = vand.u32 2147483647, %v28
  %v37 = vand.u32 2147483647, %v29
  %v38 = vand.u32 2147483647, %v30
  %v39 = vand.u32 2147483647, %v31
  %v40 = vand.u32 2147483647, %v32
  %v41 = vand.u32 2147483647, %v33
  %v42 = vand.u32 2147483647, %v34
  %43 = vst [vmem:[%s2] sm:$0xff] %v35
  %44 = vst [vmem:[%s2 + $0x8] sm:$0xff] %v36
  %45 = vst [vmem:[%s2 + $0x10] sm:$0xff] %v37
  %46 = vst [vmem:[%s2 + $0x18] sm:$0xff] %v38
  %47 = vst [vmem:[%s2 + $0x20] sm:$0xff] %v39
  %48 = vst [vmem:[%s2 + $0x28] sm:$0xff] %v40
  %49 = vst [vmem:[%s2 + $0x30] sm:$0xff] %v41
  %50 = vst [vmem:[%s2 + $0x38] sm:$0xff] %v42
  // Predicated region
  $region10: #{laean_forward.36} parent=0 // pred_check
    _
  $region11: #{laean_forward.36} parent=0 // pred_check_branch
    %52 = sbr.rel (0) target = $region13
  $region12: #{laean_forward.36} parent=0 // pred_region
    _
  $region13: #{laean_forward.36} parent=0 // pred_fallthru
    _
  // Predicated region
  $region14: #{laean_forward.36} parent=0 // pred_check
    _
  $region15: #{laean_forward.36} parent=0 // pred_check_branch
    %54 = sbr.rel (0) target = $region17
  $region16: #{laean_forward.36} parent=0 // pred_region
    _
  $region17: #{laean_forward.36} parent=0 // pred_fallthru
    _

// kernel: laean_forward.37
$region0: #{laean_forward.37}
  #allocation0 [shape = 'u32[]', space=smem, size = 0x4, offset = 0x4, fixed_abs, tag = 'smem constant byte address 0x4 - core index']
  #allocation1 [shape = 'u32[144,128]{1,0:T(1,128)}', space=vmem, size = 0x12000, scoped, tag = 'internal scratch']
  #allocation2 [shape = 'f32[1]{0:T(128)S(6)}', space=smem, size = 0x200, scoped, tag = 'scoped memory for laean_forward.37']
  %s0 = inlined_call_operand.vmem [shape: f32[2,576,64], index: 0, kind: input, shape index: {}]
  %s1 = inlined_call_operand.vmem [shape: f32[16,576], index: 1, kind: input, shape index: {}]
  %s2 = inlined_call_operand.vmem [shape: f32[16,1], index: 2, kind: input, shape index: {}]
  %s3 = inlined_call_operand.<no memory space> [shape: f32[1], index: 3, kind: input, shape index: {}]
  %s4 = inlined_call_operand.vmem [shape: f32[2,16,64], index: 4, kind: input, shape index: {}]
  %s5 = inlined_call_operand.vmem [shape: f32[2,16,64], index: 5, kind: output, shape index: {}]
  %s6 = sld [smem:[#allocation0]]
  $region53: #{laean_forward.37} parent=0
    _
  %s8 = ssub.s32 1, %s6
  %s9 = scalar_select 0, %s8, %s6
  %10 = sst [smem:[#allocation2]] %s3
  loop: start=0, step=1, limit=4
  $region2: #{laean_forward.37} parent=0 // loop_pre_header
    _
  $region3: #{laean_forward.37} parent=0 // loop_header
    %s12 = sphi 0, %s16
    %p13 = scmp.ge.s32.totalorder %s12, 4
    %s19 = sphi 0, %s31
    %s20 = sphi 0, %s27
    %s21 = sphi 0, %s19
    %s22 = sphi 0, %s20
    %s23 = sphi 0, %s21
    %s24 = sphi 0, %s22
    %s36 = sphi 0, %s38
    %s39 = sphi 0, %s36
    %s40 = sphi 0, %s39
    %s56 = sphi 0, %s40
    %s60 = sphi 0, %s60
    %s62 = sphi 0, %s60
    %s63 = sphi 0, %s62
    %s77 = sphi 0, %s63
    %s81 = sphi 0, %s81
    %s83 = sphi 0, %s81
    %s84 = sphi 0, %s83
    %s98 = sphi 0, %s84
    %s102 = sphi 0, %s102
    %s104 = sphi 0, %s102
    %s105 = sphi 0, %s104
    %s119 = sphi 0, %s105
    %s127 = sphi 0, %s129
    %s130 = sphi 0, %s127
    %s131 = sphi 0, %s130
    %s147 = sphi 0, %s131
    %s155 = sphi 0, %s157
    %s158 = sphi 0, %s155
    %s159 = sphi 0, %s158
    %s175 = sphi 0, %s159
  $region4: #{laean_forward.37} parent=0 // loop_header_branch
    %15 = sbr.rel (%p13) target = $region8
  $region5: #{laean_forward.37} parent=0 // loop_body
    %s17 = ssub.s32 %s12, 1
    %s18 = ssub.s32 %s12, 2
    %s25 = sadd.s32 1, %s20
    %p26 = scmp.ge.s32.totalorder %s25, 1
    %s27 = scalar_select %p26, 0, %s25
    %s28 = sadd.s32 1, %s19
    %s29 = scalar_select %p26, %s28, %s19
    %p30 = scmp.ge.s32.totalorder %s29, 2
    %s31 = scalar_select %p30, 0, %s29
    %s32 = ssub.s32 %s19, %s31
    %s33 = ssub.s32 %s20, %s27
    %s34 = sor.u32 %s32, %s33
    %p35 = scmp.eq.s32.totalorder %s34, 0
    %s37 = sadd.s32 %s36, 1
    %s38 = scalar_select %p35, %s36, %s37
    %p41 = pneg %p35
    %p42 = scmp.eq.s32.totalorder %s12, 1
    %p43 = por %p41, %p42
    %p44 = scmp.ne.s32.totalorder %s36, %s39
    %p45 = scmp.eq.s32.totalorder %s12, 0
    %p46 = por %p44, %p45
    %p47 = scmp.ne.s32.totalorder %s36, %s39
    %p48 = scmp.eq.s32.totalorder %s17, 1
    %p49 = por %p47, %p48
    %p50 = scmp.ne.s32.totalorder %s39, %s40
    %p51 = scmp.eq.s32.totalorder %s17, 0
    %p52 = por %p50, %p51
    %p53 = scmp.ne.s32.totalorder %s39, %s40
    %p54 = scmp.eq.s32.totalorder %s18, 1
    %p55 = por %p53, %p54
    %p57 = scmp.ne.s32.totalorder %s40, %s56
    %p58 = scmp.eq.s32.totalorder %s18, 0
    %p59 = por %p57, %p58
    %s61 = sadd.s32 %s60, 1
    %p64 = scmp.eq.s32.totalorder %s12, 1
    %p65 = scmp.ne.s32.totalorder %s60, %s62
    %p66 = scmp.eq.s32.totalorder %s12, 0
    %p67 = por %p65, %p66
    %p68 = scmp.ne.s32.totalorder %s60, %s62
    %p69 = scmp.eq.s32.totalorder %s17, 1
    %p70 = por %p68, %p69
    %p71 = scmp.ne.s32.totalorder %s62, %s63
    %p72 = scmp.eq.s32.totalorder %s17, 0
    %p73 = por %p71, %p72
    %p74 = scmp.ne.s32.totalorder %s62, %s63
    %p75 = scmp.eq.s32.totalorder %s18, 1
    %p76 = por %p74, %p75
    %p78 = scmp.ne.s32.totalorder %s63, %s77
    %p79 = scmp.eq.s32.totalorder %s18, 0
    %p80 = por %p78, %p79
    %s82 = sadd.s32 %s81, 1
    %p85 = scmp.eq.s32.totalorder %s12, 1
    %p86 = scmp.ne.s32.totalorder %s81, %s83
    %p87 = scmp.eq.s32.totalorder %s12, 0
    %p88 = por %p86, %p87
    %p89 = scmp.ne.s32.totalorder %s81, %s83
    %p90 = scmp.eq.s32.totalorder %s17, 1
    %p91 = por %p89, %p90
    %p92 = scmp.ne.s32.totalorder %s83, %s84
    %p93 = scmp.eq.s32.totalorder %s17, 0
    %p94 = por %p92, %p93
    %p95 = scmp.ne.s32.totalorder %s83, %s84
    %p96 = scmp.eq.s32.totalorder %s18, 1
    %p97 = por %p95, %p96
    %p99 = scmp.ne.s32.totalorder %s84, %s98
    %p100 = scmp.eq.s32.totalorder %s18, 0
    %p101 = por %p99, %p100
    %s103 = sadd.s32 %s102, 1
    %p106 = scmp.eq.s32.totalorder %s12, 1
    %p107 = scmp.ne.s32.totalorder %s102, %s104
    %p108 = scmp.eq.s32.totalorder %s12, 0
    %p109 = por %p107, %p108
    %p110 = scmp.ne.s32.totalorder %s102, %s104
    %p111 = scmp.eq.s32.totalorder %s17, 1
    %p112 = por %p110, %p111
    %p113 = scmp.ne.s32.totalorder %s104, %s105
    %p114 = scmp.eq.s32.totalorder %s17, 0
    %p115 = por %p113, %p114
    %p116 = scmp.ne.s32.totalorder %s104, %s105
    %p117 = scmp.eq.s32.totalorder %s18, 1
    %p118 = por %p116, %p117
    %p120 = scmp.ne.s32.totalorder %s105, %s119
    %p121 = scmp.eq.s32.totalorder %s18, 0
    %p122 = por %p120, %p121
    %s123 = ssub.s32 %s19, %s31
    %s124 = ssub.s32 %s20, %s27
    %s125 = sor.u32 %s123, %s124
    %p126 = scmp.eq.s32.totalorder %s125, 0
    %s128 = sadd.s32 %s127, 1
    %s129 = scalar_select %p126, %s127, %s128
    %p132 = pneg %p126
    %p133 = scmp.eq.s32.totalorder %s12, 1
    %p134 = por %p132, %p133
    %p135 = scmp.ne.s32.totalorder %s127, %s130
    %p136 = scmp.eq.s32.totalorder %s12, 0
    %p137 = por %p135, %p136
    %p138 = scmp.ne.s32.totalorder %s127, %s130
    %p139 = scmp.eq.s32.totalorder %s17, 1
    %p140 = por %p138, %p139
    %p141 = scmp.ne.s32.totalorder %s130, %s131
    %p142 = scmp.eq.s32.totalorder %s17, 0
    %p143 = por %p141, %p142
    %p144 = scmp.ne.s32.totalorder %s130, %s131
    %p145 = scmp.eq.s32.totalorder %s18, 1
    %p146 = por %p144, %p145
    %p148 = scmp.ne.s32.totalorder %s131, %s147
    %p149 = scmp.eq.s32.totalorder %s18, 0
    %p150 = por %p148, %p149
    %s151 = ssub.s32 %s19, %s31
    %s152 = ssub.s32 %s20, %s27
    %s153 = sor.u32 %s151, %s152
    %p154 = scmp.eq.s32.totalorder %s153, 0
    %s156 = sadd.s32 %s155, 1
    %s157 = scalar_select %p154, %s155, %s156
    %p160 = pneg %p154
    %p161 = scmp.eq.s32.totalorder %s12, 1
    %p162 = por %p160, %p161
    %p163 = scmp.ne.s32.totalorder %s155, %s158
    %p164 = scmp.eq.s32.totalorder %s12, 0
    %p165 = por %p163, %p164
    %p166 = scmp.ne.s32.totalorder %s155, %s158
    %p167 = scmp.eq.s32.totalorder %s17, 1
    %p168 = por %p166, %p167
    %p169 = scmp.ne.s32.totalorder %s158, %s159
    %p170 = scmp.eq.s32.totalorder %s17, 0
    %p171 = por %p169, %p170
    %p172 = scmp.ne.s32.totalorder %s158, %s159
    %p173 = scmp.eq.s32.totalorder %s18, 1
    %p174 = por %p172, %p173
    %p176 = scmp.ne.s32.totalorder %s159, %s175
    %p177 = scmp.eq.s32.totalorder %s18, 0
    %p178 = por %p176, %p177
    %p179 = scmp.le.s32.totalorder 1, %s12
    %p180 = scmp.lt.s32.totalorder %s12, 3
    %p181 = pnand %p179, %p180
    %p182 = pneg %p181
    // Predicated region
    $region9: #{laean_forward.37} parent=5 // pred_check
      _
    $region10: #{laean_forward.37} parent=5 // pred_check_branch
      %184 = sbr.rel (%p181) target = $region12
    $region11: #{laean_forward.37} parent=5 // pred_region
      %s185 = ssub.s32 %s12, 1
      // Predicated region
      $region13: #{laean_forward.37} parent=11 // pred_check
        %p186 = pneg %p73
      $region14: #{laean_forward.37} parent=11 // pred_check_branch
        %188 = sbr.rel (%p186) target = $region16
      $region15: #{laean_forward.37} parent=11 // pred_region
        _
      $region16: #{laean_forward.37} parent=11 // pred_fallthru
        _
      // Predicated region
      $region17: #{laean_forward.37} parent=11 // pred_check
        %p189 = pneg %p94
      $region18: #{laean_forward.37} parent=11 // pred_check_branch
        %191 = sbr.rel (%p189) target = $region20
      $region19: #{laean_forward.37} parent=11 // pred_region
        _
      $region20: #{laean_forward.37} parent=11 // pred_fallthru
        _
      // Predicated region
      $region21: #{laean_forward.37} parent=11 // pred_check
        %p192 = pneg %p115
      $region22: #{laean_forward.37} parent=11 // pred_check_branch
        %194 = sbr.rel (%p192) target = $region24
      $region23: #{laean_forward.37} parent=11 // pred_region
        _
      $region24: #{laean_forward.37} parent=11 // pred_fallthru
        _
    $region12: #{laean_forward.37} parent=5 // pred_fallthru
      _
    %p195 = scmp.lt.s32.totalorder %s12, 2
    // Predicated region
    $region25: #{laean_forward.37} parent=5 // pred_check
      %p196 = pneg %p195
    $region26: #{laean_forward.37} parent=5 // pred_check_branch
      %198 = sbr.rel (%p196) target = $region28
    $region27: #{laean_forward.37} parent=5 // pred_region
      // Predicated region
      $region29: #{laean_forward.37} parent=27 // pred_check
        %p199 = pneg %p46
      $region30: #{laean_forward.37} parent=27 // pred_check_branch
        %201 = sbr.rel (%p199) target = $region32
      $region31: #{laean_forward.37} parent=27 // pred_region
        %p202 = scmp.lt.s32.totalorder %s19, 1
        %s203 = scalar_select %p202, %s19, 1
        %p204 = scmp.lt.s32.totalorder %s20, 0
        %s205 = scalar_select %p204, %s20, 0
        %s206 = smul.addr %s203, 72
        %s207 = sadd.s32 %s205, %s206
        %s208 = smul.addr %s207, 8
        %s209 = scalar_lea.vmem %s0, %s208
      $region32: #{laean_forward.37} parent=27 // pred_fallthru
        _
      // Predicated region
      $region33: #{laean_forward.37} parent=27 // pred_check
        %p210 = pneg %p137
      $region34: #{laean_forward.37} parent=27 // pred_check_branch
        %212 = sbr.rel (%p210) target = $region36
      $region35: #{laean_forward.37} parent=27 // pred_region
        %p213 = scmp.lt.s32.totalorder %s19, 1
        %s214 = scalar_select %p213, %s19, 1
        %p215 = scmp.lt.s32.totalorder %s20, 0
        %s216 = scalar_select %p215, %s20, 0
        %s217 = smul.addr %s214, 2
        %s218 = sadd.s32 %s216, %s217
        %s219 = smul.addr %s218, 8
        %s220 = scalar_lea.vmem %s4, %s219
      $region36: #{laean_forward.37} parent=27 // pred_fallthru
        _
    $region28: #{laean_forward.37} parent=5 // pred_fallthru
      _
    %p221 = scmp.le.s32.totalorder 1, %s12
    %p222 = scmp.lt.s32.totalorder %s12, 3
    %p223 = pnand %p221, %p222
    %p224 = pneg %p223
    // Predicated region
    $region37: #{laean_forward.37} parent=5 // pred_check
      _
    $region38: #{laean_forward.37} parent=5 // pred_check_branch
      %226 = sbr.rel (%p223) target = $region40
    $region39: #{laean_forward.37} parent=5 // pred_region
      %s227 = ssub.s32 %s12, 1
      %p228 = scmp.lt.s32.totalorder %s21, 1
      %s229 = scalar_select %p228, %s21, 1
      %p230 = scmp.lt.s32.totalorder %s22, 0
      %s231 = scalar_select %p230, %s22, 0
      %s232 = smul.addr %s229, 72
      %s233 = sadd.s32 %s231, %s232
      %s234 = smul.addr %s233, 8
      %s235 = scalar_lea.vmem %s0, %s234
      %p236 = pneg %p52
      %p237 = pneg %p49
      %p238 = pneg %p73
      %p239 = pneg %p70
      %p240 = pneg %p94
      %p241 = pneg %p91
      %p242 = pneg %p115
      %p243 = pneg %p112
      %p244 = scmp.lt.s32.totalorder %s21, 1
      %s245 = scalar_select %p244, %s21, 1
      %p246 = scmp.lt.s32.totalorder %s22, 0
      %s247 = scalar_select %p246, %s22, 0
      %s248 = smul.addr %s245, 2
      %s249 = sadd.s32 %s247, %s248
      %s250 = smul.addr %s249, 8
      %s251 = scalar_lea.vmem %s4, %s250
      %p252 = pneg %p143
      %p253 = pneg %p140
      %p254 = pneg %p171
      %p255 = pneg %p168
      %p256 = scmp.lt.s32.totalorder %s21, 1
      %s257 = scalar_select %p256, %s21, 1
      %p258 = scmp.lt.s32.totalorder %s22, 0
      %s259 = scalar_select %p258, %s22, 0
      %s260 = smul.addr %s257, 2
      %s261 = sadd.s32 %s259, %s260
      %s262 = smul.addr %s261, 8
      %s263 = scalar_lea.vmem %s5, %s262
      %p264 = scmp.lt.s32.totalorder %s21, 1
      %s265 = scalar_select %p264, %s21, 1
      %p266 = scmp.lt.s32.totalorder %s22, 0
      %s267 = scalar_select %p266, %s22, 0
      %s268 = smul.addr %s265, 72
      %s269 = sadd.s32 %s267, %s268
      %s270 = smul.addr %s269, 8
      %s271 = scalar_lea.vmem %s0, %s270
      %p272 = scmp.lt.s32.totalorder %s21, 1
      %s273 = scalar_select %p272, %s21, 1
      %p274 = scmp.lt.s32.totalorder %s22, 0
      %s275 = scalar_select %p274, %s22, 0
      %s276 = smul.addr %s273, 2
      %s277 = sadd.s32 %s275, %s276
      %s278 = smul.addr %s277, 8
      %s279 = scalar_lea.vmem %s4, %s278
      %p280 = scmp.lt.s32.totalorder %s21, 1
      %s281 = scalar_select %p280, %s21, 1
      %p282 = scmp.lt.s32.totalorder %s22, 0
      %s283 = scalar_select %p282, %s22, 0
      %s284 = smul.addr %s281, 2
      %s285 = sadd.s32 %s283, %s284
      %s286 = smul.addr %s285, 8
      %s287 = scalar_lea.vmem %s5, %s286
      %v288 = vld [vmem:[%s1] sm:$0xff]
      %v289 = vld [vmem:[%s1 + $0x8] sm:$0xff]
      %v290 = vld [vmem:[%s1 + $0x10] sm:$0xff]
      %v291 = vld [vmem:[%s1 + $0x18] sm:$0xff]
      %v292 = vld [vmem:[%s1 + $0x20] sm:$0xff]
      %v293 = vld [vmem:[%s1 + $0x28] sm:$0xff]
      %v294 = vld [vmem:[%s1 + $0x30] sm:$0xff]
      %v295 = vld [vmem:[%s1 + $0x38] sm:$0xff]
      %v296 = vld [vmem:[%s1 + $0x40] sm:$0xff]
      %v297 = vld [vmem:[%s1 + $0x48] sm:$0xff]
      %v298 = vld [vmem:[%s271] sm:$0xff]
      %v299 = vld [vmem:[%s271 + $0x8] sm:$0xff]
      %v300 = vld [vmem:[%s271 + $0x10] sm:$0xff]
      %v301 = vld [vmem:[%s271 + $0x18] sm:$0xff]
      %v302 = vld [vmem:[%s271 + $0x20] sm:$0xff]
      %v303 = vld [vmem:[%s271 + $0x28] sm:$0xff]
      %v304 = vld [vmem:[%s271 + $0x30] sm:$0xff]
      %v305 = vld [vmem:[%s271 + $0x38] sm:$0xff]
      %v306 = vld [vmem:[%s271 + $0x40] sm:$0xff]
      %v307 = vld [vmem:[%s271 + $0x48] sm:$0xff]
      %v308 = vld [vmem:[%s271 + $0x50] sm:$0xff]
      %v309 = vld [vmem:[%s271 + $0x58] sm:$0xff]
      %v310 = vld [vmem:[%s271 + $0x60] sm:$0xff]
      %v311 = vld [vmem:[%s271 + $0x68] sm:$0xff]
      %v312 = vld [vmem:[%s271 + $0x70] sm:$0xff]
      %v313 = vld [vmem:[%s271 + $0x78] sm:$0xff]
      %v314 = vld [vmem:[%s271 + $0x80] sm:$0xff]
      %v315 = vld [vmem:[%s271 + $0x88] sm:$0xff]
      %v316 = vld [vmem:[%s271 + $0x90] sm:$0xff]
      %v317 = vld [vmem:[%s271 + $0x98] sm:$0xff]
      %v318 = vld [vmem:[%s271 + $0xa0] sm:$0xff]
      %v319 = vld [vmem:[%s271 + $0xa8] sm:$0xff]
      %v320 = vld [vmem:[%s271 + $0xb0] sm:$0xff]
      %v321 = vld [vmem:[%s271 + $0xb8] sm:$0xff]
      %v322 = vld [vmem:[%s271 + $0xc0] sm:$0xff]
      %v323 = vld [vmem:[%s271 + $0xc8] sm:$0xff]
      %v324 = vld [vmem:[%s271 + $0xd0] sm:$0xff]
      %v325 = vld [vmem:[%s271 + $0xd8] sm:$0xff]
      %v326 = vld [vmem:[%s271 + $0xe0] sm:$0xff]
      %v327 = vld [vmem:[%s271 + $0xe8] sm:$0xff]
      %v328 = vld [vmem:[%s271 + $0xf0] sm:$0xff]
      %v329 = vld [vmem:[%s271 + $0xf8] sm:$0xff]
      %v330 = vld [vmem:[%s271 + $0x100] sm:$0xff]
      %v331 = vld [vmem:[%s271 + $0x108] sm:$0xff]
      %v332 = vld [vmem:[%s271 + $0x110] sm:$0xff]
      %v333 = vld [vmem:[%s271 + $0x118] sm:$0xff]
      %v334 = vld [vmem:[%s271 + $0x120] sm:$0xff]
      %v335 = vld [vmem:[%s271 + $0x128] sm:$0xff]
      %v336 = vld [vmem:[%s271 + $0x130] sm:$0xff]
      %v337 = vld [vmem:[%s271 + $0x138] sm:$0xff]
      %v338 = vld [vmem:[%s271 + $0x140] sm:$0xff]
      %v339 = vld [vmem:[%s271 + $0x148] sm:$0xff]
      %v340 = vld [vmem:[%s271 + $0x150] sm:$0xff]
      %v341 = vld [vmem:[%s271 + $0x158] sm:$0xff]
      %v342 = vld [vmem:[%s271 + $0x160] sm:$0xff]
      %v343 = vld [vmem:[%s271 + $0x168] sm:$0xff]
      %v344 = vld [vmem:[%s271 + $0x170] sm:$0xff]
      %v345 = vld [vmem:[%s271 + $0x178] sm:$0xff]
      %v346 = vld [vmem:[%s271 + $0x180] sm:$0xff]
      %v347 = vld [vmem:[%s271 + $0x188] sm:$0xff]
      %v348 = vld [vmem:[%s271 + $0x190] sm:$0xff]
      %v349 = vld [vmem:[%s271 + $0x198] sm:$0xff]
      %v350 = vld [vmem:[%s271 + $0x1a0] sm:$0xff]
      %v351 = vld [vmem:[%s271 + $0x1a8] sm:$0xff]
      %v352 = vld [vmem:[%s271 + $0x1b0] sm:$0xff]
      %v353 = vld [vmem:[%s271 + $0x1b8] sm:$0xff]
      %v354 = vld [vmem:[%s271 + $0x1c0] sm:$0xff]
      %v355 = vld [vmem:[%s271 + $0x1c8] sm:$0xff]
      %v356 = vld [vmem:[%s271 + $0x1d0] sm:$0xff]
      %v357 = vld [vmem:[%s271 + $0x1d8] sm:$0xff]
      %v358 = vld [vmem:[%s271 + $0x1e0] sm:$0xff]
      %v359 = vld [vmem:[%s271 + $0x1e8] sm:$0xff]
      %v360 = vld [vmem:[%s271 + $0x1f0] sm:$0xff]
      %v361 = vld [vmem:[%s271 + $0x1f8] sm:$0xff]
      %v362 = vld [vmem:[%s271 + $0x200] sm:$0xff]
      %v363 = vld [vmem:[%s271 + $0x208] sm:$0xff]
      %v364 = vld [vmem:[%s271 + $0x210] sm:$0xff]
      %v365 = vld [vmem:[%s271 + $0x218] sm:$0xff]
      %v366 = vld [vmem:[%s271 + $0x220] sm:$0xff]
      %v367 = vld [vmem:[%s271 + $0x228] sm:$0xff]
      %v368 = vld [vmem:[%s271 + $0x230] sm:$0xff]
      %v369 = vld [vmem:[%s271 + $0x238] sm:$0xff]
      %v370 = vld [vmem:[%s2] sm:$0xff]
      %v371 = vld [vmem:[%s2 + $0x8] sm:$0xff]
      %373 = vset.pattern.permute.xlu0 0
      %374 = vperm.xlu0 %373, %v370
      %v375 = vpop.permute.xlu0 %374
      %378 = vset.pattern.permute.xlu0 0
      %379 = vperm.xlu0 %378, %v371
      %v380 = vpop.permute.xlu0 %379
      %vm382 = vcmask 523264
      %v384 = vsel %vm382, %v292, 0
      %v387 = vsel %vm382, %v297, 0
      %389 = vmatprep.subr.mxu0 0.0
      %390 = vmatpush1.msra.mxu0 %v298
      %391 = vmatprep.subr.mxu0 0.0
      %392 = vmatpush1.msra.mxu0 %v299
      %393 = vmatprep.subr.mxu0 0.0
      %394 = vmatpush1.msra.mxu0 %v300
      %395 = vmatprep.subr.mxu0 0.0
      %396 = vmatpush1.msra.mxu0 %v301
      %397 = vmatprep.subr.mxu0 0.0
      %398 = vmatpush1.msra.mxu0 %v302
      %399 = vmatprep.subr.mxu0 0.0
      %400 = vmatpush1.msra.mxu0 %v303
      %401 = vmatprep.subr.mxu0 0.0
      %402 = vmatpush1.msra.mxu0 %v304
      %403 = vmatprep.subr.mxu0 0.0
      %404 = vmatpush1.msra.mxu0 %v305
      %405 = vmatprep.subr.mxu0 0.0
      %406 = vmatpush1.msra.mxu0 %v306
      %407 = vmatprep.subr.mxu0 0.0
      %408 = vmatpush1.msra.mxu0 %v307
      %409 = vmatprep.subr.mxu0 0.0
      %410 = vmatpush1.msra.mxu0 %v308
      %411 = vmatprep.subr.mxu0 0.0
      %412 = vmatpush1.msra.mxu0 %v309
      %413 = vmatprep.subr.mxu0 0.0
      %414 = vmatpush1.msra.mxu0 %v310
      %415 = vmatprep.subr.mxu0 0.0
      %416 = vmatpush1.msra.mxu0 %v311
      %417 = vmatprep.subr.mxu0 0.0
      %418 = vmatpush1.msra.mxu0 %v312
      %419 = vmatprep.subr.mxu0 0.0
      %420 = vmatpush1.msra.mxu0 %v313
      %421 = vmatprep.subr.mxu0 0.0
      %422 = vmatpush1.msra.mxu0 %v314
      %423 = vmatprep.subr.mxu0 0.0
      %424 = vmatpush1.msra.mxu0 %v315
      %425 = vmatprep.subr.mxu0 0.0
      %426 = vmatpush1.msra.mxu0 %v316
      %427 = vmatprep.subr.mxu0 0.0
      %428 = vmatpush1.msra.mxu0 %v317
      %429 = vmatprep.subr.mxu0 0.0
      %430 = vmatpush1.msra.mxu0 %v318
      %431 = vmatprep.subr.mxu0 0.0
      %432 = vmatpush1.msra.mxu0 %v319
      %433 = vmatprep.subr.mxu0 0.0
      %434 = vmatpush1.msra.mxu0 %v320
      %435 = vmatprep.subr.mxu0 0.0
      %436 = vmatpush1.msra.mxu0 %v321
      %437 = vmatprep.subr.mxu0 0.0
      %438 = vmatpush1.msra.mxu0 %v322
      %439 = vmatprep.subr.mxu0 0.0
      %440 = vmatpush1.msra.mxu0 %v323
      %441 = vmatprep.subr.mxu0 0.0
      %442 = vmatpush1.msra.mxu0 %v324
      %443 = vmatprep.subr.mxu0 0.0
      %444 = vmatpush1.msra.mxu0 %v325
      %445 = vmatprep.subr.mxu0 0.0
      %446 = vmatpush1.msra.mxu0 %v326
      %447 = vmatprep.subr.mxu0 0.0
      %448 = vmatpush1.msra.mxu0 %v327
      %449 = vmatprep.subr.mxu0 0.0
      %450 = vmatpush1.msra.mxu0 %v328
      %451 = vmatprep.subr.mxu0 0.0
      %452 = vmatpush1.msra.mxu0 %v329
      %453 = vmatprep.mubr.f32.mxu0 %v289
      %454 = vmatmul.mubr.f32.gmra.mrb[0].mxu0 %v288
      %v455 = vpop.f32.mrb[0].mxu0
      %v456 = vadd.f32 %v375, %v455
      %v457 = vpop.f32.mrb[0].mxu0
      %458 = vmatprep.mubr.f32.mxu0 %v294
      %459 = vmatmul.mubr.f32.gmra.mrb[0].mxu0 %v293
      %v460 = vpop.f32.mrb[0].mxu0
      %v461 = vadd.f32 %v380, %v460
      %v462 = vpop.f32.mrb[0].mxu0
      %463 = vdwg.mxu0
      %464 = vmatprep.subr.mxu0 0.0
      %465 = vmatpush1.msra.mxu0 %v330
      %466 = vmatprep.subr.mxu0 0.0
      %467 = vmatpush1.msra.mxu0 %v331
      %468 = vmatprep.subr.mxu0 0.0
      %469 = vmatpush1.msra.mxu0 %v332
      %470 = vmatprep.subr.mxu0 0.0
      %471 = vmatpush1.msra.mxu0 %v333
      %472 = vmatprep.subr.mxu0 0.0
      %473 = vmatpush1.msra.mxu0 %v334
      %474 = vmatprep.subr.mxu0 0.0
      %475 = vmatpush1.msra.mxu0 %v335
      %476 = vmatprep.subr.mxu0 0.0
      %477 = vmatpush1.msra.mxu0 %v336
      %478 = vmatprep.subr.mxu0 0.0
      %479 = vmatpush1.msra.mxu0 %v337
      %480 = vmatprep.subr.mxu0 0.0
      %481 = vmatpush1.msra.mxu0 %v338
      %482 = vmatprep.subr.mxu0 0.0
      %483 = vmatpush1.msra.mxu0 %v339
      %484 = vmatprep.subr.mxu0 0.0
      %485 = vmatpush1.msra.mxu0 %v340
      %486 = vmatprep.subr.mxu0 0.0
      %487 = vmatpush1.msra.mxu0 %v341
      %488 = vmatprep.subr.mxu0 0.0
      %489 = vmatpush1.msra.mxu0 %v342
      %490 = vmatprep.subr.mxu0 0.0
      %491 = vmatpush1.msra.mxu0 %v343
      %492 = vmatprep.subr.mxu0 0.0
      %493 = vmatpush1.msra.mxu0 %v344
      %494 = vmatprep.subr.mxu0 0.0
      %495 = vmatpush1.msra.mxu0 %v345
      %496 = vmatprep.subr.mxu0 0.0
      %497 = vmatpush1.msra.mxu0 %v346
      %498 = vmatprep.subr.mxu0 0.0
      %499 = vmatpush1.msra.mxu0 %v347
      %500 = vmatprep.subr.mxu0 0.0
      %501 = vmatpush1.msra.mxu0 %v348
      %502 = vmatprep.subr.mxu0 0.0
      %503 = vmatpush1.msra.mxu0 %v349
      %504 = vmatprep.subr.mxu0 0.0
      %505 = vmatpush1.msra.mxu0 %v350
      %506 = vmatprep.subr.mxu0 0.0
      %507 = vmatpush1.msra.mxu0 %v351
      %508 = vmatprep.subr.mxu0 0.0
      %509 = vmatpush1.msra.mxu0 %v352
      %510 = vmatprep.subr.mxu0 0.0
      %511 = vmatpush1.msra.mxu0 %v353
      %512 = vmatprep.subr.mxu0 0.0
      %513 = vmatpush1.msra.mxu0 %v354
      %514 = vmatprep.subr.mxu0 0.0
      %515 = vmatpush1.msra.mxu0 %v355
      %516 = vmatprep.subr.mxu0 0.0
      %517 = vmatpush1.msra.mxu0 %v356
      %518 = vmatprep.subr.mxu0 0.0
      %519 = vmatpush1.msra.mxu0 %v357
      %520 = vmatprep.subr.mxu0 0.0
      %521 = vmatpush1.msra.mxu0 %v358
      %522 = vmatprep.subr.mxu0 0.0
      %523 = vmatpush1.msra.mxu0 %v359
      %524 = vmatprep.subr.mxu0 0.0
      %525 = vmatpush1.msra.mxu0 %v360
      %526 = vmatprep.subr.mxu0 0.0
      %527 = vmatpush1.msra.mxu0 %v361
      %528 = vmatprep.mubr.f32.mxu0 %v291
      %529 = vmatmul.mubr.f32.gmra.mrb[0].mxu0 %v290
      %v530 = vpop.f32.mrb[0].mxu0
      %v531 = vadd.f32 %v456, %v530
      %v532 = vpop.f32.mrb[0].mxu0
      %533 = vmatprep.mubr.f32.mxu0 %v296
      %534 = vmatmul.mubr.f32.gmra.mrb[0].mxu0 %v295
      %v535 = vpop.f32.mrb[0].mxu0
      %v536 = vadd.f32 %v461, %v535
      %v537 = vpop.f32.mrb[0].mxu0
      %538 = vdwg.mxu0
      %539 = vmatprep.subr.mxu0 0.0
      %540 = vmatpush1.msra.mxu0 %v362
      %541 = vmatprep.subr.mxu0 0.0
      %542 = vmatpush1.msra.mxu0 %v363
      %543 = vmatprep.subr.mxu0 0.0
      %544 = vmatpush1.msra.mxu0 %v364
      %545 = vmatprep.subr.mxu0 0.0
      %546 = vmatpush1.msra.mxu0 %v365
      %547 = vmatprep.subr.mxu0 0.0
      %548 = vmatpush1.msra.mxu0 %v366
      %549 = vmatprep.subr.mxu0 0.0
      %550 = vmatpush1.msra.mxu0 %v367
      %551 = vmatprep.subr.mxu0 0.0
      %552 = vmatpush1.msra.mxu0 %v368
      %553 = vmatprep.subr.mxu0 0.0
      %554 = vmatpush1.msra.mxu0 %v369
      %555 = vmatprep.subr.mxu0 0.0
      %556 = vmatpush1.msra.mxu0 0.0
      %557 = vmatprep.subr.mxu0 0.0
      %558 = vmatpush1.msra.mxu0 0.0
      %559 = vmatprep.subr.mxu0 0.0
      %560 = vmatpush1.msra.mxu0 0.0
      %561 = vmatprep.subr.mxu0 0.0
      %562 = vmatpush1.msra.mxu0 0.0
      %563 = vmatprep.subr.mxu0 0.0
      %564 = vmatpush1.msra.mxu0 0.0
      %565 = vmatprep.subr.mxu0 0.0
      %566 = vmatpush1.msra.mxu0 0.0
      %567 = vmatprep.subr.mxu0 0.0
      %568 = vmatpush1.msra.mxu0 0.0
      %569 = vmatprep.subr.mxu0 0.0
      %570 = vmatpush1.msra.mxu0 0.0
      %571 = vmatprep.subr.mxu0 0.0
      %572 = vmatpush1.msra.mxu0 0.0
      %573 = vmatprep.subr.mxu0 0.0
      %574 = vmatpush1.msra.mxu0 0.0
      %575 = vmatprep.subr.mxu0 0.0
      %576 = vmatpush1.msra.mxu0 0.0
      %577 = vmatprep.subr.mxu0 0.0
      %578 = vmatpush1.msra.mxu0 0.0
      %579 = vmatprep.subr.mxu0 0.0
      %580 = vmatpush1.msra.mxu0 0.0
      %581 = vmatprep.subr.mxu0 0.0
      %582 = vmatpush1.msra.mxu0 0.0
      %583 = vmatprep.subr.mxu0 0.0
      %584 = vmatpush1.msra.mxu0 0.0
      %585 = vmatprep.subr.mxu0 0.0
      %586 = vmatpush1.msra.mxu0 0.0
      %587 = vmatprep.subr.mxu0 0.0
      %588 = vmatpush1.msra.mxu0 0.0
      %589 = vmatprep.subr.mxu0 0.0
      %590 = vmatpush1.msra.mxu0 0.0
      %591 = vmatprep.subr.mxu0 0.0
      %592 = vmatpush1.msra.mxu0 0.0
      %593 = vmatprep.subr.mxu0 0.0
      %594 = vmatpush1.msra.mxu0 0.0
      %595 = vmatprep.subr.mxu0 0.0
      %596 = vmatpush1.msra.mxu0 0.0
      %597 = vmatprep.subr.mxu0 0.0
      %598 = vmatpush1.msra.mxu0 0.0
      %599 = vmatprep.subr.mxu0 0.0
      %600 = vmatpush1.msra.mxu0 0.0
      %601 = vmatprep.subr.mxu0 0.0
      %602 = vmatpush1.msra.mxu0 0.0
      %603 = vmatprep.mubr.f32.mxu0 0.0
      %604 = vmatmul.mubr.f32.gmra.mrb[0].mxu0 %v384
      %v605 = vpop.f32.mrb[0].mxu0
      %v606 = vadd.f32 %v531, %v605
      %v607 = vpop.f32.mrb[0].mxu0
      %608 = vmatprep.mubr.f32.mxu0 0.0
      %609 = vmatmul.mubr.f32.gmra.mrb[0].mxu0 %v387
      %v610 = vpop.f32.mrb[0].mxu0
      %v611 = vadd.f32 %v536, %v610
      %v612 = vpop.f32.mrb[0].mxu0
      %613 = vdwg.mxu0
      %s614 = sld [smem:[#allocation2]]
      %vm615 = vcmp.ge.f32.partialorder %v606, 0.0
      %vm616 = vcmp.ge.f32.partialorder %v611, 0.0
      %v617 = vstv %s614
      %v618 = vmul.f32 %v617, %v606
      %v619 = vmul.f32 %v617, %v611
      %v620 = vsel %vm615, %v606, %v618
      %v621 = vsel %vm616, %v611, %v619
      %v622 = vld [vmem:[%s279] sm:$0xff]
      %v623 = vld [vmem:[%s279 + $0x8] sm:$0xff]
      %v624 = vadd.f32 %v620, %v622
      %v625 = vadd.f32 %v621, %v623
      %626 = vst.msk [vmem:[%s287] sm:$0xff] %vm382, %v624
      %627 = vst.msk [vmem:[%s287 + $0x8] sm:$0xff] %vm382, %v625
      %p628 = scmp.lt.s32.totalorder %s21, 1
      %s629 = scalar_select %p628, %s21, 1
      %p630 = scmp.lt.s32.totalorder %s22, 0
      %s631 = scalar_select %p630, %s22, 0
      %s632 = smul.addr %s629, 2
      %s633 = sadd.s32 %s631, %s632
      %s634 = smul.addr %s633, 8
      %s635 = scalar_lea.vmem %s5, %s634
      // Predicated region
      $region41: #{laean_forward.37} parent=39 // pred_check
        %p636 = pneg %p168
      $region42: #{laean_forward.37} parent=39 // pred_check_branch
        %638 = sbr.rel (%p636) target = $region44
      $region43: #{laean_forward.37} parent=39 // pred_region
        _
      $region44: #{laean_forward.37} parent=39 // pred_fallthru
        _
    $region40: #{laean_forward.37} parent=5 // pred_fallthru
      _
    %p639 = scmp.le.s32.totalorder 2, %s12
    // Predicated region
    $region45: #{laean_forward.37} parent=5 // pred_check
      %p640 = pneg %p639
    $region46: #{laean_forward.37} parent=5 // pred_check_branch
      %642 = sbr.rel (%p640) target = $region48
    $region47: #{laean_forward.37} parent=5 // pred_region
      %s643 = ssub.s32 %s12, 2
      // Predicated region
      $region49: #{laean_forward.37} parent=47 // pred_check
        %p644 = pneg %p174
      $region50: #{laean_forward.37} parent=47 // pred_check_branch
        %646 = sbr.rel (%p644) target = $region52
      $region51: #{laean_forward.37} parent=47 // pred_region
        %p647 = scmp.lt.s32.totalorder %s23, 1
        %s648 = scalar_select %p647, %s23, 1
        %p649 = scmp.lt.s32.totalorder %s24, 0
        %s650 = scalar_select %p649, %s24, 0
        %s651 = smul.addr %s648, 2
        %s652 = sadd.s32 %s650, %s651
        %s653 = smul.addr %s652, 8
        %s654 = scalar_lea.vmem %s5, %s653
      $region52: #{laean_forward.37} parent=47 // pred_fallthru
        _
    $region48: #{laean_forward.37} parent=5 // pred_fallthru
      _
  $region6: #{laean_forward.37} parent=0 // loop_footer
    %s16 = sadd.s32 1, %s12
  $region7: #{laean_forward.37} parent=0 // loop_footer_branch
    %11 = sbr.rel target = $region3
  $region8: #{laean_forward.37} parent=0 // loop_exit
    _

// kernel: laean_forward.48
$region0: #{laean_forward.48}
  #allocation0 [shape = 'u32[]', space=smem, size = 0x4, offset = 0x4, fixed_abs, tag = 'smem constant byte address 0x4 - core index']
  #allocation1 [shape = 'u32[144,128]{1,0:T(1,128)}', space=vmem, size = 0x12000, scoped, tag = 'internal scratch']
  #allocation2 [shape = 'f32[1]{0:T(128)S(6)}', space=smem, size = 0x200, scoped, tag = 'scoped memory for laean_forward.48']
  %s0 = inlined_call_operand.vmem [shape: f32[2,16,64], index: 0, kind: input, shape index: {}, may-alias: {0,1}]
  %s1 = inlined_call_operand.vmem [shape: f32[2,16,64], index: 1, kind: input, shape index: {}, may-alias: {0,1}]
  %s2 = inlined_call_operand.vmem [shape: f32[2,16], index: 2, kind: input, shape index: {}]
  %s3 = inlined_call_operand.vmem [shape: f32[2,1], index: 3, kind: input, shape index: {}]
  %s4 = inlined_call_operand.vmem [shape: f32[2,16], index: 4, kind: input, shape index: {}]
  %s5 = inlined_call_operand.vmem [shape: f32[2,1], index: 5, kind: input, shape index: {}]
  %s6 = inlined_call_operand.vmem [shape: f32[16,16], index: 6, kind: input, shape index: {}]
  %s7 = inlined_call_operand.vmem [shape: f32[16,1], index: 7, kind: input, shape index: {}]
  %s8 = inlined_call_operand.<no memory space> [shape: f32[1], index: 8, kind: input, shape index: {}]
  %s9 = inlined_call_operand.vmem [shape: f32[2,16,64], index: 9, kind: output, shape index: {}]
  %s10 = sld [smem:[#allocation0]]
  $region69: #{laean_forward.48} parent=0
    _
  %s12 = ssub.s32 1, %s10
  %s13 = scalar_select 0, %s12, %s10
  %14 = sst [smem:[#allocation2]] %s8
  loop: start=0, step=1, limit=4
  $region2: #{laean_forward.48} parent=0 // loop_pre_header
    _
  $region3: #{laean_forward.48} parent=0 // loop_header
    %s16 = sphi 0, %s20
    %p17 = scmp.ge.s32.totalorder %s16, 4
    %s23 = sphi 0, %s35
    %s24 = sphi 0, %s31
    %s25 = sphi 0, %s23
    %s26 = sphi 0, %s24
    %s27 = sphi 0, %s25
    %s28 = sphi 0, %s26
    %s38 = sphi 0, %s40
    %s41 = sphi 0, %s38
    %s42 = sphi 0, %s41
    %s58 = sphi 0, %s42
    %s66 = sphi 0, %s68
    %s69 = sphi 0, %s66
    %s70 = sphi 0, %s69
    %s86 = sphi 0, %s70
    %s90 = sphi 0, %s90
    %s92 = sphi 0, %s90
    %s93 = sphi 0, %s92
    %s107 = sphi 0, %s93
    %s111 = sphi 0, %s111
    %s113 = sphi 0, %s111
    %s114 = sphi 0, %s113
    %s128 = sphi 0, %s114
    %s132 = sphi 0, %s132
    %s134 = sphi 0, %s132
    %s135 = sphi 0, %s134
    %s149 = sphi 0, %s135
    %s153 = sphi 0, %s153
    %s155 = sphi 0, %s153
    %s156 = sphi 0, %s155
    %s170 = sphi 0, %s156
    %s174 = sphi 0, %s174
    %s176 = sphi 0, %s174
    %s177 = sphi 0, %s176
    %s191 = sphi 0, %s177
    %s195 = sphi 0, %s195
    %s197 = sphi 0, %s195
    %s198 = sphi 0, %s197
    %s212 = sphi 0, %s198
    %s216 = sphi 0, %s216
    %s218 = sphi 0, %s216
    %s219 = sphi 0, %s218
    %s233 = sphi 0, %s219
    %s241 = sphi 0, %s243
    %s244 = sphi 0, %s241
    %s245 = sphi 0, %s244
    %s261 = sphi 0, %s245
  $region4: #{laean_forward.48} parent=0 // loop_header_branch
    %19 = sbr.rel (%p17) target = $region8
  $region5: #{laean_forward.48} parent=0 // loop_body
    %s21 = ssub.s32 %s16, 1
    %s22 = ssub.s32 %s16, 2
    %s29 = sadd.s32 1, %s24
    %p30 = scmp.ge.s32.totalorder %s29, 1
    %s31 = scalar_select %p30, 0, %s29
    %s32 = sadd.s32 1, %s23
    %s33 = scalar_select %p30, %s32, %s23
    %p34 = scmp.ge.s32.totalorder %s33, 2
    %s35 = scalar_select %p34, 0, %s33
    %s36 = ssub.s32 %s23, %s35
    %p37 = scmp.eq.s32.totalorder %s36, 0
    %s39 = sadd.s32 %s38, 1
    %s40 = scalar_select %p37, %s38, %s39
    %p43 = pneg %p37
    %p44 = scmp.eq.s32.totalorder %s16, 1
    %p45 = por %p43, %p44
    %p46 = scmp.ne.s32.totalorder %s38, %s41
    %p47 = scmp.eq.s32.totalorder %s16, 0
    %p48 = por %p46, %p47
    %p49 = scmp.ne.s32.totalorder %s38, %s41
    %p50 = scmp.eq.s32.totalorder %s21, 1
    %p51 = por %p49, %p50
    %p52 = scmp.ne.s32.totalorder %s41, %s42
    %p53 = scmp.eq.s32.totalorder %s21, 0
    %p54 = por %p52, %p53
    %p55 = scmp.ne.s32.totalorder %s41, %s42
    %p56 = scmp.eq.s32.totalorder %s22, 1
    %p57 = por %p55, %p56
    %p59 = scmp.ne.s32.totalorder %s42, %s58
    %p60 = scmp.eq.s32.totalorder %s22, 0
    %p61 = por %p59, %p60
    %s62 = ssub.s32 %s23, %s35
    %s63 = ssub.s32 %s24, %s31
    %s64 = sor.u32 %s62, %s63
    %p65 = scmp.eq.s32.totalorder %s64, 0
    %s67 = sadd.s32 %s66, 1
    %s68 = scalar_select %p65, %s66, %s67
    %p71 = pneg %p65
    %p72 = scmp.eq.s32.totalorder %s16, 1
    %p73 = por %p71, %p72
    %p74 = scmp.ne.s32.totalorder %s66, %s69
    %p75 = scmp.eq.s32.totalorder %s16, 0
    %p76 = por %p74, %p75
    %p77 = scmp.ne.s32.totalorder %s66, %s69
    %p78 = scmp.eq.s32.totalorder %s21, 1
    %p79 = por %p77, %p78
    %p80 = scmp.ne.s32.totalorder %s69, %s70
    %p81 = scmp.eq.s32.totalorder %s21, 0
    %p82 = por %p80, %p81
    %p83 = scmp.ne.s32.totalorder %s69, %s70
    %p84 = scmp.eq.s32.totalorder %s22, 1
    %p85 = por %p83, %p84
    %p87 = scmp.ne.s32.totalorder %s70, %s86
    %p88 = scmp.eq.s32.totalorder %s22, 0
    %p89 = por %p87, %p88
    %s91 = sadd.s32 %s90, 1
    %p94 = scmp.eq.s32.totalorder %s16, 1
    %p95 = scmp.ne.s32.totalorder %s90, %s92
    %p96 = scmp.eq.s32.totalorder %s16, 0
    %p97 = por %p95, %p96
    %p98 = scmp.ne.s32.totalorder %s90, %s92
    %p99 = scmp.eq.s32.totalorder %s21, 1
    %p100 = por %p98, %p99
    %p101 = scmp.ne.s32.totalorder %s92, %s93
    %p102 = scmp.eq.s32.totalorder %s21, 0
    %p103 = por %p101, %p102
    %p104 = scmp.ne.s32.totalorder %s92, %s93
    %p105 = scmp.eq.s32.totalorder %s22, 1
    %p106 = por %p104, %p105
    %p108 = scmp.ne.s32.totalorder %s93, %s107
    %p109 = scmp.eq.s32.totalorder %s22, 0
    %p110 = por %p108, %p109
    %s112 = sadd.s32 %s111, 1
    %p115 = scmp.eq.s32.totalorder %s16, 1
    %p116 = scmp.ne.s32.totalorder %s111, %s113
    %p117 = scmp.eq.s32.totalorder %s16, 0
    %p118 = por %p116, %p117
    %p119 = scmp.ne.s32.totalorder %s111, %s113
    %p120 = scmp.eq.s32.totalorder %s21, 1
    %p121 = por %p119, %p120
    %p122 = scmp.ne.s32.totalorder %s113, %s114
    %p123 = scmp.eq.s32.totalorder %s21, 0
    %p124 = por %p122, %p123
    %p125 = scmp.ne.s32.totalorder %s113, %s114
    %p126 = scmp.eq.s32.totalorder %s22, 1
    %p127 = por %p125, %p126
    %p129 = scmp.ne.s32.totalorder %s114, %s128
    %p130 = scmp.eq.s32.totalorder %s22, 0
    %p131 = por %p129, %p130
    %s133 = sadd.s32 %s132, 1
    %p136 = scmp.eq.s32.totalorder %s16, 1
    %p137 = scmp.ne.s32.totalorder %s132, %s134
    %p138 = scmp.eq.s32.totalorder %s16, 0
    %p139 = por %p137, %p138
    %p140 = scmp.ne.s32.totalorder %s132, %s134
    %p141 = scmp.eq.s32.totalorder %s21, 1
    %p142 = por %p140, %p141
    %p143 = scmp.ne.s32.totalorder %s134, %s135
    %p144 = scmp.eq.s32.totalorder %s21, 0
    %p145 = por %p143, %p144
    %p146 = scmp.ne.s32.totalorder %s134, %s135
    %p147 = scmp.eq.s32.totalorder %s22, 1
    %p148 = por %p146, %p147
    %p150 = scmp.ne.s32.totalorder %s135, %s149
    %p151 = scmp.eq.s32.totalorder %s22, 0
    %p152 = por %p150, %p151
    %s154 = sadd.s32 %s153, 1
    %p157 = scmp.eq.s32.totalorder %s16, 1
    %p158 = scmp.ne.s32.totalorder %s153, %s155
    %p159 = scmp.eq.s32.totalorder %s16, 0
    %p160 = por %p158, %p159
    %p161 = scmp.ne.s32.totalorder %s153, %s155
    %p162 = scmp.eq.s32.totalorder %s21, 1
    %p163 = por %p161, %p162
    %p164 = scmp.ne.s32.totalorder %s155, %s156
    %p165 = scmp.eq.s32.totalorder %s21, 0
    %p166 = por %p164, %p165
    %p167 = scmp.ne.s32.totalorder %s155, %s156
    %p168 = scmp.eq.s32.totalorder %s22, 1
    %p169 = por %p167, %p168
    %p171 = scmp.ne.s32.totalorder %s156, %s170
    %p172 = scmp.eq.s32.totalorder %s22, 0
    %p173 = por %p171, %p172
    %s175 = sadd.s32 %s174, 1
    %p178 = scmp.eq.s32.totalorder %s16, 1
    %p179 = scmp.ne.s32.totalorder %s174, %s176
    %p180 = scmp.eq.s32.totalorder %s16, 0
    %p181 = por %p179, %p180
    %p182 = scmp.ne.s32.totalorder %s174, %s176
    %p183 = scmp.eq.s32.totalorder %s21, 1
    %p184 = por %p182, %p183
    %p185 = scmp.ne.s32.totalorder %s176, %s177
    %p186 = scmp.eq.s32.totalorder %s21, 0
    %p187 = por %p185, %p186
    %p188 = scmp.ne.s32.totalorder %s176, %s177
    %p189 = scmp.eq.s32.totalorder %s22, 1
    %p190 = por %p188, %p189
    %p192 = scmp.ne.s32.totalorder %s177, %s191
    %p193 = scmp.eq.s32.totalorder %s22, 0
    %p194 = por %p192, %p193
    %s196 = sadd.s32 %s195, 1
    %p199 = scmp.eq.s32.totalorder %s16, 1
    %p200 = scmp.ne.s32.totalorder %s195, %s197
    %p201 = scmp.eq.s32.totalorder %s16, 0
    %p202 = por %p200, %p201
    %p203 = scmp.ne.s32.totalorder %s195, %s197
    %p204 = scmp.eq.s32.totalorder %s21, 1
    %p205 = por %p203, %p204
    %p206 = scmp.ne.s32.totalorder %s197, %s198
    %p207 = scmp.eq.s32.totalorder %s21, 0
    %p208 = por %p206, %p207
    %p209 = scmp.ne.s32.totalorder %s197, %s198
    %p210 = scmp.eq.s32.totalorder %s22, 1
    %p211 = por %p209, %p210
    %p213 = scmp.ne.s32.totalorder %s198, %s212
    %p214 = scmp.eq.s32.totalorder %s22, 0
    %p215 = por %p213, %p214
    %s217 = sadd.s32 %s216, 1
    %p220 = scmp.eq.s32.totalorder %s16, 1
    %p221 = scmp.ne.s32.totalorder %s216, %s218
    %p222 = scmp.eq.s32.totalorder %s16, 0
    %p223 = por %p221, %p222
    %p224 = scmp.ne.s32.totalorder %s216, %s218
    %p225 = scmp.eq.s32.totalorder %s21, 1
    %p226 = por %p224, %p225
    %p227 = scmp.ne.s32.totalorder %s218, %s219
    %p228 = scmp.eq.s32.totalorder %s21, 0
    %p229 = por %p227, %p228
    %p230 = scmp.ne.s32.totalorder %s218, %s219
    %p231 = scmp.eq.s32.totalorder %s22, 1
    %p232 = por %p230, %p231
    %p234 = scmp.ne.s32.totalorder %s219, %s233
    %p235 = scmp.eq.s32.totalorder %s22, 0
    %p236 = por %p234, %p235
    %s237 = ssub.s32 %s23, %s35
    %s238 = ssub.s32 %s24, %s31
    %s239 = sor.u32 %s237, %s238
    %p240 = scmp.eq.s32.totalorder %s239, 0
    %s242 = sadd.s32 %s241, 1
    %s243 = scalar_select %p240, %s241, %s242
    %p246 = pneg %p240
    %p247 = scmp.eq.s32.totalorder %s16, 1
    %p248 = por %p246, %p247
    %p249 = scmp.ne.s32.totalorder %s241, %s244
    %p250 = scmp.eq.s32.totalorder %s16, 0
    %p251 = por %p249, %p250
    %p252 = scmp.ne.s32.totalorder %s241, %s244
    %p253 = scmp.eq.s32.totalorder %s21, 1
    %p254 = por %p252, %p253
    %p255 = scmp.ne.s32.totalorder %s244, %s245
    %p256 = scmp.eq.s32.totalorder %s21, 0
    %p257 = por %p255, %p256
    %p258 = scmp.ne.s32.totalorder %s244, %s245
    %p259 = scmp.eq.s32.totalorder %s22, 1
    %p260 = por %p258, %p259
    %p262 = scmp.ne.s32.totalorder %s245, %s261
    %p263 = scmp.eq.s32.totalorder %s22, 0
    %p264 = por %p262, %p263
    %p265 = scmp.le.s32.totalorder 1, %s16
    %p266 = scmp.lt.s32.totalorder %s16, 3
    %p267 = pnand %p265, %p266
    %p268 = pneg %p267
    // Predicated region
    $region9: #{laean_forward.48} parent=5 // pred_check
      _
    $region10: #{laean_forward.48} parent=5 // pred_check_branch
      %270 = sbr.rel (%p267) target = $region12
    $region11: #{laean_forward.48} parent=5 // pred_region
      %s271 = ssub.s32 %s16, 1
      // Predicated region
      $region13: #{laean_forward.48} parent=11 // pred_check
        %p272 = pneg %p103
      $region14: #{laean_forward.48} parent=11 // pred_check_branch
        %274 = sbr.rel (%p272) target = $region16
      $region15: #{laean_forward.48} parent=11 // pred_region
        _
      $region16: #{laean_forward.48} parent=11 // pred_fallthru
        _
      // Predicated region
      $region17: #{laean_forward.48} parent=11 // pred_check
        %p275 = pneg %p124
      $region18: #{laean_forward.48} parent=11 // pred_check_branch
        %277 = sbr.rel (%p275) target = $region20
      $region19: #{laean_forward.48} parent=11 // pred_region
        _
      $region20: #{laean_forward.48} parent=11 // pred_fallthru
        _
      // Predicated region
      $region21: #{laean_forward.48} parent=11 // pred_check
        %p278 = pneg %p145
      $region22: #{laean_forward.48} parent=11 // pred_check_branch
        %280 = sbr.rel (%p278) target = $region24
      $region23: #{laean_forward.48} parent=11 // pred_region
        _
      $region24: #{laean_forward.48} parent=11 // pred_fallthru
        _
      // Predicated region
      $region25: #{laean_forward.48} parent=11 // pred_check
        %p281 = pneg %p166
      $region26: #{laean_forward.48} parent=11 // pred_check_branch
        %283 = sbr.rel (%p281) target = $region28
      $region27: #{laean_forward.48} parent=11 // pred_region
        _
      $region28: #{laean_forward.48} parent=11 // pred_fallthru
        _
      // Predicated region
      $region29: #{laean_forward.48} parent=11 // pred_check
        %p284 = pneg %p187
      $region30: #{laean_forward.48} parent=11 // pred_check_branch
        %286 = sbr.rel (%p284) target = $region32
      $region31: #{laean_forward.48} parent=11 // pred_region
        _
      $region32: #{laean_forward.48} parent=11 // pred_fallthru
        _
      // Predicated region
      $region33: #{laean_forward.48} parent=11 // pred_check
        %p287 = pneg %p208
      $region34: #{laean_forward.48} parent=11 // pred_check_branch
        %289 = sbr.rel (%p287) target = $region36
      $region35: #{laean_forward.48} parent=11 // pred_region
        _
      $region36: #{laean_forward.48} parent=11 // pred_fallthru
        _
      // Predicated region
      $region37: #{laean_forward.48} parent=11 // pred_check
        %p290 = pneg %p229
      $region38: #{laean_forward.48} parent=11 // pred_check_branch
        %292 = sbr.rel (%p290) target = $region40
      $region39: #{laean_forward.48} parent=11 // pred_region
        _
      $region40: #{laean_forward.48} parent=11 // pred_fallthru
        _
    $region12: #{laean_forward.48} parent=5 // pred_fallthru
      _
    %p293 = scmp.lt.s32.totalorder %s16, 2
    // Predicated region
    $region41: #{laean_forward.48} parent=5 // pred_check
      %p294 = pneg %p293
    $region42: #{laean_forward.48} parent=5 // pred_check_branch
      %296 = sbr.rel (%p294) target = $region44
    $region43: #{laean_forward.48} parent=5 // pred_region
      // Predicated region
      $region45: #{laean_forward.48} parent=43 // pred_check
        %p297 = pneg %p48
      $region46: #{laean_forward.48} parent=43 // pred_check_branch
        %299 = sbr.rel (%p297) target = $region48
      $region47: #{laean_forward.48} parent=43 // pred_region
        %p300 = scmp.lt.s32.totalorder %s23, 1
        %s301 = scalar_select %p300, %s23, 1
        %s302 = smul.addr %s301, 2
        %s303 = smul.addr %s302, 8
        %s304 = scalar_lea.vmem %s0, %s303
      $region48: #{laean_forward.48} parent=43 // pred_fallthru
        _
      // Predicated region
      $region49: #{laean_forward.48} parent=43 // pred_check
        %p305 = pneg %p76
      $region50: #{laean_forward.48} parent=43 // pred_check_branch
        %307 = sbr.rel (%p305) target = $region52
      $region51: #{laean_forward.48} parent=43 // pred_region
        %p308 = scmp.lt.s32.totalorder %s23, 1
        %s309 = scalar_select %p308, %s23, 1
        %p310 = scmp.lt.s32.totalorder %s24, 0
        %s311 = scalar_select %p310, %s24, 0
        %s312 = smul.addr %s309, 2
        %s313 = sadd.s32 %s311, %s312
        %s314 = smul.addr %s313, 8
        %s315 = scalar_lea.vmem %s1, %s314
      $region52: #{laean_forward.48} parent=43 // pred_fallthru
        _
    $region44: #{laean_forward.48} parent=5 // pred_fallthru
      _
    %p316 = scmp.le.s32.totalorder 1, %s16
    %p317 = scmp.lt.s32.totalorder %s16, 3
    %p318 = pnand %p316, %p317
    %p319 = pneg %p318
    // Predicated region
    $region53: #{laean_forward.48} parent=5 // pred_check
      _
    $region54: #{laean_forward.48} parent=5 // pred_check_branch
      %321 = sbr.rel (%p318) target = $region56
    $region55: #{laean_forward.48} parent=5 // pred_region
      %s322 = ssub.s32 %s16, 1
      %p323 = scmp.lt.s32.totalorder %s25, 1
      %s324 = scalar_select %p323, %s25, 1
      %s325 = smul.addr %s324, 2
      %s326 = smul.addr %s325, 8
      %s327 = scalar_lea.vmem %s0, %s326
      %p328 = pneg %p54
      %p329 = pneg %p51
      %p330 = scmp.lt.s32.totalorder %s25, 1
      %s331 = scalar_select %p330, %s25, 1
      %p332 = scmp.lt.s32.totalorder %s26, 0
      %s333 = scalar_select %p332, %s26, 0
      %s334 = smul.addr %s331, 2
      %s335 = sadd.s32 %s333, %s334
      %s336 = smul.addr %s335, 8
      %s337 = scalar_lea.vmem %s1, %s336
      %p338 = pneg %p82
      %p339 = pneg %p79
      %p340 = pneg %p103
      %p341 = pneg %p100
      %p342 = pneg %p124
      %p343 = pneg %p121
      %p344 = pneg %p145
      %p345 = pneg %p142
      %p346 = pneg %p166
      %p347 = pneg %p163
      %p348 = pneg %p187
      %p349 = pneg %p184
      %p350 = pneg %p208
      %p351 = pneg %p205
      %p352 = pneg %p229
      %p353 = pneg %p226
      %p354 = pneg %p257
      %p355 = pneg %p254
      %p356 = scmp.lt.s32.totalorder %s25, 1
      %s357 = scalar_select %p356, %s25, 1
      %p358 = scmp.lt.s32.totalorder %s26, 0
      %s359 = scalar_select %p358, %s26, 0
      %s360 = smul.addr %s357, 2
      %s361 = sadd.s32 %s359, %s360
      %s362 = smul.addr %s361, 8
      %s363 = scalar_lea.vmem %s9, %s362
      %p364 = scmp.lt.s32.totalorder %s25, 1
      %s365 = scalar_select %p364, %s25, 1
      %s366 = smul.addr %s365, 2
      %s367 = smul.addr %s366, 8
      %s368 = scalar_lea.vmem %s0, %s367
      %p369 = scmp.lt.s32.totalorder %s25, 1
      %s370 = scalar_select %p369, %s25, 1
      %p371 = scmp.lt.s32.totalorder %s26, 0
      %s372 = scalar_select %p371, %s26, 0
      %s373 = smul.addr %s370, 2
      %s374 = sadd.s32 %s372, %s373
      %s375 = smul.addr %s374, 8
      %s376 = scalar_lea.vmem %s1, %s375
      %p377 = scmp.lt.s32.totalorder %s25, 1
      %s378 = scalar_select %p377, %s25, 1
      %p379 = scmp.lt.s32.totalorder %s26, 0
      %s380 = scalar_select %p379, %s26, 0
      %s381 = smul.addr %s378, 2
      %s382 = sadd.s32 %s380, %s381
      %s383 = smul.addr %s382, 8
      %s384 = scalar_lea.vmem %s9, %s383
      %v385 = vld [vmem:[%s368] sm:$0xff]
      %v386 = vld [vmem:[%s368 + $0x8] sm:$0xff]
      %v387 = vld [vmem:[%s376] sm:$0xff]
      %v388 = vld [vmem:[%s376 + $0x8] sm:$0xff]
      %v389 = vld [vmem:[%s2] sm:$0x3]
      %v390 = vld [vmem:[%s3] sm:$0x3]
      %392 = vset.pattern.permute.xlu0 0
      %393 = vperm.xlu0 %392, %v390
      %v394 = vpop.permute.xlu0 %393
      %vm396 = vcmask 130048
      %v398 = vsel %vm396, %v389, 0
      %400 = vmatprep.subr.mxu0 0.0
      %401 = vmatpush1.msra.mxu0 %v387
      %402 = vmatprep.subr.mxu0 0.0
      %403 = vmatpush1.msra.mxu0 %v388
      %404 = vmatprep.subr.mxu0 0.0
      %405 = vmatpush1.msra.mxu0 0.0
      %406 = vmatprep.subr.mxu0 0.0
      %407 = vmatpush1.msra.mxu0 0.0
      %408 = vmatprep.subr.mxu0 0.0
      %409 = vmatpush1.msra.mxu0 0.0
      %410 = vmatprep.subr.mxu0 0.0
      %411 = vmatpush1.msra.mxu0 0.0
      %412 = vmatprep.subr.mxu0 0.0
      %413 = vmatpush1.msra.mxu0 0.0
      %414 = vmatprep.subr.mxu0 0.0
      %415 = vmatpush1.msra.mxu0 0.0
      %416 = vmatprep.subr.mxu0 0.0
      %417 = vmatpush1.msra.mxu0 0.0
      %418 = vmatprep.subr.mxu0 0.0
      %419 = vmatpush1.msra.mxu0 0.0
      %420 = vmatprep.subr.mxu0 0.0
      %421 = vmatpush1.msra.mxu0 0.0
      %422 = vmatprep.subr.mxu0 0.0
      %423 = vmatpush1.msra.mxu0 0.0
      %424 = vmatprep.subr.mxu0 0.0
      %425 = vmatpush1.msra.mxu0 0.0
      %426 = vmatprep.subr.mxu0 0.0
      %427 = vmatpush1.msra.mxu0 0.0
      %428 = vmatprep.subr.mxu0 0.0
      %429 = vmatpush1.msra.mxu0 0.0
      %430 = vmatprep.subr.mxu0 0.0
      %431 = vmatpush1.msra.mxu0 0.0
      %432 = vmatprep.subr.mxu0 0.0
      %433 = vmatpush1.msra.mxu0 0.0
      %434 = vmatprep.subr.mxu0 0.0
      %435 = vmatpush1.msra.mxu0 0.0
      %436 = vmatprep.subr.mxu0 0.0
      %437 = vmatpush1.msra.mxu0 0.0
      %438 = vmatprep.subr.mxu0 0.0
      %439 = vmatpush1.msra.mxu0 0.0
      %440 = vmatprep.subr.mxu0 0.0
      %441 = vmatpush1.msra.mxu0 0.0
      %442 = vmatprep.subr.mxu0 0.0
      %443 = vmatpush1.msra.mxu0 0.0
      %444 = vmatprep.subr.mxu0 0.0
      %445 = vmatpush1.msra.mxu0 0.0
      %446 = vmatprep.subr.mxu0 0.0
      %447 = vmatpush1.msra.mxu0 0.0
      %448 = vmatprep.subr.mxu0 0.0
      %449 = vmatpush1.msra.mxu0 0.0
      %450 = vmatprep.subr.mxu0 0.0
      %451 = vmatpush1.msra.mxu0 0.0
      %452 = vmatprep.subr.mxu0 0.0
      %453 = vmatpush1.msra.mxu0 0.0
      %454 = vmatprep.subr.mxu0 0.0
      %455 = vmatpush1.msra.mxu0 0.0
      %456 = vmatprep.subr.mxu0 0.0
      %457 = vmatpush1.msra.mxu0 0.0
      %458 = vmatprep.subr.mxu0 0.0
      %459 = vmatpush1.msra.mxu0 0.0
      %460 = vmatprep.subr.mxu0 0.0
      %461 = vmatpush1.msra.mxu0 0.0
      %462 = vmatprep.subr.mxu0 0.0
      %463 = vmatpush1.msra.mxu0 0.0
      %464 = vmatprep.mubr.f32.mxu0 0.0
      %465 = vmatmul.mubr.f32.gmra.mrb[0].mxu0 %v398
      %v466 = vpop.f32.mrb[0].mxu0
      %v467 = vadd.f32 %v394, %v466
      %v468 = vpop.f32.mrb[0].mxu0
      %469 = vdwg.mxu0
      %v470 = vld [vmem:[%s4] sm:$0x3]
      %v471 = vld [vmem:[%s5] sm:$0x3]
      %473 = vset.pattern.permute.xlu0 0
      %474 = vperm.xlu0 %473, %v471
      %v475 = vpop.permute.xlu0 %474
      %v478 = vsel %vm396, %v470, 0
      %480 = vmatprep.subr.mxu0 0.0
      %481 = vmatpush1.msra.mxu0 %v385
      %482 = vmatprep.subr.mxu0 0.0
      %483 = vmatpush1.msra.mxu0 %v386
      %484 = vmatprep.subr.mxu0 0.0
      %485 = vmatpush1.msra.mxu0 0.0
      %486 = vmatprep.subr.mxu0 0.0
      %487 = vmatpush1.msra.mxu0 0.0
      %488 = vmatprep.subr.mxu0 0.0
      %489 = vmatpush1.msra.mxu0 0.0
      %490 = vmatprep.subr.mxu0 0.0
      %491 = vmatpush1.msra.mxu0 0.0
      %492 = vmatprep.subr.mxu0 0.0
      %493 = vmatpush1.msra.mxu0 0.0
      %494 = vmatprep.subr.mxu0 0.0
      %495 = vmatpush1.msra.mxu0 0.0
      %496 = vmatprep.subr.mxu0 0.0
      %497 = vmatpush1.msra.mxu0 0.0
      %498 = vmatprep.subr.mxu0 0.0
      %499 = vmatpush1.msra.mxu0 0.0
      %500 = vmatprep.subr.mxu0 0.0
      %501 = vmatpush1.msra.mxu0 0.0
      %502 = vmatprep.subr.mxu0 0.0
      %503 = vmatpush1.msra.mxu0 0.0
      %504 = vmatprep.subr.mxu0 0.0
      %505 = vmatpush1.msra.mxu0 0.0
      %506 = vmatprep.subr.mxu0 0.0
      %507 = vmatpush1.msra.mxu0 0.0
      %508 = vmatprep.subr.mxu0 0.0
      %509 = vmatpush1.msra.mxu0 0.0
      %510 = vmatprep.subr.mxu0 0.0
      %511 = vmatpush1.msra.mxu0 0.0
      %512 = vmatprep.subr.mxu0 0.0
      %513 = vmatpush1.msra.mxu0 0.0
      %514 = vmatprep.subr.mxu0 0.0
      %515 = vmatpush1.msra.mxu0 0.0
      %516 = vmatprep.subr.mxu0 0.0
      %517 = vmatpush1.msra.mxu0 0.0
      %518 = vmatprep.subr.mxu0 0.0
      %519 = vmatpush1.msra.mxu0 0.0
      %520 = vmatprep.subr.mxu0 0.0
      %521 = vmatpush1.msra.mxu0 0.0
      %522 = vmatprep.subr.mxu0 0.0
      %523 = vmatpush1.msra.mxu0 0.0
      %524 = vmatprep.subr.mxu0 0.0
      %525 = vmatpush1.msra.mxu0 0.0
      %526 = vmatprep.subr.mxu0 0.0
      %527 = vmatpush1.msra.mxu0 0.0
      %528 = vmatprep.subr.mxu0 0.0
      %529 = vmatpush1.msra.mxu0 0.0
      %530 = vmatprep.subr.mxu0 0.0
      %531 = vmatpush1.msra.mxu0 0.0
      %532 = vmatprep.subr.mxu0 0.0
      %533 = vmatpush1.msra.mxu0 0.0
      %534 = vmatprep.subr.mxu0 0.0
      %535 = vmatpush1.msra.mxu0 0.0
      %536 = vmatprep.subr.mxu0 0.0
      %537 = vmatpush1.msra.mxu0 0.0
      %538 = vmatprep.subr.mxu0 0.0
      %539 = vmatpush1.msra.mxu0 0.0
      %540 = vmatprep.subr.mxu0 0.0
      %541 = vmatpush1.msra.mxu0 0.0
      %542 = vmatprep.subr.mxu0 0.0
      %543 = vmatpush1.msra.mxu0 0.0
      %544 = vmatprep.mubr.f32.mxu0 0.0
      %545 = vmatmul.mubr.f32.gmra.mrb[0].mxu0 %v478
      %v546 = vpop.f32.mrb[0].mxu0
      %v547 = vadd.f32 %v475, %v546
      %v548 = vpop.f32.mrb[0].mxu0
      %549 = vdwg.mxu0
      %v550 = vld [vmem:[%s6] sm:$0xff]
      %v551 = vld [vmem:[%s6 + $0x8] sm:$0xff]
      %v552 = vld [vmem:[%s7] sm:$0xff]
      %v553 = vld [vmem:[%s7 + $0x8] sm:$0xff]
      %555 = vset.pattern.permute.xlu0 0
      %556 = vperm.xlu0 %555, %v552
      %v557 = vpop.permute.xlu0 %556
      %560 = vset.pattern.permute.xlu0 0
      %561 = vperm.xlu0 %560, %v553
      %v562 = vpop.permute.xlu0 %561
      %v565 = vsel %vm396, %v550, 0
      %v568 = vsel %vm396, %v551, 0
      %570 = vmatprep.subr.mxu0 0.0
      %571 = vmatpush1.msra.mxu0 %v385
      %572 = vmatprep.subr.mxu0 0.0
      %573 = vmatpush1.msra.mxu0 %v386
      %574 = vmatprep.subr.mxu0 0.0
      %575 = vmatpush1.msra.mxu0 0.0
      %576 = vmatprep.subr.mxu0 0.0
      %577 = vmatpush1.msra.mxu0 0.0
      %578 = vmatprep.subr.mxu0 0.0
      %579 = vmatpush1.msra.mxu0 0.0
      %580 = vmatprep.subr.mxu0 0.0
      %581 = vmatpush1.msra.mxu0 0.0
      %582 = vmatprep.subr.mxu0 0.0
      %583 = vmatpush1.msra.mxu0 0.0
      %584 = vmatprep.subr.mxu0 0.0
      %585 = vmatpush1.msra.mxu0 0.0
      %586 = vmatprep.subr.mxu0 0.0
      %587 = vmatpush1.msra.mxu0 0.0
      %588 = vmatprep.subr.mxu0 0.0
      %589 = vmatpush1.msra.mxu0 0.0
      %590 = vmatprep.subr.mxu0 0.0
      %591 = vmatpush1.msra.mxu0 0.0
      %592 = vmatprep.subr.mxu0 0.0
      %593 = vmatpush1.msra.mxu0 0.0
      %594 = vmatprep.subr.mxu0 0.0
      %595 = vmatpush1.msra.mxu0 0.0
      %596 = vmatprep.subr.mxu0 0.0
      %597 = vmatpush1.msra.mxu0 0.0
      %598 = vmatprep.subr.mxu0 0.0
      %599 = vmatpush1.msra.mxu0 0.0
      %600 = vmatprep.subr.mxu0 0.0
      %601 = vmatpush1.msra.mxu0 0.0
      %602 = vmatprep.subr.mxu0 0.0
      %603 = vmatpush1.msra.mxu0 0.0
      %604 = vmatprep.subr.mxu0 0.0
      %605 = vmatpush1.msra.mxu0 0.0
      %606 = vmatprep.subr.mxu0 0.0
      %607 = vmatpush1.msra.mxu0 0.0
      %608 = vmatprep.subr.mxu0 0.0
      %609 = vmatpush1.msra.mxu0 0.0
      %610 = vmatprep.subr.mxu0 0.0
      %611 = vmatpush1.msra.mxu0 0.0
      %612 = vmatprep.subr.mxu0 0.0
      %613 = vmatpush1.msra.mxu0 0.0
      %614 = vmatprep.subr.mxu0 0.0
      %615 = vmatpush1.msra.mxu0 0.0
      %616 = vmatprep.subr.mxu0 0.0
      %617 = vmatpush1.msra.mxu0 0.0
      %618 = vmatprep.subr.mxu0 0.0
      %619 = vmatpush1.msra.mxu0 0.0
      %620 = vmatprep.subr.mxu0 0.0
      %621 = vmatpush1.msra.mxu0 0.0
      %622 = vmatprep.subr.mxu0 0.0
      %623 = vmatpush1.msra.mxu0 0.0
      %624 = vmatprep.subr.mxu0 0.0
      %625 = vmatpush1.msra.mxu0 0.0
      %626 = vmatprep.subr.mxu0 0.0
      %627 = vmatpush1.msra.mxu0 0.0
      %628 = vmatprep.subr.mxu0 0.0
      %629 = vmatpush1.msra.mxu0 0.0
      %630 = vmatprep.subr.mxu0 0.0
      %631 = vmatpush1.msra.mxu0 0.0
      %632 = vmatprep.subr.mxu0 0.0
      %633 = vmatpush1.msra.mxu0 0.0
      %634 = vmatprep.mubr.f32.mxu0 0.0
      %635 = vmatmul.mubr.f32.gmra.mrb[0].mxu0 %v565
      %v636 = vpop.f32.mrb[0].mxu0
      %v637 = vadd.f32 %v557, %v636
      %v638 = vpop.f32.mrb[0].mxu0
      %639 = vmatprep.mubr.f32.mxu0 0.0
      %640 = vmatmul.mubr.f32.gmra.mrb[0].mxu0 %v568
      %v641 = vpop.f32.mrb[0].mxu0
      %v642 = vadd.f32 %v562, %v641
      %v643 = vpop.f32.mrb[0].mxu0
      %644 = vdwg.mxu0
      %645 = vxpose.xlu0.b32.start [1/16] %v467, 128
      %646 = vxpose.xlu0.b32.cont [2/16] 0.0, 128
      %647 = vxpose.xlu0.b32.cont [3/16] 0.0, 128
      %648 = vxpose.xlu0.b32.cont [4/16] 0.0, 128
      %649 = vxpose.xlu0.b32.cont [5/16] 0.0, 128
      %650 = vxpose.xlu0.b32.cont [6/16] 0.0, 128
      %651 = vxpose.xlu0.b32.cont [7/16] 0.0, 128
      %652 = vxpose.xlu0.b32.cont [8/16] 0.0, 128
      %653 = vxpose.xlu0.b32.cont [9/16] 0.0, 128
      %654 = vxpose.xlu0.b32.cont [10/16] 0.0, 128
      %655 = vxpose.xlu0.b32.cont [11/16] 0.0, 128
      %656 = vxpose.xlu0.b32.cont [12/16] 0.0, 128
      %657 = vxpose.xlu0.b32.cont [13/16] 0.0, 128
      %658 = vxpose.xlu0.b32.cont [14/16] 0.0, 128
      %659 = vxpose.xlu0.b32.cont [15/16] 0.0, 128
      %660 = vxpose.xlu0.b32.end [16/16] 0.0, 128
      %v661 = vpop.trf.xlu0
      %v662 = vpop.trf.xlu0
      %v663 = vpop.trf.xlu0
      %v664 = vpop.trf.xlu0
      %v665 = vpop.trf.xlu0
      %v666 = vpop.trf.xlu0
      %v667 = vpop.trf.xlu0
      %v668 = vpop.trf.xlu0
      %v669 = vpop.trf.xlu0
      %v670 = vpop.trf.xlu0
      %v671 = vpop.trf.xlu0
      %v672 = vpop.trf.xlu0
      %v673 = vpop.trf.xlu0
      %v674 = vpop.trf.xlu0
      %v675 = vpop.trf.xlu0
      %v676 = vpop.trf.xlu0
      %vm677 = vcmask 15360
      %v679 = vsel %vm677, %v661, 0
      %v682 = vsel %vm677, %v662, 0
      %v685 = vsel %vm677, %v663, 0
      %v688 = vsel %vm677, %v664, 0
      %v691 = vsel %vm677, %v665, 0
      %v694 = vsel %vm677, %v666, 0
      %v697 = vsel %vm677, %v667, 0
      %v700 = vsel %vm677, %v668, 0
      %vm702 = vcmask 1041408
      %v704 = vsel %vm702, %v547, 0
      %706 = vmatprep.subr.mxu0 0.0
      %707 = vmatpush1.msra.mxu0 %v704
      %708 = vmatprep.subr.mxu0 0.0
      %709 = vmatpush1.msra.mxu0 0.0
      %710 = vmatprep.subr.mxu0 0.0
      %711 = vmatpush1.msra.mxu0 0.0
      %712 = vmatprep.subr.mxu0 0.0
      %713 = vmatpush1.msra.mxu0 0.0
      %714 = vmatprep.subr.mxu0 0.0
      %715 = vmatpush1.msra.mxu0 0.0
      %716 = vmatprep.subr.mxu0 0.0
      %717 = vmatpush1.msra.mxu0 0.0
      %718 = vmatprep.subr.mxu0 0.0
      %719 = vmatpush1.msra.mxu0 0.0
      %720 = vmatprep.subr.mxu0 0.0
      %721 = vmatpush1.msra.mxu0 0.0
      %722 = vmatprep.subr.mxu0 0.0
      %723 = vmatpush1.msra.mxu0 0.0
      %724 = vmatprep.subr.mxu0 0.0
      %725 = vmatpush1.msra.mxu0 0.0
      %726 = vmatprep.subr.mxu0 0.0
      %727 = vmatpush1.msra.mxu0 0.0
      %728 = vmatprep.subr.mxu0 0.0
      %729 = vmatpush1.msra.mxu0 0.0
      %730 = vmatprep.subr.mxu0 0.0
      %731 = vmatpush1.msra.mxu0 0.0
      %732 = vmatprep.subr.mxu0 0.0
      %733 = vmatpush1.msra.mxu0 0.0
      %734 = vmatprep.subr.mxu0 0.0
      %735 = vmatpush1.msra.mxu0 0.0
      %736 = vmatprep.subr.mxu0 0.0
      %737 = vmatpush1.msra.mxu0 0.0
      %738 = vmatprep.subr.mxu0 0.0
      %739 = vmatpush1.msra.mxu0 0.0
      %740 = vmatprep.subr.mxu0 0.0
      %741 = vmatpush1.msra.mxu0 0.0
      %742 = vmatprep.subr.mxu0 0.0
      %743 = vmatpush1.msra.mxu0 0.0
      %744 = vmatprep.subr.mxu0 0.0
      %745 = vmatpush1.msra.mxu0 0.0
      %746 = vmatprep.subr.mxu0 0.0
      %747 = vmatpush1.msra.mxu0 0.0
      %748 = vmatprep.subr.mxu0 0.0
      %749 = vmatpush1.msra.mxu0 0.0
      %750 = vmatprep.subr.mxu0 0.0
      %751 = vmatpush1.msra.mxu0 0.0
      %752 = vmatprep.subr.mxu0 0.0
      %753 = vmatpush1.msra.mxu0 0.0
      %754 = vmatprep.subr.mxu0 0.0
      %755 = vmatpush1.msra.mxu0 0.0
      %756 = vmatprep.subr.mxu0 0.0
      %757 = vmatpush1.msra.mxu0 0.0
      %758 = vmatprep.subr.mxu0 0.0
      %759 = vmatpush1.msra.mxu0 0.0
      %760 = vmatprep.subr.mxu0 0.0
      %761 = vmatpush1.msra.mxu0 0.0
      %762 = vmatprep.subr.mxu0 0.0
      %763 = vmatpush1.msra.mxu0 0.0
      %764 = vmatprep.subr.mxu0 0.0
      %765 = vmatpush1.msra.mxu0 0.0
      %766 = vmatprep.subr.mxu0 0.0
      %767 = vmatpush1.msra.mxu0 0.0
      %768 = vmatprep.subr.mxu0 0.0
      %769 = vmatpush1.msra.mxu0 0.0
      %770 = vmatprep.mubr.f32.mxu0 0.0
      %771 = vmatmul.mubr.f32.gmra.mrb[0].mxu0 %v679
      %v772 = vpop.f32.mrb[0].mxu0
      %v773 = vadd.f32 0.0, %v772
      %v774 = vpop.f32.mrb[0].mxu0
      %775 = vmatprep.mubr.f32.mxu0 0.0
      %776 = vmatmul.mubr.f32.gmra.mrb[0].mxu0 %v682
      %v777 = vpop.f32.mrb[0].mxu0
      %v778 = vadd.f32 0.0, %v777
      %v779 = vpop.f32.mrb[0].mxu0
      %780 = vmatprep.mubr.f32.mxu0 0.0
      %781 = vmatmul.mubr.f32.gmra.mrb[0].mxu0 %v685
      %v782 = vpop.f32.mrb[0].mxu0
      %v783 = vadd.f32 0.0, %v782
      %v784 = vpop.f32.mrb[0].mxu0
      %785 = vmatprep.mubr.f32.mxu0 0.0
      %786 = vmatmul.mubr.f32.gmra.mrb[0].mxu0 %v688
      %v787 = vpop.f32.mrb[0].mxu0
      %v788 = vadd.f32 0.0, %v787
      %v789 = vpop.f32.mrb[0].mxu0
      %790 = vmatprep.mubr.f32.mxu0 0.0
      %791 = vmatmul.mubr.f32.gmra.mrb[0].mxu0 %v691
      %v792 = vpop.f32.mrb[0].mxu0
      %v793 = vadd.f32 0.0, %v792
      %v794 = vpop.f32.mrb[0].mxu0
      %795 = vmatprep.mubr.f32.mxu0 0.0
      %796 = vmatmul.mubr.f32.gmra.mrb[0].mxu0 %v694
      %v797 = vpop.f32.mrb[0].mxu0
      %v798 = vadd.f32 0.0, %v797
      %v799 = vpop.f32.mrb[0].mxu0
      %800 = vmatprep.mubr.f32.mxu0 0.0
      %801 = vmatmul.mubr.f32.gmra.mrb[0].mxu0 %v697
      %v802 = vpop.f32.mrb[0].mxu0
      %v803 = vadd.f32 0.0, %v802
      %v804 = vpop.f32.mrb[0].mxu0
      %805 = vmatprep.mubr.f32.mxu0 0.0
      %806 = vmatmul.mubr.f32.gmra.mrb[0].mxu0 %v700
      %v807 = vpop.f32.mrb[0].mxu0
      %v808 = vadd.f32 0.0, %v807
      %v809 = vpop.f32.mrb[0].mxu0
      %810 = vdwg.mxu0
      %vm811 = vcmask 523264
      %v812 = vsel %vm811, %v773, -inf
      %813 = vmax.xlane.f32.xlu0 %v812
      %v814 = vpop.xlane.xlu0 %813
      %v815 = vsel %vm811, %v778, -inf
      %816 = vmax.xlane.f32.xlu0 %v815
      %v817 = vpop.xlane.xlu0 %816
      %v818 = vsel %vm811, %v783, -inf
      %819 = vmax.xlane.f32.xlu0 %v818
      %v820 = vpop.xlane.xlu0 %819
      %v821 = vsel %vm811, %v788, -inf
      %822 = vmax.xlane.f32.xlu0 %v821
      %v823 = vpop.xlane.xlu0 %822
      %v824 = vsel %vm811, %v793, -inf
      %825 = vmax.xlane.f32.xlu0 %v824
      %v826 = vpop.xlane.xlu0 %825
      %v827 = vsel %vm811, %v798, -inf
      %828 = vmax.xlane.f32.xlu0 %v827
      %v829 = vpop.xlane.xlu0 %828
      %v830 = vsel %vm811, %v803, -inf
      %831 = vmax.xlane.f32.xlu0 %v830
      %v832 = vpop.xlane.xlu0 %831
      %v833 = vsel %vm811, %v808, -inf
      %834 = vmax.xlane.f32.xlu0 %v833
      %v835 = vpop.xlane.xlu0 %834
      %v836 = vsub.f32 %v773, %v814
      %v837 = vsub.f32 %v778, %v817
      %v838 = vsub.f32 %v783, %v820
      %v839 = vsub.f32 %v788, %v823
      %v840 = vsub.f32 %v793, %v826
      %v841 = vsub.f32 %v798, %v829
      %v842 = vsub.f32 %v803, %v832
      %v843 = vsub.f32 %v808, %v835
      %v844 = vmul.f32 %v836, 1.442695
      %v845 = vpow.pop %v844
      %v846 = vmul.f32 %v837, 1.442695
      %v847 = vpow.pop %v846
      %v848 = vmul.f32 %v838, 1.442695
      %v849 = vpow.pop %v848
      %v850 = vmul.f32 %v839, 1.442695
      %v851 = vpow.pop %v850
      %v852 = vmul.f32 %v840, 1.442695
      %v853 = vpow.pop %v852
      %v854 = vmul.f32 %v841, 1.442695
      %v855 = vpow.pop %v854
      %v856 = vmul.f32 %v842, 1.442695
      %v857 = vpow.pop %v856
      %v858 = vmul.f32 %v843, 1.442695
      %v859 = vpow.pop %v858
      %v860 = vsel %vm811, %v845, 0.0
      %861 = vadd.xlane.f32.xlu0 %v860
      %v862 = vpop.xlane.xlu0 %861
      %v863 = vsel %vm811, %v847, 0.0
      %864 = vadd.xlane.f32.xlu0 %v863
      %v865 = vpop.xlane.xlu0 %864
      %v866 = vsel %vm811, %v849, 0.0
      %867 = vadd.xlane.f32.xlu0 %v866
      %v868 = vpop.xlane.xlu0 %867
      %v869 = vsel %vm811, %v851, 0.0
      %870 = vadd.xlane.f32.xlu0 %v869
      %v871 = vpop.xlane.xlu0 %870
      %v872 = vsel %vm811, %v853, 0.0
      %873 = vadd.xlane.f32.xlu0 %v872
      %v874 = vpop.xlane.xlu0 %873
      %v875 = vsel %vm811, %v855, 0.0
      %876 = vadd.xlane.f32.xlu0 %v875
      %v877 = vpop.xlane.xlu0 %876
      %v878 = vsel %vm811, %v857, 0.0
      %879 = vadd.xlane.f32.xlu0 %v878
      %v880 = vpop.xlane.xlu0 %879
      %v881 = vsel %vm811, %v859, 0.0
      %882 = vadd.xlane.f32.xlu0 %v881
      %v883 = vpop.xlane.xlu0 %882
      %v884 = vrcp.pop %v862
      %v885 = vmul.f32 %v845, %v884
      %v886 = vrcp.pop %v865
      %v887 = vmul.f32 %v847, %v886
      %v888 = vrcp.pop %v868
      %v889 = vmul.f32 %v849, %v888
      %v890 = vrcp.pop %v871
      %v891 = vmul.f32 %v851, %v890
      %v892 = vrcp.pop %v874
      %v893 = vmul.f32 %v853, %v892
      %v894 = vrcp.pop %v877
      %v895 = vmul.f32 %v855, %v894
      %v896 = vrcp.pop %v880
      %v897 = vmul.f32 %v857, %v896
      %v898 = vrcp.pop %v883
      %v899 = vmul.f32 %v859, %v898
      %v901 = vsel %vm811, %v637, 0
      %v904 = vsel %vm811, %v642, 0
      %v907 = vsel %vm811, %v885, 0
      %v910 = vsel %vm811, %v887, 0
      %v913 = vsel %vm811, %v889, 0
      %v916 = vsel %vm811, %v891, 0
      %v919 = vsel %vm811, %v893, 0
      %v922 = vsel %vm811, %v895, 0
      %v925 = vsel %vm811, %v897, 0
      %v928 = vsel %vm811, %v899, 0
      %930 = vmatprep.subr.mxu0 0.0
      %931 = vmatpush1.xpose.msra.mxu0 %v907
      %932 = vmatprep.subr.mxu0 0.0
      %933 = vmatpush1.xpose.msra.mxu0 %v910
      %934 = vmatprep.subr.mxu0 0.0
      %935 = vmatpush1.xpose.msra.mxu0 %v913
      %936 = vmatprep.subr.mxu0 0.0
      %937 = vmatpush1.xpose.msra.mxu0 %v916
      %938 = vmatprep.subr.mxu0 0.0
      %939 = vmatpush1.xpose.msra.mxu0 %v919
      %940 = vmatprep.subr.mxu0 0.0
      %941 = vmatpush1.xpose.msra.mxu0 %v922
      %942 = vmatprep.subr.mxu0 0.0
      %943 = vmatpush1.xpose.msra.mxu0 %v925
      %944 = vmatprep.subr.mxu0 0.0
      %945 = vmatpush1.xpose.msra.mxu0 %v928
      %946 = vmatprep.subr.mxu0 0.0
      %947 = vmatpush1.xpose.msra.mxu0 0.0
      %948 = vmatprep.subr.mxu0 0.0
      %949 = vmatpush1.xpose.msra.mxu0 0.0
      %950 = vmatprep.subr.mxu0 0.0
      %951 = vmatpush1.xpose.msra.mxu0 0.0
      %952 = vmatprep.subr.mxu0 0.0
      %953 = vmatpush1.xpose.msra.mxu0 0.0
      %954 = vmatprep.subr.mxu0 0.0
      %955 = vmatpush1.xpose.msra.mxu0 0.0
      %956 = vmatprep.subr.mxu0 0.0
      %957 = vmatpush1.xpose.msra.mxu0 0.0
      %958 = vmatprep.subr.mxu0 0.0
      %959 = vmatpush1.xpose.msra.mxu0 0.0
      %960 = vmatprep.subr.mxu0 0.0
      %961 = vmatpush1.xpose.msra.mxu0 0.0
      %962 = vmatprep.subr.mxu0 0.0
      %963 = vmatpush1.xpose.msra.mxu0 0.0
      %964 = vmatprep.subr.mxu0 0.0
      %965 = vmatpush1.xpose.msra.mxu0 0.0
      %966 = vmatprep.subr.mxu0 0.0
      %967 = vmatpush1.xpose.msra.mxu0 0.0
      %968 = vmatprep.subr.mxu0 0.0
      %969 = vmatpush1.xpose.msra.mxu0 0.0
      %970 = vmatprep.subr.mxu0 0.0
      %971 = vmatpush1.xpose.msra.mxu0 0.0
      %972 = vmatprep.subr.mxu0 0.0
      %973 = vmatpush1.xpose.msra.mxu0 0.0
      %974 = vmatprep.subr.mxu0 0.0
      %975 = vmatpush1.xpose.msra.mxu0 0.0
      %976 = vmatprep.subr.mxu0 0.0
      %977 = vmatpush1.xpose.msra.mxu0 0.0
      %978 = vmatprep.subr.mxu0 0.0
      %979 = vmatpush1.xpose.msra.mxu0 0.0
      %980 = vmatprep.subr.mxu0 0.0
      %981 = vmatpush1.xpose.msra.mxu0 0.0
      %982 = vmatprep.subr.mxu0 0.0
      %983 = vmatpush1.xpose.msra.mxu0 0.0
      %984 = vmatprep.subr.mxu0 0.0
      %985 = vmatpush1.xpose.msra.mxu0 0.0
      %986 = vmatprep.subr.mxu0 0.0
      %987 = vmatpush1.xpose.msra.mxu0 0.0
      %988 = vmatprep.subr.mxu0 0.0
      %989 = vmatpush1.xpose.msra.mxu0 0.0
      %990 = vmatprep.subr.mxu0 0.0
      %991 = vmatpush1.xpose.msra.mxu0 0.0
      %992 = vmatprep.subr.mxu0 0.0
      %993 = vmatpush1.xpose.msra.mxu0 0.0
      %994 = vmatprep.mubr.f32.mxu0 0.0
      %995 = vmatmul.mubr.f32.gmra.mrb[0].mxu0 %v901
      %v996 = vpop.f32.mrb[0].mxu0
      %v997 = vadd.f32 0.0, %v996
      %v998 = vpop.f32.mrb[0].mxu0
      %999 = vmatprep.mubr.f32.mxu0 0.0
      %1000 = vmatmul.mubr.f32.gmra.mrb[0].mxu0 %v904
      %v1001 = vpop.f32.mrb[0].mxu0
      %v1002 = vadd.f32 0.0, %v1001
      %v1003 = vpop.f32.mrb[0].mxu0
      %1004 = vdwg.mxu0
      %s1005 = sld [smem:[#allocation2]]
      %v1006 = vstv %s1005
      %v1007 = vmul.f32 %v1006, %v997
      %v1008 = vmul.f32 %v1006, %v1002
      %v1009 = vadd.f32 %v1007, %v387
      %v1010 = vadd.f32 %v1008, %v388
      %1011 = vst.msk [vmem:[%s384] sm:$0xff] %vm811, %v1009
      %1012 = vst.msk [vmem:[%s384 + $0x8] sm:$0xff] %vm811, %v1010
      %p1013 = scmp.lt.s32.totalorder %s25, 1
      %s1014 = scalar_select %p1013, %s25, 1
      %p1015 = scmp.lt.s32.totalorder %s26, 0
      %s1016 = scalar_select %p1015, %s26, 0
      %s1017 = smul.addr %s1014, 2
      %s1018 = sadd.s32 %s1016, %s1017
      %s1019 = smul.addr %s1018, 8
      %s1020 = scalar_lea.vmem %s9, %s1019
      // Predicated region
      $region57: #{laean_forward.48} parent=55 // pred_check
        %p1021 = pneg %p254
      $region58: #{laean_forward.48} parent=55 // pred_check_branch
        %1023 = sbr.rel (%p1021) target = $region60
      $region59: #{laean_forward.48} parent=55 // pred_region
        _
      $region60: #{laean_forward.48} parent=55 // pred_fallthru
        _
    $region56: #{laean_forward.48} parent=5 // pred_fallthru
      _
    %p1024 = scmp.le.s32.totalorder 2, %s16
    // Predicated region
    $region61: #{laean_forward.48} parent=5 // pred_check
      %p1025 = pneg %p1024
    $region62: #{laean_forward.48} parent=5 // pred_check_branch
      %1027 = sbr.rel (%p1025) target = $region64
    $region63: #{laean_forward.48} parent=5 // pred_region
      %s1028 = ssub.s32 %s16, 2
      // Predicated region
      $region65: #{laean_forward.48} parent=63 // pred_check
        %p1029 = pneg %p260
      $region66: #{laean_forward.48} parent=63 // pred_check_branch
        %1031 = sbr.rel (%p1029) target = $region68
      $region67: #{laean_forward.48} parent=63 // pred_region
        %p1032 = scmp.lt.s32.totalorder %s27, 1
        %s1033 = scalar_select %p1032, %s27, 1
        %p1034 = scmp.lt.s32.totalorder %s28, 0
        %s1035 = scalar_select %p1034, %s28, 0
        %s1036 = smul.addr %s1033, 2
        %s1037 = sadd.s32 %s1035, %s1036
        %s1038 = smul.addr %s1037, 8
        %s1039 = scalar_lea.vmem %s9, %s1038
      $region68: #{laean_forward.48} parent=63 // pred_fallthru
        _
    $region64: #{laean_forward.48} parent=5 // pred_fallthru
      _
  $region6: #{laean_forward.48} parent=0 // loop_footer
    %s20 = sadd.s32 1, %s16
  $region7: #{laean_forward.48} parent=0 // loop_footer_branch
    %15 = sbr.rel target = $region3
  $region8: #{laean_forward.48} parent=0 // loop_exit
    _

// kernel: laean_forward.49
$region0: #{laean_forward.49}
  #allocation0 [shape = 'u32[]', space=smem, size = 0x4, offset = 0x4, fixed_abs, tag = 'smem constant byte address 0x4 - core index']
  #allocation1 [shape = 'u32[144,128]{1,0:T(1,128)}', space=vmem, size = 0x12000, scoped, tag = 'internal scratch']
  #allocation2 [shape = 'f32[1]{0:T(128)S(6)}', space=smem, size = 0x200, scoped, tag = 'scoped memory for laean_forward.49']
  %s0 = inlined_call_operand.vmem [shape: f32[2,144,64], index: 0, kind: input, shape index: {}]
  %s1 = inlined_call_operand.vmem [shape: f32[16,144], index: 1, kind: input, shape index: {}]
  %s2 = inlined_call_operand.vmem [shape: f32[16,1], index: 2, kind: input, shape index: {}]
  %s3 = inlined_call_operand.<no memory space> [shape: f32[1], index: 3, kind: input, shape index: {}]
  %s4 = inlined_call_operand.vmem [shape: f32[2,16,64], index: 4, kind: output, shape index: {}]
  %s5 = sld [smem:[#allocation0]]
  $region49: #{laean_forward.49} parent=0
    _
  %s7 = ssub.s32 1, %s5
  %s8 = scalar_select 0, %s7, %s5
  %9 = sst [smem:[#allocation2]] %s3
  loop: start=0, step=1, limit=4
  $region2: #{laean_forward.49} parent=0 // loop_pre_header
    _
  $region3: #{laean_forward.49} parent=0 // loop_header
    %s11 = sphi 0, %s15
    %p12 = scmp.ge.s32.totalorder %s11, 4
    %s18 = sphi 0, %s30
    %s19 = sphi 0, %s26
    %s20 = sphi 0, %s18
    %s21 = sphi 0, %s19
    %s22 = sphi 0, %s20
    %s23 = sphi 0, %s21
    %s35 = sphi 0, %s37
    %s38 = sphi 0, %s35
    %s39 = sphi 0, %s38
    %s55 = sphi 0, %s39
    %s59 = sphi 0, %s59
    %s61 = sphi 0, %s59
    %s62 = sphi 0, %s61
    %s76 = sphi 0, %s62
    %s80 = sphi 0, %s80
    %s82 = sphi 0, %s80
    %s83 = sphi 0, %s82
    %s97 = sphi 0, %s83
    %s101 = sphi 0, %s101
    %s103 = sphi 0, %s101
    %s104 = sphi 0, %s103
    %s118 = sphi 0, %s104
    %s126 = sphi 0, %s128
    %s129 = sphi 0, %s126
    %s130 = sphi 0, %s129
    %s146 = sphi 0, %s130
  $region4: #{laean_forward.49} parent=0 // loop_header_branch
    %14 = sbr.rel (%p12) target = $region8
  $region5: #{laean_forward.49} parent=0 // loop_body
    %s16 = ssub.s32 %s11, 1
    %s17 = ssub.s32 %s11, 2
    %s24 = sadd.s32 1, %s19
    %p25 = scmp.ge.s32.totalorder %s24, 1
    %s26 = scalar_select %p25, 0, %s24
    %s27 = sadd.s32 1, %s18
    %s28 = scalar_select %p25, %s27, %s18
    %p29 = scmp.ge.s32.totalorder %s28, 2
    %s30 = scalar_select %p29, 0, %s28
    %s31 = ssub.s32 %s18, %s30
    %s32 = ssub.s32 %s19, %s26
    %s33 = sor.u32 %s31, %s32
    %p34 = scmp.eq.s32.totalorder %s33, 0
    %s36 = sadd.s32 %s35, 1
    %s37 = scalar_select %p34, %s35, %s36
    %p40 = pneg %p34
    %p41 = scmp.eq.s32.totalorder %s11, 1
    %p42 = por %p40, %p41
    %p43 = scmp.ne.s32.totalorder %s35, %s38
    %p44 = scmp.eq.s32.totalorder %s11, 0
    %p45 = por %p43, %p44
    %p46 = scmp.ne.s32.totalorder %s35, %s38
    %p47 = scmp.eq.s32.totalorder %s16, 1
    %p48 = por %p46, %p47
    %p49 = scmp.ne.s32.totalorder %s38, %s39
    %p50 = scmp.eq.s32.totalorder %s16, 0
    %p51 = por %p49, %p50
    %p52 = scmp.ne.s32.totalorder %s38, %s39
    %p53 = scmp.eq.s32.totalorder %s17, 1
    %p54 = por %p52, %p53
    %p56 = scmp.ne.s32.totalorder %s39, %s55
    %p57 = scmp.eq.s32.totalorder %s17, 0
    %p58 = por %p56, %p57
    %s60 = sadd.s32 %s59, 1
    %p63 = scmp.eq.s32.totalorder %s11, 1
    %p64 = scmp.ne.s32.totalorder %s59, %s61
    %p65 = scmp.eq.s32.totalorder %s11, 0
    %p66 = por %p64, %p65
    %p67 = scmp.ne.s32.totalorder %s59, %s61
    %p68 = scmp.eq.s32.totalorder %s16, 1
    %p69 = por %p67, %p68
    %p70 = scmp.ne.s32.totalorder %s61, %s62
    %p71 = scmp.eq.s32.totalorder %s16, 0
    %p72 = por %p70, %p71
    %p73 = scmp.ne.s32.totalorder %s61, %s62
    %p74 = scmp.eq.s32.totalorder %s17, 1
    %p75 = por %p73, %p74
    %p77 = scmp.ne.s32.totalorder %s62, %s76
    %p78 = scmp.eq.s32.totalorder %s17, 0
    %p79 = por %p77, %p78
    %s81 = sadd.s32 %s80, 1
    %p84 = scmp.eq.s32.totalorder %s11, 1
    %p85 = scmp.ne.s32.totalorder %s80, %s82
    %p86 = scmp.eq.s32.totalorder %s11, 0
    %p87 = por %p85, %p86
    %p88 = scmp.ne.s32.totalorder %s80, %s82
    %p89 = scmp.eq.s32.totalorder %s16, 1
    %p90 = por %p88, %p89
    %p91 = scmp.ne.s32.totalorder %s82, %s83
    %p92 = scmp.eq.s32.totalorder %s16, 0
    %p93 = por %p91, %p92
    %p94 = scmp.ne.s32.totalorder %s82, %s83
    %p95 = scmp.eq.s32.totalorder %s17, 1
    %p96 = por %p94, %p95
    %p98 = scmp.ne.s32.totalorder %s83, %s97
    %p99 = scmp.eq.s32.totalorder %s17, 0
    %p100 = por %p98, %p99
    %s102 = sadd.s32 %s101, 1
    %p105 = scmp.eq.s32.totalorder %s11, 1
    %p106 = scmp.ne.s32.totalorder %s101, %s103
    %p107 = scmp.eq.s32.totalorder %s11, 0
    %p108 = por %p106, %p107
    %p109 = scmp.ne.s32.totalorder %s101, %s103
    %p110 = scmp.eq.s32.totalorder %s16, 1
    %p111 = por %p109, %p110
    %p112 = scmp.ne.s32.totalorder %s103, %s104
    %p113 = scmp.eq.s32.totalorder %s16, 0
    %p114 = por %p112, %p113
    %p115 = scmp.ne.s32.totalorder %s103, %s104
    %p116 = scmp.eq.s32.totalorder %s17, 1
    %p117 = por %p115, %p116
    %p119 = scmp.ne.s32.totalorder %s104, %s118
    %p120 = scmp.eq.s32.totalorder %s17, 0
    %p121 = por %p119, %p120
    %s122 = ssub.s32 %s18, %s30
    %s123 = ssub.s32 %s19, %s26
    %s124 = sor.u32 %s122, %s123
    %p125 = scmp.eq.s32.totalorder %s124, 0
    %s127 = sadd.s32 %s126, 1
    %s128 = scalar_select %p125, %s126, %s127
    %p131 = pneg %p125
    %p132 = scmp.eq.s32.totalorder %s11, 1
    %p133 = por %p131, %p132
    %p134 = scmp.ne.s32.totalorder %s126, %s129
    %p135 = scmp.eq.s32.totalorder %s11, 0
    %p136 = por %p134, %p135
    %p137 = scmp.ne.s32.totalorder %s126, %s129
    %p138 = scmp.eq.s32.totalorder %s16, 1
    %p139 = por %p137, %p138
    %p140 = scmp.ne.s32.totalorder %s129, %s130
    %p141 = scmp.eq.s32.totalorder %s16, 0
    %p142 = por %p140, %p141
    %p143 = scmp.ne.s32.totalorder %s129, %s130
    %p144 = scmp.eq.s32.totalorder %s17, 1
    %p145 = por %p143, %p144
    %p147 = scmp.ne.s32.totalorder %s130, %s146
    %p148 = scmp.eq.s32.totalorder %s17, 0
    %p149 = por %p147, %p148
    %p150 = scmp.le.s32.totalorder 1, %s11
    %p151 = scmp.lt.s32.totalorder %s11, 3
    %p152 = pnand %p150, %p151
    %p153 = pneg %p152
    // Predicated region
    $region9: #{laean_forward.49} parent=5 // pred_check
      _
    $region10: #{laean_forward.49} parent=5 // pred_check_branch
      %155 = sbr.rel (%p152) target = $region12
    $region11: #{laean_forward.49} parent=5 // pred_region
      %s156 = ssub.s32 %s11, 1
      // Predicated region
      $region13: #{laean_forward.49} parent=11 // pred_check
        %p157 = pneg %p72
      $region14: #{laean_forward.49} parent=11 // pred_check_branch
        %159 = sbr.rel (%p157) target = $region16
      $region15: #{laean_forward.49} parent=11 // pred_region
        _
      $region16: #{laean_forward.49} parent=11 // pred_fallthru
        _
      // Predicated region
      $region17: #{laean_forward.49} parent=11 // pred_check
        %p160 = pneg %p93
      $region18: #{laean_forward.49} parent=11 // pred_check_branch
        %162 = sbr.rel (%p160) target = $region20
      $region19: #{laean_forward.49} parent=11 // pred_region
        _
      $region20: #{laean_forward.49} parent=11 // pred_fallthru
        _
      // Predicated region
      $region21: #{laean_forward.49} parent=11 // pred_check
        %p163 = pneg %p114
      $region22: #{laean_forward.49} parent=11 // pred_check_branch
        %165 = sbr.rel (%p163) target = $region24
      $region23: #{laean_forward.49} parent=11 // pred_region
        _
      $region24: #{laean_forward.49} parent=11 // pred_fallthru
        _
    $region12: #{laean_forward.49} parent=5 // pred_fallthru
      _
    %p166 = scmp.lt.s32.totalorder %s11, 2
    // Predicated region
    $region25: #{laean_forward.49} parent=5 // pred_check
      %p167 = pneg %p166
    $region26: #{laean_forward.49} parent=5 // pred_check_branch
      %169 = sbr.rel (%p167) target = $region28
    $region27: #{laean_forward.49} parent=5 // pred_region
      // Predicated region
      $region29: #{laean_forward.49} parent=27 // pred_check
        %p170 = pneg %p45
      $region30: #{laean_forward.49} parent=27 // pred_check_branch
        %172 = sbr.rel (%p170) target = $region32
      $region31: #{laean_forward.49} parent=27 // pred_region
        %p173 = scmp.lt.s32.totalorder %s18, 1
        %s174 = scalar_select %p173, %s18, 1
        %p175 = scmp.lt.s32.totalorder %s19, 0
        %s176 = scalar_select %p175, %s19, 0
        %s177 = smul.addr %s174, 18
        %s178 = sadd.s32 %s176, %s177
        %s179 = smul.addr %s178, 8
        %s180 = scalar_lea.vmem %s0, %s179
      $region32: #{laean_forward.49} parent=27 // pred_fallthru
        _
    $region28: #{laean_forward.49} parent=5 // pred_fallthru
      _
    %p181 = scmp.le.s32.totalorder 1, %s11
    %p182 = scmp.lt.s32.totalorder %s11, 3
    %p183 = pnand %p181, %p182
    %p184 = pneg %p183
    // Predicated region
    $region33: #{laean_forward.49} parent=5 // pred_check
      _
    $region34: #{laean_forward.49} parent=5 // pred_check_branch
      %186 = sbr.rel (%p183) target = $region36
    $region35: #{laean_forward.49} parent=5 // pred_region
      %s187 = ssub.s32 %s11, 1
      %p188 = scmp.lt.s32.totalorder %s20, 1
      %s189 = scalar_select %p188, %s20, 1
      %p190 = scmp.lt.s32.totalorder %s21, 0
      %s191 = scalar_select %p190, %s21, 0
      %s192 = smul.addr %s189, 18
      %s193 = sadd.s32 %s191, %s192
      %s194 = smul.addr %s193, 8
      %s195 = scalar_lea.vmem %s0, %s194
      %p196 = pneg %p51
      %p197 = pneg %p48
      %p198 = pneg %p72
      %p199 = pneg %p69
      %p200 = pneg %p93
      %p201 = pneg %p90
      %p202 = pneg %p114
      %p203 = pneg %p111
      %p204 = pneg %p142
      %p205 = pneg %p139
      %p206 = scmp.lt.s32.totalorder %s20, 1
      %s207 = scalar_select %p206, %s20, 1
      %p208 = scmp.lt.s32.totalorder %s21, 0
      %s209 = scalar_select %p208, %s21, 0
      %s210 = smul.addr %s207, 2
      %s211 = sadd.s32 %s209, %s210
      %s212 = smul.addr %s211, 8
      %s213 = scalar_lea.vmem %s4, %s212
      %p214 = scmp.lt.s32.totalorder %s20, 1
      %s215 = scalar_select %p214, %s20, 1
      %p216 = scmp.lt.s32.totalorder %s21, 0
      %s217 = scalar_select %p216, %s21, 0
      %s218 = smul.addr %s215, 18
      %s219 = sadd.s32 %s217, %s218
      %s220 = smul.addr %s219, 8
      %s221 = scalar_lea.vmem %s0, %s220
      %p222 = scmp.lt.s32.totalorder %s20, 1
      %s223 = scalar_select %p222, %s20, 1
      %p224 = scmp.lt.s32.totalorder %s21, 0
      %s225 = scalar_select %p224, %s21, 0
      %s226 = smul.addr %s223, 2
      %s227 = sadd.s32 %s225, %s226
      %s228 = smul.addr %s227, 8
      %s229 = scalar_lea.vmem %s4, %s228
      %v230 = vld [vmem:[%s1] sm:$0xff]
      %v231 = vld [vmem:[%s1 + $0x8] sm:$0xff]
      %v232 = vld [vmem:[%s1 + $0x10] sm:$0xff]
      %v233 = vld [vmem:[%s1 + $0x18] sm:$0xff]
      %v234 = vld [vmem:[%s221] sm:$0xff]
      %v235 = vld [vmem:[%s221 + $0x8] sm:$0xff]
      %v236 = vld [vmem:[%s221 + $0x10] sm:$0xff]
      %v237 = vld [vmem:[%s221 + $0x18] sm:$0xff]
      %v238 = vld [vmem:[%s221 + $0x20] sm:$0xff]
      %v239 = vld [vmem:[%s221 + $0x28] sm:$0xff]
      %v240 = vld [vmem:[%s221 + $0x30] sm:$0xff]
      %v241 = vld [vmem:[%s221 + $0x38] sm:$0xff]
      %v242 = vld [vmem:[%s221 + $0x40] sm:$0xff]
      %v243 = vld [vmem:[%s221 + $0x48] sm:$0xff]
      %v244 = vld [vmem:[%s221 + $0x50] sm:$0xff]
      %v245 = vld [vmem:[%s221 + $0x58] sm:$0xff]
      %v246 = vld [vmem:[%s221 + $0x60] sm:$0xff]
      %v247 = vld [vmem:[%s221 + $0x68] sm:$0xff]
      %v248 = vld [vmem:[%s221 + $0x70] sm:$0xff]
      %v249 = vld [vmem:[%s221 + $0x78] sm:$0xff]
      %v250 = vld [vmem:[%s221 + $0x80] sm:$0xff]
      %v251 = vld [vmem:[%s221 + $0x88] sm:$0xff]
      %v252 = vld [vmem:[%s2] sm:$0xff]
      %v253 = vld [vmem:[%s2 + $0x8] sm:$0xff]
      %255 = vset.pattern.permute.xlu0 0
      %256 = vperm.xlu0 %255, %v252
      %v257 = vpop.permute.xlu0 %256
      %260 = vset.pattern.permute.xlu0 0
      %261 = vperm.xlu0 %260, %v253
      %v262 = vpop.permute.xlu0 %261
      %vm264 = vcmask 130048
      %v266 = vsel %vm264, %v231, 0
      %v269 = vsel %vm264, %v233, 0
      %271 = vmatprep.subr.mxu0 0.0
      %272 = vmatpush1.msra.mxu0 %v234
      %273 = vmatprep.subr.mxu0 0.0
      %274 = vmatpush1.msra.mxu0 %v235
      %275 = vmatprep.subr.mxu0 0.0
      %276 = vmatpush1.msra.mxu0 %v236
      %277 = vmatprep.subr.mxu0 0.0
      %278 = vmatpush1.msra.mxu0 %v237
      %279 = vmatprep.subr.mxu0 0.0
      %280 = vmatpush1.msra.mxu0 %v238
      %281 = vmatprep.subr.mxu0 0.0
      %282 = vmatpush1.msra.mxu0 %v239
      %283 = vmatprep.subr.mxu0 0.0
      %284 = vmatpush1.msra.mxu0 %v240
      %285 = vmatprep.subr.mxu0 0.0
      %286 = vmatpush1.msra.mxu0 %v241
      %287 = vmatprep.subr.mxu0 0.0
      %288 = vmatpush1.msra.mxu0 %v242
      %289 = vmatprep.subr.mxu0 0.0
      %290 = vmatpush1.msra.mxu0 %v243
      %291 = vmatprep.subr.mxu0 0.0
      %292 = vmatpush1.msra.mxu0 %v244
      %293 = vmatprep.subr.mxu0 0.0
      %294 = vmatpush1.msra.mxu0 %v245
      %295 = vmatprep.subr.mxu0 0.0
      %296 = vmatpush1.msra.mxu0 %v246
      %297 = vmatprep.subr.mxu0 0.0
      %298 = vmatpush1.msra.mxu0 %v247
      %299 = vmatprep.subr.mxu0 0.0
      %300 = vmatpush1.msra.mxu0 %v248
      %301 = vmatprep.subr.mxu0 0.0
      %302 = vmatpush1.msra.mxu0 %v249
      %303 = vmatprep.subr.mxu0 0.0
      %304 = vmatpush1.msra.mxu0 %v250
      %305 = vmatprep.subr.mxu0 0.0
      %306 = vmatpush1.msra.mxu0 %v251
      %307 = vmatprep.subr.mxu0 0.0
      %308 = vmatpush1.msra.mxu0 0.0
      %309 = vmatprep.subr.mxu0 0.0
      %310 = vmatpush1.msra.mxu0 0.0
      %311 = vmatprep.subr.mxu0 0.0
      %312 = vmatpush1.msra.mxu0 0.0
      %313 = vmatprep.subr.mxu0 0.0
      %314 = vmatpush1.msra.mxu0 0.0
      %315 = vmatprep.subr.mxu0 0.0
      %316 = vmatpush1.msra.mxu0 0.0
      %317 = vmatprep.subr.mxu0 0.0
      %318 = vmatpush1.msra.mxu0 0.0
      %319 = vmatprep.subr.mxu0 0.0
      %320 = vmatpush1.msra.mxu0 0.0
      %321 = vmatprep.subr.mxu0 0.0
      %322 = vmatpush1.msra.mxu0 0.0
      %323 = vmatprep.subr.mxu0 0.0
      %324 = vmatpush1.msra.mxu0 0.0
      %325 = vmatprep.subr.mxu0 0.0
      %326 = vmatpush1.msra.mxu0 0.0
      %327 = vmatprep.subr.mxu0 0.0
      %328 = vmatpush1.msra.mxu0 0.0
      %329 = vmatprep.subr.mxu0 0.0
      %330 = vmatpush1.msra.mxu0 0.0
      %331 = vmatprep.subr.mxu0 0.0
      %332 = vmatpush1.msra.mxu0 0.0
      %333 = vmatprep.subr.mxu0 0.0
      %334 = vmatpush1.msra.mxu0 0.0
      %335 = vmatprep.mubr.f32.mxu0 %v266
      %336 = vmatmul.mubr.f32.gmra.mrb[0].mxu0 %v230
      %v337 = vpop.f32.mrb[0].mxu0
      %v338 = vadd.f32 %v257, %v337
      %v339 = vpop.f32.mrb[0].mxu0
      %340 = vmatprep.mubr.f32.mxu0 %v269
      %341 = vmatmul.mubr.f32.gmra.mrb[0].mxu0 %v232
      %v342 = vpop.f32.mrb[0].mxu0
      %v343 = vadd.f32 %v262, %v342
      %v344 = vpop.f32.mrb[0].mxu0
      %345 = vdwg.mxu0
      %s346 = sld [smem:[#allocation2]]
      %vm347 = vcmp.ge.f32.partialorder %v338, 0.0
      %vm348 = vcmp.ge.f32.partialorder %v343, 0.0
      %v349 = vstv %s346
      %v350 = vmul.f32 %v349, %v338
      %v351 = vmul.f32 %v349, %v343
      %v352 = vsel %vm347, %v338, %v350
      %v353 = vsel %vm348, %v343, %v351
      %vm354 = vcmask 523264
      %355 = vst.msk [vmem:[%s229] sm:$0xff] %vm354, %v352
      %356 = vst.msk [vmem:[%s229 + $0x8] sm:$0xff] %vm354, %v353
      %p357 = scmp.lt.s32.totalorder %s20, 1
      %s358 = scalar_select %p357, %s20, 1
      %p359 = scmp.lt.s32.totalorder %s21, 0
      %s360 = scalar_select %p359, %s21, 0
      %s361 = smul.addr %s358, 2
      %s362 = sadd.s32 %s360, %s361
      %s363 = smul.addr %s362, 8
      %s364 = scalar_lea.vmem %s4, %s363
      // Predicated region
      $region37: #{laean_forward.49} parent=35 // pred_check
        %p365 = pneg %p139
      $region38: #{laean_forward.49} parent=35 // pred_check_branch
        %367 = sbr.rel (%p365) target = $region40
      $region39: #{laean_forward.49} parent=35 // pred_region
        _
      $region40: #{laean_forward.49} parent=35 // pred_fallthru
        _
    $region36: #{laean_forward.49} parent=5 // pred_fallthru
      _
    %p368 = scmp.le.s32.totalorder 2, %s11
    // Predicated region
    $region41: #{laean_forward.49} parent=5 // pred_check
      %p369 = pneg %p368
    $region42: #{laean_forward.49} parent=5 // pred_check_branch
      %371 = sbr.rel (%p369) target = $region44
    $region43: #{laean_forward.49} parent=5 // pred_region
      %s372 = ssub.s32 %s11, 2
      // Predicated region
      $region45: #{laean_forward.49} parent=43 // pred_check
        %p373 = pneg %p145
      $region46: #{laean_forward.49} parent=43 // pred_check_branch
        %375 = sbr.rel (%p373) target = $region48
      $region47: #{laean_forward.49} parent=43 // pred_region
        %p376 = scmp.lt.s32.totalorder %s22, 1
        %s377 = scalar_select %p376, %s22, 1
        %p378 = scmp.lt.s32.totalorder %s23, 0
        %s379 = scalar_select %p378, %s23, 0
        %s380 = smul.addr %s377, 2
        %s381 = sadd.s32 %s379, %s380
        %s382 = smul.addr %s381, 8
        %s383 = scalar_lea.vmem %s4, %s382
      $region48: #{laean_forward.49} parent=43 // pred_fallthru
        _
    $region44: #{laean_forward.49} parent=5 // pred_fallthru
      _
  $region6: #{laean_forward.49} parent=0 // loop_footer
    %s15 = sadd.s32 1, %s11
  $region7: #{laean_forward.49} parent=0 // loop_footer_branch
    %10 = sbr.rel target = $region3
  $region8: #{laean_forward.49} parent=0 // loop_exit
    _

// kernel: laean_forward.50
$region0: #{laean_forward.50}
  #allocation0 [shape = 'u32[]', space=smem, size = 0x4, offset = 0x4, fixed_abs, tag = 'smem constant byte address 0x4 - core index']
  #allocation1 [shape = 'u32[144,128]{1,0:T(1,128)}', space=vmem, size = 0x12000, scoped, tag = 'internal scratch']
  #allocation2 [shape = 'f32[1]{0:T(128)S(6)}', space=smem, size = 0x200, scoped, tag = 'scoped memory for laean_forward.50']
  %s0 = inlined_call_operand.vmem [shape: f32[2,16,64], index: 0, kind: input, shape index: {}]
  %s1 = inlined_call_operand.<no memory space> [shape: f32[1], index: 1, kind: input, shape index: {}]
  %s2 = inlined_call_operand.vmem [shape: f32[2,16,64], index: 2, kind: output, shape index: {}]
  %s3 = sld [smem:[#allocation0]]
  $region41: #{laean_forward.50} parent=0
    _
  %s5 = ssub.s32 1, %s3
  %s6 = scalar_select 0, %s5, %s3
  %7 = sst [smem:[#allocation2]] %s1
  loop: start=0, step=1, limit=4
  $region2: #{laean_forward.50} parent=0 // loop_pre_header
    _
  $region3: #{laean_forward.50} parent=0 // loop_header
    %s9 = sphi 0, %s13
    %p10 = scmp.ge.s32.totalorder %s9, 4
    %s19 = sphi 0, %s21
    %s22 = sphi 0, %s19
    %s23 = sphi 0, %s22
    %s39 = sphi 0, %s23
    %s43 = sphi 0, %s43
    %s45 = sphi 0, %s43
    %s46 = sphi 0, %s45
    %s60 = sphi 0, %s46
    %s66 = sphi 0, %s68
    %s69 = sphi 0, %s66
    %s70 = sphi 0, %s69
    %s86 = sphi 0, %s70
  $region4: #{laean_forward.50} parent=0 // loop_header_branch
    %12 = sbr.rel (%p10) target = $region8
  $region5: #{laean_forward.50} parent=0 // loop_body
    %s14 = ssub.s32 %s9, 1
    %s15 = ssub.s32 %s9, 2
    %s16 = sadd.s32 %s9, 1
    %s17 = ssub.s32 %s9, %s16
    %p18 = scmp.eq.s32.totalorder %s17, 0
    %s20 = sadd.s32 %s19, 1
    %s21 = scalar_select %p18, %s19, %s20
    %p24 = pneg %p18
    %p25 = scmp.eq.s32.totalorder %s9, 1
    %p26 = por %p24, %p25
    %p27 = scmp.ne.s32.totalorder %s19, %s22
    %p28 = scmp.eq.s32.totalorder %s9, 0
    %p29 = por %p27, %p28
    %p30 = scmp.ne.s32.totalorder %s19, %s22
    %p31 = scmp.eq.s32.totalorder %s14, 1
    %p32 = por %p30, %p31
    %p33 = scmp.ne.s32.totalorder %s22, %s23
    %p34 = scmp.eq.s32.totalorder %s14, 0
    %p35 = por %p33, %p34
    %p36 = scmp.ne.s32.totalorder %s22, %s23
    %p37 = scmp.eq.s32.totalorder %s15, 1
    %p38 = por %p36, %p37
    %p40 = scmp.ne.s32.totalorder %s23, %s39
    %p41 = scmp.eq.s32.totalorder %s15, 0
    %p42 = por %p40, %p41
    %s44 = sadd.s32 %s43, 1
    %p47 = scmp.eq.s32.totalorder %s9, 1
    %p48 = scmp.ne.s32.totalorder %s43, %s45
    %p49 = scmp.eq.s32.totalorder %s9, 0
    %p50 = por %p48, %p49
    %p51 = scmp.ne.s32.totalorder %s43, %s45
    %p52 = scmp.eq.s32.totalorder %s14, 1
    %p53 = por %p51, %p52
    %p54 = scmp.ne.s32.totalorder %s45, %s46
    %p55 = scmp.eq.s32.totalorder %s14, 0
    %p56 = por %p54, %p55
    %p57 = scmp.ne.s32.totalorder %s45, %s46
    %p58 = scmp.eq.s32.totalorder %s15, 1
    %p59 = por %p57, %p58
    %p61 = scmp.ne.s32.totalorder %s46, %s60
    %p62 = scmp.eq.s32.totalorder %s15, 0
    %p63 = por %p61, %p62
    %s64 = ssub.s32 %s9, %s16
    %p65 = scmp.eq.s32.totalorder %s64, 0
    %s67 = sadd.s32 %s66, 1
    %s68 = scalar_select %p65, %s66, %s67
    %p71 = pneg %p65
    %p72 = scmp.eq.s32.totalorder %s9, 1
    %p73 = por %p71, %p72
    %p74 = scmp.ne.s32.totalorder %s66, %s69
    %p75 = scmp.eq.s32.totalorder %s9, 0
    %p76 = por %p74, %p75
    %p77 = scmp.ne.s32.totalorder %s66, %s69
    %p78 = scmp.eq.s32.totalorder %s14, 1
    %p79 = por %p77, %p78
    %p80 = scmp.ne.s32.totalorder %s69, %s70
    %p81 = scmp.eq.s32.totalorder %s14, 0
    %p82 = por %p80, %p81
    %p83 = scmp.ne.s32.totalorder %s69, %s70
    %p84 = scmp.eq.s32.totalorder %s15, 1
    %p85 = por %p83, %p84
    %p87 = scmp.ne.s32.totalorder %s70, %s86
    %p88 = scmp.eq.s32.totalorder %s15, 0
    %p89 = por %p87, %p88
    %p90 = scmp.le.s32.totalorder 1, %s9
    %p91 = scmp.lt.s32.totalorder %s9, 3
    %p92 = pnand %p90, %p91
    %p93 = pneg %p92
    // Predicated region
    $region9: #{laean_forward.50} parent=5 // pred_check
      _
    $region10: #{laean_forward.50} parent=5 // pred_check_branch
      %95 = sbr.rel (%p92) target = $region12
    $region11: #{laean_forward.50} parent=5 // pred_region
      %s96 = ssub.s32 %s9, 1
      // Predicated region
      $region13: #{laean_forward.50} parent=11 // pred_check
        %p97 = pneg %p56
      $region14: #{laean_forward.50} parent=11 // pred_check_branch
        %99 = sbr.rel (%p97) target = $region16
      $region15: #{laean_forward.50} parent=11 // pred_region
        _
      $region16: #{laean_forward.50} parent=11 // pred_fallthru
        _
    $region12: #{laean_forward.50} parent=5 // pred_fallthru
      _
    %p100 = scmp.lt.s32.totalorder %s9, 2
    // Predicated region
    $region17: #{laean_forward.50} parent=5 // pred_check
      %p101 = pneg %p100
    $region18: #{laean_forward.50} parent=5 // pred_check_branch
      %103 = sbr.rel (%p101) target = $region20
    $region19: #{laean_forward.50} parent=5 // pred_region
      // Predicated region
      $region21: #{laean_forward.50} parent=19 // pred_check
        %p104 = pneg %p29
      $region22: #{laean_forward.50} parent=19 // pred_check_branch
        %106 = sbr.rel (%p104) target = $region24
      $region23: #{laean_forward.50} parent=19 // pred_region
        %p107 = scmp.lt.s32.totalorder %s9, 1
        %s108 = scalar_select %p107, %s9, 1
        %s109 = smul.addr %s108, 2
        %s110 = smul.addr %s109, 8
        %s111 = scalar_lea.vmem %s0, %s110
      $region24: #{laean_forward.50} parent=19 // pred_fallthru
        _
    $region20: #{laean_forward.50} parent=5 // pred_fallthru
      _
    %p112 = scmp.le.s32.totalorder 1, %s9
    %p113 = scmp.lt.s32.totalorder %s9, 3
    %p114 = pnand %p112, %p113
    %p115 = pneg %p114
    // Predicated region
    $region25: #{laean_forward.50} parent=5 // pred_check
      _
    $region26: #{laean_forward.50} parent=5 // pred_check_branch
      %117 = sbr.rel (%p114) target = $region28
    $region27: #{laean_forward.50} parent=5 // pred_region
      %s118 = ssub.s32 %s9, 1
      %p119 = scmp.lt.s32.totalorder %s14, 1
      %s120 = scalar_select %p119, %s14, 1
      %s121 = smul.addr %s120, 2
      %s122 = smul.addr %s121, 8
      %s123 = scalar_lea.vmem %s0, %s122
      %p124 = pneg %p35
      %p125 = pneg %p32
      %p126 = pneg %p56
      %p127 = pneg %p53
      %p128 = pneg %p82
      %p129 = pneg %p79
      %p130 = scmp.lt.s32.totalorder %s14, 1
      %s131 = scalar_select %p130, %s14, 1
      %s132 = smul.addr %s131, 2
      %s133 = smul.addr %s132, 8
      %s134 = scalar_lea.vmem %s2, %s133
      %p135 = scmp.lt.s32.totalorder %s14, 1
      %s136 = scalar_select %p135, %s14, 1
      %s137 = smul.addr %s136, 2
      %s138 = smul.addr %s137, 8
      %s139 = scalar_lea.vmem %s0, %s138
      %p140 = scmp.lt.s32.totalorder %s14, 1
      %s141 = scalar_select %p140, %s14, 1
      %s142 = smul.addr %s141, 2
      %s143 = smul.addr %s142, 8
      %s144 = scalar_lea.vmem %s2, %s143
      %v145 = vld [vmem:[%s139] sm:$0xff]
      %v146 = vld [vmem:[%s139 + $0x8] sm:$0xff]
      %vm147 = vcmask 523264
      %v149 = vsel %vm147, %v145, 0
      %v152 = vsel %vm147, %v146, 0
      %154 = vmatprep.subr.mxu0 0.0
      %155 = vmatpush1.xpose.msra.mxu0 %v149
      %156 = vmatprep.subr.mxu0 0.0
      %157 = vmatpush1.xpose.msra.mxu0 %v152
      %158 = vmatprep.subr.mxu0 0.0
      %159 = vmatpush1.xpose.msra.mxu0 0.0
      %160 = vmatprep.subr.mxu0 0.0
      %161 = vmatpush1.xpose.msra.mxu0 0.0
      %162 = vmatprep.subr.mxu0 0.0
      %163 = vmatpush1.xpose.msra.mxu0 0.0
      %164 = vmatprep.subr.mxu0 0.0
      %165 = vmatpush1.xpose.msra.mxu0 0.0
      %166 = vmatprep.subr.mxu0 0.0
      %167 = vmatpush1.xpose.msra.mxu0 0.0
      %168 = vmatprep.subr.mxu0 0.0
      %169 = vmatpush1.xpose.msra.mxu0 0.0
      %170 = vmatprep.subr.mxu0 0.0
      %171 = vmatpush1.xpose.msra.mxu0 0.0
      %172 = vmatprep.subr.mxu0 0.0
      %173 = vmatpush1.xpose.msra.mxu0 0.0
      %174 = vmatprep.subr.mxu0 0.0
      %175 = vmatpush1.xpose.msra.mxu0 0.0
      %176 = vmatprep.subr.mxu0 0.0
      %177 = vmatpush1.xpose.msra.mxu0 0.0
      %178 = vmatprep.subr.mxu0 0.0
      %179 = vmatpush1.xpose.msra.mxu0 0.0
      %180 = vmatprep.subr.mxu0 0.0
      %181 = vmatpush1.xpose.msra.mxu0 0.0
      %182 = vmatprep.subr.mxu0 0.0
      %183 = vmatpush1.xpose.msra.mxu0 0.0
      %184 = vmatprep.subr.mxu0 0.0
      %185 = vmatpush1.xpose.msra.mxu0 0.0
      %186 = vmatprep.subr.mxu0 0.0
      %187 = vmatpush1.xpose.msra.mxu0 0.0
      %188 = vmatprep.subr.mxu0 0.0
      %189 = vmatpush1.xpose.msra.mxu0 0.0
      %190 = vmatprep.subr.mxu0 0.0
      %191 = vmatpush1.xpose.msra.mxu0 0.0
      %192 = vmatprep.subr.mxu0 0.0
      %193 = vmatpush1.xpose.msra.mxu0 0.0
      %194 = vmatprep.subr.mxu0 0.0
      %195 = vmatpush1.xpose.msra.mxu0 0.0
      %196 = vmatprep.subr.mxu0 0.0
      %197 = vmatpush1.xpose.msra.mxu0 0.0
      %198 = vmatprep.subr.mxu0 0.0
      %199 = vmatpush1.xpose.msra.mxu0 0.0
      %200 = vmatprep.subr.mxu0 0.0
      %201 = vmatpush1.xpose.msra.mxu0 0.0
      %202 = vmatprep.subr.mxu0 0.0
      %203 = vmatpush1.xpose.msra.mxu0 0.0
      %204 = vmatprep.subr.mxu0 0.0
      %205 = vmatpush1.xpose.msra.mxu0 0.0
      %206 = vmatprep.subr.mxu0 0.0
      %207 = vmatpush1.xpose.msra.mxu0 0.0
      %208 = vmatprep.subr.mxu0 0.0
      %209 = vmatpush1.xpose.msra.mxu0 0.0
      %210 = vmatprep.subr.mxu0 0.0
      %211 = vmatpush1.xpose.msra.mxu0 0.0
      %212 = vmatprep.subr.mxu0 0.0
      %213 = vmatpush1.xpose.msra.mxu0 0.0
      %214 = vmatprep.subr.mxu0 0.0
      %215 = vmatpush1.xpose.msra.mxu0 0.0
      %216 = vmatprep.subr.mxu0 0.0
      %217 = vmatpush1.xpose.msra.mxu0 0.0
      %218 = vmatprep.mubr.f32.mxu0 0.0
      %219 = vmatmul.mubr.f32.gmra.mrb[0].mxu0 %v149
      %v220 = vpop.f32.mrb[0].mxu0
      %v221 = vadd.f32 0.0, %v220
      %v222 = vpop.f32.mrb[0].mxu0
      %223 = vmatprep.mubr.f32.mxu0 0.0
      %224 = vmatmul.mubr.f32.gmra.mrb[0].mxu0 %v152
      %v225 = vpop.f32.mrb[0].mxu0
      %v226 = vadd.f32 0.0, %v225
      %v227 = vpop.f32.mrb[0].mxu0
      %228 = vdwg.mxu0
      %vm229 = vcmask 130048
      %v230 = vsel %vm229, %v221, -inf
      %231 = vmax.xlane.f32.xlu0 %v230
      %v232 = vpop.xlane.xlu0 %231
      %v233 = vsel %vm229, %v226, -inf
      %234 = vmax.xlane.f32.xlu0 %v233
      %v235 = vpop.xlane.xlu0 %234
      %v236 = vsub.f32 %v232, %v221
      %v237 = vsub.f32 %v235, %v226
      %v238 = vsel %vm229, %v236, -inf
      %239 = vmax.xlane.f32.xlu0 %v238
      %v240 = vpop.xlane.xlu0 %239
      %v241 = vsel %vm229, %v237, -inf
      %242 = vmax.xlane.f32.xlu0 %v241
      %v243 = vpop.xlane.xlu0 %242
      %v244 = vsub.f32 %v236, %v240
      %v245 = vsub.f32 %v237, %v243
      %v246 = vmul.f32 %v244, 1.442695
      %v247 = vpow.pop %v246
      %v248 = vmul.f32 %v245, 1.442695
      %v249 = vpow.pop %v248
      %v250 = vsel %vm229, %v247, 0.0
      %251 = vadd.xlane.f32.xlu0 %v250
      %v252 = vpop.xlane.xlu0 %251
      %v253 = vsel %vm229, %v249, 0.0
      %254 = vadd.xlane.f32.xlu0 %v253
      %v255 = vpop.xlane.xlu0 %254
      %v256 = vrcp.pop %v252
      %v257 = vmul.f32 %v247, %v256
      %v258 = vrcp.pop %v255
      %v259 = vmul.f32 %v249, %v258
      %v261 = vsel %vm229, %v257, 0
      %v264 = vsel %vm229, %v259, 0
      %266 = vmatprep.subr.mxu0 0.0
      %267 = vmatpush1.msra.mxu0 %v145
      %268 = vmatprep.subr.mxu0 0.0
      %269 = vmatpush1.msra.mxu0 %v146
      %270 = vmatprep.subr.mxu0 0.0
      %271 = vmatpush1.msra.mxu0 0.0
      %272 = vmatprep.subr.mxu0 0.0
      %273 = vmatpush1.msra.mxu0 0.0
      %274 = vmatprep.subr.mxu0 0.0
      %275 = vmatpush1.msra.mxu0 0.0
      %276 = vmatprep.subr.mxu0 0.0
      %277 = vmatpush1.msra.mxu0 0.0
      %278 = vmatprep.subr.mxu0 0.0
      %279 = vmatpush1.msra.mxu0 0.0
      %280 = vmatprep.subr.mxu0 0.0
      %281 = vmatpush1.msra.mxu0 0.0
      %282 = vmatprep.subr.mxu0 0.0
      %283 = vmatpush1.msra.mxu0 0.0
      %284 = vmatprep.subr.mxu0 0.0
      %285 = vmatpush1.msra.mxu0 0.0
      %286 = vmatprep.subr.mxu0 0.0
      %287 = vmatpush1.msra.mxu0 0.0
      %288 = vmatprep.subr.mxu0 0.0
      %289 = vmatpush1.msra.mxu0 0.0
      %290 = vmatprep.subr.mxu0 0.0
      %291 = vmatpush1.msra.mxu0 0.0
      %292 = vmatprep.subr.mxu0 0.0
      %293 = vmatpush1.msra.mxu0 0.0
      %294 = vmatprep.subr.mxu0 0.0
      %295 = vmatpush1.msra.mxu0 0.0
      %296 = vmatprep.subr.mxu0 0.0
      %297 = vmatpush1.msra.mxu0 0.0
      %298 = vmatprep.subr.mxu0 0.0
      %299 = vmatpush1.msra.mxu0 0.0
      %300 = vmatprep.subr.mxu0 0.0
      %301 = vmatpush1.msra.mxu0 0.0
      %302 = vmatprep.subr.mxu0 0.0
      %303 = vmatpush1.msra.mxu0 0.0
      %304 = vmatprep.subr.mxu0 0.0
      %305 = vmatpush1.msra.mxu0 0.0
      %306 = vmatprep.subr.mxu0 0.0
      %307 = vmatpush1.msra.mxu0 0.0
      %308 = vmatprep.subr.mxu0 0.0
      %309 = vmatpush1.msra.mxu0 0.0
      %310 = vmatprep.subr.mxu0 0.0
      %311 = vmatpush1.msra.mxu0 0.0
      %312 = vmatprep.subr.mxu0 0.0
      %313 = vmatpush1.msra.mxu0 0.0
      %314 = vmatprep.subr.mxu0 0.0
      %315 = vmatpush1.msra.mxu0 0.0
      %316 = vmatprep.subr.mxu0 0.0
      %317 = vmatpush1.msra.mxu0 0.0
      %318 = vmatprep.subr.mxu0 0.0
      %319 = vmatpush1.msra.mxu0 0.0
      %320 = vmatprep.subr.mxu0 0.0
      %321 = vmatpush1.msra.mxu0 0.0
      %322 = vmatprep.subr.mxu0 0.0
      %323 = vmatpush1.msra.mxu0 0.0
      %324 = vmatprep.subr.mxu0 0.0
      %325 = vmatpush1.msra.mxu0 0.0
      %326 = vmatprep.subr.mxu0 0.0
      %327 = vmatpush1.msra.mxu0 0.0
      %328 = vmatprep.subr.mxu0 0.0
      %329 = vmatpush1.msra.mxu0 0.0
      %330 = vmatprep.mubr.f32.mxu0 0.0
      %331 = vmatmul.mubr.f32.gmra.mrb[0].mxu0 %v261
      %v332 = vpop.f32.mrb[0].mxu0
      %v333 = vadd.f32 0.0, %v332
      %v334 = vpop.f32.mrb[0].mxu0
      %335 = vmatprep.mubr.f32.mxu0 0.0
      %336 = vmatmul.mubr.f32.gmra.mrb[0].mxu0 %v264
      %v337 = vpop.f32.mrb[0].mxu0
      %v338 = vadd.f32 0.0, %v337
      %v339 = vpop.f32.mrb[0].mxu0
      %340 = vdwg.mxu0
      %s341 = sld [smem:[#allocation2]]
      %v342 = vstv %s341
      %v343 = vmul.f32 %v342, %v333
      %v344 = vmul.f32 %v342, %v338
      %v345 = vadd.f32 %v343, %v145
      %v346 = vadd.f32 %v344, %v146
      %347 = vst.msk [vmem:[%s144] sm:$0xff] %vm147, %v345
      %348 = vst.msk [vmem:[%s144 + $0x8] sm:$0xff] %vm147, %v346
      %p349 = scmp.lt.s32.totalorder %s14, 1
      %s350 = scalar_select %p349, %s14, 1
      %s351 = smul.addr %s350, 2
      %s352 = smul.addr %s351, 8
      %s353 = scalar_lea.vmem %s2, %s352
      // Predicated region
      $region29: #{laean_forward.50} parent=27 // pred_check
        %p354 = pneg %p79
      $region30: #{laean_forward.50} parent=27 // pred_check_branch
        %356 = sbr.rel (%p354) target = $region32
      $region31: #{laean_forward.50} parent=27 // pred_region
        _
      $region32: #{laean_forward.50} parent=27 // pred_fallthru
        _
    $region28: #{laean_forward.50} parent=5 // pred_fallthru
      _
    %p357 = scmp.le.s32.totalorder 2, %s9
    // Predicated region
    $region33: #{laean_forward.50} parent=5 // pred_check
      %p358 = pneg %p357
    $region34: #{laean_forward.50} parent=5 // pred_check_branch
      %360 = sbr.rel (%p358) target = $region36
    $region35: #{laean_forward.50} parent=5 // pred_region
      %s361 = ssub.s32 %s9, 2
      // Predicated region
      $region37: #{laean_forward.50} parent=35 // pred_check
        %p362 = pneg %p85
      $region38: #{laean_forward.50} parent=35 // pred_check_branch
        %364 = sbr.rel (%p362) target = $region40
      $region39: #{laean_forward.50} parent=35 // pred_region
        %p365 = scmp.lt.s32.totalorder %s15, 1
        %s366 = scalar_select %p365, %s15, 1
        %s367 = smul.addr %s366, 2
        %s368 = smul.addr %s367, 8
        %s369 = scalar_lea.vmem %s2, %s368
      $region40: #{laean_forward.50} parent=35 // pred_fallthru
        _
    $region36: #{laean_forward.50} parent=5 // pred_fallthru
      _
  $region6: #{laean_forward.50} parent=0 // loop_footer
    %s13 = sadd.s32 1, %s9
  $region7: #{laean_forward.50} parent=0 // loop_footer_branch
    %8 = sbr.rel target = $region3
  $region8: #{laean_forward.50} parent=0 // loop_exit
    _

// kernel: laean_forward.57
$region0: #{laean_forward.57}
  #allocation0 [shape = 'u32[]', space=smem, size = 0x4, offset = 0x4, fixed_abs, tag = 'smem constant byte address 0x4 - core index']
  #allocation1 [shape = 'u32[144,128]{1,0:T(1,128)}', space=vmem, size = 0x12000, scoped, tag = 'internal scratch']
  #allocation2 [shape = 'f32[1]{0:T(128)S(6)}', space=smem, size = 0x200, scoped, tag = 'scoped memory for laean_forward.57']
  %s0 = inlined_call_operand.vmem [shape: f32[2,16,64], index: 0, kind: input, shape index: {}]
  %s1 = inlined_call_operand.vmem [shape: f32[2,16,64], index: 1, kind: input, shape index: {}]
  %s2 = inlined_call_operand.vmem [shape: f32[2,16,64], index: 2, kind: input, shape index: {}]
  %s3 = inlined_call_operand.vmem [shape: f32[2,16,64], index: 3, kind: input, shape index: {}]
  %s4 = inlined_call_operand.vmem [shape: f32[2,16,64], index: 4, kind: input, shape index: {}]
  %s5 = inlined_call_operand.vmem [shape: f32[16,16], index: 5, kind: input, shape index: {}]
  %s6 = inlined_call_operand.vmem [shape: f32[16,1], index: 6, kind: input, shape index: {}]
  %s7 = inlined_call_operand.<no memory space> [shape: f32[1], index: 7, kind: input, shape index: {}]
  %s8 = inlined_call_operand.hbm [shape: f32[2,16,64], index: 8, kind: output, shape index: {0}]
  %s9 = inlined_call_operand.vmem [shape: f32[2,16,64], index: 9, kind: output, shape index: {1}]
  %10 = xla_tuple %s8, %s9
  %s11 = sld [smem:[#allocation0]]
  $region73: #{laean_forward.57} parent=0
    _
  %s13 = ssub.s32 1, %s11
  %s14 = scalar_select 0, %s13, %s11
  %15 = sst [smem:[#allocation2]] %s7
  $region1: #{laean_forward.57} parent=0
    #allocation3 [shape = 'u8[16384]{0}', space=vmem, size = 0x4000, scoped, tag = 'output window, operand 0']
    #allocation4 [shape = 's32[2]{0}', space=sflag, size = 0x8, scoped, tag = 'scoped memory for laean_forward.57']
    %16 = vsyncpa [#allocation4], 0
    %s17 = scalar_lea.sflag [#allocation4], 1
    %18 = vsyncpa %s17, 0
    loop: start=0, step=1, limit=4
    $region2: #{laean_forward.57} parent=1 // loop_pre_header
      _
    $region3: #{laean_forward.57} parent=1 // loop_header
      %s20 = sphi 0, %s24
      %p21 = scmp.ge.s32.totalorder %s20, 4
      %s27 = sphi 0, %s39
      %s28 = sphi 0, %s35
      %s29 = sphi 0, %s27
      %s30 = sphi 0, %s28
      %s31 = sphi 0, %s29
      %s32 = sphi 0, %s30
      %s44 = sphi 0, %s46
      %s47 = sphi 0, %s44
      %s48 = sphi 0, %s47
      %s64 = sphi 0, %s48
      %s72 = sphi 0, %s74
      %s75 = sphi 0, %s72
      %s76 = sphi 0, %s75
      %s92 = sphi 0, %s76
      %s100 = sphi 0, %s102
      %s103 = sphi 0, %s100
      %s104 = sphi 0, %s103
      %s120 = sphi 0, %s104
      %s128 = sphi 0, %s130
      %s131 = sphi 0, %s128
      %s132 = sphi 0, %s131
      %s148 = sphi 0, %s132
      %s156 = sphi 0, %s158
      %s159 = sphi 0, %s156
      %s160 = sphi 0, %s159
      %s176 = sphi 0, %s160
      %s180 = sphi 0, %s180
      %s182 = sphi 0, %s180
      %s183 = sphi 0, %s182
      %s197 = sphi 0, %s183
      %s201 = sphi 0, %s201
      %s203 = sphi 0, %s201
      %s204 = sphi 0, %s203
      %s218 = sphi 0, %s204
      %s222 = sphi 0, %s222
      %s224 = sphi 0, %s222
      %s225 = sphi 0, %s224
      %s239 = sphi 0, %s225
      %s247 = sphi 0, %s249
      %s250 = sphi 0, %s247
      %s251 = sphi 0, %s250
      %s267 = sphi 0, %s251
      %s275 = sphi 0, %s277
      %s278 = sphi 0, %s275
      %s279 = sphi 0, %s278
      %s295 = sphi 0, %s279
    $region4: #{laean_forward.57} parent=1 // loop_header_branch
      %23 = sbr.rel (%p21) target = $region8
    $region5: #{laean_forward.57} parent=1 // loop_body
      %s25 = ssub.s32 %s20, 1
      %s26 = ssub.s32 %s20, 2
      %s33 = sadd.s32 1, %s28
      %p34 = scmp.ge.s32.totalorder %s33, 1
      %s35 = scalar_select %p34, 0, %s33
      %s36 = sadd.s32 1, %s27
      %s37 = scalar_select %p34, %s36, %s27
      %p38 = scmp.ge.s32.totalorder %s37, 2
      %s39 = scalar_select %p38, 0, %s37
      %s40 = ssub.s32 %s27, %s39
      %s41 = ssub.s32 %s28, %s35
      %s42 = sor.u32 %s40, %s41
      %p43 = scmp.eq.s32.totalorder %s42, 0
      %s45 = sadd.s32 %s44, 1
      %s46 = scalar_select %p43, %s44, %s45
      %p49 = pneg %p43
      %p50 = scmp.eq.s32.totalorder %s20, 1
      %p51 = por %p49, %p50
      %p52 = scmp.ne.s32.totalorder %s44, %s47
      %p53 = scmp.eq.s32.totalorder %s20, 0
      %p54 = por %p52, %p53
      %p55 = scmp.ne.s32.totalorder %s44, %s47
      %p56 = scmp.eq.s32.totalorder %s25, 1
      %p57 = por %p55, %p56
      %p58 = scmp.ne.s32.totalorder %s47, %s48
      %p59 = scmp.eq.s32.totalorder %s25, 0
      %p60 = por %p58, %p59
      %p61 = scmp.ne.s32.totalorder %s47, %s48
      %p62 = scmp.eq.s32.totalorder %s26, 1
      %p63 = por %p61, %p62
      %p65 = scmp.ne.s32.totalorder %s48, %s64
      %p66 = scmp.eq.s32.totalorder %s26, 0
      %p67 = por %p65, %p66
      %s68 = ssub.s32 %s27, %s39
      %s69 = ssub.s32 %s28, %s35
      %s70 = sor.u32 %s68, %s69
      %p71 = scmp.eq.s32.totalorder %s70, 0
      %s73 = sadd.s32 %s72, 1
      %s74 = scalar_select %p71, %s72, %s73
      %p77 = pneg %p71
      %p78 = scmp.eq.s32.totalorder %s20, 1
      %p79 = por %p77, %p78
      %p80 = scmp.ne.s32.totalorder %s72, %s75
      %p81 = scmp.eq.s32.totalorder %s20, 0
      %p82 = por %p80, %p81
      %p83 = scmp.ne.s32.totalorder %s72, %s75
      %p84 = scmp.eq.s32.totalorder %s25, 1
      %p85 = por %p83, %p84
      %p86 = scmp.ne.s32.totalorder %s75, %s76
      %p87 = scmp.eq.s32.totalorder %s25, 0
      %p88 = por %p86, %p87
      %p89 = scmp.ne.s32.totalorder %s75, %s76
      %p90 = scmp.eq.s32.totalorder %s26, 1
      %p91 = por %p89, %p90
      %p93 = scmp.ne.s32.totalorder %s76, %s92
      %p94 = scmp.eq.s32.totalorder %s26, 0
      %p95 = por %p93, %p94
      %s96 = ssub.s32 %s27, %s39
      %s97 = ssub.s32 %s28, %s35
      %s98 = sor.u32 %s96, %s97
      %p99 = scmp.eq.s32.totalorder %s98, 0
      %s101 = sadd.s32 %s100, 1
      %s102 = scalar_select %p99, %s100, %s101
      %p105 = pneg %p99
      %p106 = scmp.eq.s32.totalorder %s20, 1
      %p107 = por %p105, %p106
      %p108 = scmp.ne.s32.totalorder %s100, %s103
      %p109 = scmp.eq.s32.totalorder %s20, 0
      %p110 = por %p108, %p109
      %p111 = scmp.ne.s32.totalorder %s100, %s103
      %p112 = scmp.eq.s32.totalorder %s25, 1
      %p113 = por %p111, %p112
      %p114 = scmp.ne.s32.totalorder %s103, %s104
      %p115 = scmp.eq.s32.totalorder %s25, 0
      %p116 = por %p114, %p115
      %p117 = scmp.ne.s32.totalorder %s103, %s104
      %p118 = scmp.eq.s32.totalorder %s26, 1
      %p119 = por %p117, %p118
      %p121 = scmp.ne.s32.totalorder %s104, %s120
      %p122 = scmp.eq.s32.totalorder %s26, 0
      %p123 = por %p121, %p122
      %s124 = ssub.s32 %s27, %s39
      %s125 = ssub.s32 %s28, %s35
      %s126 = sor.u32 %s124, %s125
      %p127 = scmp.eq.s32.totalorder %s126, 0
      %s129 = sadd.s32 %s128, 1
      %s130 = scalar_select %p127, %s128, %s129
      %p133 = pneg %p127
      %p134 = scmp.eq.s32.totalorder %s20, 1
      %p135 = por %p133, %p134
      %p136 = scmp.ne.s32.totalorder %s128, %s131
      %p137 = scmp.eq.s32.totalorder %s20, 0
      %p138 = por %p136, %p137
      %p139 = scmp.ne.s32.totalorder %s128, %s131
      %p140 = scmp.eq.s32.totalorder %s25, 1
      %p141 = por %p139, %p140
      %p142 = scmp.ne.s32.totalorder %s131, %s132
      %p143 = scmp.eq.s32.totalorder %s25, 0
      %p144 = por %p142, %p143
      %p145 = scmp.ne.s32.totalorder %s131, %s132
      %p146 = scmp.eq.s32.totalorder %s26, 1
      %p147 = por %p145, %p146
      %p149 = scmp.ne.s32.totalorder %s132, %s148
      %p150 = scmp.eq.s32.totalorder %s26, 0
      %p151 = por %p149, %p150
      %s152 = ssub.s32 %s27, %s39
      %s153 = ssub.s32 %s28, %s35
      %s154 = sor.u32 %s152, %s153
      %p155 = scmp.eq.s32.totalorder %s154, 0
      %s157 = sadd.s32 %s156, 1
      %s158 = scalar_select %p155, %s156, %s157
      %p161 = pneg %p155
      %p162 = scmp.eq.s32.totalorder %s20, 1
      %p163 = por %p161, %p162
      %p164 = scmp.ne.s32.totalorder %s156, %s159
      %p165 = scmp.eq.s32.totalorder %s20, 0
      %p166 = por %p164, %p165
      %p167 = scmp.ne.s32.totalorder %s156, %s159
      %p168 = scmp.eq.s32.totalorder %s25, 1
      %p169 = por %p167, %p168
      %p170 = scmp.ne.s32.totalorder %s159, %s160
      %p171 = scmp.eq.s32.totalorder %s25, 0
      %p172 = por %p170, %p171
      %p173 = scmp.ne.s32.totalorder %s159, %s160
      %p174 = scmp.eq.s32.totalorder %s26, 1
      %p175 = por %p173, %p174
      %p177 = scmp.ne.s32.totalorder %s160, %s176
      %p178 = scmp.eq.s32.totalorder %s26, 0
      %p179 = por %p177, %p178
      %s181 = sadd.s32 %s180, 1
      %p184 = scmp.eq.s32.totalorder %s20, 1
      %p185 = scmp.ne.s32.totalorder %s180, %s182
      %p186 = scmp.eq.s32.totalorder %s20, 0
      %p187 = por %p185, %p186
      %p188 = scmp.ne.s32.totalorder %s180, %s182
      %p189 = scmp.eq.s32.totalorder %s25, 1
      %p190 = por %p188, %p189
      %p191 = scmp.ne.s32.totalorder %s182, %s183
      %p192 = scmp.eq.s32.totalorder %s25, 0
      %p193 = por %p191, %p192
      %p194 = scmp.ne.s32.totalorder %s182, %s183
      %p195 = scmp.eq.s32.totalorder %s26, 1
      %p196 = por %p194, %p195
      %p198 = scmp.ne.s32.totalorder %s183, %s197
      %p199 = scmp.eq.s32.totalorder %s26, 0
      %p200 = por %p198, %p199
      %s202 = sadd.s32 %s201, 1
      %p205 = scmp.eq.s32.totalorder %s20, 1
      %p206 = scmp.ne.s32.totalorder %s201, %s203
      %p207 = scmp.eq.s32.totalorder %s20, 0
      %p208 = por %p206, %p207
      %p209 = scmp.ne.s32.totalorder %s201, %s203
      %p210 = scmp.eq.s32.totalorder %s25, 1
      %p211 = por %p209, %p210
      %p212 = scmp.ne.s32.totalorder %s203, %s204
      %p213 = scmp.eq.s32.totalorder %s25, 0
      %p214 = por %p212, %p213
      %p215 = scmp.ne.s32.totalorder %s203, %s204
      %p216 = scmp.eq.s32.totalorder %s26, 1
      %p217 = por %p215, %p216
      %p219 = scmp.ne.s32.totalorder %s204, %s218
      %p220 = scmp.eq.s32.totalorder %s26, 0
      %p221 = por %p219, %p220
      %s223 = sadd.s32 %s222, 1
      %p226 = scmp.eq.s32.totalorder %s20, 1
      %p227 = scmp.ne.s32.totalorder %s222, %s224
      %p228 = scmp.eq.s32.totalorder %s20, 0
      %p229 = por %p227, %p228
      %p230 = scmp.ne.s32.totalorder %s222, %s224
      %p231 = scmp.eq.s32.totalorder %s25, 1
      %p232 = por %p230, %p231
      %p233 = scmp.ne.s32.totalorder %s224, %s225
      %p234 = scmp.eq.s32.totalorder %s25, 0
      %p235 = por %p233, %p234
      %p236 = scmp.ne.s32.totalorder %s224, %s225
      %p237 = scmp.eq.s32.totalorder %s26, 1
      %p238 = por %p236, %p237
      %p240 = scmp.ne.s32.totalorder %s225, %s239
      %p241 = scmp.eq.s32.totalorder %s26, 0
      %p242 = por %p240, %p241
      %s243 = ssub.s32 %s27, %s39
      %s244 = ssub.s32 %s28, %s35
      %s245 = sor.u32 %s243, %s244
      %p246 = scmp.eq.s32.totalorder %s245, 0
      %s248 = sadd.s32 %s247, 1
      %s249 = scalar_select %p246, %s247, %s248
      %p252 = pneg %p246
      %p253 = scmp.eq.s32.totalorder %s20, 1
      %p254 = por %p252, %p253
      %p255 = scmp.ne.s32.totalorder %s247, %s250
      %p256 = scmp.eq.s32.totalorder %s20, 0
      %p257 = por %p255, %p256
      %p258 = scmp.ne.s32.totalorder %s247, %s250
      %p259 = scmp.eq.s32.totalorder %s25, 1
      %p260 = por %p258, %p259
      %p261 = scmp.ne.s32.totalorder %s250, %s251
      %p262 = scmp.eq.s32.totalorder %s25, 0
      %p263 = por %p261, %p262
      %p264 = scmp.ne.s32.totalorder %s250, %s251
      %p265 = scmp.eq.s32.totalorder %s26, 1
      %p266 = por %p264, %p265
      %p268 = scmp.ne.s32.totalorder %s251, %s267
      %p269 = scmp.eq.s32.totalorder %s26, 0
      %p270 = por %p268, %p269
      %s271 = ssub.s32 %s27, %s39
      %s272 = ssub.s32 %s28, %s35
      %s273 = sor.u32 %s271, %s272
      %p274 = scmp.eq.s32.totalorder %s273, 0
      %s276 = sadd.s32 %s275, 1
      %s277 = scalar_select %p274, %s275, %s276
      %p280 = pneg %p274
      %p281 = scmp.eq.s32.totalorder %s20, 1
      %p282 = por %p280, %p281
      %p283 = scmp.ne.s32.totalorder %s275, %s278
      %p284 = scmp.eq.s32.totalorder %s20, 0
      %p285 = por %p283, %p284
      %p286 = scmp.ne.s32.totalorder %s275, %s278
      %p287 = scmp.eq.s32.totalorder %s25, 1
      %p288 = por %p286, %p287
      %p289 = scmp.ne.s32.totalorder %s278, %s279
      %p290 = scmp.eq.s32.totalorder %s25, 0
      %p291 = por %p289, %p290
      %p292 = scmp.ne.s32.totalorder %s278, %s279
      %p293 = scmp.eq.s32.totalorder %s26, 1
      %p294 = por %p292, %p293
      %p296 = scmp.ne.s32.totalorder %s279, %s295
      %p297 = scmp.eq.s32.totalorder %s26, 0
      %p298 = por %p296, %p297
      %p299 = scmp.le.s32.totalorder 1, %s20
      %p300 = scmp.lt.s32.totalorder %s20, 3
      %p301 = pnand %p299, %p300
      %p302 = pneg %p301
      // Predicated region
      $region9: #{laean_forward.57} parent=5 // pred_check
        _
      $region10: #{laean_forward.57} parent=5 // pred_check_branch
        %304 = sbr.rel (%p301) target = $region12
      $region11: #{laean_forward.57} parent=5 // pred_region
        %s305 = ssub.s32 %s20, 1
        // Predicated region
        $region13: #{laean_forward.57} parent=11 // pred_check
          %p306 = pneg %p193
        $region14: #{laean_forward.57} parent=11 // pred_check_branch
          %308 = sbr.rel (%p306) target = $region16
        $region15: #{laean_forward.57} parent=11 // pred_region
          _
        $region16: #{laean_forward.57} parent=11 // pred_fallthru
          _
        // Predicated region
        $region17: #{laean_forward.57} parent=11 // pred_check
          %p309 = pneg %p214
        $region18: #{laean_forward.57} parent=11 // pred_check_branch
          %311 = sbr.rel (%p309) target = $region20
        $region19: #{laean_forward.57} parent=11 // pred_region
          _
        $region20: #{laean_forward.57} parent=11 // pred_fallthru
          _
        // Predicated region
        $region21: #{laean_forward.57} parent=11 // pred_check
          %p312 = pneg %p235
        $region22: #{laean_forward.57} parent=11 // pred_check_branch
          %314 = sbr.rel (%p312) target = $region24
        $region23: #{laean_forward.57} parent=11 // pred_region
          _
        $region24: #{laean_forward.57} parent=11 // pred_fallthru
          _
      $region12: #{laean_forward.57} parent=5 // pred_fallthru
        _
      %p315 = scmp.lt.s32.totalorder %s20, 2
      // Predicated region
      $region25: #{laean_forward.57} parent=5 // pred_check
        %p316 = pneg %p315
      $region26: #{laean_forward.57} parent=5 // pred_check_branch
        %318 = sbr.rel (%p316) target = $region28
      $region27: #{laean_forward.57} parent=5 // pred_region
        // Predicated region
        $region29: #{laean_forward.57} parent=27 // pred_check
          %p319 = pneg %p54
        $region30: #{laean_forward.57} parent=27 // pred_check_branch
          %321 = sbr.rel (%p319) target = $region32
        $region31: #{laean_forward.57} parent=27 // pred_region
          %p322 = scmp.lt.s32.totalorder %s27, 1
          %s323 = scalar_select %p322, %s27, 1
          %p324 = scmp.lt.s32.totalorder %s28, 0
          %s325 = scalar_select %p324, %s28, 0
          %s326 = smul.addr %s323, 2
          %s327 = sadd.s32 %s325, %s326
          %s328 = smul.addr %s327, 8
          %s329 = scalar_lea.vmem %s0, %s328
        $region32: #{laean_forward.57} parent=27 // pred_fallthru
          _
        // Predicated region
        $region33: #{laean_forward.57} parent=27 // pred_check
          %p330 = pneg %p82
        $region34: #{laean_forward.57} parent=27 // pred_check_branch
          %332 = sbr.rel (%p330) target = $region36
        $region35: #{laean_forward.57} parent=27 // pred_region
          %p333 = scmp.lt.s32.totalorder %s27, 1
          %s334 = scalar_select %p333, %s27, 1
          %p335 = scmp.lt.s32.totalorder %s28, 0
          %s336 = scalar_select %p335, %s28, 0
          %s337 = smul.addr %s334, 2
          %s338 = sadd.s32 %s336, %s337
          %s339 = smul.addr %s338, 8
          %s340 = scalar_lea.vmem %s1, %s339
        $region36: #{laean_forward.57} parent=27 // pred_fallthru
          _
        // Predicated region
        $region37: #{laean_forward.57} parent=27 // pred_check
          %p341 = pneg %p110
        $region38: #{laean_forward.57} parent=27 // pred_check_branch
          %343 = sbr.rel (%p341) target = $region40
        $region39: #{laean_forward.57} parent=27 // pred_region
          %p344 = scmp.lt.s32.totalorder %s27, 1
          %s345 = scalar_select %p344, %s27, 1
          %p346 = scmp.lt.s32.totalorder %s28, 0
          %s347 = scalar_select %p346, %s28, 0
          %s348 = smul.addr %s345, 2
          %s349 = sadd.s32 %s347, %s348
          %s350 = smul.addr %s349, 8
          %s351 = scalar_lea.vmem %s2, %s350
        $region40: #{laean_forward.57} parent=27 // pred_fallthru
          _
        // Predicated region
        $region41: #{laean_forward.57} parent=27 // pred_check
          %p352 = pneg %p138
        $region42: #{laean_forward.57} parent=27 // pred_check_branch
          %354 = sbr.rel (%p352) target = $region44
        $region43: #{laean_forward.57} parent=27 // pred_region
          %p355 = scmp.lt.s32.totalorder %s27, 1
          %s356 = scalar_select %p355, %s27, 1
          %p357 = scmp.lt.s32.totalorder %s28, 0
          %s358 = scalar_select %p357, %s28, 0
          %s359 = smul.addr %s356, 2
          %s360 = sadd.s32 %s358, %s359
          %s361 = smul.addr %s360, 8
          %s362 = scalar_lea.vmem %s3, %s361
        $region44: #{laean_forward.57} parent=27 // pred_fallthru
          _
        // Predicated region
        $region45: #{laean_forward.57} parent=27 // pred_check
          %p363 = pneg %p166
        $region46: #{laean_forward.57} parent=27 // pred_check_branch
          %365 = sbr.rel (%p363) target = $region48
        $region47: #{laean_forward.57} parent=27 // pred_region
          %p366 = scmp.lt.s32.totalorder %s27, 1
          %s367 = scalar_select %p366, %s27, 1
          %p368 = scmp.lt.s32.totalorder %s28, 0
          %s369 = scalar_select %p368, %s28, 0
          %s370 = smul.addr %s367, 2
          %s371 = sadd.s32 %s369, %s370
          %s372 = smul.addr %s371, 8
          %s373 = scalar_lea.vmem %s4, %s372
        $region48: #{laean_forward.57} parent=27 // pred_fallthru
          _
      $region28: #{laean_forward.57} parent=5 // pred_fallthru
        _
      %p374 = scmp.le.s32.totalorder 1, %s20
      %p375 = scmp.lt.s32.totalorder %s20, 3
      %p376 = pnand %p374, %p375
      %p377 = pneg %p376
      // Predicated region
      $region49: #{laean_forward.57} parent=5 // pred_check
        _
      $region50: #{laean_forward.57} parent=5 // pred_check_branch
        %379 = sbr.rel (%p376) target = $region52
      $region51: #{laean_forward.57} parent=5 // pred_region
        %s380 = ssub.s32 %s20, 1
        %p381 = scmp.lt.s32.totalorder %s29, 1
        %s382 = scalar_select %p381, %s29, 1
        %p383 = scmp.lt.s32.totalorder %s30, 0
        %s384 = scalar_select %p383, %s30, 0
        %s385 = smul.addr %s382, 2
        %s386 = sadd.s32 %s384, %s385
        %s387 = smul.addr %s386, 8
        %s388 = scalar_lea.vmem %s0, %s387
        %p389 = pneg %p60
        %p390 = pneg %p57
        %p391 = scmp.lt.s32.totalorder %s29, 1
        %s392 = scalar_select %p391, %s29, 1
        %p393 = scmp.lt.s32.totalorder %s30, 0
        %s394 = scalar_select %p393, %s30, 0
        %s395 = smul.addr %s392, 2
        %s396 = sadd.s32 %s394, %s395
        %s397 = smul.addr %s396, 8
        %s398 = scalar_lea.vmem %s1, %s397
        %p399 = pneg %p88
        %p400 = pneg %p85
        %p401 = scmp.lt.s32.totalorder %s29, 1
        %s402 = scalar_select %p401, %s29, 1
        %p403 = scmp.lt.s32.totalorder %s30, 0
        %s404 = scalar_select %p403, %s30, 0
        %s405 = smul.addr %s402, 2
        %s406 = sadd.s32 %s404, %s405
        %s407 = smul.addr %s406, 8
        %s408 = scalar_lea.vmem %s2, %s407
        %p409 = pneg %p116
        %p410 = pneg %p113
        %p411 = scmp.lt.s32.totalorder %s29, 1
        %s412 = scalar_select %p411, %s29, 1
        %p413 = scmp.lt.s32.totalorder %s30, 0
        %s414 = scalar_select %p413, %s30, 0
        %s415 = smul.addr %s412, 2
        %s416 = sadd.s32 %s414, %s415
        %s417 = smul.addr %s416, 8
        %s418 = scalar_lea.vmem %s3, %s417
        %p419 = pneg %p144
        %p420 = pneg %p141
        %p421 = scmp.lt.s32.totalorder %s29, 1
        %s422 = scalar_select %p421, %s29, 1
        %p423 = scmp.lt.s32.totalorder %s30, 0
        %s424 = scalar_select %p423, %s30, 0
        %s425 = smul.addr %s422, 2
        %s426 = sadd.s32 %s424, %s425
        %s427 = smul.addr %s426, 8
        %s428 = scalar_lea.vmem %s4, %s427
        %p429 = pneg %p172
        %p430 = pneg %p169
        %p431 = pneg %p193
        %p432 = pneg %p190
        %p433 = pneg %p214
        %p434 = pneg %p211
        %p435 = pneg %p235
        %p436 = pneg %p232
        %p437 = pneg %p263
        %p438 = pneg %p260
        %s439 = sand.u32 %s250, 1
        %s440 = scalar_lea.sflag [#allocation4], %s439
        %s441 = sand.u32 %s250, 1
        %s442 = smul.addr %s441, 16
        %s443 = scalar_lea.vmem [#allocation3], %s442
        %p444 = pneg %p291
        %p445 = pneg %p288
        %p446 = scmp.lt.s32.totalorder %s29, 1
        %s447 = scalar_select %p446, %s29, 1
        %p448 = scmp.lt.s32.totalorder %s30, 0
        %s449 = scalar_select %p448, %s30, 0
        %s450 = smul.addr %s447, 2
        %s451 = sadd.s32 %s449, %s450
        %s452 = smul.addr %s451, 8
        %s453 = scalar_lea.vmem %s9, %s452
        %p454 = scmp.lt.s32.totalorder %s29, 1
        %s455 = scalar_select %p454, %s29, 1
        %p456 = scmp.lt.s32.totalorder %s30, 0
        %s457 = scalar_select %p456, %s30, 0
        %s458 = smul.addr %s455, 2
        %s459 = sadd.s32 %s457, %s458
        %s460 = smul.addr %s459, 8
        %s461 = scalar_lea.vmem %s0, %s460
        %p462 = scmp.lt.s32.totalorder %s29, 1
        %s463 = scalar_select %p462, %s29, 1
        %p464 = scmp.lt.s32.totalorder %s30, 0
        %s465 = scalar_select %p464, %s30, 0
        %s466 = smul.addr %s463, 2
        %s467 = sadd.s32 %s465, %s466
        %s468 = smul.addr %s467, 8
        %s469 = scalar_lea.vmem %s1, %s468
        %p470 = scmp.lt.s32.totalorder %s29, 1
        %s471 = scalar_select %p470, %s29, 1
        %p472 = scmp.lt.s32.totalorder %s30, 0
        %s473 = scalar_select %p472, %s30, 0
        %s474 = smul.addr %s471, 2
        %s475 = sadd.s32 %s473, %s474
        %s476 = smul.addr %s475, 8
        %s477 = scalar_lea.vmem %s2, %s476
        %p478 = scmp.lt.s32.totalorder %s29, 1
        %s479 = scalar_select %p478, %s29, 1
        %p480 = scmp.lt.s32.totalorder %s30, 0
        %s481 = scalar_select %p480, %s30, 0
        %s482 = smul.addr %s479, 2
        %s483 = sadd.s32 %s481, %s482
        %s484 = smul.addr %s483, 8
        %s485 = scalar_lea.vmem %s3, %s484
        %p486 = scmp.lt.s32.totalorder %s29, 1
        %s487 = scalar_select %p486, %s29, 1
        %p488 = scmp.lt.s32.totalorder %s30, 0
        %s489 = scalar_select %p488, %s30, 0
        %s490 = smul.addr %s487, 2
        %s491 = sadd.s32 %s489, %s490
        %s492 = smul.addr %s491, 8
        %s493 = scalar_lea.vmem %s4, %s492
        %p494 = scmp.lt.s32.totalorder %s29, 1
        %s495 = scalar_select %p494, %s29, 1
        %p496 = scmp.lt.s32.totalorder %s30, 0
        %s497 = scalar_select %p496, %s30, 0
        %s498 = smul.addr %s495, 2
        %s499 = sadd.s32 %s497, %s498
        %s500 = smul.addr %s499, 8
        %s501 = scalar_lea.vmem %s9, %s500
        %v502 = vld [vmem:[%s461] sm:$0xff]
        %v503 = vld [vmem:[%s461 + $0x8] sm:$0xff]
        %v504 = vld [vmem:[%s469] sm:$0xff]
        %v505 = vld [vmem:[%s469 + $0x8] sm:$0xff]
        %v506 = vadd.f32 %v502, %v504
        %v507 = vadd.f32 %v503, %v505
        %v508 = vld [vmem:[%s5] sm:$0xff]
        %v509 = vld [vmem:[%s5 + $0x8] sm:$0xff]
        %v510 = vld [vmem:[%s6] sm:$0xff]
        %v511 = vld [vmem:[%s6 + $0x8] sm:$0xff]
        %513 = vset.pattern.permute.xlu0 0
        %514 = vperm.xlu0 %513, %v510
        %v515 = vpop.permute.xlu0 %514
        %518 = vset.pattern.permute.xlu0 0
        %519 = vperm.xlu0 %518, %v511
        %v520 = vpop.permute.xlu0 %519
        %vm522 = vcmask 130048
        %v524 = vsel %vm522, %v508, 0
        %v527 = vsel %vm522, %v509, 0
        %529 = vmatprep.subr.mxu0 0.0
        %530 = vmatpush1.msra.mxu0 %v506
        %531 = vmatprep.subr.mxu0 0.0
        %532 = vmatpush1.msra.mxu0 %v507
        %533 = vmatprep.subr.mxu0 0.0
        %534 = vmatpush1.msra.mxu0 0.0
        %535 = vmatprep.subr.mxu0 0.0
        %536 = vmatpush1.msra.mxu0 0.0
        %537 = vmatprep.subr.mxu0 0.0
        %538 = vmatpush1.msra.mxu0 0.0
        %539 = vmatprep.subr.mxu0 0.0
        %540 = vmatpush1.msra.mxu0 0.0
        %541 = vmatprep.subr.mxu0 0.0
        %542 = vmatpush1.msra.mxu0 0.0
        %543 = vmatprep.subr.mxu0 0.0
        %544 = vmatpush1.msra.mxu0 0.0
        %545 = vmatprep.subr.mxu0 0.0
        %546 = vmatpush1.msra.mxu0 0.0
        %547 = vmatprep.subr.mxu0 0.0
        %548 = vmatpush1.msra.mxu0 0.0
        %549 = vmatprep.subr.mxu0 0.0
        %550 = vmatpush1.msra.mxu0 0.0
        %551 = vmatprep.subr.mxu0 0.0
        %552 = vmatpush1.msra.mxu0 0.0
        %553 = vmatprep.subr.mxu0 0.0
        %554 = vmatpush1.msra.mxu0 0.0
        %555 = vmatprep.subr.mxu0 0.0
        %556 = vmatpush1.msra.mxu0 0.0
        %557 = vmatprep.subr.mxu0 0.0
        %558 = vmatpush1.msra.mxu0 0.0
        %559 = vmatprep.subr.mxu0 0.0
        %560 = vmatpush1.msra.mxu0 0.0
        %561 = vmatprep.subr.mxu0 0.0
        %562 = vmatpush1.msra.mxu0 0.0
        %563 = vmatprep.subr.mxu0 0.0
        %564 = vmatpush1.msra.mxu0 0.0
        %565 = vmatprep.subr.mxu0 0.0
        %566 = vmatpush1.msra.mxu0 0.0
        %567 = vmatprep.subr.mxu0 0.0
        %568 = vmatpush1.msra.mxu0 0.0
        %569 = vmatprep.subr.mxu0 0.0
        %570 = vmatpush1.msra.mxu0 0.0
        %571 = vmatprep.subr.mxu0 0.0
        %572 = vmatpush1.msra.mxu0 0.0
        %573 = vmatprep.subr.mxu0 0.0
        %574 = vmatpush1.msra.mxu0 0.0
        %575 = vmatprep.subr.mxu0 0.0
        %576 = vmatpush1.msra.mxu0 0.0
        %577 = vmatprep.subr.mxu0 0.0
        %578 = vmatpush1.msra.mxu0 0.0
        %579 = vmatprep.subr.mxu0 0.0
        %580 = vmatpush1.msra.mxu0 0.0
        %581 = vmatprep.subr.mxu0 0.0
        %582 = vmatpush1.msra.mxu0 0.0
        %583 = vmatprep.subr.mxu0 0.0
        %584 = vmatpush1.msra.mxu0 0.0
        %585 = vmatprep.subr.mxu0 0.0
        %586 = vmatpush1.msra.mxu0 0.0
        %587 = vmatprep.subr.mxu0 0.0
        %588 = vmatpush1.msra.mxu0 0.0
        %589 = vmatprep.subr.mxu0 0.0
        %590 = vmatpush1.msra.mxu0 0.0
        %591 = vmatprep.subr.mxu0 0.0
        %592 = vmatpush1.msra.mxu0 0.0
        %593 = vmatprep.mubr.f32.mxu0 0.0
        %594 = vmatmul.mubr.f32.gmra.mrb[0].mxu0 %v524
        %v595 = vpop.f32.mrb[0].mxu0
        %v596 = vadd.f32 %v515, %v595
        %v597 = vpop.f32.mrb[0].mxu0
        %598 = vmatprep.mubr.f32.mxu0 0.0
        %599 = vmatmul.mubr.f32.gmra.mrb[0].mxu0 %v527
        %v600 = vpop.f32.mrb[0].mxu0
        %v601 = vadd.f32 %v520, %v600
        %v602 = vpop.f32.mrb[0].mxu0
        %603 = vdwg.mxu0
        %v604 = vsub.f32 0.0, %v596
        %v605 = vsub.f32 0.0, %v601
        %v606 = vmul.f32 %v604, 1.442695
        %v607 = vpow.pop %v606
        %v608 = vmul.f32 %v605, 1.442695
        %v609 = vpow.pop %v608
        %v610 = vadd.f32 %v607, 1.0
        %v611 = vadd.f32 %v609, 1.0
        %v612 = vrcp.pop %v610
        %v613 = vmul.f32 1.0, %v612
        %v614 = vrcp.pop %v611
        %v615 = vmul.f32 1.0, %v614
        %v616 = vld [vmem:[%s485] sm:$0xff]
        %v617 = vld [vmem:[%s485 + $0x8] sm:$0xff]
        %v618 = vmul.f32 %v613, %v616
        %v619 = vmul.f32 %v615, %v617
        %v620 = vld [vmem:[%s477] sm:$0xff]
        %v621 = vld [vmem:[%s477 + $0x8] sm:$0xff]
        %v622 = vadd.f32 %v618, %v620
        %v623 = vadd.f32 %v619, %v621
        %vm624 = vcmask 523264
        %625 = vst.msk [vmem:[%s443] sm:$0xff] %vm624, %v622
        %626 = vst.msk [vmem:[%s443 + $0x8] sm:$0xff] %vm624, %v623
        %v627 = vld [vmem:[%s493] sm:$0xff]
        %v628 = vld [vmem:[%s493 + $0x8] sm:$0xff]
        %s629 = sld [smem:[#allocation2]]
        %v630 = vstv %s629
        %v631 = vmul.f32 %v630, %v622
        %v632 = vmul.f32 %v630, %v623
        %v633 = vadd.f32 %v627, %v631
        %v634 = vadd.f32 %v628, %v632
        %635 = vst.msk [vmem:[%s501] sm:$0xff] %vm624, %v633
        %636 = vst.msk [vmem:[%s501 + $0x8] sm:$0xff] %vm624, %v634
        %s637 = sand.u32 %s250, 1
        %s638 = scalar_lea.sflag [#allocation4], %s637
        %s639 = sand.u32 %s250, 1
        %s640 = smul.addr %s639, 16
        %s641 = scalar_lea.vmem [#allocation3], %s640
        %p642 = scmp.lt.s32.totalorder %s29, 1
        %s643 = scalar_select %p642, %s29, 1
        %p644 = scmp.lt.s32.totalorder %s30, 0
        %s645 = scalar_select %p644, %s30, 0
        %s646 = smul.addr %s643, 2
        %s647 = sadd.s32 %s645, %s646
        %s648 = smul.addr %s647, 8
        %s649 = scalar_lea.vmem %s9, %s648
        // Predicated region
        $region53: #{laean_forward.57} parent=51 // pred_check
          %p650 = pneg %p260
        $region54: #{laean_forward.57} parent=51 // pred_check_branch
          %652 = sbr.rel (%p650) target = $region56
        $region55: #{laean_forward.57} parent=51 // pred_region
          %s654 = ssub.s32 256, 256
          %655 = vsyncadd %s638, %s654
          %s656 = smul.addr %s29, 2
          %s657 = sadd.s32 %s30, %s656
          %s658 = smul.addr %s657, 128
          %s659 = scalar_lea.hbm %s8, %s658
          %s660 = sshll.u32 %s641, 4
          %s661 = int_to_ptr.vmem [resolvable:$true] %s660
          %666 = dma.vmem_to_hbm [thread:$0]  %s661, 256, %s659, %s638, 128, 128, 8
        $region56: #{laean_forward.57} parent=51 // pred_fallthru
          _
        // Predicated region
        $region57: #{laean_forward.57} parent=51 // pred_check
          %p667 = pneg %p288
        $region58: #{laean_forward.57} parent=51 // pred_check_branch
          %669 = sbr.rel (%p667) target = $region60
        $region59: #{laean_forward.57} parent=51 // pred_region
          _
        $region60: #{laean_forward.57} parent=51 // pred_fallthru
          _
      $region52: #{laean_forward.57} parent=5 // pred_fallthru
        _
      %p670 = scmp.le.s32.totalorder 2, %s20
      // Predicated region
      $region61: #{laean_forward.57} parent=5 // pred_check
        %p671 = pneg %p670
      $region62: #{laean_forward.57} parent=5 // pred_check_branch
        %673 = sbr.rel (%p671) target = $region64
      $region63: #{laean_forward.57} parent=5 // pred_region
        %s674 = ssub.s32 %s20, 2
        // Predicated region
        $region65: #{laean_forward.57} parent=63 // pred_check
          %p675 = pneg %p266
        $region66: #{laean_forward.57} parent=63 // pred_check_branch
          %677 = sbr.rel (%p675) target = $region68
        $region67: #{laean_forward.57} parent=63 // pred_region
          %s678 = sand.u32 %s251, 1
          %s679 = scalar_lea.sflag [#allocation4], %s678
          %s680 = sand.u32 %s251, 1
          %s681 = smul.addr %s680, 16
          %s682 = scalar_lea.vmem [#allocation3], %s681
          %683 = dma.done %s679, 256
        $region68: #{laean_forward.57} parent=63 // pred_fallthru
          _
        // Predicated region
        $region69: #{laean_forward.57} parent=63 // pred_check
          %p684 = pneg %p294
        $region70: #{laean_forward.57} parent=63 // pred_check_branch
          %686 = sbr.rel (%p684) target = $region72
        $region71: #{laean_forward.57} parent=63 // pred_region
          %p687 = scmp.lt.s32.totalorder %s31, 1
          %s688 = scalar_select %p687, %s31, 1
          %p689 = scmp.lt.s32.totalorder %s32, 0
          %s690 = scalar_select %p689, %s32, 0
          %s691 = smul.addr %s688, 2
          %s692 = sadd.s32 %s690, %s691
          %s693 = smul.addr %s692, 8
          %s694 = scalar_lea.vmem %s9, %s693
        $region72: #{laean_forward.57} parent=63 // pred_fallthru
          _
      $region64: #{laean_forward.57} parent=5 // pred_fallthru
        _
    $region6: #{laean_forward.57} parent=1 // loop_footer
      %s24 = sadd.s32 1, %s20
    $region7: #{laean_forward.57} parent=1 // loop_footer_branch
      %19 = sbr.rel target = $region3
    $region8: #{laean_forward.57} parent=1 // loop_exit
      _
    %695 = vsyncpa [#allocation4], 1
    %s696 = scalar_lea.sflag [#allocation4], 1
    %697 = vsyncpa %s696, 1

// kernel: laean_forward.52
$region0: #{laean_forward.52}
  #allocation0 [shape = 'u32[]', space=smem, size = 0x4, offset = 0x4, fixed_abs, tag = 'smem constant byte address 0x4 - core index']
  #allocation1 [shape = 'u32[144,128]{1,0:T(1,128)}', space=vmem, size = 0x12000, scoped, tag = 'internal scratch']
  #allocation2 [shape = 'f32[1]{0:T(128)S(6)}', space=smem, size = 0x200, scoped, tag = 'scoped memory for laean_forward.52']
  %s0 = inlined_call_operand.vmem [shape: f32[2,16,64], index: 0, kind: input, shape index: {}]
  %s1 = inlined_call_operand.vmem [shape: f32[2,16,64], index: 1, kind: input, shape index: {}]
  %s2 = inlined_call_operand.vmem [shape: f32[2,16,64], index: 2, kind: input, shape index: {}]
  %s3 = inlined_call_operand.vmem [shape: f32[2,16,64], index: 3, kind: input, shape index: {}]
  %s4 = inlined_call_operand.vmem [shape: f32[2,16,64], index: 4, kind: input, shape index: {}]
  %s5 = inlined_call_operand.vmem [shape: f32[16,16], index: 5, kind: input, shape index: {}]
  %s6 = inlined_call_operand.vmem [shape: f32[16,1], index: 6, kind: input, shape index: {}]
  %s7 = inlined_call_operand.<no memory space> [shape: f32[1], index: 7, kind: input, shape index: {}]
  %s8 = inlined_call_operand.vmem [shape: f32[2,16,64], index: 8, kind: output, shape index: {0}]
  %s9 = inlined_call_operand.vmem [shape: f32[2,16,64], index: 9, kind: output, shape index: {1}]
  %10 = xla_tuple %s8, %s9
  %s11 = sld [smem:[#allocation0]]
  $region73: #{laean_forward.52} parent=0
    _
  %s13 = ssub.s32 1, %s11
  %s14 = scalar_select 0, %s13, %s11
  %15 = sst [smem:[#allocation2]] %s7
  loop: start=0, step=1, limit=4
  $region2: #{laean_forward.52} parent=0 // loop_pre_header
    _
  $region3: #{laean_forward.52} parent=0 // loop_header
    %s17 = sphi 0, %s21
    %p18 = scmp.ge.s32.totalorder %s17, 4
    %s24 = sphi 0, %s36
    %s25 = sphi 0, %s32
    %s26 = sphi 0, %s24
    %s27 = sphi 0, %s25
    %s28 = sphi 0, %s26
    %s29 = sphi 0, %s27
    %s41 = sphi 0, %s43
    %s44 = sphi 0, %s41
    %s45 = sphi 0, %s44
    %s61 = sphi 0, %s45
    %s69 = sphi 0, %s71
    %s72 = sphi 0, %s69
    %s73 = sphi 0, %s72
    %s89 = sphi 0, %s73
    %s97 = sphi 0, %s99
    %s100 = sphi 0, %s97
    %s101 = sphi 0, %s100
    %s117 = sphi 0, %s101
    %s125 = sphi 0, %s127
    %s128 = sphi 0, %s125
    %s129 = sphi 0, %s128
    %s145 = sphi 0, %s129
    %s153 = sphi 0, %s155
    %s156 = sphi 0, %s153
    %s157 = sphi 0, %s156
    %s173 = sphi 0, %s157
    %s177 = sphi 0, %s177
    %s179 = sphi 0, %s177
    %s180 = sphi 0, %s179
    %s194 = sphi 0, %s180
    %s198 = sphi 0, %s198
    %s200 = sphi 0, %s198
    %s201 = sphi 0, %s200
    %s215 = sphi 0, %s201
    %s219 = sphi 0, %s219
    %s221 = sphi 0, %s219
    %s222 = sphi 0, %s221
    %s236 = sphi 0, %s222
    %s244 = sphi 0, %s246
    %s247 = sphi 0, %s244
    %s248 = sphi 0, %s247
    %s264 = sphi 0, %s248
    %s272 = sphi 0, %s274
    %s275 = sphi 0, %s272
    %s276 = sphi 0, %s275
    %s292 = sphi 0, %s276
  $region4: #{laean_forward.52} parent=0 // loop_header_branch
    %20 = sbr.rel (%p18) target = $region8
  $region5: #{laean_forward.52} parent=0 // loop_body
    %s22 = ssub.s32 %s17, 1
    %s23 = ssub.s32 %s17, 2
    %s30 = sadd.s32 1, %s25
    %p31 = scmp.ge.s32.totalorder %s30, 1
    %s32 = scalar_select %p31, 0, %s30
    %s33 = sadd.s32 1, %s24
    %s34 = scalar_select %p31, %s33, %s24
    %p35 = scmp.ge.s32.totalorder %s34, 2
    %s36 = scalar_select %p35, 0, %s34
    %s37 = ssub.s32 %s24, %s36
    %s38 = ssub.s32 %s25, %s32
    %s39 = sor.u32 %s37, %s38
    %p40 = scmp.eq.s32.totalorder %s39, 0
    %s42 = sadd.s32 %s41, 1
    %s43 = scalar_select %p40, %s41, %s42
    %p46 = pneg %p40
    %p47 = scmp.eq.s32.totalorder %s17, 1
    %p48 = por %p46, %p47
    %p49 = scmp.ne.s32.totalorder %s41, %s44
    %p50 = scmp.eq.s32.totalorder %s17, 0
    %p51 = por %p49, %p50
    %p52 = scmp.ne.s32.totalorder %s41, %s44
    %p53 = scmp.eq.s32.totalorder %s22, 1
    %p54 = por %p52, %p53
    %p55 = scmp.ne.s32.totalorder %s44, %s45
    %p56 = scmp.eq.s32.totalorder %s22, 0
    %p57 = por %p55, %p56
    %p58 = scmp.ne.s32.totalorder %s44, %s45
    %p59 = scmp.eq.s32.totalorder %s23, 1
    %p60 = por %p58, %p59
    %p62 = scmp.ne.s32.totalorder %s45, %s61
    %p63 = scmp.eq.s32.totalorder %s23, 0
    %p64 = por %p62, %p63
    %s65 = ssub.s32 %s24, %s36
    %s66 = ssub.s32 %s25, %s32
    %s67 = sor.u32 %s65, %s66
    %p68 = scmp.eq.s32.totalorder %s67, 0
    %s70 = sadd.s32 %s69, 1
    %s71 = scalar_select %p68, %s69, %s70
    %p74 = pneg %p68
    %p75 = scmp.eq.s32.totalorder %s17, 1
    %p76 = por %p74, %p75
    %p77 = scmp.ne.s32.totalorder %s69, %s72
    %p78 = scmp.eq.s32.totalorder %s17, 0
    %p79 = por %p77, %p78
    %p80 = scmp.ne.s32.totalorder %s69, %s72
    %p81 = scmp.eq.s32.totalorder %s22, 1
    %p82 = por %p80, %p81
    %p83 = scmp.ne.s32.totalorder %s72, %s73
    %p84 = scmp.eq.s32.totalorder %s22, 0
    %p85 = por %p83, %p84
    %p86 = scmp.ne.s32.totalorder %s72, %s73
    %p87 = scmp.eq.s32.totalorder %s23, 1
    %p88 = por %p86, %p87
    %p90 = scmp.ne.s32.totalorder %s73, %s89
    %p91 = scmp.eq.s32.totalorder %s23, 0
    %p92 = por %p90, %p91
    %s93 = ssub.s32 %s24, %s36
    %s94 = ssub.s32 %s25, %s32
    %s95 = sor.u32 %s93, %s94
    %p96 = scmp.eq.s32.totalorder %s95, 0
    %s98 = sadd.s32 %s97, 1
    %s99 = scalar_select %p96, %s97, %s98
    %p102 = pneg %p96
    %p103 = scmp.eq.s32.totalorder %s17, 1
    %p104 = por %p102, %p103
    %p105 = scmp.ne.s32.totalorder %s97, %s100
    %p106 = scmp.eq.s32.totalorder %s17, 0
    %p107 = por %p105, %p106
    %p108 = scmp.ne.s32.totalorder %s97, %s100
    %p109 = scmp.eq.s32.totalorder %s22, 1
    %p110 = por %p108, %p109
    %p111 = scmp.ne.s32.totalorder %s100, %s101
    %p112 = scmp.eq.s32.totalorder %s22, 0
    %p113 = por %p111, %p112
    %p114 = scmp.ne.s32.totalorder %s100, %s101
    %p115 = scmp.eq.s32.totalorder %s23, 1
    %p116 = por %p114, %p115
    %p118 = scmp.ne.s32.totalorder %s101, %s117
    %p119 = scmp.eq.s32.totalorder %s23, 0
    %p120 = por %p118, %p119
    %s121 = ssub.s32 %s24, %s36
    %s122 = ssub.s32 %s25, %s32
    %s123 = sor.u32 %s121, %s122
    %p124 = scmp.eq.s32.totalorder %s123, 0
    %s126 = sadd.s32 %s125, 1
    %s127 = scalar_select %p124, %s125, %s126
    %p130 = pneg %p124
    %p131 = scmp.eq.s32.totalorder %s17, 1
    %p132 = por %p130, %p131
    %p133 = scmp.ne.s32.totalorder %s125, %s128
    %p134 = scmp.eq.s32.totalorder %s17, 0
    %p135 = por %p133, %p134
    %p136 = scmp.ne.s32.totalorder %s125, %s128
    %p137 = scmp.eq.s32.totalorder %s22, 1
    %p138 = por %p136, %p137
    %p139 = scmp.ne.s32.totalorder %s128, %s129
    %p140 = scmp.eq.s32.totalorder %s22, 0
    %p141 = por %p139, %p140
    %p142 = scmp.ne.s32.totalorder %s128, %s129
    %p143 = scmp.eq.s32.totalorder %s23, 1
    %p144 = por %p142, %p143
    %p146 = scmp.ne.s32.totalorder %s129, %s145
    %p147 = scmp.eq.s32.totalorder %s23, 0
    %p148 = por %p146, %p147
    %s149 = ssub.s32 %s24, %s36
    %s150 = ssub.s32 %s25, %s32
    %s151 = sor.u32 %s149, %s150
    %p152 = scmp.eq.s32.totalorder %s151, 0
    %s154 = sadd.s32 %s153, 1
    %s155 = scalar_select %p152, %s153, %s154
    %p158 = pneg %p152
    %p159 = scmp.eq.s32.totalorder %s17, 1
    %p160 = por %p158, %p159
    %p161 = scmp.ne.s32.totalorder %s153, %s156
    %p162 = scmp.eq.s32.totalorder %s17, 0
    %p163 = por %p161, %p162
    %p164 = scmp.ne.s32.totalorder %s153, %s156
    %p165 = scmp.eq.s32.totalorder %s22, 1
    %p166 = por %p164, %p165
    %p167 = scmp.ne.s32.totalorder %s156, %s157
    %p168 = scmp.eq.s32.totalorder %s22, 0
    %p169 = por %p167, %p168
    %p170 = scmp.ne.s32.totalorder %s156, %s157
    %p171 = scmp.eq.s32.totalorder %s23, 1
    %p172 = por %p170, %p171
    %p174 = scmp.ne.s32.totalorder %s157, %s173
    %p175 = scmp.eq.s32.totalorder %s23, 0
    %p176 = por %p174, %p175
    %s178 = sadd.s32 %s177, 1
    %p181 = scmp.eq.s32.totalorder %s17, 1
    %p182 = scmp.ne.s32.totalorder %s177, %s179
    %p183 = scmp.eq.s32.totalorder %s17, 0
    %p184 = por %p182, %p183
    %p185 = scmp.ne.s32.totalorder %s177, %s179
    %p186 = scmp.eq.s32.totalorder %s22, 1
    %p187 = por %p185, %p186
    %p188 = scmp.ne.s32.totalorder %s179, %s180
    %p189 = scmp.eq.s32.totalorder %s22, 0
    %p190 = por %p188, %p189
    %p191 = scmp.ne.s32.totalorder %s179, %s180
    %p192 = scmp.eq.s32.totalorder %s23, 1
    %p193 = por %p191, %p192
    %p195 = scmp.ne.s32.totalorder %s180, %s194
    %p196 = scmp.eq.s32.totalorder %s23, 0
    %p197 = por %p195, %p196
    %s199 = sadd.s32 %s198, 1
    %p202 = scmp.eq.s32.totalorder %s17, 1
    %p203 = scmp.ne.s32.totalorder %s198, %s200
    %p204 = scmp.eq.s32.totalorder %s17, 0
    %p205 = por %p203, %p204
    %p206 = scmp.ne.s32.totalorder %s198, %s200
    %p207 = scmp.eq.s32.totalorder %s22, 1
    %p208 = por %p206, %p207
    %p209 = scmp.ne.s32.totalorder %s200, %s201
    %p210 = scmp.eq.s32.totalorder %s22, 0
    %p211 = por %p209, %p210
    %p212 = scmp.ne.s32.totalorder %s200, %s201
    %p213 = scmp.eq.s32.totalorder %s23, 1
    %p214 = por %p212, %p213
    %p216 = scmp.ne.s32.totalorder %s201, %s215
    %p217 = scmp.eq.s32.totalorder %s23, 0
    %p218 = por %p216, %p217
    %s220 = sadd.s32 %s219, 1
    %p223 = scmp.eq.s32.totalorder %s17, 1
    %p224 = scmp.ne.s32.totalorder %s219, %s221
    %p225 = scmp.eq.s32.totalorder %s17, 0
    %p226 = por %p224, %p225
    %p227 = scmp.ne.s32.totalorder %s219, %s221
    %p228 = scmp.eq.s32.totalorder %s22, 1
    %p229 = por %p227, %p228
    %p230 = scmp.ne.s32.totalorder %s221, %s222
    %p231 = scmp.eq.s32.totalorder %s22, 0
    %p232 = por %p230, %p231
    %p233 = scmp.ne.s32.totalorder %s221, %s222
    %p234 = scmp.eq.s32.totalorder %s23, 1
    %p235 = por %p233, %p234
    %p237 = scmp.ne.s32.totalorder %s222, %s236
    %p238 = scmp.eq.s32.totalorder %s23, 0
    %p239 = por %p237, %p238
    %s240 = ssub.s32 %s24, %s36
    %s241 = ssub.s32 %s25, %s32
    %s242 = sor.u32 %s240, %s241
    %p243 = scmp.eq.s32.totalorder %s242, 0
    %s245 = sadd.s32 %s244, 1
    %s246 = scalar_select %p243, %s244, %s245
    %p249 = pneg %p243
    %p250 = scmp.eq.s32.totalorder %s17, 1
    %p251 = por %p249, %p250
    %p252 = scmp.ne.s32.totalorder %s244, %s247
    %p253 = scmp.eq.s32.totalorder %s17, 0
    %p254 = por %p252, %p253
    %p255 = scmp.ne.s32.totalorder %s244, %s247
    %p256 = scmp.eq.s32.totalorder %s22, 1
    %p257 = por %p255, %p256
    %p258 = scmp.ne.s32.totalorder %s247, %s248
    %p259 = scmp.eq.s32.totalorder %s22, 0
    %p260 = por %p258, %p259
    %p261 = scmp.ne.s32.totalorder %s247, %s248
    %p262 = scmp.eq.s32.totalorder %s23, 1
    %p263 = por %p261, %p262
    %p265 = scmp.ne.s32.totalorder %s248, %s264
    %p266 = scmp.eq.s32.totalorder %s23, 0
    %p267 = por %p265, %p266
    %s268 = ssub.s32 %s24, %s36
    %s269 = ssub.s32 %s25, %s32
    %s270 = sor.u32 %s268, %s269
    %p271 = scmp.eq.s32.totalorder %s270, 0
    %s273 = sadd.s32 %s272, 1
    %s274 = scalar_select %p271, %s272, %s273
    %p277 = pneg %p271
    %p278 = scmp.eq.s32.totalorder %s17, 1
    %p279 = por %p277, %p278
    %p280 = scmp.ne.s32.totalorder %s272, %s275
    %p281 = scmp.eq.s32.totalorder %s17, 0
    %p282 = por %p280, %p281
    %p283 = scmp.ne.s32.totalorder %s272, %s275
    %p284 = scmp.eq.s32.totalorder %s22, 1
    %p285 = por %p283, %p284
    %p286 = scmp.ne.s32.totalorder %s275, %s276
    %p287 = scmp.eq.s32.totalorder %s22, 0
    %p288 = por %p286, %p287
    %p289 = scmp.ne.s32.totalorder %s275, %s276
    %p290 = scmp.eq.s32.totalorder %s23, 1
    %p291 = por %p289, %p290
    %p293 = scmp.ne.s32.totalorder %s276, %s292
    %p294 = scmp.eq.s32.totalorder %s23, 0
    %p295 = por %p293, %p294
    %p296 = scmp.le.s32.totalorder 1, %s17
    %p297 = scmp.lt.s32.totalorder %s17, 3
    %p298 = pnand %p296, %p297
    %p299 = pneg %p298
    // Predicated region
    $region9: #{laean_forward.52} parent=5 // pred_check
      _
    $region10: #{laean_forward.52} parent=5 // pred_check_branch
      %301 = sbr.rel (%p298) target = $region12
    $region11: #{laean_forward.52} parent=5 // pred_region
      %s302 = ssub.s32 %s17, 1
      // Predicated region
      $region13: #{laean_forward.52} parent=11 // pred_check
        %p303 = pneg %p190
      $region14: #{laean_forward.52} parent=11 // pred_check_branch
        %305 = sbr.rel (%p303) target = $region16
      $region15: #{laean_forward.52} parent=11 // pred_region
        _
      $region16: #{laean_forward.52} parent=11 // pred_fallthru
        _
      // Predicated region
      $region17: #{laean_forward.52} parent=11 // pred_check
        %p306 = pneg %p211
      $region18: #{laean_forward.52} parent=11 // pred_check_branch
        %308 = sbr.rel (%p306) target = $region20
      $region19: #{laean_forward.52} parent=11 // pred_region
        _
      $region20: #{laean_forward.52} parent=11 // pred_fallthru
        _
      // Predicated region
      $region21: #{laean_forward.52} parent=11 // pred_check
        %p309 = pneg %p232
      $region22: #{laean_forward.52} parent=11 // pred_check_branch
        %311 = sbr.rel (%p309) target = $region24
      $region23: #{laean_forward.52} parent=11 // pred_region
        _
      $region24: #{laean_forward.52} parent=11 // pred_fallthru
        _
    $region12: #{laean_forward.52} parent=5 // pred_fallthru
      _
    %p312 = scmp.lt.s32.totalorder %s17, 2
    // Predicated region
    $region25: #{laean_forward.52} parent=5 // pred_check
      %p313 = pneg %p312
    $region26: #{laean_forward.52} parent=5 // pred_check_branch
      %315 = sbr.rel (%p313) target = $region28
    $region27: #{laean_forward.52} parent=5 // pred_region
      // Predicated region
      $region29: #{laean_forward.52} parent=27 // pred_check
        %p316 = pneg %p51
      $region30: #{laean_forward.52} parent=27 // pred_check_branch
        %318 = sbr.rel (%p316) target = $region32
      $region31: #{laean_forward.52} parent=27 // pred_region
        %p319 = scmp.lt.s32.totalorder %s24, 1
        %s320 = scalar_select %p319, %s24, 1
        %p321 = scmp.lt.s32.totalorder %s25, 0
        %s322 = scalar_select %p321, %s25, 0
        %s323 = smul.addr %s320, 2
        %s324 = sadd.s32 %s322, %s323
        %s325 = smul.addr %s324, 8
        %s326 = scalar_lea.vmem %s0, %s325
      $region32: #{laean_forward.52} parent=27 // pred_fallthru
        _
      // Predicated region
      $region33: #{laean_forward.52} parent=27 // pred_check
        %p327 = pneg %p79
      $region34: #{laean_forward.52} parent=27 // pred_check_branch
        %329 = sbr.rel (%p327) target = $region36
      $region35: #{laean_forward.52} parent=27 // pred_region
        %p330 = scmp.lt.s32.totalorder %s24, 1
        %s331 = scalar_select %p330, %s24, 1
        %p332 = scmp.lt.s32.totalorder %s25, 0
        %s333 = scalar_select %p332, %s25, 0
        %s334 = smul.addr %s331, 2
        %s335 = sadd.s32 %s333, %s334
        %s336 = smul.addr %s335, 8
        %s337 = scalar_lea.vmem %s1, %s336
      $region36: #{laean_forward.52} parent=27 // pred_fallthru
        _
      // Predicated region
      $region37: #{laean_forward.52} parent=27 // pred_check
        %p338 = pneg %p107
      $region38: #{laean_forward.52} parent=27 // pred_check_branch
        %340 = sbr.rel (%p338) target = $region40
      $region39: #{laean_forward.52} parent=27 // pred_region
        %p341 = scmp.lt.s32.totalorder %s24, 1
        %s342 = scalar_select %p341, %s24, 1
        %p343 = scmp.lt.s32.totalorder %s25, 0
        %s344 = scalar_select %p343, %s25, 0
        %s345 = smul.addr %s342, 2
        %s346 = sadd.s32 %s344, %s345
        %s347 = smul.addr %s346, 8
        %s348 = scalar_lea.vmem %s2, %s347
      $region40: #{laean_forward.52} parent=27 // pred_fallthru
        _
      // Predicated region
      $region41: #{laean_forward.52} parent=27 // pred_check
        %p349 = pneg %p135
      $region42: #{laean_forward.52} parent=27 // pred_check_branch
        %351 = sbr.rel (%p349) target = $region44
      $region43: #{laean_forward.52} parent=27 // pred_region
        %p352 = scmp.lt.s32.totalorder %s24, 1
        %s353 = scalar_select %p352, %s24, 1
        %p354 = scmp.lt.s32.totalorder %s25, 0
        %s355 = scalar_select %p354, %s25, 0
        %s356 = smul.addr %s353, 2
        %s357 = sadd.s32 %s355, %s356
        %s358 = smul.addr %s357, 8
        %s359 = scalar_lea.vmem %s3, %s358
      $region44: #{laean_forward.52} parent=27 // pred_fallthru
        _
      // Predicated region
      $region45: #{laean_forward.52} parent=27 // pred_check
        %p360 = pneg %p163
      $region46: #{laean_forward.52} parent=27 // pred_check_branch
        %362 = sbr.rel (%p360) target = $region48
      $region47: #{laean_forward.52} parent=27 // pred_region
        %p363 = scmp.lt.s32.totalorder %s24, 1
        %s364 = scalar_select %p363, %s24, 1
        %p365 = scmp.lt.s32.totalorder %s25, 0
        %s366 = scalar_select %p365, %s25, 0
        %s367 = smul.addr %s364, 2
        %s368 = sadd.s32 %s366, %s367
        %s369 = smul.addr %s368, 8
        %s370 = scalar_lea.vmem %s4, %s369
      $region48: #{laean_forward.52} parent=27 // pred_fallthru
        _
    $region28: #{laean_forward.52} parent=5 // pred_fallthru
      _
    %p371 = scmp.le.s32.totalorder 1, %s17
    %p372 = scmp.lt.s32.totalorder %s17, 3
    %p373 = pnand %p371, %p372
    %p374 = pneg %p373
    // Predicated region
    $region49: #{laean_forward.52} parent=5 // pred_check
      _
    $region50: #{laean_forward.52} parent=5 // pred_check_branch
      %376 = sbr.rel (%p373) target = $region52
    $region51: #{laean_forward.52} parent=5 // pred_region
      %s377 = ssub.s32 %s17, 1
      %p378 = scmp.lt.s32.totalorder %s26, 1
      %s379 = scalar_select %p378, %s26, 1
      %p380 = scmp.lt.s32.totalorder %s27, 0
      %s381 = scalar_select %p380, %s27, 0
      %s382 = smul.addr %s379, 2
      %s383 = sadd.s32 %s381, %s382
      %s384 = smul.addr %s383, 8
      %s385 = scalar_lea.vmem %s0, %s384
      %p386 = pneg %p57
      %p387 = pneg %p54
      %p388 = scmp.lt.s32.totalorder %s26, 1
      %s389 = scalar_select %p388, %s26, 1
      %p390 = scmp.lt.s32.totalorder %s27, 0
      %s391 = scalar_select %p390, %s27, 0
      %s392 = smul.addr %s389, 2
      %s393 = sadd.s32 %s391, %s392
      %s394 = smul.addr %s393, 8
      %s395 = scalar_lea.vmem %s1, %s394
      %p396 = pneg %p85
      %p397 = pneg %p82
      %p398 = scmp.lt.s32.totalorder %s26, 1
      %s399 = scalar_select %p398, %s26, 1
      %p400 = scmp.lt.s32.totalorder %s27, 0
      %s401 = scalar_select %p400, %s27, 0
      %s402 = smul.addr %s399, 2
      %s403 = sadd.s32 %s401, %s402
      %s404 = smul.addr %s403, 8
      %s405 = scalar_lea.vmem %s2, %s404
      %p406 = pneg %p113
      %p407 = pneg %p110
      %p408 = scmp.lt.s32.totalorder %s26, 1
      %s409 = scalar_select %p408, %s26, 1
      %p410 = scmp.lt.s32.totalorder %s27, 0
      %s411 = scalar_select %p410, %s27, 0
      %s412 = smul.addr %s409, 2
      %s413 = sadd.s32 %s411, %s412
      %s414 = smul.addr %s413, 8
      %s415 = scalar_lea.vmem %s3, %s414
      %p416 = pneg %p141
      %p417 = pneg %p138
      %p418 = scmp.lt.s32.totalorder %s26, 1
      %s419 = scalar_select %p418, %s26, 1
      %p420 = scmp.lt.s32.totalorder %s27, 0
      %s421 = scalar_select %p420, %s27, 0
      %s422 = smul.addr %s419, 2
      %s423 = sadd.s32 %s421, %s422
      %s424 = smul.addr %s423, 8
      %s425 = scalar_lea.vmem %s4, %s424
      %p426 = pneg %p169
      %p427 = pneg %p166
      %p428 = pneg %p190
      %p429 = pneg %p187
      %p430 = pneg %p211
      %p431 = pneg %p208
      %p432 = pneg %p232
      %p433 = pneg %p229
      %p434 = pneg %p260
      %p435 = pneg %p257
      %p436 = scmp.lt.s32.totalorder %s26, 1
      %s437 = scalar_select %p436, %s26, 1
      %p438 = scmp.lt.s32.totalorder %s27, 0
      %s439 = scalar_select %p438, %s27, 0
      %s440 = smul.addr %s437, 2
      %s441 = sadd.s32 %s439, %s440
      %s442 = smul.addr %s441, 8
      %s443 = scalar_lea.vmem %s8, %s442
      %p444 = pneg %p288
      %p445 = pneg %p285
      %p446 = scmp.lt.s32.totalorder %s26, 1
      %s447 = scalar_select %p446, %s26, 1
      %p448 = scmp.lt.s32.totalorder %s27, 0
      %s449 = scalar_select %p448, %s27, 0
      %s450 = smul.addr %s447, 2
      %s451 = sadd.s32 %s449, %s450
      %s452 = smul.addr %s451, 8
      %s453 = scalar_lea.vmem %s9, %s452
      %p454 = scmp.lt.s32.totalorder %s26, 1
      %s455 = scalar_select %p454, %s26, 1
      %p456 = scmp.lt.s32.totalorder %s27, 0
      %s457 = scalar_select %p456, %s27, 0
      %s458 = smul.addr %s455, 2
      %s459 = sadd.s32 %s457, %s458
      %s460 = smul.addr %s459, 8
      %s461 = scalar_lea.vmem %s0, %s460
      %p462 = scmp.lt.s32.totalorder %s26, 1
      %s463 = scalar_select %p462, %s26, 1
      %p464 = scmp.lt.s32.totalorder %s27, 0
      %s465 = scalar_select %p464, %s27, 0
      %s466 = smul.addr %s463, 2
      %s467 = sadd.s32 %s465, %s466
      %s468 = smul.addr %s467, 8
      %s469 = scalar_lea.vmem %s1, %s468
      %p470 = scmp.lt.s32.totalorder %s26, 1
      %s471 = scalar_select %p470, %s26, 1
      %p472 = scmp.lt.s32.totalorder %s27, 0
      %s473 = scalar_select %p472, %s27, 0
      %s474 = smul.addr %s471, 2
      %s475 = sadd.s32 %s473, %s474
      %s476 = smul.addr %s475, 8
      %s477 = scalar_lea.vmem %s2, %s476
      %p478 = scmp.lt.s32.totalorder %s26, 1
      %s479 = scalar_select %p478, %s26, 1
      %p480 = scmp.lt.s32.totalorder %s27, 0
      %s481 = scalar_select %p480, %s27, 0
      %s482 = smul.addr %s479, 2
      %s483 = sadd.s32 %s481, %s482
      %s484 = smul.addr %s483, 8
      %s485 = scalar_lea.vmem %s3, %s484
      %p486 = scmp.lt.s32.totalorder %s26, 1
      %s487 = scalar_select %p486, %s26, 1
      %p488 = scmp.lt.s32.totalorder %s27, 0
      %s489 = scalar_select %p488, %s27, 0
      %s490 = smul.addr %s487, 2
      %s491 = sadd.s32 %s489, %s490
      %s492 = smul.addr %s491, 8
      %s493 = scalar_lea.vmem %s4, %s492
      %p494 = scmp.lt.s32.totalorder %s26, 1
      %s495 = scalar_select %p494, %s26, 1
      %p496 = scmp.lt.s32.totalorder %s27, 0
      %s497 = scalar_select %p496, %s27, 0
      %s498 = smul.addr %s495, 2
      %s499 = sadd.s32 %s497, %s498
      %s500 = smul.addr %s499, 8
      %s501 = scalar_lea.vmem %s8, %s500
      %p502 = scmp.lt.s32.totalorder %s26, 1
      %s503 = scalar_select %p502, %s26, 1
      %p504 = scmp.lt.s32.totalorder %s27, 0
      %s505 = scalar_select %p504, %s27, 0
      %s506 = smul.addr %s503, 2
      %s507 = sadd.s32 %s505, %s506
      %s508 = smul.addr %s507, 8
      %s509 = scalar_lea.vmem %s9, %s508
      %v510 = vld [vmem:[%s461] sm:$0xff]
      %v511 = vld [vmem:[%s461 + $0x8] sm:$0xff]
      %v512 = vld [vmem:[%s469] sm:$0xff]
      %v513 = vld [vmem:[%s469 + $0x8] sm:$0xff]
      %v514 = vadd.f32 %v510, %v512
      %v515 = vadd.f32 %v511, %v513
      %v516 = vld [vmem:[%s5] sm:$0xff]
      %v517 = vld [vmem:[%s5 + $0x8] sm:$0xff]
      %v518 = vld [vmem:[%s6] sm:$0xff]
      %v519 = vld [vmem:[%s6 + $0x8] sm:$0xff]
      %521 = vset.pattern.permute.xlu0 0
      %522 = vperm.xlu0 %521, %v518
      %v523 = vpop.permute.xlu0 %522
      %526 = vset.pattern.permute.xlu0 0
      %527 = vperm.xlu0 %526, %v519
      %v528 = vpop.permute.xlu0 %527
      %vm530 = vcmask 130048
      %v532 = vsel %vm530, %v516, 0
      %v535 = vsel %vm530, %v517, 0
      %537 = vmatprep.subr.mxu0 0.0
      %538 = vmatpush1.msra.mxu0 %v514
      %539 = vmatprep.subr.mxu0 0.0
      %540 = vmatpush1.msra.mxu0 %v515
      %541 = vmatprep.subr.mxu0 0.0
      %542 = vmatpush1.msra.mxu0 0.0
      %543 = vmatprep.subr.mxu0 0.0
      %544 = vmatpush1.msra.mxu0 0.0
      %545 = vmatprep.subr.mxu0 0.0
      %546 = vmatpush1.msra.mxu0 0.0
      %547 = vmatprep.subr.mxu0 0.0
      %548 = vmatpush1.msra.mxu0 0.0
      %549 = vmatprep.subr.mxu0 0.0
      %550 = vmatpush1.msra.mxu0 0.0
      %551 = vmatprep.subr.mxu0 0.0
      %552 = vmatpush1.msra.mxu0 0.0
      %553 = vmatprep.subr.mxu0 0.0
      %554 = vmatpush1.msra.mxu0 0.0
      %555 = vmatprep.subr.mxu0 0.0
      %556 = vmatpush1.msra.mxu0 0.0
      %557 = vmatprep.subr.mxu0 0.0
      %558 = vmatpush1.msra.mxu0 0.0
      %559 = vmatprep.subr.mxu0 0.0
      %560 = vmatpush1.msra.mxu0 0.0
      %561 = vmatprep.subr.mxu0 0.0
      %562 = vmatpush1.msra.mxu0 0.0
      %563 = vmatprep.subr.mxu0 0.0
      %564 = vmatpush1.msra.mxu0 0.0
      %565 = vmatprep.subr.mxu0 0.0
      %566 = vmatpush1.msra.mxu0 0.0
      %567 = vmatprep.subr.mxu0 0.0
      %568 = vmatpush1.msra.mxu0 0.0
      %569 = vmatprep.subr.mxu0 0.0
      %570 = vmatpush1.msra.mxu0 0.0
      %571 = vmatprep.subr.mxu0 0.0
      %572 = vmatpush1.msra.mxu0 0.0
      %573 = vmatprep.subr.mxu0 0.0
      %574 = vmatpush1.msra.mxu0 0.0
      %575 = vmatprep.subr.mxu0 0.0
      %576 = vmatpush1.msra.mxu0 0.0
      %577 = vmatprep.subr.mxu0 0.0
      %578 = vmatpush1.msra.mxu0 0.0
      %579 = vmatprep.subr.mxu0 0.0
      %580 = vmatpush1.msra.mxu0 0.0
      %581 = vmatprep.subr.mxu0 0.0
      %582 = vmatpush1.msra.mxu0 0.0
      %583 = vmatprep.subr.mxu0 0.0
      %584 = vmatpush1.msra.mxu0 0.0
      %585 = vmatprep.subr.mxu0 0.0
      %586 = vmatpush1.msra.mxu0 0.0
      %587 = vmatprep.subr.mxu0 0.0
      %588 = vmatpush1.msra.mxu0 0.0
      %589 = vmatprep.subr.mxu0 0.0
      %590 = vmatpush1.msra.mxu0 0.0
      %591 = vmatprep.subr.mxu0 0.0
      %592 = vmatpush1.msra.mxu0 0.0
      %593 = vmatprep.subr.mxu0 0.0
      %594 = vmatpush1.msra.mxu0 0.0
      %595 = vmatprep.subr.mxu0 0.0
      %596 = vmatpush1.msra.mxu0 0.0
      %597 = vmatprep.subr.mxu0 0.0
      %598 = vmatpush1.msra.mxu0 0.0
      %599 = vmatprep.subr.mxu0 0.0
      %600 = vmatpush1.msra.mxu0 0.0
      %601 = vmatprep.mubr.f32.mxu0 0.0
      %602 = vmatmul.mubr.f32.gmra.mrb[0].mxu0 %v532
      %v603 = vpop.f32.mrb[0].mxu0
      %v604 = vadd.f32 %v523, %v603
      %v605 = vpop.f32.mrb[0].mxu0
      %606 = vmatprep.mubr.f32.mxu0 0.0
      %607 = vmatmul.mubr.f32.gmra.mrb[0].mxu0 %v535
      %v608 = vpop.f32.mrb[0].mxu0
      %v609 = vadd.f32 %v528, %v608
      %v610 = vpop.f32.mrb[0].mxu0
      %611 = vdwg.mxu0
      %v612 = vsub.f32 0.0, %v604
      %v613 = vsub.f32 0.0, %v609
      %v614 = vmul.f32 %v612, 1.442695
      %v615 = vpow.pop %v614
      %v616 = vmul.f32 %v613, 1.442695
      %v617 = vpow.pop %v616
      %v618 = vadd.f32 %v615, 1.0
      %v619 = vadd.f32 %v617, 1.0
      %v620 = vrcp.pop %v618
      %v621 = vmul.f32 1.0, %v620
      %v622 = vrcp.pop %v619
      %v623 = vmul.f32 1.0, %v622
      %v624 = vld [vmem:[%s485] sm:$0xff]
      %v625 = vld [vmem:[%s485 + $0x8] sm:$0xff]
      %v626 = vmul.f32 %v621, %v624
      %v627 = vmul.f32 %v623, %v625
      %v628 = vld [vmem:[%s477] sm:$0xff]
      %v629 = vld [vmem:[%s477 + $0x8] sm:$0xff]
      %v630 = vadd.f32 %v626, %v628
      %v631 = vadd.f32 %v627, %v629
      %vm632 = vcmask 523264
      %633 = vst.msk [vmem:[%s501] sm:$0xff] %vm632, %v630
      %634 = vst.msk [vmem:[%s501 + $0x8] sm:$0xff] %vm632, %v631
      %v635 = vld [vmem:[%s493] sm:$0xff]
      %v636 = vld [vmem:[%s493 + $0x8] sm:$0xff]
      %s637 = sld [smem:[#allocation2]]
      %v638 = vstv %s637
      %v639 = vmul.f32 %v638, %v630
      %v640 = vmul.f32 %v638, %v631
      %v641 = vadd.f32 %v635, %v639
      %v642 = vadd.f32 %v636, %v640
      %643 = vst.msk [vmem:[%s509] sm:$0xff] %vm632, %v641
      %644 = vst.msk [vmem:[%s509 + $0x8] sm:$0xff] %vm632, %v642
      %p645 = scmp.lt.s32.totalorder %s26, 1
      %s646 = scalar_select %p645, %s26, 1
      %p647 = scmp.lt.s32.totalorder %s27, 0
      %s648 = scalar_select %p647, %s27, 0
      %s649 = smul.addr %s646, 2
      %s650 = sadd.s32 %s648, %s649
      %s651 = smul.addr %s650, 8
      %s652 = scalar_lea.vmem %s8, %s651
      %p653 = scmp.lt.s32.totalorder %s26, 1
      %s654 = scalar_select %p653, %s26, 1
      %p655 = scmp.lt.s32.totalorder %s27, 0
      %s656 = scalar_select %p655, %s27, 0
      %s657 = smul.addr %s654, 2
      %s658 = sadd.s32 %s656, %s657
      %s659 = smul.addr %s658, 8
      %s660 = scalar_lea.vmem %s9, %s659
      // Predicated region
      $region53: #{laean_forward.52} parent=51 // pred_check
        %p661 = pneg %p257
      $region54: #{laean_forward.52} parent=51 // pred_check_branch
        %663 = sbr.rel (%p661) target = $region56
      $region55: #{laean_forward.52} parent=51 // pred_region
        _
      $region56: #{laean_forward.52} parent=51 // pred_fallthru
        _
      // Predicated region
      $region57: #{laean_forward.52} parent=51 // pred_check
        %p664 = pneg %p285
      $region58: #{laean_forward.52} parent=51 // pred_check_branch
        %666 = sbr.rel (%p664) target = $region60
      $region59: #{laean_forward.52} parent=51 // pred_region
        _
      $region60: #{laean_forward.52} parent=51 // pred_fallthru
        _
    $region52: #{laean_forward.52} parent=5 // pred_fallthru
      _
    %p667 = scmp.le.s32.totalorder 2, %s17
    // Predicated region
    $region61: #{laean_forward.52} parent=5 // pred_check
      %p668 = pneg %p667
    $region62: #{laean_forward.52} parent=5 // pred_check_branch
      %670 = sbr.rel (%p668) target = $region64
    $region63: #{laean_forward.52} parent=5 // pred_region
      %s671 = ssub.s32 %s17, 2
      // Predicated region
      $region65: #{laean_forward.52} parent=63 // pred_check
        %p672 = pneg %p263
      $region66: #{laean_forward.52} parent=63 // pred_check_branch
        %674 = sbr.rel (%p672) target = $region68
      $region67: #{laean_forward.52} parent=63 // pred_region
        %p675 = scmp.lt.s32.totalorder %s28, 1
        %s676 = scalar_select %p675, %s28, 1
        %p677 = scmp.lt.s32.totalorder %s29, 0
        %s678 = scalar_select %p677, %s29, 0
        %s679 = smul.addr %s676, 2
        %s680 = sadd.s32 %s678, %s679
        %s681 = smul.addr %s680, 8
        %s682 = scalar_lea.vmem %s8, %s681
      $region68: #{laean_forward.52} parent=63 // pred_fallthru
        _
      // Predicated region
      $region69: #{laean_forward.52} parent=63 // pred_check
        %p683 = pneg %p291
      $region70: #{laean_forward.52} parent=63 // pred_check_branch
        %685 = sbr.rel (%p683) target = $region72
      $region71: #{laean_forward.52} parent=63 // pred_region
        %p686 = scmp.lt.s32.totalorder %s28, 1
        %s687 = scalar_select %p686, %s28, 1
        %p688 = scmp.lt.s32.totalorder %s29, 0
        %s689 = scalar_select %p688, %s29, 0
        %s690 = smul.addr %s687, 2
        %s691 = sadd.s32 %s689, %s690
        %s692 = smul.addr %s691, 8
        %s693 = scalar_lea.vmem %s9, %s692
      $region72: #{laean_forward.52} parent=63 // pred_fallthru
        _
    $region64: #{laean_forward.52} parent=5 // pred_fallthru
      _
  $region6: #{laean_forward.52} parent=0 // loop_footer
    %s21 = sadd.s32 1, %s17
  $region7: #{laean_forward.52} parent=0 // loop_footer_branch
    %16 = sbr.rel target = $region3
  $region8: #{laean_forward.52} parent=0 // loop_exit
    _

// kernel: laean_forward.58
$region0: #{laean_forward.58}
  #allocation0 [shape = 'u32[]', space=smem, size = 0x4, offset = 0x4, fixed_abs, tag = 'smem constant byte address 0x4 - core index']
  #allocation1 [shape = 'u32[144,128]{1,0:T(1,128)}', space=vmem, size = 0x12000, scoped, tag = 'internal scratch']
  %s0 = inlined_call_operand.vmem [shape: f32[2,16,64], index: 0, kind: input, shape index: {}]
  %s1 = inlined_call_operand.vmem [shape: f32[16,16], index: 1, kind: input, shape index: {}]
  %s2 = inlined_call_operand.vmem [shape: f32[16,1], index: 2, kind: input, shape index: {}]
  %s3 = inlined_call_operand.vmem [shape: f32[2,16,64], index: 3, kind: input, shape index: {}]
  %s4 = inlined_call_operand.vmem [shape: f32[2,16,64], index: 4, kind: output, shape index: {}]
  %s5 = sld [smem:[#allocation0]]
  $region49: #{laean_forward.58} parent=0
    _
  %s7 = ssub.s32 1, %s5
  %s8 = scalar_select 0, %s7, %s5
  loop: start=0, step=1, limit=4
  $region2: #{laean_forward.58} parent=0 // loop_pre_header
    _
  $region3: #{laean_forward.58} parent=0 // loop_header
    %s10 = sphi 0, %s14
    %p11 = scmp.ge.s32.totalorder %s10, 4
    %s17 = sphi 0, %s29
    %s18 = sphi 0, %s25
    %s19 = sphi 0, %s17
    %s20 = sphi 0, %s18
    %s21 = sphi 0, %s19
    %s22 = sphi 0, %s20
    %s34 = sphi 0, %s36
    %s37 = sphi 0, %s34
    %s38 = sphi 0, %s37
    %s54 = sphi 0, %s38
    %s58 = sphi 0, %s58
    %s60 = sphi 0, %s58
    %s61 = sphi 0, %s60
    %s75 = sphi 0, %s61
    %s79 = sphi 0, %s79
    %s81 = sphi 0, %s79
    %s82 = sphi 0, %s81
    %s96 = sphi 0, %s82
    %s104 = sphi 0, %s106
    %s107 = sphi 0, %s104
    %s108 = sphi 0, %s107
    %s124 = sphi 0, %s108
    %s132 = sphi 0, %s134
    %s135 = sphi 0, %s132
    %s136 = sphi 0, %s135
    %s152 = sphi 0, %s136
  $region4: #{laean_forward.58} parent=0 // loop_header_branch
    %13 = sbr.rel (%p11) target = $region8
  $region5: #{laean_forward.58} parent=0 // loop_body
    %s15 = ssub.s32 %s10, 1
    %s16 = ssub.s32 %s10, 2
    %s23 = sadd.s32 1, %s18
    %p24 = scmp.ge.s32.totalorder %s23, 1
    %s25 = scalar_select %p24, 0, %s23
    %s26 = sadd.s32 1, %s17
    %s27 = scalar_select %p24, %s26, %s17
    %p28 = scmp.ge.s32.totalorder %s27, 2
    %s29 = scalar_select %p28, 0, %s27
    %s30 = ssub.s32 %s17, %s29
    %s31 = ssub.s32 %s18, %s25
    %s32 = sor.u32 %s30, %s31
    %p33 = scmp.eq.s32.totalorder %s32, 0
    %s35 = sadd.s32 %s34, 1
    %s36 = scalar_select %p33, %s34, %s35
    %p39 = pneg %p33
    %p40 = scmp.eq.s32.totalorder %s10, 1
    %p41 = por %p39, %p40
    %p42 = scmp.ne.s32.totalorder %s34, %s37
    %p43 = scmp.eq.s32.totalorder %s10, 0
    %p44 = por %p42, %p43
    %p45 = scmp.ne.s32.totalorder %s34, %s37
    %p46 = scmp.eq.s32.totalorder %s15, 1
    %p47 = por %p45, %p46
    %p48 = scmp.ne.s32.totalorder %s37, %s38
    %p49 = scmp.eq.s32.totalorder %s15, 0
    %p50 = por %p48, %p49
    %p51 = scmp.ne.s32.totalorder %s37, %s38
    %p52 = scmp.eq.s32.totalorder %s16, 1
    %p53 = por %p51, %p52
    %p55 = scmp.ne.s32.totalorder %s38, %s54
    %p56 = scmp.eq.s32.totalorder %s16, 0
    %p57 = por %p55, %p56
    %s59 = sadd.s32 %s58, 1
    %p62 = scmp.eq.s32.totalorder %s10, 1
    %p63 = scmp.ne.s32.totalorder %s58, %s60
    %p64 = scmp.eq.s32.totalorder %s10, 0
    %p65 = por %p63, %p64
    %p66 = scmp.ne.s32.totalorder %s58, %s60
    %p67 = scmp.eq.s32.totalorder %s15, 1
    %p68 = por %p66, %p67
    %p69 = scmp.ne.s32.totalorder %s60, %s61
    %p70 = scmp.eq.s32.totalorder %s15, 0
    %p71 = por %p69, %p70
    %p72 = scmp.ne.s32.totalorder %s60, %s61
    %p73 = scmp.eq.s32.totalorder %s16, 1
    %p74 = por %p72, %p73
    %p76 = scmp.ne.s32.totalorder %s61, %s75
    %p77 = scmp.eq.s32.totalorder %s16, 0
    %p78 = por %p76, %p77
    %s80 = sadd.s32 %s79, 1
    %p83 = scmp.eq.s32.totalorder %s10, 1
    %p84 = scmp.ne.s32.totalorder %s79, %s81
    %p85 = scmp.eq.s32.totalorder %s10, 0
    %p86 = por %p84, %p85
    %p87 = scmp.ne.s32.totalorder %s79, %s81
    %p88 = scmp.eq.s32.totalorder %s15, 1
    %p89 = por %p87, %p88
    %p90 = scmp.ne.s32.totalorder %s81, %s82
    %p91 = scmp.eq.s32.totalorder %s15, 0
    %p92 = por %p90, %p91
    %p93 = scmp.ne.s32.totalorder %s81, %s82
    %p94 = scmp.eq.s32.totalorder %s16, 1
    %p95 = por %p93, %p94
    %p97 = scmp.ne.s32.totalorder %s82, %s96
    %p98 = scmp.eq.s32.totalorder %s16, 0
    %p99 = por %p97, %p98
    %s100 = ssub.s32 %s17, %s29
    %s101 = ssub.s32 %s18, %s25
    %s102 = sor.u32 %s100, %s101
    %p103 = scmp.eq.s32.totalorder %s102, 0
    %s105 = sadd.s32 %s104, 1
    %s106 = scalar_select %p103, %s104, %s105
    %p109 = pneg %p103
    %p110 = scmp.eq.s32.totalorder %s10, 1
    %p111 = por %p109, %p110
    %p112 = scmp.ne.s32.totalorder %s104, %s107
    %p113 = scmp.eq.s32.totalorder %s10, 0
    %p114 = por %p112, %p113
    %p115 = scmp.ne.s32.totalorder %s104, %s107
    %p116 = scmp.eq.s32.totalorder %s15, 1
    %p117 = por %p115, %p116
    %p118 = scmp.ne.s32.totalorder %s107, %s108
    %p119 = scmp.eq.s32.totalorder %s15, 0
    %p120 = por %p118, %p119
    %p121 = scmp.ne.s32.totalorder %s107, %s108
    %p122 = scmp.eq.s32.totalorder %s16, 1
    %p123 = por %p121, %p122
    %p125 = scmp.ne.s32.totalorder %s108, %s124
    %p126 = scmp.eq.s32.totalorder %s16, 0
    %p127 = por %p125, %p126
    %s128 = ssub.s32 %s17, %s29
    %s129 = ssub.s32 %s18, %s25
    %s130 = sor.u32 %s128, %s129
    %p131 = scmp.eq.s32.totalorder %s130, 0
    %s133 = sadd.s32 %s132, 1
    %s134 = scalar_select %p131, %s132, %s133
    %p137 = pneg %p131
    %p138 = scmp.eq.s32.totalorder %s10, 1
    %p139 = por %p137, %p138
    %p140 = scmp.ne.s32.totalorder %s132, %s135
    %p141 = scmp.eq.s32.totalorder %s10, 0
    %p142 = por %p140, %p141
    %p143 = scmp.ne.s32.totalorder %s132, %s135
    %p144 = scmp.eq.s32.totalorder %s15, 1
    %p145 = por %p143, %p144
    %p146 = scmp.ne.s32.totalorder %s135, %s136
    %p147 = scmp.eq.s32.totalorder %s15, 0
    %p148 = por %p146, %p147
    %p149 = scmp.ne.s32.totalorder %s135, %s136
    %p150 = scmp.eq.s32.totalorder %s16, 1
    %p151 = por %p149, %p150
    %p153 = scmp.ne.s32.totalorder %s136, %s152
    %p154 = scmp.eq.s32.totalorder %s16, 0
    %p155 = por %p153, %p154
    %p156 = scmp.le.s32.totalorder 1, %s10
    %p157 = scmp.lt.s32.totalorder %s10, 3
    %p158 = pnand %p156, %p157
    %p159 = pneg %p158
    // Predicated region
    $region9: #{laean_forward.58} parent=5 // pred_check
      _
    $region10: #{laean_forward.58} parent=5 // pred_check_branch
      %161 = sbr.rel (%p158) target = $region12
    $region11: #{laean_forward.58} parent=5 // pred_region
      %s162 = ssub.s32 %s10, 1
      // Predicated region
      $region13: #{laean_forward.58} parent=11 // pred_check
        %p163 = pneg %p71
      $region14: #{laean_forward.58} parent=11 // pred_check_branch
        %165 = sbr.rel (%p163) target = $region16
      $region15: #{laean_forward.58} parent=11 // pred_region
        _
      $region16: #{laean_forward.58} parent=11 // pred_fallthru
        _
      // Predicated region
      $region17: #{laean_forward.58} parent=11 // pred_check
        %p166 = pneg %p92
      $region18: #{laean_forward.58} parent=11 // pred_check_branch
        %168 = sbr.rel (%p166) target = $region20
      $region19: #{laean_forward.58} parent=11 // pred_region
        _
      $region20: #{laean_forward.58} parent=11 // pred_fallthru
        _
    $region12: #{laean_forward.58} parent=5 // pred_fallthru
      _
    %p169 = scmp.lt.s32.totalorder %s10, 2
    // Predicated region
    $region21: #{laean_forward.58} parent=5 // pred_check
      %p170 = pneg %p169
    $region22: #{laean_forward.58} parent=5 // pred_check_branch
      %172 = sbr.rel (%p170) target = $region24
    $region23: #{laean_forward.58} parent=5 // pred_region
      // Predicated region
      $region25: #{laean_forward.58} parent=23 // pred_check
        %p173 = pneg %p44
      $region26: #{laean_forward.58} parent=23 // pred_check_branch
        %175 = sbr.rel (%p173) target = $region28
      $region27: #{laean_forward.58} parent=23 // pred_region
        %p176 = scmp.lt.s32.totalorder %s17, 1
        %s177 = scalar_select %p176, %s17, 1
        %p178 = scmp.lt.s32.totalorder %s18, 0
        %s179 = scalar_select %p178, %s18, 0
        %s180 = smul.addr %s177, 2
        %s181 = sadd.s32 %s179, %s180
        %s182 = smul.addr %s181, 8
        %s183 = scalar_lea.vmem %s0, %s182
      $region28: #{laean_forward.58} parent=23 // pred_fallthru
        _
      // Predicated region
      $region29: #{laean_forward.58} parent=23 // pred_check
        %p184 = pneg %p114
      $region30: #{laean_forward.58} parent=23 // pred_check_branch
        %186 = sbr.rel (%p184) target = $region32
      $region31: #{laean_forward.58} parent=23 // pred_region
        %p187 = scmp.lt.s32.totalorder %s17, 1
        %s188 = scalar_select %p187, %s17, 1
        %p189 = scmp.lt.s32.totalorder %s18, 0
        %s190 = scalar_select %p189, %s18, 0
        %s191 = smul.addr %s188, 2
        %s192 = sadd.s32 %s190, %s191
        %s193 = smul.addr %s192, 8
        %s194 = scalar_lea.vmem %s3, %s193
      $region32: #{laean_forward.58} parent=23 // pred_fallthru
        _
    $region24: #{laean_forward.58} parent=5 // pred_fallthru
      _
    %p195 = scmp.le.s32.totalorder 1, %s10
    %p196 = scmp.lt.s32.totalorder %s10, 3
    %p197 = pnand %p195, %p196
    %p198 = pneg %p197
    // Predicated region
    $region33: #{laean_forward.58} parent=5 // pred_check
      _
    $region34: #{laean_forward.58} parent=5 // pred_check_branch
      %200 = sbr.rel (%p197) target = $region36
    $region35: #{laean_forward.58} parent=5 // pred_region
      %s201 = ssub.s32 %s10, 1
      %p202 = scmp.lt.s32.totalorder %s19, 1
      %s203 = scalar_select %p202, %s19, 1
      %p204 = scmp.lt.s32.totalorder %s20, 0
      %s205 = scalar_select %p204, %s20, 0
      %s206 = smul.addr %s203, 2
      %s207 = sadd.s32 %s205, %s206
      %s208 = smul.addr %s207, 8
      %s209 = scalar_lea.vmem %s0, %s208
      %p210 = pneg %p50
      %p211 = pneg %p47
      %p212 = pneg %p71
      %p213 = pneg %p68
      %p214 = pneg %p92
      %p215 = pneg %p89
      %p216 = scmp.lt.s32.totalorder %s19, 1
      %s217 = scalar_select %p216, %s19, 1
      %p218 = scmp.lt.s32.totalorder %s20, 0
      %s219 = scalar_select %p218, %s20, 0
      %s220 = smul.addr %s217, 2
      %s221 = sadd.s32 %s219, %s220
      %s222 = smul.addr %s221, 8
      %s223 = scalar_lea.vmem %s3, %s222
      %p224 = pneg %p120
      %p225 = pneg %p117
      %p226 = pneg %p148
      %p227 = pneg %p145
      %p228 = scmp.lt.s32.totalorder %s19, 1
      %s229 = scalar_select %p228, %s19, 1
      %p230 = scmp.lt.s32.totalorder %s20, 0
      %s231 = scalar_select %p230, %s20, 0
      %s232 = smul.addr %s229, 2
      %s233 = sadd.s32 %s231, %s232
      %s234 = smul.addr %s233, 8
      %s235 = scalar_lea.vmem %s4, %s234
      %p236 = scmp.lt.s32.totalorder %s19, 1
      %s237 = scalar_select %p236, %s19, 1
      %p238 = scmp.lt.s32.totalorder %s20, 0
      %s239 = scalar_select %p238, %s20, 0
      %s240 = smul.addr %s237, 2
      %s241 = sadd.s32 %s239, %s240
      %s242 = smul.addr %s241, 8
      %s243 = scalar_lea.vmem %s0, %s242
      %p244 = scmp.lt.s32.totalorder %s19, 1
      %s245 = scalar_select %p244, %s19, 1
      %p246 = scmp.lt.s32.totalorder %s20, 0
      %s247 = scalar_select %p246, %s20, 0
      %s248 = smul.addr %s245, 2
      %s249 = sadd.s32 %s247, %s248
      %s250 = smul.addr %s249, 8
      %s251 = scalar_lea.vmem %s3, %s250
      %p252 = scmp.lt.s32.totalorder %s19, 1
      %s253 = scalar_select %p252, %s19, 1
      %p254 = scmp.lt.s32.totalorder %s20, 0
      %s255 = scalar_select %p254, %s20, 0
      %s256 = smul.addr %s253, 2
      %s257 = sadd.s32 %s255, %s256
      %s258 = smul.addr %s257, 8
      %s259 = scalar_lea.vmem %s4, %s258
      %v260 = vld [vmem:[%s1] sm:$0xff]
      %v261 = vld [vmem:[%s1 + $0x8] sm:$0xff]
      %v262 = vld [vmem:[%s243] sm:$0xff]
      %v263 = vld [vmem:[%s243 + $0x8] sm:$0xff]
      %v264 = vld [vmem:[%s2] sm:$0xff]
      %v265 = vld [vmem:[%s2 + $0x8] sm:$0xff]
      %267 = vset.pattern.permute.xlu0 0
      %268 = vperm.xlu0 %267, %v264
      %v269 = vpop.permute.xlu0 %268
      %272 = vset.pattern.permute.xlu0 0
      %273 = vperm.xlu0 %272, %v265
      %v274 = vpop.permute.xlu0 %273
      %vm276 = vcmask 130048
      %v278 = vsel %vm276, %v260, 0
      %v281 = vsel %vm276, %v261, 0
      %283 = vmatprep.subr.mxu0 0.0
      %284 = vmatpush1.msra.mxu0 %v262
      %285 = vmatprep.subr.mxu0 0.0
      %286 = vmatpush1.msra.mxu0 %v263
      %287 = vmatprep.subr.mxu0 0.0
      %288 = vmatpush1.msra.mxu0 0.0
      %289 = vmatprep.subr.mxu0 0.0
      %290 = vmatpush1.msra.mxu0 0.0
      %291 = vmatprep.subr.mxu0 0.0
      %292 = vmatpush1.msra.mxu0 0.0
      %293 = vmatprep.subr.mxu0 0.0
      %294 = vmatpush1.msra.mxu0 0.0
      %295 = vmatprep.subr.mxu0 0.0
      %296 = vmatpush1.msra.mxu0 0.0
      %297 = vmatprep.subr.mxu0 0.0
      %298 = vmatpush1.msra.mxu0 0.0
      %299 = vmatprep.subr.mxu0 0.0
      %300 = vmatpush1.msra.mxu0 0.0
      %301 = vmatprep.subr.mxu0 0.0
      %302 = vmatpush1.msra.mxu0 0.0
      %303 = vmatprep.subr.mxu0 0.0
      %304 = vmatpush1.msra.mxu0 0.0
      %305 = vmatprep.subr.mxu0 0.0
      %306 = vmatpush1.msra.mxu0 0.0
      %307 = vmatprep.subr.mxu0 0.0
      %308 = vmatpush1.msra.mxu0 0.0
      %309 = vmatprep.subr.mxu0 0.0
      %310 = vmatpush1.msra.mxu0 0.0
      %311 = vmatprep.subr.mxu0 0.0
      %312 = vmatpush1.msra.mxu0 0.0
      %313 = vmatprep.subr.mxu0 0.0
      %314 = vmatpush1.msra.mxu0 0.0
      %315 = vmatprep.subr.mxu0 0.0
      %316 = vmatpush1.msra.mxu0 0.0
      %317 = vmatprep.subr.mxu0 0.0
      %318 = vmatpush1.msra.mxu0 0.0
      %319 = vmatprep.subr.mxu0 0.0
      %320 = vmatpush1.msra.mxu0 0.0
      %321 = vmatprep.subr.mxu0 0.0
      %322 = vmatpush1.msra.mxu0 0.0
      %323 = vmatprep.subr.mxu0 0.0
      %324 = vmatpush1.msra.mxu0 0.0
      %325 = vmatprep.subr.mxu0 0.0
      %326 = vmatpush1.msra.mxu0 0.0
      %327 = vmatprep.subr.mxu0 0.0
      %328 = vmatpush1.msra.mxu0 0.0
      %329 = vmatprep.subr.mxu0 0.0
      %330 = vmatpush1.msra.mxu0 0.0
      %331 = vmatprep.subr.mxu0 0.0
      %332 = vmatpush1.msra.mxu0 0.0
      %333 = vmatprep.subr.mxu0 0.0
      %334 = vmatpush1.msra.mxu0 0.0
      %335 = vmatprep.subr.mxu0 0.0
      %336 = vmatpush1.msra.mxu0 0.0
      %337 = vmatprep.subr.mxu0 0.0
      %338 = vmatpush1.msra.mxu0 0.0
      %339 = vmatprep.subr.mxu0 0.0
      %340 = vmatpush1.msra.mxu0 0.0
      %341 = vmatprep.subr.mxu0 0.0
      %342 = vmatpush1.msra.mxu0 0.0
      %343 = vmatprep.subr.mxu0 0.0
      %344 = vmatpush1.msra.mxu0 0.0
      %345 = vmatprep.subr.mxu0 0.0
      %346 = vmatpush1.msra.mxu0 0.0
      %347 = vmatprep.mubr.f32.mxu0 0.0
      %348 = vmatmul.mubr.f32.gmra.mrb[0].mxu0 %v278
      %v349 = vpop.f32.mrb[0].mxu0
      %v350 = vadd.f32 %v269, %v349
      %v351 = vpop.f32.mrb[0].mxu0
      %352 = vmatprep.mubr.f32.mxu0 0.0
      %353 = vmatmul.mubr.f32.gmra.mrb[0].mxu0 %v281
      %v354 = vpop.f32.mrb[0].mxu0
      %v355 = vadd.f32 %v274, %v354
      %v356 = vpop.f32.mrb[0].mxu0
      %357 = vdwg.mxu0
      %v358 = vld [vmem:[%s251] sm:$0xff]
      %v359 = vld [vmem:[%s251 + $0x8] sm:$0xff]
      %v360 = vadd.f32 %v350, %v358
      %v361 = vadd.f32 %v355, %v359
      %vm362 = vcmask 523264
      %363 = vst.msk [vmem:[%s259] sm:$0xff] %vm362, %v360
      %364 = vst.msk [vmem:[%s259 + $0x8] sm:$0xff] %vm362, %v361
      %p365 = scmp.lt.s32.totalorder %s19, 1
      %s366 = scalar_select %p365, %s19, 1
      %p367 = scmp.lt.s32.totalorder %s20, 0
      %s368 = scalar_select %p367, %s20, 0
      %s369 = smul.addr %s366, 2
      %s370 = sadd.s32 %s368, %s369
      %s371 = smul.addr %s370, 8
      %s372 = scalar_lea.vmem %s4, %s371
      // Predicated region
      $region37: #{laean_forward.58} parent=35 // pred_check
        %p373 = pneg %p145
      $region38: #{laean_forward.58} parent=35 // pred_check_branch
        %375 = sbr.rel (%p373) target = $region40
      $region39: #{laean_forward.58} parent=35 // pred_region
        _
      $region40: #{laean_forward.58} parent=35 // pred_fallthru
        _
    $region36: #{laean_forward.58} parent=5 // pred_fallthru
      _
    %p376 = scmp.le.s32.totalorder 2, %s10
    // Predicated region
    $region41: #{laean_forward.58} parent=5 // pred_check
      %p377 = pneg %p376
    $region42: #{laean_forward.58} parent=5 // pred_check_branch
      %379 = sbr.rel (%p377) target = $region44
    $region43: #{laean_forward.58} parent=5 // pred_region
      %s380 = ssub.s32 %s10, 2
      // Predicated region
      $region45: #{laean_forward.58} parent=43 // pred_check
        %p381 = pneg %p151
      $region46: #{laean_forward.58} parent=43 // pred_check_branch
        %383 = sbr.rel (%p381) target = $region48
      $region47: #{laean_forward.58} parent=43 // pred_region
        %p384 = scmp.lt.s32.totalorder %s21, 1
        %s385 = scalar_select %p384, %s21, 1
        %p386 = scmp.lt.s32.totalorder %s22, 0
        %s387 = scalar_select %p386, %s22, 0
        %s388 = smul.addr %s385, 2
        %s389 = sadd.s32 %s387, %s388
        %s390 = smul.addr %s389, 8
        %s391 = scalar_lea.vmem %s4, %s390
      $region48: #{laean_forward.58} parent=43 // pred_fallthru
        _
    $region44: #{laean_forward.58} parent=5 // pred_fallthru
      _
  $region6: #{laean_forward.58} parent=0 // loop_footer
    %s14 = sadd.s32 1, %s10
  $region7: #{laean_forward.58} parent=0 // loop_footer_branch
    %9 = sbr.rel target = $region3
  $region8: #{laean_forward.58} parent=0 // loop_exit
    _

// kernel: laean_forward.61
$region0: #{laean_forward.61}
  #allocation0 [shape = 'u32[]', space=smem, size = 0x4, offset = 0x4, fixed_abs, tag = 'smem constant byte address 0x4 - core index']
  #allocation1 [shape = 'u32[144,128]{1,0:T(1,128)}', space=vmem, size = 0x12000, scoped, tag = 'internal scratch']
  %s0 = inlined_call_operand.vmem [shape: f32[2,3,256], index: 0, kind: input, shape index: {}]
  %s1 = inlined_call_operand.vmem [shape: f32[3,3], index: 1, kind: input, shape index: {}]
  %s2 = inlined_call_operand.vmem [shape: f32[3,1], index: 2, kind: input, shape index: {}]
  %s3 = inlined_call_operand.vmem [shape: f32[2,3,256], index: 3, kind: output, shape index: {}]
  %s4 = sld [smem:[#allocation0]]
  $region45: #{laean_forward.61} parent=0
    _
  %s6 = ssub.s32 1, %s4
  %s7 = scalar_select 0, %s6, %s4
  loop: start=0, step=1, limit=4
  $region2: #{laean_forward.61} parent=0 // loop_pre_header
    _
  $region3: #{laean_forward.61} parent=0 // loop_header
    %s9 = sphi 0, %s13
    %p10 = scmp.ge.s32.totalorder %s9, 4
    %s16 = sphi 0, %s28
    %s17 = sphi 0, %s24
    %s18 = sphi 0, %s16
    %s19 = sphi 0, %s17
    %s20 = sphi 0, %s18
    %s21 = sphi 0, %s19
    %s33 = sphi 0, %s35
    %s36 = sphi 0, %s33
    %s37 = sphi 0, %s36
    %s53 = sphi 0, %s37
    %s57 = sphi 0, %s57
    %s59 = sphi 0, %s57
    %s60 = sphi 0, %s59
    %s74 = sphi 0, %s60
    %s78 = sphi 0, %s78
    %s80 = sphi 0, %s78
    %s81 = sphi 0, %s80
    %s95 = sphi 0, %s81
    %s103 = sphi 0, %s105
    %s106 = sphi 0, %s103
    %s107 = sphi 0, %s106
    %s123 = sphi 0, %s107
  $region4: #{laean_forward.61} parent=0 // loop_header_branch
    %12 = sbr.rel (%p10) target = $region8
  $region5: #{laean_forward.61} parent=0 // loop_body
    %s14 = ssub.s32 %s9, 1
    %s15 = ssub.s32 %s9, 2
    %s22 = sadd.s32 1, %s17
    %p23 = scmp.ge.s32.totalorder %s22, 1
    %s24 = scalar_select %p23, 0, %s22
    %s25 = sadd.s32 1, %s16
    %s26 = scalar_select %p23, %s25, %s16
    %p27 = scmp.ge.s32.totalorder %s26, 2
    %s28 = scalar_select %p27, 0, %s26
    %s29 = ssub.s32 %s16, %s28
    %s30 = ssub.s32 %s17, %s24
    %s31 = sor.u32 %s29, %s30
    %p32 = scmp.eq.s32.totalorder %s31, 0
    %s34 = sadd.s32 %s33, 1
    %s35 = scalar_select %p32, %s33, %s34
    %p38 = pneg %p32
    %p39 = scmp.eq.s32.totalorder %s9, 1
    %p40 = por %p38, %p39
    %p41 = scmp.ne.s32.totalorder %s33, %s36
    %p42 = scmp.eq.s32.totalorder %s9, 0
    %p43 = por %p41, %p42
    %p44 = scmp.ne.s32.totalorder %s33, %s36
    %p45 = scmp.eq.s32.totalorder %s14, 1
    %p46 = por %p44, %p45
    %p47 = scmp.ne.s32.totalorder %s36, %s37
    %p48 = scmp.eq.s32.totalorder %s14, 0
    %p49 = por %p47, %p48
    %p50 = scmp.ne.s32.totalorder %s36, %s37
    %p51 = scmp.eq.s32.totalorder %s15, 1
    %p52 = por %p50, %p51
    %p54 = scmp.ne.s32.totalorder %s37, %s53
    %p55 = scmp.eq.s32.totalorder %s15, 0
    %p56 = por %p54, %p55
    %s58 = sadd.s32 %s57, 1
    %p61 = scmp.eq.s32.totalorder %s9, 1
    %p62 = scmp.ne.s32.totalorder %s57, %s59
    %p63 = scmp.eq.s32.totalorder %s9, 0
    %p64 = por %p62, %p63
    %p65 = scmp.ne.s32.totalorder %s57, %s59
    %p66 = scmp.eq.s32.totalorder %s14, 1
    %p67 = por %p65, %p66
    %p68 = scmp.ne.s32.totalorder %s59, %s60
    %p69 = scmp.eq.s32.totalorder %s14, 0
    %p70 = por %p68, %p69
    %p71 = scmp.ne.s32.totalorder %s59, %s60
    %p72 = scmp.eq.s32.totalorder %s15, 1
    %p73 = por %p71, %p72
    %p75 = scmp.ne.s32.totalorder %s60, %s74
    %p76 = scmp.eq.s32.totalorder %s15, 0
    %p77 = por %p75, %p76
    %s79 = sadd.s32 %s78, 1
    %p82 = scmp.eq.s32.totalorder %s9, 1
    %p83 = scmp.ne.s32.totalorder %s78, %s80
    %p84 = scmp.eq.s32.totalorder %s9, 0
    %p85 = por %p83, %p84
    %p86 = scmp.ne.s32.totalorder %s78, %s80
    %p87 = scmp.eq.s32.totalorder %s14, 1
    %p88 = por %p86, %p87
    %p89 = scmp.ne.s32.totalorder %s80, %s81
    %p90 = scmp.eq.s32.totalorder %s14, 0
    %p91 = por %p89, %p90
    %p92 = scmp.ne.s32.totalorder %s80, %s81
    %p93 = scmp.eq.s32.totalorder %s15, 1
    %p94 = por %p92, %p93
    %p96 = scmp.ne.s32.totalorder %s81, %s95
    %p97 = scmp.eq.s32.totalorder %s15, 0
    %p98 = por %p96, %p97
    %s99 = ssub.s32 %s16, %s28
    %s100 = ssub.s32 %s17, %s24
    %s101 = sor.u32 %s99, %s100
    %p102 = scmp.eq.s32.totalorder %s101, 0
    %s104 = sadd.s32 %s103, 1
    %s105 = scalar_select %p102, %s103, %s104
    %p108 = pneg %p102
    %p109 = scmp.eq.s32.totalorder %s9, 1
    %p110 = por %p108, %p109
    %p111 = scmp.ne.s32.totalorder %s103, %s106
    %p112 = scmp.eq.s32.totalorder %s9, 0
    %p113 = por %p111, %p112
    %p114 = scmp.ne.s32.totalorder %s103, %s106
    %p115 = scmp.eq.s32.totalorder %s14, 1
    %p116 = por %p114, %p115
    %p117 = scmp.ne.s32.totalorder %s106, %s107
    %p118 = scmp.eq.s32.totalorder %s14, 0
    %p119 = por %p117, %p118
    %p120 = scmp.ne.s32.totalorder %s106, %s107
    %p121 = scmp.eq.s32.totalorder %s15, 1
    %p122 = por %p120, %p121
    %p124 = scmp.ne.s32.totalorder %s107, %s123
    %p125 = scmp.eq.s32.totalorder %s15, 0
    %p126 = por %p124, %p125
    %p127 = scmp.le.s32.totalorder 1, %s9
    %p128 = scmp.lt.s32.totalorder %s9, 3
    %p129 = pnand %p127, %p128
    %p130 = pneg %p129
    // Predicated region
    $region9: #{laean_forward.61} parent=5 // pred_check
      _
    $region10: #{laean_forward.61} parent=5 // pred_check_branch
      %132 = sbr.rel (%p129) target = $region12
    $region11: #{laean_forward.61} parent=5 // pred_region
      %s133 = ssub.s32 %s9, 1
      // Predicated region
      $region13: #{laean_forward.61} parent=11 // pred_check
        %p134 = pneg %p70
      $region14: #{laean_forward.61} parent=11 // pred_check_branch
        %136 = sbr.rel (%p134) target = $region16
      $region15: #{laean_forward.61} parent=11 // pred_region
        _
      $region16: #{laean_forward.61} parent=11 // pred_fallthru
        _
      // Predicated region
      $region17: #{laean_forward.61} parent=11 // pred_check
        %p137 = pneg %p91
      $region18: #{laean_forward.61} parent=11 // pred_check_branch
        %139 = sbr.rel (%p137) target = $region20
      $region19: #{laean_forward.61} parent=11 // pred_region
        _
      $region20: #{laean_forward.61} parent=11 // pred_fallthru
        _
    $region12: #{laean_forward.61} parent=5 // pred_fallthru
      _
    %p140 = scmp.lt.s32.totalorder %s9, 2
    // Predicated region
    $region21: #{laean_forward.61} parent=5 // pred_check
      %p141 = pneg %p140
    $region22: #{laean_forward.61} parent=5 // pred_check_branch
      %143 = sbr.rel (%p141) target = $region24
    $region23: #{laean_forward.61} parent=5 // pred_region
      // Predicated region
      $region25: #{laean_forward.61} parent=23 // pred_check
        %p144 = pneg %p43
      $region26: #{laean_forward.61} parent=23 // pred_check_branch
        %146 = sbr.rel (%p144) target = $region28
      $region27: #{laean_forward.61} parent=23 // pred_region
        %s147 = smul.u32 2, %s17
        %p148 = scmp.lt.s32.totalorder %s16, 1
        %s149 = scalar_select %p148, %s16, 1
        %p150 = scmp.lt.s32.totalorder %s147, 1
        %s151 = scalar_select %p150, %s147, 1
        %s152 = smul.addr %s149, 2
        %s153 = sadd.s32 %s151, %s152
        %s154 = smul.addr %s153, 4
        %s155 = scalar_lea.vmem %s0, %s154
        %s156 = smul.u32 2, %s17
      $region28: #{laean_forward.61} parent=23 // pred_fallthru
        _
    $region24: #{laean_forward.61} parent=5 // pred_fallthru
      _
    %p157 = scmp.le.s32.totalorder 1, %s9
    %p158 = scmp.lt.s32.totalorder %s9, 3
    %p159 = pnand %p157, %p158
    %p160 = pneg %p159
    // Predicated region
    $region29: #{laean_forward.61} parent=5 // pred_check
      _
    $region30: #{laean_forward.61} parent=5 // pred_check_branch
      %162 = sbr.rel (%p159) target = $region32
    $region31: #{laean_forward.61} parent=5 // pred_region
      %s163 = ssub.s32 %s9, 1
      %s164 = smul.u32 2, %s19
      %p165 = scmp.lt.s32.totalorder %s18, 1
      %s166 = scalar_select %p165, %s18, 1
      %p167 = scmp.lt.s32.totalorder %s164, 1
      %s168 = scalar_select %p167, %s164, 1
      %s169 = smul.addr %s166, 2
      %s170 = sadd.s32 %s168, %s169
      %s171 = smul.addr %s170, 4
      %s172 = scalar_lea.vmem %s0, %s171
      %p173 = pneg %p49
      %p174 = pneg %p46
      %p175 = pneg %p70
      %p176 = pneg %p67
      %p177 = pneg %p91
      %p178 = pneg %p88
      %p179 = pneg %p119
      %p180 = pneg %p116
      %s181 = smul.u32 2, %s19
      %p182 = scmp.lt.s32.totalorder %s18, 1
      %s183 = scalar_select %p182, %s18, 1
      %p184 = scmp.lt.s32.totalorder %s181, 1
      %s185 = scalar_select %p184, %s181, 1
      %s186 = smul.addr %s183, 2
      %s187 = sadd.s32 %s185, %s186
      %s188 = smul.addr %s187, 4
      %s189 = scalar_lea.vmem %s3, %s188
      %s190 = smul.u32 2, %s19
      %p191 = scmp.lt.s32.totalorder %s18, 1
      %s192 = scalar_select %p191, %s18, 1
      %p193 = scmp.lt.s32.totalorder %s190, 1
      %s194 = scalar_select %p193, %s190, 1
      %s195 = smul.addr %s192, 2
      %s196 = sadd.s32 %s194, %s195
      %s197 = smul.addr %s196, 4
      %s198 = scalar_lea.vmem %s0, %s197
      %s199 = smul.u32 2, %s19
      %s200 = smul.u32 2, %s19
      %p201 = scmp.lt.s32.totalorder %s18, 1
      %s202 = scalar_select %p201, %s18, 1
      %p203 = scmp.lt.s32.totalorder %s200, 1
      %s204 = scalar_select %p203, %s200, 1
      %s205 = smul.addr %s202, 2
      %s206 = sadd.s32 %s204, %s205
      %s207 = smul.addr %s206, 4
      %s208 = scalar_lea.vmem %s3, %s207
      %s209 = smul.u32 2, %s19
      %v210 = vld [vmem:[%s1] sm:$0x7]
      %v211 = vld [vmem:[%s198] sm:$0x77]
      %v212 = vld [vmem:[%s2] sm:$0x7]
      %214 = vset.pattern.permute.xlu0 0
      %215 = vperm.xlu0 %214, %v212
      %v216 = vpop.permute.xlu0 %215
      %v219 = vcombine.high %v211, %v211
      %vm220 = vcmask 23552
      %v222 = vsel %vm220, %v210, 0
      %vm224 = vcmask 1042432
      %v225 = vsel %vm224, %v211, 0
      %v227 = vsel %vm224, %v219, 0
      %229 = vmatprep.subr.mxu0 %v227
      %230 = vmatpush1.msra.mxu0 %v225
      %231 = vmatprep.subr.mxu0 0.0
      %232 = vmatpush1.msra.mxu0 0.0
      %233 = vmatprep.subr.mxu0 0.0
      %234 = vmatpush1.msra.mxu0 0.0
      %235 = vmatprep.subr.mxu0 0.0
      %236 = vmatpush1.msra.mxu0 0.0
      %237 = vmatprep.subr.mxu0 0.0
      %238 = vmatpush1.msra.mxu0 0.0
      %239 = vmatprep.subr.mxu0 0.0
      %240 = vmatpush1.msra.mxu0 0.0
      %241 = vmatprep.subr.mxu0 0.0
      %242 = vmatpush1.msra.mxu0 0.0
      %243 = vmatprep.subr.mxu0 0.0
      %244 = vmatpush1.msra.mxu0 0.0
      %245 = vmatprep.subr.mxu0 0.0
      %246 = vmatpush1.msra.mxu0 0.0
      %247 = vmatprep.subr.mxu0 0.0
      %248 = vmatpush1.msra.mxu0 0.0
      %249 = vmatprep.subr.mxu0 0.0
      %250 = vmatpush1.msra.mxu0 0.0
      %251 = vmatprep.subr.mxu0 0.0
      %252 = vmatpush1.msra.mxu0 0.0
      %253 = vmatprep.subr.mxu0 0.0
      %254 = vmatpush1.msra.mxu0 0.0
      %255 = vmatprep.subr.mxu0 0.0
      %256 = vmatpush1.msra.mxu0 0.0
      %257 = vmatprep.subr.mxu0 0.0
      %258 = vmatpush1.msra.mxu0 0.0
      %259 = vmatprep.subr.mxu0 0.0
      %260 = vmatpush1.msra.mxu0 0.0
      %261 = vmatprep.subr.mxu0 0.0
      %262 = vmatpush1.msra.mxu0 0.0
      %263 = vmatprep.subr.mxu0 0.0
      %264 = vmatpush1.msra.mxu0 0.0
      %265 = vmatprep.subr.mxu0 0.0
      %266 = vmatpush1.msra.mxu0 0.0
      %267 = vmatprep.subr.mxu0 0.0
      %268 = vmatpush1.msra.mxu0 0.0
      %269 = vmatprep.subr.mxu0 0.0
      %270 = vmatpush1.msra.mxu0 0.0
      %271 = vmatprep.subr.mxu0 0.0
      %272 = vmatpush1.msra.mxu0 0.0
      %273 = vmatprep.subr.mxu0 0.0
      %274 = vmatpush1.msra.mxu0 0.0
      %275 = vmatprep.subr.mxu0 0.0
      %276 = vmatpush1.msra.mxu0 0.0
      %277 = vmatprep.subr.mxu0 0.0
      %278 = vmatpush1.msra.mxu0 0.0
      %279 = vmatprep.subr.mxu0 0.0
      %280 = vmatpush1.msra.mxu0 0.0
      %281 = vmatprep.subr.mxu0 0.0
      %282 = vmatpush1.msra.mxu0 0.0
      %283 = vmatprep.subr.mxu0 0.0
      %284 = vmatpush1.msra.mxu0 0.0
      %285 = vmatprep.subr.mxu0 0.0
      %286 = vmatpush1.msra.mxu0 0.0
      %287 = vmatprep.subr.mxu0 0.0
      %288 = vmatpush1.msra.mxu0 0.0
      %289 = vmatprep.subr.mxu0 0.0
      %290 = vmatpush1.msra.mxu0 0.0
      %291 = vmatprep.subr.mxu0 0.0
      %292 = vmatpush1.msra.mxu0 0.0
      %293 = vmatprep.mubr.f32.mxu0 0.0
      %294 = vmatmul.mubr.f32.gmra.mrb[0].mxu0 %v222
      %v295 = vpop.f32.mrb[0].mxu0
      %v296 = vadd.f32 %v216, %v295
      %v297 = vpop.f32.mrb[0].mxu0
      %v298 = vadd.f32 %v216, %v297
      %299 = vdwg.mxu0
      %v302 = vcombine.low %v296, %v298
      %304 = vst [vmem:[%s208] sm:$0x77] %v302
      %s305 = smul.u32 2, %s19
      %p306 = scmp.lt.s32.totalorder %s18, 1
      %s307 = scalar_select %p306, %s18, 1
      %p308 = scmp.lt.s32.totalorder %s305, 1
      %s309 = scalar_select %p308, %s305, 1
      %s310 = smul.addr %s307, 2
      %s311 = sadd.s32 %s309, %s310
      %s312 = smul.addr %s311, 4
      %s313 = scalar_lea.vmem %s3, %s312
      // Predicated region
      $region33: #{laean_forward.61} parent=31 // pred_check
        %p314 = pneg %p116
      $region34: #{laean_forward.61} parent=31 // pred_check_branch
        %316 = sbr.rel (%p314) target = $region36
      $region35: #{laean_forward.61} parent=31 // pred_region
        %s317 = smul.u32 2, %s19
      $region36: #{laean_forward.61} parent=31 // pred_fallthru
        _
    $region32: #{laean_forward.61} parent=5 // pred_fallthru
      _
    %p318 = scmp.le.s32.totalorder 2, %s9
    // Predicated region
    $region37: #{laean_forward.61} parent=5 // pred_check
      %p319 = pneg %p318
    $region38: #{laean_forward.61} parent=5 // pred_check_branch
      %321 = sbr.rel (%p319) target = $region40
    $region39: #{laean_forward.61} parent=5 // pred_region
      %s322 = ssub.s32 %s9, 2
      // Predicated region
      $region41: #{laean_forward.61} parent=39 // pred_check
        %p323 = pneg %p122
      $region42: #{laean_forward.61} parent=39 // pred_check_branch
        %325 = sbr.rel (%p323) target = $region44
      $region43: #{laean_forward.61} parent=39 // pred_region
        %s326 = smul.u32 2, %s21
        %p327 = scmp.lt.s32.totalorder %s20, 1
        %s328 = scalar_select %p327, %s20, 1
        %p329 = scmp.lt.s32.totalorder %s326, 1
        %s330 = scalar_select %p329, %s326, 1
        %s331 = smul.addr %s328, 2
        %s332 = sadd.s32 %s330, %s331
        %s333 = smul.addr %s332, 4
        %s334 = scalar_lea.vmem %s3, %s333
      $region44: #{laean_forward.61} parent=39 // pred_fallthru
        _
    $region40: #{laean_forward.61} parent=5 // pred_fallthru
      _
  $region6: #{laean_forward.61} parent=0 // loop_footer
    %s13 = sadd.s32 1, %s9
  $region7: #{laean_forward.61} parent=0 // loop_footer_branch
    %8 = sbr.rel target = $region3
  $region8: #{laean_forward.61} parent=0 // loop_exit
    _

// kernel: laean_forward.60
$region0: #{laean_forward.60}
  #allocation0 [shape = 'u32[]', space=smem, size = 0x4, offset = 0x4, fixed_abs, tag = 'smem constant byte address 0x4 - core index']
  #allocation1 [shape = 'u32[144,128]{1,0:T(1,128)}', space=vmem, size = 0x12000, scoped, tag = 'internal scratch']
  %s0 = inlined_call_operand.vmem [shape: f32[2,16,256], index: 0, kind: input, shape index: {}]
  %s1 = inlined_call_operand.vmem [shape: f32[3,16], index: 1, kind: input, shape index: {}]
  %s2 = inlined_call_operand.vmem [shape: f32[3,1], index: 2, kind: input, shape index: {}]
  %s3 = inlined_call_operand.vmem [shape: f32[2,3,256], index: 3, kind: output, shape index: {}]
  %s4 = sld [smem:[#allocation0]]
  $region45: #{laean_forward.60} parent=0
    _
  %s6 = ssub.s32 1, %s4
  %s7 = scalar_select 0, %s6, %s4
  loop: start=0, step=1, limit=4
  $region2: #{laean_forward.60} parent=0 // loop_pre_header
    _
  $region3: #{laean_forward.60} parent=0 // loop_header
    %s9 = sphi 0, %s13
    %p10 = scmp.ge.s32.totalorder %s9, 4
    %s16 = sphi 0, %s28
    %s17 = sphi 0, %s24
    %s18 = sphi 0, %s16
    %s19 = sphi 0, %s17
    %s20 = sphi 0, %s18
    %s21 = sphi 0, %s19
    %s33 = sphi 0, %s35
    %s36 = sphi 0, %s33
    %s37 = sphi 0, %s36
    %s53 = sphi 0, %s37
    %s57 = sphi 0, %s57
    %s59 = sphi 0, %s57
    %s60 = sphi 0, %s59
    %s74 = sphi 0, %s60
    %s78 = sphi 0, %s78
    %s80 = sphi 0, %s78
    %s81 = sphi 0, %s80
    %s95 = sphi 0, %s81
    %s103 = sphi 0, %s105
    %s106 = sphi 0, %s103
    %s107 = sphi 0, %s106
    %s123 = sphi 0, %s107
  $region4: #{laean_forward.60} parent=0 // loop_header_branch
    %12 = sbr.rel (%p10) target = $region8
  $region5: #{laean_forward.60} parent=0 // loop_body
    %s14 = ssub.s32 %s9, 1
    %s15 = ssub.s32 %s9, 2
    %s22 = sadd.s32 1, %s17
    %p23 = scmp.ge.s32.totalorder %s22, 1
    %s24 = scalar_select %p23, 0, %s22
    %s25 = sadd.s32 1, %s16
    %s26 = scalar_select %p23, %s25, %s16
    %p27 = scmp.ge.s32.totalorder %s26, 2
    %s28 = scalar_select %p27, 0, %s26
    %s29 = ssub.s32 %s16, %s28
    %s30 = ssub.s32 %s17, %s24
    %s31 = sor.u32 %s29, %s30
    %p32 = scmp.eq.s32.totalorder %s31, 0
    %s34 = sadd.s32 %s33, 1
    %s35 = scalar_select %p32, %s33, %s34
    %p38 = pneg %p32
    %p39 = scmp.eq.s32.totalorder %s9, 1
    %p40 = por %p38, %p39
    %p41 = scmp.ne.s32.totalorder %s33, %s36
    %p42 = scmp.eq.s32.totalorder %s9, 0
    %p43 = por %p41, %p42
    %p44 = scmp.ne.s32.totalorder %s33, %s36
    %p45 = scmp.eq.s32.totalorder %s14, 1
    %p46 = por %p44, %p45
    %p47 = scmp.ne.s32.totalorder %s36, %s37
    %p48 = scmp.eq.s32.totalorder %s14, 0
    %p49 = por %p47, %p48
    %p50 = scmp.ne.s32.totalorder %s36, %s37
    %p51 = scmp.eq.s32.totalorder %s15, 1
    %p52 = por %p50, %p51
    %p54 = scmp.ne.s32.totalorder %s37, %s53
    %p55 = scmp.eq.s32.totalorder %s15, 0
    %p56 = por %p54, %p55
    %s58 = sadd.s32 %s57, 1
    %p61 = scmp.eq.s32.totalorder %s9, 1
    %p62 = scmp.ne.s32.totalorder %s57, %s59
    %p63 = scmp.eq.s32.totalorder %s9, 0
    %p64 = por %p62, %p63
    %p65 = scmp.ne.s32.totalorder %s57, %s59
    %p66 = scmp.eq.s32.totalorder %s14, 1
    %p67 = por %p65, %p66
    %p68 = scmp.ne.s32.totalorder %s59, %s60
    %p69 = scmp.eq.s32.totalorder %s14, 0
    %p70 = por %p68, %p69
    %p71 = scmp.ne.s32.totalorder %s59, %s60
    %p72 = scmp.eq.s32.totalorder %s15, 1
    %p73 = por %p71, %p72
    %p75 = scmp.ne.s32.totalorder %s60, %s74
    %p76 = scmp.eq.s32.totalorder %s15, 0
    %p77 = por %p75, %p76
    %s79 = sadd.s32 %s78, 1
    %p82 = scmp.eq.s32.totalorder %s9, 1
    %p83 = scmp.ne.s32.totalorder %s78, %s80
    %p84 = scmp.eq.s32.totalorder %s9, 0
    %p85 = por %p83, %p84
    %p86 = scmp.ne.s32.totalorder %s78, %s80
    %p87 = scmp.eq.s32.totalorder %s14, 1
    %p88 = por %p86, %p87
    %p89 = scmp.ne.s32.totalorder %s80, %s81
    %p90 = scmp.eq.s32.totalorder %s14, 0
    %p91 = por %p89, %p90
    %p92 = scmp.ne.s32.totalorder %s80, %s81
    %p93 = scmp.eq.s32.totalorder %s15, 1
    %p94 = por %p92, %p93
    %p96 = scmp.ne.s32.totalorder %s81, %s95
    %p97 = scmp.eq.s32.totalorder %s15, 0
    %p98 = por %p96, %p97
    %s99 = ssub.s32 %s16, %s28
    %s100 = ssub.s32 %s17, %s24
    %s101 = sor.u32 %s99, %s100
    %p102 = scmp.eq.s32.totalorder %s101, 0
    %s104 = sadd.s32 %s103, 1
    %s105 = scalar_select %p102, %s103, %s104
    %p108 = pneg %p102
    %p109 = scmp.eq.s32.totalorder %s9, 1
    %p110 = por %p108, %p109
    %p111 = scmp.ne.s32.totalorder %s103, %s106
    %p112 = scmp.eq.s32.totalorder %s9, 0
    %p113 = por %p111, %p112
    %p114 = scmp.ne.s32.totalorder %s103, %s106
    %p115 = scmp.eq.s32.totalorder %s14, 1
    %p116 = por %p114, %p115
    %p117 = scmp.ne.s32.totalorder %s106, %s107
    %p118 = scmp.eq.s32.totalorder %s14, 0
    %p119 = por %p117, %p118
    %p120 = scmp.ne.s32.totalorder %s106, %s107
    %p121 = scmp.eq.s32.totalorder %s15, 1
    %p122 = por %p120, %p121
    %p124 = scmp.ne.s32.totalorder %s107, %s123
    %p125 = scmp.eq.s32.totalorder %s15, 0
    %p126 = por %p124, %p125
    %p127 = scmp.le.s32.totalorder 1, %s9
    %p128 = scmp.lt.s32.totalorder %s9, 3
    %p129 = pnand %p127, %p128
    %p130 = pneg %p129
    // Predicated region
    $region9: #{laean_forward.60} parent=5 // pred_check
      _
    $region10: #{laean_forward.60} parent=5 // pred_check_branch
      %132 = sbr.rel (%p129) target = $region12
    $region11: #{laean_forward.60} parent=5 // pred_region
      %s133 = ssub.s32 %s9, 1
      // Predicated region
      $region13: #{laean_forward.60} parent=11 // pred_check
        %p134 = pneg %p70
      $region14: #{laean_forward.60} parent=11 // pred_check_branch
        %136 = sbr.rel (%p134) target = $region16
      $region15: #{laean_forward.60} parent=11 // pred_region
        _
      $region16: #{laean_forward.60} parent=11 // pred_fallthru
        _
      // Predicated region
      $region17: #{laean_forward.60} parent=11 // pred_check
        %p137 = pneg %p91
      $region18: #{laean_forward.60} parent=11 // pred_check_branch
        %139 = sbr.rel (%p137) target = $region20
      $region19: #{laean_forward.60} parent=11 // pred_region
        _
      $region20: #{laean_forward.60} parent=11 // pred_fallthru
        _
    $region12: #{laean_forward.60} parent=5 // pred_fallthru
      _
    %p140 = scmp.lt.s32.totalorder %s9, 2
    // Predicated region
    $region21: #{laean_forward.60} parent=5 // pred_check
      %p141 = pneg %p140
    $region22: #{laean_forward.60} parent=5 // pred_check_branch
      %143 = sbr.rel (%p141) target = $region24
    $region23: #{laean_forward.60} parent=5 // pred_region
      // Predicated region
      $region25: #{laean_forward.60} parent=23 // pred_check
        %p144 = pneg %p43
      $region26: #{laean_forward.60} parent=23 // pred_check_branch
        %146 = sbr.rel (%p144) target = $region28
      $region27: #{laean_forward.60} parent=23 // pred_region
        %s147 = smul.u32 2, %s17
        %p148 = scmp.lt.s32.totalorder %s16, 1
        %s149 = scalar_select %p148, %s16, 1
        %p150 = scmp.lt.s32.totalorder %s147, 1
        %s151 = scalar_select %p150, %s147, 1
        %s152 = smul.addr %s149, 4
        %s153 = sadd.s32 %s151, %s152
        %s154 = smul.addr %s153, 8
        %s155 = scalar_lea.vmem %s0, %s154
        %s156 = smul.u32 2, %s17
      $region28: #{laean_forward.60} parent=23 // pred_fallthru
        _
    $region24: #{laean_forward.60} parent=5 // pred_fallthru
      _
    %p157 = scmp.le.s32.totalorder 1, %s9
    %p158 = scmp.lt.s32.totalorder %s9, 3
    %p159 = pnand %p157, %p158
    %p160 = pneg %p159
    // Predicated region
    $region29: #{laean_forward.60} parent=5 // pred_check
      _
    $region30: #{laean_forward.60} parent=5 // pred_check_branch
      %162 = sbr.rel (%p159) target = $region32
    $region31: #{laean_forward.60} parent=5 // pred_region
      %s163 = ssub.s32 %s9, 1
      %s164 = smul.u32 2, %s19
      %p165 = scmp.lt.s32.totalorder %s18, 1
      %s166 = scalar_select %p165, %s18, 1
      %p167 = scmp.lt.s32.totalorder %s164, 1
      %s168 = scalar_select %p167, %s164, 1
      %s169 = smul.addr %s166, 4
      %s170 = sadd.s32 %s168, %s169
      %s171 = smul.addr %s170, 8
      %s172 = scalar_lea.vmem %s0, %s171
      %p173 = pneg %p49
      %p174 = pneg %p46
      %p175 = pneg %p70
      %p176 = pneg %p67
      %p177 = pneg %p91
      %p178 = pneg %p88
      %p179 = pneg %p119
      %p180 = pneg %p116
      %s181 = smul.u32 2, %s19
      %p182 = scmp.lt.s32.totalorder %s18, 1
      %s183 = scalar_select %p182, %s18, 1
      %p184 = scmp.lt.s32.totalorder %s181, 1
      %s185 = scalar_select %p184, %s181, 1
      %s186 = smul.addr %s183, 2
      %s187 = sadd.s32 %s185, %s186
      %s188 = smul.addr %s187, 4
      %s189 = scalar_lea.vmem %s3, %s188
      %s190 = smul.u32 2, %s19
      %p191 = scmp.lt.s32.totalorder %s18, 1
      %s192 = scalar_select %p191, %s18, 1
      %p193 = scmp.lt.s32.totalorder %s190, 1
      %s194 = scalar_select %p193, %s190, 1
      %s195 = smul.addr %s192, 4
      %s196 = sadd.s32 %s194, %s195
      %s197 = smul.addr %s196, 8
      %s198 = scalar_lea.vmem %s0, %s197
      %s199 = smul.u32 2, %s19
      %s200 = smul.u32 2, %s19
      %p201 = scmp.lt.s32.totalorder %s18, 1
      %s202 = scalar_select %p201, %s18, 1
      %p203 = scmp.lt.s32.totalorder %s200, 1
      %s204 = scalar_select %p203, %s200, 1
      %s205 = smul.addr %s202, 2
      %s206 = sadd.s32 %s204, %s205
      %s207 = smul.addr %s206, 4
      %s208 = scalar_lea.vmem %s3, %s207
      %s209 = smul.u32 2, %s19
      %v210 = vld [vmem:[%s1] sm:$0x7]
      %v211 = vld [vmem:[%s198] sm:$0xff]
      %v212 = vld [vmem:[%s198 + $0x8] sm:$0xff]
      %v213 = vld [vmem:[%s198 + $0x10] sm:$0xff]
      %v214 = vld [vmem:[%s198 + $0x18] sm:$0xff]
      %v215 = vld [vmem:[%s2] sm:$0x7]
      %217 = vset.pattern.permute.xlu0 0
      %218 = vperm.xlu0 %217, %v215
      %v219 = vpop.permute.xlu0 %218
      %vm221 = vcmask 130048
      %v223 = vsel %vm221, %v210, 0
      %225 = vmatprep.subr.mxu0 %v212
      %226 = vmatpush1.msra.mxu0 %v211
      %227 = vmatprep.subr.mxu0 %v214
      %228 = vmatpush1.msra.mxu0 %v213
      %229 = vmatprep.subr.mxu0 0.0
      %230 = vmatpush1.msra.mxu0 0.0
      %231 = vmatprep.subr.mxu0 0.0
      %232 = vmatpush1.msra.mxu0 0.0
      %233 = vmatprep.subr.mxu0 0.0
      %234 = vmatpush1.msra.mxu0 0.0
      %235 = vmatprep.subr.mxu0 0.0
      %236 = vmatpush1.msra.mxu0 0.0
      %237 = vmatprep.subr.mxu0 0.0
      %238 = vmatpush1.msra.mxu0 0.0
      %239 = vmatprep.subr.mxu0 0.0
      %240 = vmatpush1.msra.mxu0 0.0
      %241 = vmatprep.subr.mxu0 0.0
      %242 = vmatpush1.msra.mxu0 0.0
      %243 = vmatprep.subr.mxu0 0.0
      %244 = vmatpush1.msra.mxu0 0.0
      %245 = vmatprep.subr.mxu0 0.0
      %246 = vmatpush1.msra.mxu0 0.0
      %247 = vmatprep.subr.mxu0 0.0
      %248 = vmatpush1.msra.mxu0 0.0
      %249 = vmatprep.subr.mxu0 0.0
      %250 = vmatpush1.msra.mxu0 0.0
      %251 = vmatprep.subr.mxu0 0.0
      %252 = vmatpush1.msra.mxu0 0.0
      %253 = vmatprep.subr.mxu0 0.0
      %254 = vmatpush1.msra.mxu0 0.0
      %255 = vmatprep.subr.mxu0 0.0
      %256 = vmatpush1.msra.mxu0 0.0
      %257 = vmatprep.subr.mxu0 0.0
      %258 = vmatpush1.msra.mxu0 0.0
      %259 = vmatprep.subr.mxu0 0.0
      %260 = vmatpush1.msra.mxu0 0.0
      %261 = vmatprep.subr.mxu0 0.0
      %262 = vmatpush1.msra.mxu0 0.0
      %263 = vmatprep.subr.mxu0 0.0
      %264 = vmatpush1.msra.mxu0 0.0
      %265 = vmatprep.subr.mxu0 0.0
      %266 = vmatpush1.msra.mxu0 0.0
      %267 = vmatprep.subr.mxu0 0.0
      %268 = vmatpush1.msra.mxu0 0.0
      %269 = vmatprep.subr.mxu0 0.0
      %270 = vmatpush1.msra.mxu0 0.0
      %271 = vmatprep.subr.mxu0 0.0
      %272 = vmatpush1.msra.mxu0 0.0
      %273 = vmatprep.subr.mxu0 0.0
      %274 = vmatpush1.msra.mxu0 0.0
      %275 = vmatprep.subr.mxu0 0.0
      %276 = vmatpush1.msra.mxu0 0.0
      %277 = vmatprep.subr.mxu0 0.0
      %278 = vmatpush1.msra.mxu0 0.0
      %279 = vmatprep.subr.mxu0 0.0
      %280 = vmatpush1.msra.mxu0 0.0
      %281 = vmatprep.subr.mxu0 0.0
      %282 = vmatpush1.msra.mxu0 0.0
      %283 = vmatprep.subr.mxu0 0.0
      %284 = vmatpush1.msra.mxu0 0.0
      %285 = vmatprep.subr.mxu0 0.0
      %286 = vmatpush1.msra.mxu0 0.0
      %287 = vmatprep.subr.mxu0 0.0
      %288 = vmatpush1.msra.mxu0 0.0
      %289 = vmatprep.mubr.f32.mxu0 0.0
      %290 = vmatmul.mubr.f32.gmra.mrb[0].mxu0 %v223
      %v291 = vpop.f32.mrb[0].mxu0
      %v292 = vadd.f32 %v219, %v291
      %v293 = vpop.f32.mrb[0].mxu0
      %v294 = vadd.f32 %v219, %v293
      %295 = vdwg.mxu0
      %v298 = vcombine.low %v292, %v294
      %300 = vst [vmem:[%s208] sm:$0x77] %v298
      %s301 = smul.u32 2, %s19
      %p302 = scmp.lt.s32.totalorder %s18, 1
      %s303 = scalar_select %p302, %s18, 1
      %p304 = scmp.lt.s32.totalorder %s301, 1
      %s305 = scalar_select %p304, %s301, 1
      %s306 = smul.addr %s303, 2
      %s307 = sadd.s32 %s305, %s306
      %s308 = smul.addr %s307, 4
      %s309 = scalar_lea.vmem %s3, %s308
      // Predicated region
      $region33: #{laean_forward.60} parent=31 // pred_check
        %p310 = pneg %p116
      $region34: #{laean_forward.60} parent=31 // pred_check_branch
        %312 = sbr.rel (%p310) target = $region36
      $region35: #{laean_forward.60} parent=31 // pred_region
        %s313 = smul.u32 2, %s19
      $region36: #{laean_forward.60} parent=31 // pred_fallthru
        _
    $region32: #{laean_forward.60} parent=5 // pred_fallthru
      _
    %p314 = scmp.le.s32.totalorder 2, %s9
    // Predicated region
    $region37: #{laean_forward.60} parent=5 // pred_check
      %p315 = pneg %p314
    $region38: #{laean_forward.60} parent=5 // pred_check_branch
      %317 = sbr.rel (%p315) target = $region40
    $region39: #{laean_forward.60} parent=5 // pred_region
      %s318 = ssub.s32 %s9, 2
      // Predicated region
      $region41: #{laean_forward.60} parent=39 // pred_check
        %p319 = pneg %p122
      $region42: #{laean_forward.60} parent=39 // pred_check_branch
        %321 = sbr.rel (%p319) target = $region44
      $region43: #{laean_forward.60} parent=39 // pred_region
        %s322 = smul.u32 2, %s21
        %p323 = scmp.lt.s32.totalorder %s20, 1
        %s324 = scalar_select %p323, %s20, 1
        %p325 = scmp.lt.s32.totalorder %s322, 1
        %s326 = scalar_select %p325, %s322, 1
        %s327 = smul.addr %s324, 2
        %s328 = sadd.s32 %s326, %s327
        %s329 = smul.addr %s328, 4
        %s330 = scalar_lea.vmem %s3, %s329
      $region44: #{laean_forward.60} parent=39 // pred_fallthru
        _
    $region40: #{laean_forward.60} parent=5 // pred_fallthru
      _
  $region6: #{laean_forward.60} parent=0 // loop_footer
    %s13 = sadd.s32 1, %s9
  $region7: #{laean_forward.60} parent=0 // loop_footer_branch
    %8 = sbr.rel target = $region3
  $region8: #{laean_forward.60} parent=0 // loop_exit
    _

</llo_original>
